<compile_context>
chip_gen: v6e
topology: v6e:2x2x1
jax: 0.10.0
libtpu: 0.0.40
codegen_flags: <defaults>
</compile_context>

<pallas_src>
import functools

import jax
import jax.numpy as jnp
from jax.experimental import pallas as pl
from jax.experimental.pallas import tpu as pltpu

EPS = 1e-5  # nn.BatchNorm2d default eps
VMEM_LIMIT = 48 * 1024 * 1024  # <= 64 MiB physical on v7x, > 32 MiB default


def _round_up(x, m):
    return (x + m - 1) // m * m


# ----------------------------------------------------------------------------
# Pallas kernels
# ----------------------------------------------------------------------------
def _epilogue(y_f32, i, tm, m_real, activation, y_ref, st_ref):
    """Shared epilogue: optional tanh, per-channel sum/sumsq, downcast store."""
    if activation == "tanh":
        y_f32 = jnp.tanh(y_f32)
    # Per-channel partial statistics (padded rows masked out), taken in f32.
    row = i * tm + jax.lax.broadcasted_iota(jnp.int32, (tm, 1), 0)
    valid = (row < m_real).astype(jnp.float32)
    ym = y_f32 * valid
    s = jnp.sum(ym, axis=0, keepdims=True)        # (1, tn)
    ss = jnp.sum(ym * ym, axis=0, keepdims=True)  # (1, tn)
    st_ref[0, 0:1, :] = s
    st_ref[0, 1:2, :] = ss
    y_ref[...] = y_f32.astype(y_ref.dtype)


def _conv_kernel_direct(x_ref, w_ref, b_ref, y_ref, st_ref,
                        *, m_real, tm, activation):
    """Single-K-step matmul + bias: no accumulator scratch round-trip."""
    i = pl.program_id(0)
    y = jnp.dot(x_ref[...], w_ref[...],
                preferred_element_type=jnp.float32) + b_ref[...]
    _epilogue(y, i, tm, m_real, activation, y_ref, st_ref)


def _conv_kernel_acc(x_ref, w_ref, b_ref, y_ref, st_ref, acc_ref,
                     *, m_real, tm, activation):
    """K-split matmul with f32 VMEM accumulator."""
    # program_id/num_programs hoisted out of pl.when bodies (compile fix).
    i = pl.program_id(0)
    k = pl.program_id(2)
    k_last = pl.num_programs(2) - 1

    @pl.when(k == 0)
    def _():
        acc_ref[...] = jnp.zeros_like(acc_ref)

    acc_ref[...] += jnp.dot(x_ref[...], w_ref[...],
                            preferred_element_type=jnp.float32)

    @pl.when(k == k_last)
    def _():
        y = acc_ref[...] + b_ref[...]
        _epilogue(y, i, tm, m_real, activation, y_ref, st_ref)


def _affine_kernel(x_ref, sc_ref, sh_ref, o_ref, *, relu):
    y = x_ref[...].astype(jnp.float32) * sc_ref[...] + sh_ref[...]
    if relu:
        y = jnp.maximum(y, 0.0)
    o_ref[...] = y.astype(o_ref.dtype)


def _affine_add_kernel(x_ref, sc_ref, sh_ref, r_ref, o_ref):
    y = (x_ref[...].astype(jnp.float32) * sc_ref[...] + sh_ref[...]
         + r_ref[...].astype(jnp.float32))
    o_ref[...] = y.astype(o_ref.dtype)


# ----------------------------------------------------------------------------
# Pallas wrappers
# ----------------------------------------------------------------------------
def _tiles(M, K, N):
    # Rows: up to 512, keep >= 2 row blocks for large layers (v7x 2 TCs).
    if M >= 1024:
        tm = 512
    elif M >= 512:
        tm = 256
    else:
        tm = _round_up(M, 16)
    Mp = _round_up(M, tm)
    # Output channels (lanes): gn == 1 whenever possible for max x-tile reuse.
    Np = _round_up(N, 128)
    if Np <= 512:
        tn = Np
    elif Np % 256 == 0:
        tn = 256
    else:
        tn = 128
    # Contraction.
    Kp = _round_up(K, 128)
    if Kp <= 2048:
        tk = Kp
    else:
        tk = 128
        for d in range(2048 // 128, 0, -1):
            if Kp % (d * 128) == 0:
                tk = d * 128
                break
    return tm, tk, tn, Mp, Kp, Np


def conv_matmul(patches, w2, bias, activation="none", out_dtype=jnp.bfloat16):
    """patches (M,K) bf16, w2 (K,N) f32, bias (N,) f32 ->
       (y (Mp,Np) out_dtype, sums (Np,), sumsq (Np,), tm, M, Np)."""
    M, K = patches.shape
    N = w2.shape[1]
    tm, tk, tn, Mp, Kp, Np = _tiles(M, K, N)

    xp = patches
    if (Mp, Kp) != (M, K):
        xp = jnp.pad(xp, ((0, Mp - M), (0, Kp - K)))
    wp = jnp.pad(w2, ((0, Kp - K), (0, Np - N))).astype(jnp.bfloat16)
    bp = jnp.pad(bias, (0, Np - N)).reshape(1, Np).astype(jnp.float32)

    gm, gn, gk = Mp // tm, Np // tn, Kp // tk
    out_shape = [
        jax.ShapeDtypeStruct((Mp, Np), out_dtype),
        jax.ShapeDtypeStruct((gm, 8, Np), jnp.float32),   # rows 0/1 = sum/sumsq
    ]

    if gk == 1:
        kern = functools.partial(_conv_kernel_direct,
                                 m_real=M, tm=tm, activation=activation)
        y, st = pl.pallas_call(
            kern,
            grid=(gm, gn),
            in_specs=[
                pl.BlockSpec((tm, tk), lambda i, j: (i, 0)),
                pl.BlockSpec((tk, tn), lambda i, j: (0, j)),
                pl.BlockSpec((1, tn), lambda i, j: (0, j)),
            ],
            out_specs=[
                pl.BlockSpec((tm, tn), lambda i, j: (i, j)),
                pl.BlockSpec((1, 8, tn), lambda i, j: (i, 0, j)),
            ],
            out_shape=out_shape,
            compiler_params=pltpu.CompilerParams(
                dimension_semantics=("parallel", "parallel"),
                vmem_limit_bytes=VMEM_LIMIT,
            ),
        )(xp, wp, bp)
    else:
        kern = functools.partial(_conv_kernel_acc,
                                 m_real=M, tm=tm, activation=activation)
        y, st = pl.pallas_call(
            kern,
            grid=(gm, gn, gk),
            in_specs=[
                pl.BlockSpec((tm, tk), lambda i, j, k: (i, k)),
                pl.BlockSpec((tk, tn), lambda i, j, k: (k, j)),
                pl.BlockSpec((1, tn), lambda i, j, k: (0, j)),
            ],
            out_specs=[
                pl.BlockSpec((tm, tn), lambda i, j, k: (i, j)),
                pl.BlockSpec((1, 8, tn), lambda i, j, k: (i, 0, j)),
            ],
            out_shape=out_shape,
            scratch_shapes=[pltpu.VMEM((tm, tn), jnp.float32)],
            compiler_params=pltpu.CompilerParams(
                dimension_semantics=("parallel", "parallel", "arbitrary"),
                vmem_limit_bytes=VMEM_LIMIT,
            ),
        )(xp, wp, bp)

    sums = jnp.sum(st[:, 0, :], axis=0)
    sumsq = jnp.sum(st[:, 1, :], axis=0)
    return y, sums, sumsq, tm, M, Np


def _affine_rows(Mp, tm):
    # Mem-bound streaming pass: grow the row tile toward 1024.
    t = tm
    while t < 1024 and Mp % (2 * t) == 0:
        t *= 2
    return t


def affine_apply(y, scale, shift, tm, relu):
    Mp, Np = y.shape
    t = _affine_rows(Mp, tm)
    kern = functools.partial(_affine_kernel, relu=relu)
    return pl.pallas_call(
        kern,
        grid=(Mp // t,),
        in_specs=[
            pl.BlockSpec((t, Np), lambda i: (i, 0)),
            pl.BlockSpec((1, Np), lambda i: (0, 0)),
            pl.BlockSpec((1, Np), lambda i: (0, 0)),
        ],
        out_specs=pl.BlockSpec((t, Np), lambda i: (i, 0)),
        out_shape=jax.ShapeDtypeStruct((Mp, Np), jnp.bfloat16),
        compiler_params=pltpu.CompilerParams(
            dimension_semantics=("parallel",),
            vmem_limit_bytes=VMEM_LIMIT,
        ),
    )(y, scale, shift)


def affine_add_apply(y, scale, shift, res_pad, tm):
    Mp, Np = y.shape
    t = _affine_rows(Mp, tm)
    return pl.pallas_call(
        _affine_add_kernel,
        grid=(Mp // t,),
        in_specs=[
            pl.BlockSpec((t, Np), lambda i: (i, 0)),
            pl.BlockSpec((1, Np), lambda i: (0, 0)),
            pl.BlockSpec((1, Np), lambda i: (0, 0)),
            pl.BlockSpec((t, Np), lambda i: (i, 0)),
        ],
        out_specs=pl.BlockSpec((t, Np), lambda i: (i, 0)),
        out_shape=jax.ShapeDtypeStruct((Mp, Np), jnp.bfloat16),
        compiler_params=pltpu.CompilerParams(
            dimension_semantics=("parallel",),
            vmem_limit_bytes=VMEM_LIMIT,
        ),
    )(y, scale, shift, res_pad)


# ----------------------------------------------------------------------------
# Conv layers (im2col glue in plain JAX bf16; matmul + BN on MXU/VPU via Pallas)
# ----------------------------------------------------------------------------
def _im2col(x, k, stride, pad, pad_mode):
    if pad > 0:
        mode = "reflect" if pad_mode == "reflect" else "constant"
        x = jnp.pad(x, ((0, 0), (pad, pad), (pad, pad), (0, 0)), mode=mode)
    N, H, W, C = x.shape
    Ho = (H - k) // stride + 1
    Wo = (W - k) // stride + 1
    cols = []
    for kh in range(k):
        for kw in range(k):
            cols.append(
                x[:, kh:kh + stride * (Ho - 1) + 1:stride,
                     kw:kw + stride * (Wo - 1) + 1:stride, :]
            )
    patches = jnp.stack(cols, axis=3).reshape(N * Ho * Wo, k * k * C)
    return patches, (N, Ho, Wo)


def _bn_scale_shift(sums, sumsq, count, gamma, beta, width):
    count = jnp.float32(count)
    mean = sums / count
    var = jnp.maximum(sumsq / count - mean * mean, 0.0)  # biased, torch train BN
    g = jnp.pad(gamma, (0, width - gamma.shape[0]))
    bta = jnp.pad(beta, (0, width - beta.shape[0]))
    scale = g * jax.lax.rsqrt(var + EPS)
    shift = bta - mean * scale
    return scale.reshape(1, width), shift.reshape(1, width)


def conv_bn_relu(x, w, b, gamma, beta, *, stride, pad, pad_mode):
    Cout, Cin, k, _ = w.shape
    patches, (N, Ho, Wo) = _im2col(x, k, stride, pad, pad_mode)
    w2 = jnp.transpose(w, (2, 3, 1, 0)).reshape(k * k * Cin, Cout)
    y, sums, sumsq, tm, M, Np = conv_matmul(patches, w2, b)
    scale, shift = _bn_scale_shift(sums, sumsq, M, gamma, beta, Np)
    out = affine_apply(y, scale, shift, tm, relu=True)
    return out[:M, :Cout].reshape(N, Ho, Wo, Cout)


def conv_bn_add(x, w, b, gamma, beta, res):
    Cout, Cin, k, _ = w.shape
    patches, (N, Ho, Wo) = _im2col(x, 3, 1, 1, "reflect")
    w2 = jnp.transpose(w, (2, 3, 1, 0)).reshape(9 * Cin, Cout)
    y, sums, sumsq, tm, M, Np = conv_matmul(patches, w2, b)
    Mp = y.shape[0]
    scale, shift = _bn_scale_shift(sums, sumsq, M, gamma, beta, Np)
    res_pad = jnp.pad(res.reshape(M, Cout), ((0, Mp - M), (0, Np - Cout)))
    out = affine_add_apply(y, scale, shift, res_pad, tm)
    return out[:M, :Cout].reshape(N, Ho, Wo, Cout)


def conv_tanh(x, w, b, *, pad):
    Cout, Cin, k, _ = w.shape
    patches, (N, Ho, Wo) = _im2col(x, k, 1, pad, "reflect")
    w2 = jnp.transpose(w, (2, 3, 1, 0)).reshape(k * k * Cin, Cout)
    y, _, _, _, M, _ = conv_matmul(patches, w2, b,
                                   activation="tanh", out_dtype=jnp.float32)
    return y[:M, :Cout].reshape(N, Ho, Wo, Cout)


# Fused sub-pixel decomposition of ConvTranspose2d(k=3, s=2, p=1, out_pad=1):
# shared 4-tap patches, 4 sub-pixel weight sets concatenated along N.
_TAPS = [(0, 0), (0, 1), (1, 0), (1, 1)]


def convT_bn_relu(x, w, b, gamma, beta):
    Cin, Cout, k, _ = w.shape
    assert k == 3
    N, H, W, _ = x.shape
    Cp = _round_up(Cout, 128)

    # Fused weight: (4*Cin, 4*Cp); tap (dy,dx) contributes to sub-pixel (a,b)
    # with kernel index (kh,kw) = (a-2*dy+1, b-2*dx+1) when in range.
    wf = jnp.zeros((4, Cin, 4, Cp), jnp.float32)
    for t, (dy, dx) in enumerate(_TAPS):
        for g, (a, bb) in enumerate(_TAPS):
            kh, kw = a - 2 * dy + 1, bb - 2 * dx + 1
            if 0 <= kh <= 2 and 0 <= kw <= 2:
                wf = wf.at[t, :, g, :Cout].set(w[:, :, kh, kw])
    w2 = wf.reshape(4 * Cin, 4 * Cp)
    bias4 = jnp.tile(jnp.pad(b, (0, Cp - Cout)), 4)

    # Shared 4-tap patches with far-side zero pad.
    xp = jnp.pad(x, ((0, 0), (0, 1), (0, 1), (0, 0)))
    cols = [xp[:, dy:dy + H, dx:dx + W, :] for (dy, dx) in _TAPS]
    patches = jnp.stack(cols, axis=3).reshape(N * H * W, 4 * Cin)

    y, sums, sumsq, tm, M, Np = conv_matmul(patches, w2, bias4)
    # BN statistics are global over the full (N, 2H, 2W) output = 4*M rows.
    sums_c = sums.reshape(4, Cp).sum(axis=0)
    sumsq_c = sumsq.reshape(4, Cp).sum(axis=0)
    scale, shift = _bn_scale_shift(sums_c, sumsq_c, 4 * M, gamma, beta, Cp)
    scale = jnp.tile(scale, (1, 4))
    shift = jnp.tile(shift, (1, 4))

    out = affine_apply(y, scale, shift, tm, relu=True)
    # Depth-to-space: columns are [g=(0,0) | (0,1) | (1,0) | (1,1)] x Cp.
    out = out[:M].reshape(N, H, W, 2, 2, Cp)
    out = jnp.transpose(out, (0, 1, 3, 2, 4, 5)).reshape(N, 2 * H, 2 * W, Cp)
    return out[..., :Cout]


# ----------------------------------------------------------------------------
# GlobalGenerator: parameter construction + forward
# ----------------------------------------------------------------------------
def _init_conv(key, cout, cin, k):
    kw, kb = jax.random.split(key)
    scale = 1.0 / jnp.sqrt(jnp.float32(cin * k * k))
    w = jax.random.normal(kw, (cout, cin, k, k), jnp.float32) * scale
    b = jax.random.normal(kb, (cout,), jnp.float32) * scale
    return w, b


def _init_convT(key, cin, cout, k):
    kw, kb = jax.random.split(key)
    scale = 1.0 / jnp.sqrt(jnp.float32(cin * k * k))
    w = jax.random.normal(kw, (cin, cout, k, k), jnp.float32) * scale
    b = jax.random.normal(kb, (cout,), jnp.float32) * scale
    return w, b


def _init_bn(c):
    return jnp.ones((c,), jnp.float32), jnp.zeros((c,), jnp.float32)


def build_params(key, input_nc, output_nc, ngf, n_downsampling, n_blocks):
    n_keys = 1 + n_downsampling + 2 * n_blocks + n_downsampling + 1
    keys = iter(jax.random.split(key, n_keys))
    p = {}
    p["stem_w"], p["stem_b"] = _init_conv(next(keys), ngf, input_nc, 7)
    p["stem_g"], p["stem_bb"] = _init_bn(ngf)
    for i in range(n_downsampling):
        mult = 2 ** i
        cin, cout = ngf * mult, ngf * mult * 2
        p[f"down{i}_w"], p[f"down{i}_b"] = _init_conv(next(keys), cout, cin, 3)
        p[f"down{i}_g"], p[f"down{i}_bb"] = _init_bn(cout)
    dim = ngf * (2 ** n_downsampling)
    for i in range(n_blocks):
        p[f"res{i}_w1"], p[f"res{i}_b1"] = _init_conv(next(keys), dim, dim, 3)
        p[f"res{i}_g1"], p[f"res{i}_bb1"] = _init_bn(dim)
        p[f"res{i}_w2"], p[f"res{i}_b2"] = _init_conv(next(keys), dim, dim, 3)
        p[f"res{i}_g2"], p[f"res{i}_bb2"] = _init_bn(dim)
    for i in range(n_downsampling):
        mult = 2 ** (n_downsampling - i)
        cin, cout = ngf * mult, (ngf * mult) // 2
        p[f"up{i}_w"], p[f"up{i}_b"] = _init_convT(next(keys), cin, cout, 3)
        p[f"up{i}_g"], p[f"up{i}_bb"] = _init_bn(cout)
    p["out_w"], p["out_b"] = _init_conv(next(keys), output_nc, ngf, 7)
    return p


def global_generator_forward(params, x_nchw, *, n_downsampling, n_blocks):
    p = params
    # NCHW f32 -> NHWC bf16 (all intermediates kept bf16).
    x = jnp.transpose(x_nchw, (0, 2, 3, 1)).astype(jnp.bfloat16)

    # stem: ReflectionPad2d(3) + Conv(k=7) + BN + ReLU
    x = conv_bn_relu(x, p["stem_w"], p["stem_b"], p["stem_g"], p["stem_bb"],
                     stride=1, pad=3, pad_mode="reflect")

    # downsampling: Conv(k=3, s=2, p=1) + BN + ReLU
    for i in range(n_downsampling):
        x = conv_bn_relu(x, p[f"down{i}_w"], p[f"down{i}_b"],
                         p[f"down{i}_g"], p[f"down{i}_bb"],
                         stride=2, pad=1, pad_mode="zero")

    # ResnetBlock_gll (reflect padding, no dropout)
    for i in range(n_blocks):
        res = x
        y = conv_bn_relu(x, p[f"res{i}_w1"], p[f"res{i}_b1"],
                         p[f"res{i}_g1"], p[f"res{i}_bb1"],
                         stride=1, pad=1, pad_mode="reflect")
        x = conv_bn_add(y, p[f"res{i}_w2"], p[f"res{i}_b2"],
                        p[f"res{i}_g2"], p[f"res{i}_bb2"], res)

    # upsampling: ConvTranspose(k=3, s=2, p=1, op=1) + BN + ReLU (fused subpixel)
    for i in range(n_downsampling):
        x = convT_bn_relu(x, p[f"up{i}_w"], p[f"up{i}_b"],
                          p[f"up{i}_g"], p[f"up{i}_bb"])

    # output head: ReflectionPad2d(3) + Conv(k=7) + Tanh (tanh fused, f32 out)
    x = conv_tanh(x, p["out_w"], p["out_b"], pad=3)

    return jnp.transpose(x, (0, 3, 1, 2)).astype(jnp.float32)  # NHWC -> NCHW


if __name__ == "__main__":
    # Small, module-consistent configuration.
    input_nc, output_nc = 3, 3
    ngf, n_downsampling, n_blocks = 16, 2, 3
    batch, H, W = 2, 16, 16

    key = jax.random.PRNGKey(0)
    k_params, k_input = jax.random.split(key)
    params = build_params(k_params, input_nc, output_nc, ngf,
                          n_downsampling, n_blocks)
    x = jax.random.normal(k_input, (batch, input_nc, H, W), jnp.float32)  # NCHW

    fwd = jax.jit(
        functools.partial(
            global_generator_forward,
            n_downsampling=n_downsampling, n_blocks=n_blocks,
        )
    )
    out = fwd(params, x)
    out = jax.block_until_ready(out)

    assert out.shape == (batch, output_nc, H, W), out.shape
    assert bool(jnp.all(jnp.isfinite(out)))
    assert bool(jnp.all(jnp.abs(out) <= 1.0))  # tanh range
    print("KERNEL_OK")
</pallas_src>

<mosaic_0001>
module attributes {stable_mosaic.version = 11 : i64} {
  func.func @_affine_kernel(%arg0: i32, %arg1: memref<512x128xbf16, #tpu.memory_space<vmem>>, %arg2: memref<1x128xf32, #tpu.memory_space<vmem>>, %arg3: memref<1x128xf32, #tpu.memory_space<vmem>>, %arg4: memref<512x128xbf16, #tpu.memory_space<vmem>>) attributes {dimension_semantics = [#tpu.dimension_semantics<parallel>], iteration_bounds = array<i64: 1>, scalar_prefetch = 0 : i64, scratch_operands = 0 : i64, tpu.core_type = #tpu.core_type<tc>, window_params = [{transform_indices = @transform_0, window_bounds = array<i64: 512, 128>}, {pipeline_mode = #tpu.pipeline_mode<synchronous>, transform_indices = @transform_1, window_bounds = array<i64: 1, 128>}, {pipeline_mode = #tpu.pipeline_mode<synchronous>, transform_indices = @transform_2, window_bounds = array<i64: 1, 128>}, {transform_indices = @transform_3, window_bounds = array<i64: 512, 128>}]} {
    %c0 = arith.constant 0 : index
    %c0_0 = arith.constant 0 : index
    %0 = vector.load %arg1[%c0, %c0_0] : memref<512x128xbf16, #tpu.memory_space<vmem>>, vector<512x128xbf16>
    %1 = arith.extf %0 : vector<512x128xbf16> to vector<512x128xf32>
    %c0_1 = arith.constant 0 : index
    %c0_2 = arith.constant 0 : index
    %2 = vector.load %arg2[%c0_1, %c0_2] : memref<1x128xf32, #tpu.memory_space<vmem>>, vector<1x128xf32>
    %3 = vector.broadcast %2 : vector<1x128xf32> to vector<512x128xf32>
    %4 = arith.mulf %1, %3 : vector<512x128xf32>
    %c0_3 = arith.constant 0 : index
    %c0_4 = arith.constant 0 : index
    %5 = vector.load %arg3[%c0_3, %c0_4] : memref<1x128xf32, #tpu.memory_space<vmem>>, vector<1x128xf32>
    %6 = vector.broadcast %5 : vector<1x128xf32> to vector<512x128xf32>
    %7 = arith.addf %4, %6 : vector<512x128xf32>
    %cst = arith.constant 0.000000e+00 : f32
    %8 = vector.broadcast %cst : f32 to vector<512x128xf32>
    %9 = arith.maximumf %7, %8 : vector<512x128xf32>
    %10 = arith.truncf %9 : vector<512x128xf32> to vector<512x128xbf16>
    %c0_5 = arith.constant 0 : index
    %c0_6 = arith.constant 0 : index
    %11 = vector.load %arg4[%c0_5, %c0_6] : memref<512x128xbf16, #tpu.memory_space<vmem>>, vector<512x128xbf16>
    tpu.vector_store %arg4[%c0_5, %c0_6], %10 {strides = array<i32>} : memref<512x128xbf16, #tpu.memory_space<vmem>>, vector<512x128xbf16>,
    return
  }
  func.func @transform_0(%arg0: i32) -> (i32, i32) {
    %c0_i32 = arith.constant 0 : i32
    %c0_i32_0 = arith.constant 0 : i32
    return %arg0, %c0_i32 : i32, i32
  }
  func.func @transform_1(%arg0: i32) -> (i32, i32) {
    %c0_i32 = arith.constant 0 : i32
    %c0_i32_0 = arith.constant 0 : i32
    %c0_i32_1 = arith.constant 0 : i32
    return %c0_i32, %c0_i32_0 : i32, i32
  }
  func.func @transform_2(%arg0: i32) -> (i32, i32) {
    %c0_i32 = arith.constant 0 : i32
    %c0_i32_0 = arith.constant 0 : i32
    %c0_i32_1 = arith.constant 0 : i32
    return %c0_i32, %c0_i32_0 : i32, i32
  }
  func.func @transform_3(%arg0: i32) -> (i32, i32) {
    %c0_i32 = arith.constant 0 : i32
    %c0_i32_0 = arith.constant 0 : i32
    return %arg0, %c0_i32 : i32, i32
  }
}

module attributes {stable_mosaic.version = 11 : i64} {
  func.func @_conv_kernel_direct(%arg0: i32, %arg1: i32, %arg2: memref<256x256xbf16, #tpu.memory_space<vmem>>, %arg3: memref<256x128xbf16, #tpu.memory_space<vmem>>, %arg4: memref<1x128xf32, #tpu.memory_space<vmem>>, %arg5: memref<256x128xbf16, #tpu.memory_space<vmem>>, %arg6: memref<1x8x128xf32, #tpu.memory_space<vmem>>) attributes {dimension_semantics = [#tpu.dimension_semantics<parallel>, #tpu.dimension_semantics<parallel>], iteration_bounds = array<i64: 2, 1>, scalar_prefetch = 0 : i64, scratch_operands = 0 : i64, tpu.core_type = #tpu.core_type<tc>, window_params = [{transform_indices = @transform_0, window_bounds = array<i64: 256, 256>}, {transform_indices = @transform_1, window_bounds = array<i64: 256, 128>}, {transform_indices = @transform_2, window_bounds = array<i64: 1, 128>}, {transform_indices = @transform_3, window_bounds = array<i64: 256, 128>}, {transform_indices = @transform_4, window_bounds = array<i64: 1, 8, 128>}]} {
    %c0 = arith.constant 0 : index
    %c0_0 = arith.constant 0 : index
    %0 = vector.load %arg2[%c0, %c0_0] : memref<256x256xbf16, #tpu.memory_space<vmem>>, vector<256x256xbf16>
    %c0_1 = arith.constant 0 : index
    %c0_2 = arith.constant 0 : index
    %1 = vector.load %arg3[%c0_1, %c0_2] : memref<256x128xbf16, #tpu.memory_space<vmem>>, vector<256x128xbf16>
    %cst = arith.constant dense<0.000000e+00> : vector<256x128xf32>
    %2 = tpu.matmul %0, %1, %cst {dimension_numbers = #tpu.dot_dimension_numbers<[1], [0], [0], [1], [0, 0, 1, 1], [], []>} : vector<256x256xbf16>, vector<256x128xbf16>, vector<256x128xf32> -> vector<256x128xf32>
    %c0_3 = arith.constant 0 : index
    %c0_4 = arith.constant 0 : index
    %3 = vector.load %arg4[%c0_3, %c0_4] : memref<1x128xf32, #tpu.memory_space<vmem>>, vector<1x128xf32>
    %4 = vector.broadcast %3 : vector<1x128xf32> to vector<256x128xf32>
    %5 = arith.addf %2, %4 : vector<256x128xf32>
    %c256_i32 = arith.constant 256 : i32
    %6 = arith.muli %arg0, %c256_i32 : i32
    %7 = tpu.iota {dimensions = array<i32: 0>} : vector<256x1xi32>
    %8 = vector.broadcast %6 : i32 to vector<256x1xi32>
    %9 = arith.addi %8, %7 : vector<256x1xi32>
    %c512_i32 = arith.constant 512 : i32
    %10 = vector.broadcast %c512_i32 : i32 to vector<256x1xi32>
    %11 = arith.cmpi slt, %9, %10 : vector<256x1xi32>
    %12 = arith.extui %11 : vector<256x1xi1> to vector<256x1xi32>
    %13 = arith.sitofp %12 : vector<256x1xi32> to vector<256x1xf32>
    %14 = vector.broadcast %13 : vector<256x1xf32> to vector<256x128xf32>
    %15 = arith.mulf %5, %14 : vector<256x128xf32>
    %cst_5 = arith.constant dense<0.000000e+00> : vector<128xf32>
    %16 = vector.multi_reduction <add>, %15, %cst_5 [0] : vector<256x128xf32> to vector<128xf32>
    %17 = vector.shape_cast %16 : vector<128xf32> to vector<1x128xf32>
    %18 = arith.mulf %15, %15 : vector<256x128xf32>
    %cst_6 = arith.constant dense<0.000000e+00> : vector<128xf32>
    %19 = vector.multi_reduction <add>, %18, %cst_6 [0] : vector<256x128xf32> to vector<128xf32>
    %20 = vector.shape_cast %19 : vector<128xf32> to vector<1x128xf32>
    %c0_7 = arith.constant 0 : index
    %c0_8 = arith.constant 0 : index
    %c0_9 = arith.constant 0 : index
    %21 = vector.load %arg6[%c0_7, %c0_8, %c0_9] : memref<1x8x128xf32, #tpu.memory_space<vmem>>, vector<1x1x128xf32>
    %22 = vector.shape_cast %21 : vector<1x1x128xf32> to vector<1x128xf32>
    %23 = vector.shape_cast %17 : vector<1x128xf32> to vector<1x1x128xf32>
    tpu.vector_store %arg6[%c0_7, %c0_8, %c0_9], %23 {strides = array<i32>} : memref<1x8x128xf32, #tpu.memory_space<vmem>>, vector<1x1x128xf32>,
    %c0_10 = arith.constant 0 : index
    %c1 = arith.constant 1 : index
    %c0_11 = arith.constant 0 : index
    %24 = vector.load %arg6[%c0_10, %c1, %c0_11] : memref<1x8x128xf32, #tpu.memory_space<vmem>>, vector<1x1x128xf32>
    %25 = vector.shape_cast %24 : vector<1x1x128xf32> to vector<1x128xf32>
    %26 = vector.shape_cast %20 : vector<1x128xf32> to vector<1x1x128xf32>
    tpu.vector_store %arg6[%c0_10, %c1, %c0_11], %26 {strides = array<i32>} : memref<1x8x128xf32, #tpu.memory_space<vmem>>, vector<1x1x128xf32>,
    %27 = arith.truncf %5 : vector<256x128xf32> to vector<256x128xbf16>
    %c0_12 = arith.constant 0 : index
    %c0_13 = arith.constant 0 : index
    %28 = vector.load %arg5[%c0_12, %c0_13] : memref<256x128xbf16, #tpu.memory_space<vmem>>, vector<256x128xbf16>
    tpu.vector_store %arg5[%c0_12, %c0_13], %27 {strides = array<i32>} : memref<256x128xbf16, #tpu.memory_space<vmem>>, vector<256x128xbf16>,
    return
  }
  func.func @transform_0(%arg0: i32, %arg1: i32) -> (i32, i32) {
    %c0_i32 = arith.constant 0 : i32
    %c0_i32_0 = arith.constant 0 : i32
    return %arg0, %c0_i32 : i32, i32
  }
  func.func @transform_1(%arg0: i32, %arg1: i32) -> (i32, i32) {
    %c0_i32 = arith.constant 0 : i32
    %c0_i32_0 = arith.constant 0 : i32
    return %c0_i32, %arg1 : i32, i32
  }
  func.func @transform_2(%arg0: i32, %arg1: i32) -> (i32, i32) {
    %c0_i32 = arith.constant 0 : i32
    %c0_i32_0 = arith.constant 0 : i32
    return %c0_i32, %arg1 : i32, i32
  }
  func.func @transform_3(%arg0: i32, %arg1: i32) -> (i32, i32) {
    %c0_i32 = arith.constant 0 : i32
    return %arg0, %arg1 : i32, i32
  }
  func.func @transform_4(%arg0: i32, %arg1: i32) -> (i32, i32, i32) {
    %c0_i32 = arith.constant 0 : i32
    %c0_i32_0 = arith.constant 0 : i32
    return %arg0, %c0_i32, %arg1 : i32, i32, i32
  }
}

module attributes {stable_mosaic.version = 11 : i64} {
  func.func @_conv_kernel_direct(%arg0: i32, %arg1: i32, %arg2: memref<128x256xbf16, #tpu.memory_space<vmem>>, %arg3: memref<256x128xbf16, #tpu.memory_space<vmem>>, %arg4: memref<1x128xf32, #tpu.memory_space<vmem>>, %arg5: memref<128x128xbf16, #tpu.memory_space<vmem>>, %arg6: memref<1x8x128xf32, #tpu.memory_space<vmem>>) attributes {dimension_semantics = [#tpu.dimension_semantics<parallel>, #tpu.dimension_semantics<parallel>], iteration_bounds = array<i64: 1, 1>, scalar_prefetch = 0 : i64, scratch_operands = 0 : i64, tpu.core_type = #tpu.core_type<tc>, window_params = [{transform_indices = @transform_0, window_bounds = array<i64: 128, 256>}, {transform_indices = @transform_1, window_bounds = array<i64: 256, 128>}, {transform_indices = @transform_2, window_bounds = array<i64: 1, 128>}, {transform_indices = @transform_3, window_bounds = array<i64: 128, 128>}, {transform_indices = @transform_4, window_bounds = array<i64: 1, 8, 128>}]} {
    %c0 = arith.constant 0 : index
    %c0_0 = arith.constant 0 : index
    %0 = vector.load %arg2[%c0, %c0_0] : memref<128x256xbf16, #tpu.memory_space<vmem>>, vector<128x256xbf16>
    %c0_1 = arith.constant 0 : index
    %c0_2 = arith.constant 0 : index
    %1 = vector.load %arg3[%c0_1, %c0_2] : memref<256x128xbf16, #tpu.memory_space<vmem>>, vector<256x128xbf16>
    %cst = arith.constant dense<0.000000e+00> : vector<128x128xf32>
    %2 = tpu.matmul %0, %1, %cst {dimension_numbers = #tpu.dot_dimension_numbers<[1], [0], [0], [1], [0, 0, 1, 1], [], []>} : vector<128x256xbf16>, vector<256x128xbf16>, vector<128x128xf32> -> vector<128x128xf32>
    %c0_3 = arith.constant 0 : index
    %c0_4 = arith.constant 0 : index
    %3 = vector.load %arg4[%c0_3, %c0_4] : memref<1x128xf32, #tpu.memory_space<vmem>>, vector<1x128xf32>
    %4 = vector.broadcast %3 : vector<1x128xf32> to vector<128x128xf32>
    %5 = arith.addf %2, %4 : vector<128x128xf32>
    %c128_i32 = arith.constant 128 : i32
    %6 = arith.muli %arg0, %c128_i32 : i32
    %7 = tpu.iota {dimensions = array<i32: 0>} : vector<128x1xi32>
    %8 = vector.broadcast %6 : i32 to vector<128x1xi32>
    %9 = arith.addi %8, %7 : vector<128x1xi32>
    %c128_i32_5 = arith.constant 128 : i32
    %10 = vector.broadcast %c128_i32_5 : i32 to vector<128x1xi32>
    %11 = arith.cmpi slt, %9, %10 : vector<128x1xi32>
    %12 = arith.extui %11 : vector<128x1xi1> to vector<128x1xi32>
    %13 = arith.sitofp %12 : vector<128x1xi32> to vector<128x1xf32>
    %14 = vector.broadcast %13 : vector<128x1xf32> to vector<128x128xf32>
    %15 = arith.mulf %5, %14 : vector<128x128xf32>
    %cst_6 = arith.constant dense<0.000000e+00> : vector<128xf32>
    %16 = vector.multi_reduction <add>, %15, %cst_6 [0] : vector<128x128xf32> to vector<128xf32>
    %17 = vector.shape_cast %16 : vector<128xf32> to vector<1x128xf32>
    %18 = arith.mulf %15, %15 : vector<128x128xf32>
    %cst_7 = arith.constant dense<0.000000e+00> : vector<128xf32>
    %19 = vector.multi_reduction <add>, %18, %cst_7 [0] : vector<128x128xf32> to vector<128xf32>
    %20 = vector.shape_cast %19 : vector<128xf32> to vector<1x128xf32>
    %c0_8 = arith.constant 0 : index
    %c0_9 = arith.constant 0 : index
    %c0_10 = arith.constant 0 : index
    %21 = vector.load %arg6[%c0_8, %c0_9, %c0_10] : memref<1x8x128xf32, #tpu.memory_space<vmem>>, vector<1x1x128xf32>
    %22 = vector.shape_cast %21 : vector<1x1x128xf32> to vector<1x128xf32>
    %23 = vector.shape_cast %17 : vector<1x128xf32> to vector<1x1x128xf32>
    tpu.vector_store %arg6[%c0_8, %c0_9, %c0_10], %23 {strides = array<i32>} : memref<1x8x128xf32, #tpu.memory_space<vmem>>, vector<1x1x128xf32>,
    %c0_11 = arith.constant 0 : index
    %c1 = arith.constant 1 : index
    %c0_12 = arith.constant 0 : index
    %24 = vector.load %arg6[%c0_11, %c1, %c0_12] : memref<1x8x128xf32, #tpu.memory_space<vmem>>, vector<1x1x128xf32>
    %25 = vector.shape_cast %24 : vector<1x1x128xf32> to vector<1x128xf32>
    %26 = vector.shape_cast %20 : vector<1x128xf32> to vector<1x1x128xf32>
    tpu.vector_store %arg6[%c0_11, %c1, %c0_12], %26 {strides = array<i32>} : memref<1x8x128xf32, #tpu.memory_space<vmem>>, vector<1x1x128xf32>,
    %27 = arith.truncf %5 : vector<128x128xf32> to vector<128x128xbf16>
    %c0_13 = arith.constant 0 : index
    %c0_14 = arith.constant 0 : index
    %28 = vector.load %arg5[%c0_13, %c0_14] : memref<128x128xbf16, #tpu.memory_space<vmem>>, vector<128x128xbf16>
    tpu.vector_store %arg5[%c0_13, %c0_14], %27 {strides = array<i32>} : memref<128x128xbf16, #tpu.memory_space<vmem>>, vector<128x128xbf16>,
    return
  }
  func.func @transform_0(%arg0: i32, %arg1: i32) -> (i32, i32) {
    %c0_i32 = arith.constant 0 : i32
    %c0_i32_0 = arith.constant 0 : i32
    return %arg0, %c0_i32 : i32, i32
  }
  func.func @transform_1(%arg0: i32, %arg1: i32) -> (i32, i32) {
    %c0_i32 = arith.constant 0 : i32
    %c0_i32_0 = arith.constant 0 : i32
    return %c0_i32, %arg1 : i32, i32
  }
  func.func @transform_2(%arg0: i32, %arg1: i32) -> (i32, i32) {
    %c0_i32 = arith.constant 0 : i32
    %c0_i32_0 = arith.constant 0 : i32
    return %c0_i32, %arg1 : i32, i32
  }
  func.func @transform_3(%arg0: i32, %arg1: i32) -> (i32, i32) {
    %c0_i32 = arith.constant 0 : i32
    return %arg0, %arg1 : i32, i32
  }
  func.func @transform_4(%arg0: i32, %arg1: i32) -> (i32, i32, i32) {
    %c0_i32 = arith.constant 0 : i32
    %c0_i32_0 = arith.constant 0 : i32
    return %arg0, %c0_i32, %arg1 : i32, i32, i32
  }
}

module attributes {stable_mosaic.version = 11 : i64} {
  func.func @_affine_kernel(%arg0: i32, %arg1: memref<128x128xbf16, #tpu.memory_space<vmem>>, %arg2: memref<1x128xf32, #tpu.memory_space<vmem>>, %arg3: memref<1x128xf32, #tpu.memory_space<vmem>>, %arg4: memref<128x128xbf16, #tpu.memory_space<vmem>>) attributes {dimension_semantics = [#tpu.dimension_semantics<parallel>], iteration_bounds = array<i64: 1>, scalar_prefetch = 0 : i64, scratch_operands = 0 : i64, tpu.core_type = #tpu.core_type<tc>, window_params = [{transform_indices = @transform_0, window_bounds = array<i64: 128, 128>}, {pipeline_mode = #tpu.pipeline_mode<synchronous>, transform_indices = @transform_1, window_bounds = array<i64: 1, 128>}, {pipeline_mode = #tpu.pipeline_mode<synchronous>, transform_indices = @transform_2, window_bounds = array<i64: 1, 128>}, {transform_indices = @transform_3, window_bounds = array<i64: 128, 128>}]} {
    %c0 = arith.constant 0 : index
    %c0_0 = arith.constant 0 : index
    %0 = vector.load %arg1[%c0, %c0_0] : memref<128x128xbf16, #tpu.memory_space<vmem>>, vector<128x128xbf16>
    %1 = arith.extf %0 : vector<128x128xbf16> to vector<128x128xf32>
    %c0_1 = arith.constant 0 : index
    %c0_2 = arith.constant 0 : index
    %2 = vector.load %arg2[%c0_1, %c0_2] : memref<1x128xf32, #tpu.memory_space<vmem>>, vector<1x128xf32>
    %3 = vector.broadcast %2 : vector<1x128xf32> to vector<128x128xf32>
    %4 = arith.mulf %1, %3 : vector<128x128xf32>
    %c0_3 = arith.constant 0 : index
    %c0_4 = arith.constant 0 : index
    %5 = vector.load %arg3[%c0_3, %c0_4] : memref<1x128xf32, #tpu.memory_space<vmem>>, vector<1x128xf32>
    %6 = vector.broadcast %5 : vector<1x128xf32> to vector<128x128xf32>
    %7 = arith.addf %4, %6 : vector<128x128xf32>
    %cst = arith.constant 0.000000e+00 : f32
    %8 = vector.broadcast %cst : f32 to vector<128x128xf32>
    %9 = arith.maximumf %7, %8 : vector<128x128xf32>
    %10 = arith.truncf %9 : vector<128x128xf32> to vector<128x128xbf16>
    %c0_5 = arith.constant 0 : index
    %c0_6 = arith.constant 0 : index
    %11 = vector.load %arg4[%c0_5, %c0_6] : memref<128x128xbf16, #tpu.memory_space<vmem>>, vector<128x128xbf16>
    tpu.vector_store %arg4[%c0_5, %c0_6], %10 {strides = array<i32>} : memref<128x128xbf16, #tpu.memory_space<vmem>>, vector<128x128xbf16>,
    return
  }
  func.func @transform_0(%arg0: i32) -> (i32, i32) {
    %c0_i32 = arith.constant 0 : i32
    %c0_i32_0 = arith.constant 0 : i32
    return %arg0, %c0_i32 : i32, i32
  }
  func.func @transform_1(%arg0: i32) -> (i32, i32) {
    %c0_i32 = arith.constant 0 : i32
    %c0_i32_0 = arith.constant 0 : i32
    %c0_i32_1 = arith.constant 0 : i32
    return %c0_i32, %c0_i32_0 : i32, i32
  }
  func.func @transform_2(%arg0: i32) -> (i32, i32) {
    %c0_i32 = arith.constant 0 : i32
    %c0_i32_0 = arith.constant 0 : i32
    %c0_i32_1 = arith.constant 0 : i32
    return %c0_i32, %c0_i32_0 : i32, i32
  }
  func.func @transform_3(%arg0: i32) -> (i32, i32) {
    %c0_i32 = arith.constant 0 : i32
    %c0_i32_0 = arith.constant 0 : i32
    return %arg0, %c0_i32 : i32, i32
  }
}

module attributes {stable_mosaic.version = 11 : i64} {
  func.func @_affine_kernel(%arg0: i32, %arg1: memref<32x128xbf16, #tpu.memory_space<vmem>>, %arg2: memref<1x128xf32, #tpu.memory_space<vmem>>, %arg3: memref<1x128xf32, #tpu.memory_space<vmem>>, %arg4: memref<32x128xbf16, #tpu.memory_space<vmem>>) attributes {dimension_semantics = [#tpu.dimension_semantics<parallel>], iteration_bounds = array<i64: 1>, scalar_prefetch = 0 : i64, scratch_operands = 0 : i64, tpu.core_type = #tpu.core_type<tc>, window_params = [{transform_indices = @transform_0, window_bounds = array<i64: 32, 128>}, {pipeline_mode = #tpu.pipeline_mode<synchronous>, transform_indices = @transform_1, window_bounds = array<i64: 1, 128>}, {pipeline_mode = #tpu.pipeline_mode<synchronous>, transform_indices = @transform_2, window_bounds = array<i64: 1, 128>}, {transform_indices = @transform_3, window_bounds = array<i64: 32, 128>}]} {
    %c0 = arith.constant 0 : index
    %c0_0 = arith.constant 0 : index
    %0 = vector.load %arg1[%c0, %c0_0] : memref<32x128xbf16, #tpu.memory_space<vmem>>, vector<32x128xbf16>
    %1 = arith.extf %0 : vector<32x128xbf16> to vector<32x128xf32>
    %c0_1 = arith.constant 0 : index
    %c0_2 = arith.constant 0 : index
    %2 = vector.load %arg2[%c0_1, %c0_2] : memref<1x128xf32, #tpu.memory_space<vmem>>, vector<1x128xf32>
    %3 = vector.broadcast %2 : vector<1x128xf32> to vector<32x128xf32>
    %4 = arith.mulf %1, %3 : vector<32x128xf32>
    %c0_3 = arith.constant 0 : index
    %c0_4 = arith.constant 0 : index
    %5 = vector.load %arg3[%c0_3, %c0_4] : memref<1x128xf32, #tpu.memory_space<vmem>>, vector<1x128xf32>
    %6 = vector.broadcast %5 : vector<1x128xf32> to vector<32x128xf32>
    %7 = arith.addf %4, %6 : vector<32x128xf32>
    %cst = arith.constant 0.000000e+00 : f32
    %8 = vector.broadcast %cst : f32 to vector<32x128xf32>
    %9 = arith.maximumf %7, %8 : vector<32x128xf32>
    %10 = arith.truncf %9 : vector<32x128xf32> to vector<32x128xbf16>
    %c0_5 = arith.constant 0 : index
    %c0_6 = arith.constant 0 : index
    %11 = vector.load %arg4[%c0_5, %c0_6] : memref<32x128xbf16, #tpu.memory_space<vmem>>, vector<32x128xbf16>
    tpu.vector_store %arg4[%c0_5, %c0_6], %10 {strides = array<i32>} : memref<32x128xbf16, #tpu.memory_space<vmem>>, vector<32x128xbf16>,
    return
  }
  func.func @transform_0(%arg0: i32) -> (i32, i32) {
    %c0_i32 = arith.constant 0 : i32
    %c0_i32_0 = arith.constant 0 : i32
    return %arg0, %c0_i32 : i32, i32
  }
  func.func @transform_1(%arg0: i32) -> (i32, i32) {
    %c0_i32 = arith.constant 0 : i32
    %c0_i32_0 = arith.constant 0 : i32
    %c0_i32_1 = arith.constant 0 : i32
    return %c0_i32, %c0_i32_0 : i32, i32
  }
  func.func @transform_2(%arg0: i32) -> (i32, i32) {
    %c0_i32 = arith.constant 0 : i32
    %c0_i32_0 = arith.constant 0 : i32
    %c0_i32_1 = arith.constant 0 : i32
    return %c0_i32, %c0_i32_0 : i32, i32
  }
  func.func @transform_3(%arg0: i32) -> (i32, i32) {
    %c0_i32 = arith.constant 0 : i32
    %c0_i32_0 = arith.constant 0 : i32
    return %arg0, %c0_i32 : i32, i32
  }
}

module attributes {stable_mosaic.version = 11 : i64} {
  func.func @_conv_kernel_direct(%arg0: i32, %arg1: i32, %arg2: memref<32x384xbf16, #tpu.memory_space<vmem>>, %arg3: memref<384x128xbf16, #tpu.memory_space<vmem>>, %arg4: memref<1x128xf32, #tpu.memory_space<vmem>>, %arg5: memref<32x128xbf16, #tpu.memory_space<vmem>>, %arg6: memref<1x8x128xf32, #tpu.memory_space<vmem>>) attributes {dimension_semantics = [#tpu.dimension_semantics<parallel>, #tpu.dimension_semantics<parallel>], iteration_bounds = array<i64: 1, 1>, scalar_prefetch = 0 : i64, scratch_operands = 0 : i64, tpu.core_type = #tpu.core_type<tc>, window_params = [{transform_indices = @transform_0, window_bounds = array<i64: 32, 384>}, {transform_indices = @transform_1, window_bounds = array<i64: 384, 128>}, {transform_indices = @transform_2, window_bounds = array<i64: 1, 128>}, {transform_indices = @transform_3, window_bounds = array<i64: 32, 128>}, {transform_indices = @transform_4, window_bounds = array<i64: 1, 8, 128>}]} {
    %c0 = arith.constant 0 : index
    %c0_0 = arith.constant 0 : index
    %0 = vector.load %arg2[%c0, %c0_0] : memref<32x384xbf16, #tpu.memory_space<vmem>>, vector<32x384xbf16>
    %c0_1 = arith.constant 0 : index
    %c0_2 = arith.constant 0 : index
    %1 = vector.load %arg3[%c0_1, %c0_2] : memref<384x128xbf16, #tpu.memory_space<vmem>>, vector<384x128xbf16>
    %cst = arith.constant dense<0.000000e+00> : vector<32x128xf32>
    %2 = tpu.matmul %0, %1, %cst {dimension_numbers = #tpu.dot_dimension_numbers<[1], [0], [0], [1], [0, 0, 1, 1], [], []>} : vector<32x384xbf16>, vector<384x128xbf16>, vector<32x128xf32> -> vector<32x128xf32>
    %c0_3 = arith.constant 0 : index
    %c0_4 = arith.constant 0 : index
    %3 = vector.load %arg4[%c0_3, %c0_4] : memref<1x128xf32, #tpu.memory_space<vmem>>, vector<1x128xf32>
    %4 = vector.broadcast %3 : vector<1x128xf32> to vector<32x128xf32>
    %5 = arith.addf %2, %4 : vector<32x128xf32>
    %c32_i32 = arith.constant 32 : i32
    %6 = arith.muli %arg0, %c32_i32 : i32
    %7 = tpu.iota {dimensions = array<i32: 0>} : vector<32x1xi32>
    %8 = vector.broadcast %6 : i32 to vector<32x1xi32>
    %9 = arith.addi %8, %7 : vector<32x1xi32>
    %c32_i32_5 = arith.constant 32 : i32
    %10 = vector.broadcast %c32_i32_5 : i32 to vector<32x1xi32>
    %11 = arith.cmpi slt, %9, %10 : vector<32x1xi32>
    %12 = arith.extui %11 : vector<32x1xi1> to vector<32x1xi32>
    %13 = arith.sitofp %12 : vector<32x1xi32> to vector<32x1xf32>
    %14 = vector.broadcast %13 : vector<32x1xf32> to vector<32x128xf32>
    %15 = arith.mulf %5, %14 : vector<32x128xf32>
    %cst_6 = arith.constant dense<0.000000e+00> : vector<128xf32>
    %16 = vector.multi_reduction <add>, %15, %cst_6 [0] : vector<32x128xf32> to vector<128xf32>
    %17 = vector.shape_cast %16 : vector<128xf32> to vector<1x128xf32>
    %18 = arith.mulf %15, %15 : vector<32x128xf32>
    %cst_7 = arith.constant dense<0.000000e+00> : vector<128xf32>
    %19 = vector.multi_reduction <add>, %18, %cst_7 [0] : vector<32x128xf32> to vector<128xf32>
    %20 = vector.shape_cast %19 : vector<128xf32> to vector<1x128xf32>
    %c0_8 = arith.constant 0 : index
    %c0_9 = arith.constant 0 : index
    %c0_10 = arith.constant 0 : index
    %21 = vector.load %arg6[%c0_8, %c0_9, %c0_10] : memref<1x8x128xf32, #tpu.memory_space<vmem>>, vector<1x1x128xf32>
    %22 = vector.shape_cast %21 : vector<1x1x128xf32> to vector<1x128xf32>
    %23 = vector.shape_cast %17 : vector<1x128xf32> to vector<1x1x128xf32>
    tpu.vector_store %arg6[%c0_8, %c0_9, %c0_10], %23 {strides = array<i32>} : memref<1x8x128xf32, #tpu.memory_space<vmem>>, vector<1x1x128xf32>,
    %c0_11 = arith.constant 0 : index
    %c1 = arith.constant 1 : index
    %c0_12 = arith.constant 0 : index
    %24 = vector.load %arg6[%c0_11, %c1, %c0_12] : memref<1x8x128xf32, #tpu.memory_space<vmem>>, vector<1x1x128xf32>
    %25 = vector.shape_cast %24 : vector<1x1x128xf32> to vector<1x128xf32>
    %26 = vector.shape_cast %20 : vector<1x128xf32> to vector<1x1x128xf32>
    tpu.vector_store %arg6[%c0_11, %c1, %c0_12], %26 {strides = array<i32>} : memref<1x8x128xf32, #tpu.memory_space<vmem>>, vector<1x1x128xf32>,
    %27 = arith.truncf %5 : vector<32x128xf32> to vector<32x128xbf16>
    %c0_13 = arith.constant 0 : index
    %c0_14 = arith.constant 0 : index
    %28 = vector.load %arg5[%c0_13, %c0_14] : memref<32x128xbf16, #tpu.memory_space<vmem>>, vector<32x128xbf16>
    tpu.vector_store %arg5[%c0_13, %c0_14], %27 {strides = array<i32>} : memref<32x128xbf16, #tpu.memory_space<vmem>>, vector<32x128xbf16>,
    return
  }
  func.func @transform_0(%arg0: i32, %arg1: i32) -> (i32, i32) {
    %c0_i32 = arith.constant 0 : i32
    %c0_i32_0 = arith.constant 0 : i32
    return %arg0, %c0_i32 : i32, i32
  }
  func.func @transform_1(%arg0: i32, %arg1: i32) -> (i32, i32) {
    %c0_i32 = arith.constant 0 : i32
    %c0_i32_0 = arith.constant 0 : i32
    return %c0_i32, %arg1 : i32, i32
  }
  func.func @transform_2(%arg0: i32, %arg1: i32) -> (i32, i32) {
    %c0_i32 = arith.constant 0 : i32
    %c0_i32_0 = arith.constant 0 : i32
    return %c0_i32, %arg1 : i32, i32
  }
  func.func @transform_3(%arg0: i32, %arg1: i32) -> (i32, i32) {
    %c0_i32 = arith.constant 0 : i32
    return %arg0, %arg1 : i32, i32
  }
  func.func @transform_4(%arg0: i32, %arg1: i32) -> (i32, i32, i32) {
    %c0_i32 = arith.constant 0 : i32
    %c0_i32_0 = arith.constant 0 : i32
    return %arg0, %c0_i32, %arg1 : i32, i32, i32
  }
}

module attributes {stable_mosaic.version = 11 : i64} {
  func.func @_conv_kernel_direct(%arg0: i32, %arg1: i32, %arg2: memref<32x640xbf16, #tpu.memory_space<vmem>>, %arg3: memref<640x128xbf16, #tpu.memory_space<vmem>>, %arg4: memref<1x128xf32, #tpu.memory_space<vmem>>, %arg5: memref<32x128xbf16, #tpu.memory_space<vmem>>, %arg6: memref<1x8x128xf32, #tpu.memory_space<vmem>>) attributes {dimension_semantics = [#tpu.dimension_semantics<parallel>, #tpu.dimension_semantics<parallel>], iteration_bounds = array<i64: 1, 1>, scalar_prefetch = 0 : i64, scratch_operands = 0 : i64, tpu.core_type = #tpu.core_type<tc>, window_params = [{transform_indices = @transform_0, window_bounds = array<i64: 32, 640>}, {transform_indices = @transform_1, window_bounds = array<i64: 640, 128>}, {transform_indices = @transform_2, window_bounds = array<i64: 1, 128>}, {transform_indices = @transform_3, window_bounds = array<i64: 32, 128>}, {transform_indices = @transform_4, window_bounds = array<i64: 1, 8, 128>}]} {
    %c0 = arith.constant 0 : index
    %c0_0 = arith.constant 0 : index
    %0 = vector.load %arg2[%c0, %c0_0] : memref<32x640xbf16, #tpu.memory_space<vmem>>, vector<32x640xbf16>
    %c0_1 = arith.constant 0 : index
    %c0_2 = arith.constant 0 : index
    %1 = vector.load %arg3[%c0_1, %c0_2] : memref<640x128xbf16, #tpu.memory_space<vmem>>, vector<640x128xbf16>
    %cst = arith.constant dense<0.000000e+00> : vector<32x128xf32>
    %2 = tpu.matmul %0, %1, %cst {dimension_numbers = #tpu.dot_dimension_numbers<[1], [0], [0], [1], [0, 0, 1, 1], [], []>} : vector<32x640xbf16>, vector<640x128xbf16>, vector<32x128xf32> -> vector<32x128xf32>
    %c0_3 = arith.constant 0 : index
    %c0_4 = arith.constant 0 : index
    %3 = vector.load %arg4[%c0_3, %c0_4] : memref<1x128xf32, #tpu.memory_space<vmem>>, vector<1x128xf32>
    %4 = vector.broadcast %3 : vector<1x128xf32> to vector<32x128xf32>
    %5 = arith.addf %2, %4 : vector<32x128xf32>
    %c32_i32 = arith.constant 32 : i32
    %6 = arith.muli %arg0, %c32_i32 : i32
    %7 = tpu.iota {dimensions = array<i32: 0>} : vector<32x1xi32>
    %8 = vector.broadcast %6 : i32 to vector<32x1xi32>
    %9 = arith.addi %8, %7 : vector<32x1xi32>
    %c32_i32_5 = arith.constant 32 : i32
    %10 = vector.broadcast %c32_i32_5 : i32 to vector<32x1xi32>
    %11 = arith.cmpi slt, %9, %10 : vector<32x1xi32>
    %12 = arith.extui %11 : vector<32x1xi1> to vector<32x1xi32>
    %13 = arith.sitofp %12 : vector<32x1xi32> to vector<32x1xf32>
    %14 = vector.broadcast %13 : vector<32x1xf32> to vector<32x128xf32>
    %15 = arith.mulf %5, %14 : vector<32x128xf32>
    %cst_6 = arith.constant dense<0.000000e+00> : vector<128xf32>
    %16 = vector.multi_reduction <add>, %15, %cst_6 [0] : vector<32x128xf32> to vector<128xf32>
    %17 = vector.shape_cast %16 : vector<128xf32> to vector<1x128xf32>
    %18 = arith.mulf %15, %15 : vector<32x128xf32>
    %cst_7 = arith.constant dense<0.000000e+00> : vector<128xf32>
    %19 = vector.multi_reduction <add>, %18, %cst_7 [0] : vector<32x128xf32> to vector<128xf32>
    %20 = vector.shape_cast %19 : vector<128xf32> to vector<1x128xf32>
    %c0_8 = arith.constant 0 : index
    %c0_9 = arith.constant 0 : index
    %c0_10 = arith.constant 0 : index
    %21 = vector.load %arg6[%c0_8, %c0_9, %c0_10] : memref<1x8x128xf32, #tpu.memory_space<vmem>>, vector<1x1x128xf32>
    %22 = vector.shape_cast %21 : vector<1x1x128xf32> to vector<1x128xf32>
    %23 = vector.shape_cast %17 : vector<1x128xf32> to vector<1x1x128xf32>
    tpu.vector_store %arg6[%c0_8, %c0_9, %c0_10], %23 {strides = array<i32>} : memref<1x8x128xf32, #tpu.memory_space<vmem>>, vector<1x1x128xf32>,
    %c0_11 = arith.constant 0 : index
    %c1 = arith.constant 1 : index
    %c0_12 = arith.constant 0 : index
    %24 = vector.load %arg6[%c0_11, %c1, %c0_12] : memref<1x8x128xf32, #tpu.memory_space<vmem>>, vector<1x1x128xf32>
    %25 = vector.shape_cast %24 : vector<1x1x128xf32> to vector<1x128xf32>
    %26 = vector.shape_cast %20 : vector<1x128xf32> to vector<1x1x128xf32>
    tpu.vector_store %arg6[%c0_11, %c1, %c0_12], %26 {strides = array<i32>} : memref<1x8x128xf32, #tpu.memory_space<vmem>>, vector<1x1x128xf32>,
    %27 = arith.truncf %5 : vector<32x128xf32> to vector<32x128xbf16>
    %c0_13 = arith.constant 0 : index
    %c0_14 = arith.constant 0 : index
    %28 = vector.load %arg5[%c0_13, %c0_14] : memref<32x128xbf16, #tpu.memory_space<vmem>>, vector<32x128xbf16>
    tpu.vector_store %arg5[%c0_13, %c0_14], %27 {strides = array<i32>} : memref<32x128xbf16, #tpu.memory_space<vmem>>, vector<32x128xbf16>,
    return
  }
  func.func @transform_0(%arg0: i32, %arg1: i32) -> (i32, i32) {
    %c0_i32 = arith.constant 0 : i32
    %c0_i32_0 = arith.constant 0 : i32
    return %arg0, %c0_i32 : i32, i32
  }
  func.func @transform_1(%arg0: i32, %arg1: i32) -> (i32, i32) {
    %c0_i32 = arith.constant 0 : i32
    %c0_i32_0 = arith.constant 0 : i32
    return %c0_i32, %arg1 : i32, i32
  }
  func.func @transform_2(%arg0: i32, %arg1: i32) -> (i32, i32) {
    %c0_i32 = arith.constant 0 : i32
    %c0_i32_0 = arith.constant 0 : i32
    return %c0_i32, %arg1 : i32, i32
  }
  func.func @transform_3(%arg0: i32, %arg1: i32) -> (i32, i32) {
    %c0_i32 = arith.constant 0 : i32
    return %arg0, %arg1 : i32, i32
  }
  func.func @transform_4(%arg0: i32, %arg1: i32) -> (i32, i32, i32) {
    %c0_i32 = arith.constant 0 : i32
    %c0_i32_0 = arith.constant 0 : i32
    return %arg0, %c0_i32, %arg1 : i32, i32, i32
  }
}

module attributes {stable_mosaic.version = 11 : i64} {
  func.func @_affine_add_kernel(%arg0: i32, %arg1: memref<32x128xbf16, #tpu.memory_space<vmem>>, %arg2: memref<1x128xf32, #tpu.memory_space<vmem>>, %arg3: memref<1x128xf32, #tpu.memory_space<vmem>>, %arg4: memref<32x128xbf16, #tpu.memory_space<vmem>>, %arg5: memref<32x128xbf16, #tpu.memory_space<vmem>>) attributes {dimension_semantics = [#tpu.dimension_semantics<parallel>], iteration_bounds = array<i64: 1>, scalar_prefetch = 0 : i64, scratch_operands = 0 : i64, tpu.core_type = #tpu.core_type<tc>, window_params = [{transform_indices = @transform_0, window_bounds = array<i64: 32, 128>}, {pipeline_mode = #tpu.pipeline_mode<synchronous>, transform_indices = @transform_1, window_bounds = array<i64: 1, 128>}, {pipeline_mode = #tpu.pipeline_mode<synchronous>, transform_indices = @transform_2, window_bounds = array<i64: 1, 128>}, {transform_indices = @transform_3, window_bounds = array<i64: 32, 128>}, {transform_indices = @transform_4, window_bounds = array<i64: 32, 128>}]} {
    %c0 = arith.constant 0 : index
    %c0_0 = arith.constant 0 : index
    %0 = vector.load %arg1[%c0, %c0_0] : memref<32x128xbf16, #tpu.memory_space<vmem>>, vector<32x128xbf16>
    %1 = arith.extf %0 : vector<32x128xbf16> to vector<32x128xf32>
    %c0_1 = arith.constant 0 : index
    %c0_2 = arith.constant 0 : index
    %2 = vector.load %arg2[%c0_1, %c0_2] : memref<1x128xf32, #tpu.memory_space<vmem>>, vector<1x128xf32>
    %3 = vector.broadcast %2 : vector<1x128xf32> to vector<32x128xf32>
    %4 = arith.mulf %1, %3 : vector<32x128xf32>
    %c0_3 = arith.constant 0 : index
    %c0_4 = arith.constant 0 : index
    %5 = vector.load %arg3[%c0_3, %c0_4] : memref<1x128xf32, #tpu.memory_space<vmem>>, vector<1x128xf32>
    %6 = vector.broadcast %5 : vector<1x128xf32> to vector<32x128xf32>
    %7 = arith.addf %4, %6 : vector<32x128xf32>
    %c0_5 = arith.constant 0 : index
    %c0_6 = arith.constant 0 : index
    %8 = vector.load %arg4[%c0_5, %c0_6] : memref<32x128xbf16, #tpu.memory_space<vmem>>, vector<32x128xbf16>
    %9 = arith.extf %8 : vector<32x128xbf16> to vector<32x128xf32>
    %10 = arith.addf %7, %9 : vector<32x128xf32>
    %11 = arith.truncf %10 : vector<32x128xf32> to vector<32x128xbf16>
    %c0_7 = arith.constant 0 : index
    %c0_8 = arith.constant 0 : index
    %12 = vector.load %arg5[%c0_7, %c0_8] : memref<32x128xbf16, #tpu.memory_space<vmem>>, vector<32x128xbf16>
    tpu.vector_store %arg5[%c0_7, %c0_8], %11 {strides = array<i32>} : memref<32x128xbf16, #tpu.memory_space<vmem>>, vector<32x128xbf16>,
    return
  }
  func.func @transform_0(%arg0: i32) -> (i32, i32) {
    %c0_i32 = arith.constant 0 : i32
    %c0_i32_0 = arith.constant 0 : i32
    return %arg0, %c0_i32 : i32, i32
  }
  func.func @transform_1(%arg0: i32) -> (i32, i32) {
    %c0_i32 = arith.constant 0 : i32
    %c0_i32_0 = arith.constant 0 : i32
    %c0_i32_1 = arith.constant 0 : i32
    return %c0_i32, %c0_i32_0 : i32, i32
  }
  func.func @transform_2(%arg0: i32) -> (i32, i32) {
    %c0_i32 = arith.constant 0 : i32
    %c0_i32_0 = arith.constant 0 : i32
    %c0_i32_1 = arith.constant 0 : i32
    return %c0_i32, %c0_i32_0 : i32, i32
  }
  func.func @transform_3(%arg0: i32) -> (i32, i32) {
    %c0_i32 = arith.constant 0 : i32
    %c0_i32_0 = arith.constant 0 : i32
    return %arg0, %c0_i32 : i32, i32
  }
  func.func @transform_4(%arg0: i32) -> (i32, i32) {
    %c0_i32 = arith.constant 0 : i32
    %c0_i32_0 = arith.constant 0 : i32
    return %arg0, %c0_i32 : i32, i32
  }
}

module attributes {stable_mosaic.version = 11 : i64} {
  func.func @_conv_kernel_direct(%arg0: i32, %arg1: i32, %arg2: memref<32x256xbf16, #tpu.memory_space<vmem>>, %arg3: memref<256x512xbf16, #tpu.memory_space<vmem>>, %arg4: memref<1x512xf32, #tpu.memory_space<vmem>>, %arg5: memref<32x512xbf16, #tpu.memory_space<vmem>>, %arg6: memref<1x8x512xf32, #tpu.memory_space<vmem>>) attributes {dimension_semantics = [#tpu.dimension_semantics<parallel>, #tpu.dimension_semantics<parallel>], iteration_bounds = array<i64: 1, 1>, scalar_prefetch = 0 : i64, scratch_operands = 0 : i64, tpu.core_type = #tpu.core_type<tc>, window_params = [{transform_indices = @transform_0, window_bounds = array<i64: 32, 256>}, {transform_indices = @transform_1, window_bounds = array<i64: 256, 512>}, {transform_indices = @transform_2, window_bounds = array<i64: 1, 512>}, {transform_indices = @transform_3, window_bounds = array<i64: 32, 512>}, {transform_indices = @transform_4, window_bounds = array<i64: 1, 8, 512>}]} {
    %c0 = arith.constant 0 : index
    %c0_0 = arith.constant 0 : index
    %0 = vector.load %arg2[%c0, %c0_0] : memref<32x256xbf16, #tpu.memory_space<vmem>>, vector<32x256xbf16>
    %c0_1 = arith.constant 0 : index
    %c0_2 = arith.constant 0 : index
    %1 = vector.load %arg3[%c0_1, %c0_2] : memref<256x512xbf16, #tpu.memory_space<vmem>>, vector<256x512xbf16>
    %cst = arith.constant dense<0.000000e+00> : vector<32x512xf32>
    %2 = tpu.matmul %0, %1, %cst {dimension_numbers = #tpu.dot_dimension_numbers<[1], [0], [0], [1], [0, 0, 1, 1], [], []>} : vector<32x256xbf16>, vector<256x512xbf16>, vector<32x512xf32> -> vector<32x512xf32>
    %c0_3 = arith.constant 0 : index
    %c0_4 = arith.constant 0 : index
    %3 = vector.load %arg4[%c0_3, %c0_4] : memref<1x512xf32, #tpu.memory_space<vmem>>, vector<1x512xf32>
    %4 = vector.broadcast %3 : vector<1x512xf32> to vector<32x512xf32>
    %5 = arith.addf %2, %4 : vector<32x512xf32>
    %c32_i32 = arith.constant 32 : i32
    %6 = arith.muli %arg0, %c32_i32 : i32
    %7 = tpu.iota {dimensions = array<i32: 0>} : vector<32x1xi32>
    %8 = vector.broadcast %6 : i32 to vector<32x1xi32>
    %9 = arith.addi %8, %7 : vector<32x1xi32>
    %c32_i32_5 = arith.constant 32 : i32
    %10 = vector.broadcast %c32_i32_5 : i32 to vector<32x1xi32>
    %11 = arith.cmpi slt, %9, %10 : vector<32x1xi32>
    %12 = arith.extui %11 : vector<32x1xi1> to vector<32x1xi32>
    %13 = arith.sitofp %12 : vector<32x1xi32> to vector<32x1xf32>
    %14 = vector.broadcast %13 : vector<32x1xf32> to vector<32x512xf32>
    %15 = arith.mulf %5, %14 : vector<32x512xf32>
    %cst_6 = arith.constant dense<0.000000e+00> : vector<512xf32>
    %16 = vector.multi_reduction <add>, %15, %cst_6 [0] : vector<32x512xf32> to vector<512xf32>
    %17 = vector.shape_cast %16 : vector<512xf32> to vector<1x512xf32>
    %18 = arith.mulf %15, %15 : vector<32x512xf32>
    %cst_7 = arith.constant dense<0.000000e+00> : vector<512xf32>
    %19 = vector.multi_reduction <add>, %18, %cst_7 [0] : vector<32x512xf32> to vector<512xf32>
    %20 = vector.shape_cast %19 : vector<512xf32> to vector<1x512xf32>
    %c0_8 = arith.constant 0 : index
    %c0_9 = arith.constant 0 : index
    %c0_10 = arith.constant 0 : index
    %21 = vector.load %arg6[%c0_8, %c0_9, %c0_10] : memref<1x8x512xf32, #tpu.memory_space<vmem>>, vector<1x1x512xf32>
    %22 = vector.shape_cast %21 : vector<1x1x512xf32> to vector<1x512xf32>
    %23 = vector.shape_cast %17 : vector<1x512xf32> to vector<1x1x512xf32>
    tpu.vector_store %arg6[%c0_8, %c0_9, %c0_10], %23 {strides = array<i32>} : memref<1x8x512xf32, #tpu.memory_space<vmem>>, vector<1x1x512xf32>,
    %c0_11 = arith.constant 0 : index
    %c1 = arith.constant 1 : index
    %c0_12 = arith.constant 0 : index
    %24 = vector.load %arg6[%c0_11, %c1, %c0_12] : memref<1x8x512xf32, #tpu.memory_space<vmem>>, vector<1x1x512xf32>
    %25 = vector.shape_cast %24 : vector<1x1x512xf32> to vector<1x512xf32>
    %26 = vector.shape_cast %20 : vector<1x512xf32> to vector<1x1x512xf32>
    tpu.vector_store %arg6[%c0_11, %c1, %c0_12], %26 {strides = array<i32>} : memref<1x8x512xf32, #tpu.memory_space<vmem>>, vector<1x1x512xf32>,
    %27 = arith.truncf %5 : vector<32x512xf32> to vector<32x512xbf16>
    %c0_13 = arith.constant 0 : index
    %c0_14 = arith.constant 0 : index
    %28 = vector.load %arg5[%c0_13, %c0_14] : memref<32x512xbf16, #tpu.memory_space<vmem>>, vector<32x512xbf16>
    tpu.vector_store %arg5[%c0_13, %c0_14], %27 {strides = array<i32>} : memref<32x512xbf16, #tpu.memory_space<vmem>>, vector<32x512xbf16>,
    return
  }
  func.func @transform_0(%arg0: i32, %arg1: i32) -> (i32, i32) {
    %c0_i32 = arith.constant 0 : i32
    %c0_i32_0 = arith.constant 0 : i32
    return %arg0, %c0_i32 : i32, i32
  }
  func.func @transform_1(%arg0: i32, %arg1: i32) -> (i32, i32) {
    %c0_i32 = arith.constant 0 : i32
    %c0_i32_0 = arith.constant 0 : i32
    return %c0_i32, %arg1 : i32, i32
  }
  func.func @transform_2(%arg0: i32, %arg1: i32) -> (i32, i32) {
    %c0_i32 = arith.constant 0 : i32
    %c0_i32_0 = arith.constant 0 : i32
    return %c0_i32, %arg1 : i32, i32
  }
  func.func @transform_3(%arg0: i32, %arg1: i32) -> (i32, i32) {
    %c0_i32 = arith.constant 0 : i32
    return %arg0, %arg1 : i32, i32
  }
  func.func @transform_4(%arg0: i32, %arg1: i32) -> (i32, i32, i32) {
    %c0_i32 = arith.constant 0 : i32
    %c0_i32_0 = arith.constant 0 : i32
    return %arg0, %c0_i32, %arg1 : i32, i32, i32
  }
}

module attributes {stable_mosaic.version = 11 : i64} {
  func.func @_affine_kernel(%arg0: i32, %arg1: memref<32x512xbf16, #tpu.memory_space<vmem>>, %arg2: memref<1x512xf32, #tpu.memory_space<vmem>>, %arg3: memref<1x512xf32, #tpu.memory_space<vmem>>, %arg4: memref<32x512xbf16, #tpu.memory_space<vmem>>) attributes {dimension_semantics = [#tpu.dimension_semantics<parallel>], iteration_bounds = array<i64: 1>, scalar_prefetch = 0 : i64, scratch_operands = 0 : i64, tpu.core_type = #tpu.core_type<tc>, window_params = [{transform_indices = @transform_0, window_bounds = array<i64: 32, 512>}, {pipeline_mode = #tpu.pipeline_mode<synchronous>, transform_indices = @transform_1, window_bounds = array<i64: 1, 512>}, {pipeline_mode = #tpu.pipeline_mode<synchronous>, transform_indices = @transform_2, window_bounds = array<i64: 1, 512>}, {transform_indices = @transform_3, window_bounds = array<i64: 32, 512>}]} {
    %c0 = arith.constant 0 : index
    %c0_0 = arith.constant 0 : index
    %0 = vector.load %arg1[%c0, %c0_0] : memref<32x512xbf16, #tpu.memory_space<vmem>>, vector<32x512xbf16>
    %1 = arith.extf %0 : vector<32x512xbf16> to vector<32x512xf32>
    %c0_1 = arith.constant 0 : index
    %c0_2 = arith.constant 0 : index
    %2 = vector.load %arg2[%c0_1, %c0_2] : memref<1x512xf32, #tpu.memory_space<vmem>>, vector<1x512xf32>
    %3 = vector.broadcast %2 : vector<1x512xf32> to vector<32x512xf32>
    %4 = arith.mulf %1, %3 : vector<32x512xf32>
    %c0_3 = arith.constant 0 : index
    %c0_4 = arith.constant 0 : index
    %5 = vector.load %arg3[%c0_3, %c0_4] : memref<1x512xf32, #tpu.memory_space<vmem>>, vector<1x512xf32>
    %6 = vector.broadcast %5 : vector<1x512xf32> to vector<32x512xf32>
    %7 = arith.addf %4, %6 : vector<32x512xf32>
    %cst = arith.constant 0.000000e+00 : f32
    %8 = vector.broadcast %cst : f32 to vector<32x512xf32>
    %9 = arith.maximumf %7, %8 : vector<32x512xf32>
    %10 = arith.truncf %9 : vector<32x512xf32> to vector<32x512xbf16>
    %c0_5 = arith.constant 0 : index
    %c0_6 = arith.constant 0 : index
    %11 = vector.load %arg4[%c0_5, %c0_6] : memref<32x512xbf16, #tpu.memory_space<vmem>>, vector<32x512xbf16>
    tpu.vector_store %arg4[%c0_5, %c0_6], %10 {strides = array<i32>} : memref<32x512xbf16, #tpu.memory_space<vmem>>, vector<32x512xbf16>,
    return
  }
  func.func @transform_0(%arg0: i32) -> (i32, i32) {
    %c0_i32 = arith.constant 0 : i32
    %c0_i32_0 = arith.constant 0 : i32
    return %arg0, %c0_i32 : i32, i32
  }
  func.func @transform_1(%arg0: i32) -> (i32, i32) {
    %c0_i32 = arith.constant 0 : i32
    %c0_i32_0 = arith.constant 0 : i32
    %c0_i32_1 = arith.constant 0 : i32
    return %c0_i32, %c0_i32_0 : i32, i32
  }
  func.func @transform_2(%arg0: i32) -> (i32, i32) {
    %c0_i32 = arith.constant 0 : i32
    %c0_i32_0 = arith.constant 0 : i32
    %c0_i32_1 = arith.constant 0 : i32
    return %c0_i32, %c0_i32_0 : i32, i32
  }
  func.func @transform_3(%arg0: i32) -> (i32, i32) {
    %c0_i32 = arith.constant 0 : i32
    %c0_i32_0 = arith.constant 0 : i32
    return %arg0, %c0_i32 : i32, i32
  }
}

module attributes {stable_mosaic.version = 11 : i64} {
  func.func @_conv_kernel_direct(%arg0: i32, %arg1: i32, %arg2: memref<128x128xbf16, #tpu.memory_space<vmem>>, %arg3: memref<128x512xbf16, #tpu.memory_space<vmem>>, %arg4: memref<1x512xf32, #tpu.memory_space<vmem>>, %arg5: memref<128x512xbf16, #tpu.memory_space<vmem>>, %arg6: memref<1x8x512xf32, #tpu.memory_space<vmem>>) attributes {dimension_semantics = [#tpu.dimension_semantics<parallel>, #tpu.dimension_semantics<parallel>], iteration_bounds = array<i64: 1, 1>, scalar_prefetch = 0 : i64, scratch_operands = 0 : i64, tpu.core_type = #tpu.core_type<tc>, window_params = [{transform_indices = @transform_0, window_bounds = array<i64: 128, 128>}, {transform_indices = @transform_1, window_bounds = array<i64: 128, 512>}, {transform_indices = @transform_2, window_bounds = array<i64: 1, 512>}, {transform_indices = @transform_3, window_bounds = array<i64: 128, 512>}, {transform_indices = @transform_4, window_bounds = array<i64: 1, 8, 512>}]} {
    %c0 = arith.constant 0 : index
    %c0_0 = arith.constant 0 : index
    %0 = vector.load %arg2[%c0, %c0_0] : memref<128x128xbf16, #tpu.memory_space<vmem>>, vector<128x128xbf16>
    %c0_1 = arith.constant 0 : index
    %c0_2 = arith.constant 0 : index
    %1 = vector.load %arg3[%c0_1, %c0_2] : memref<128x512xbf16, #tpu.memory_space<vmem>>, vector<128x512xbf16>
    %cst = arith.constant dense<0.000000e+00> : vector<128x512xf32>
    %2 = tpu.matmul %0, %1, %cst {dimension_numbers = #tpu.dot_dimension_numbers<[1], [0], [0], [1], [0, 0, 1, 1], [], []>} : vector<128x128xbf16>, vector<128x512xbf16>, vector<128x512xf32> -> vector<128x512xf32>
    %c0_3 = arith.constant 0 : index
    %c0_4 = arith.constant 0 : index
    %3 = vector.load %arg4[%c0_3, %c0_4] : memref<1x512xf32, #tpu.memory_space<vmem>>, vector<1x512xf32>
    %4 = vector.broadcast %3 : vector<1x512xf32> to vector<128x512xf32>
    %5 = arith.addf %2, %4 : vector<128x512xf32>
    %c128_i32 = arith.constant 128 : i32
    %6 = arith.muli %arg0, %c128_i32 : i32
    %7 = tpu.iota {dimensions = array<i32: 0>} : vector<128x1xi32>
    %8 = vector.broadcast %6 : i32 to vector<128x1xi32>
    %9 = arith.addi %8, %7 : vector<128x1xi32>
    %c128_i32_5 = arith.constant 128 : i32
    %10 = vector.broadcast %c128_i32_5 : i32 to vector<128x1xi32>
    %11 = arith.cmpi slt, %9, %10 : vector<128x1xi32>
    %12 = arith.extui %11 : vector<128x1xi1> to vector<128x1xi32>
    %13 = arith.sitofp %12 : vector<128x1xi32> to vector<128x1xf32>
    %14 = vector.broadcast %13 : vector<128x1xf32> to vector<128x512xf32>
    %15 = arith.mulf %5, %14 : vector<128x512xf32>
    %cst_6 = arith.constant dense<0.000000e+00> : vector<512xf32>
    %16 = vector.multi_reduction <add>, %15, %cst_6 [0] : vector<128x512xf32> to vector<512xf32>
    %17 = vector.shape_cast %16 : vector<512xf32> to vector<1x512xf32>
    %18 = arith.mulf %15, %15 : vector<128x512xf32>
    %cst_7 = arith.constant dense<0.000000e+00> : vector<512xf32>
    %19 = vector.multi_reduction <add>, %18, %cst_7 [0] : vector<128x512xf32> to vector<512xf32>
    %20 = vector.shape_cast %19 : vector<512xf32> to vector<1x512xf32>
    %c0_8 = arith.constant 0 : index
    %c0_9 = arith.constant 0 : index
    %c0_10 = arith.constant 0 : index
    %21 = vector.load %arg6[%c0_8, %c0_9, %c0_10] : memref<1x8x512xf32, #tpu.memory_space<vmem>>, vector<1x1x512xf32>
    %22 = vector.shape_cast %21 : vector<1x1x512xf32> to vector<1x512xf32>
    %23 = vector.shape_cast %17 : vector<1x512xf32> to vector<1x1x512xf32>
    tpu.vector_store %arg6[%c0_8, %c0_9, %c0_10], %23 {strides = array<i32>} : memref<1x8x512xf32, #tpu.memory_space<vmem>>, vector<1x1x512xf32>,
    %c0_11 = arith.constant 0 : index
    %c1 = arith.constant 1 : index
    %c0_12 = arith.constant 0 : index
    %24 = vector.load %arg6[%c0_11, %c1, %c0_12] : memref<1x8x512xf32, #tpu.memory_space<vmem>>, vector<1x1x512xf32>
    %25 = vector.shape_cast %24 : vector<1x1x512xf32> to vector<1x512xf32>
    %26 = vector.shape_cast %20 : vector<1x512xf32> to vector<1x1x512xf32>
    tpu.vector_store %arg6[%c0_11, %c1, %c0_12], %26 {strides = array<i32>} : memref<1x8x512xf32, #tpu.memory_space<vmem>>, vector<1x1x512xf32>,
    %27 = arith.truncf %5 : vector<128x512xf32> to vector<128x512xbf16>
    %c0_13 = arith.constant 0 : index
    %c0_14 = arith.constant 0 : index
    %28 = vector.load %arg5[%c0_13, %c0_14] : memref<128x512xbf16, #tpu.memory_space<vmem>>, vector<128x512xbf16>
    tpu.vector_store %arg5[%c0_13, %c0_14], %27 {strides = array<i32>} : memref<128x512xbf16, #tpu.memory_space<vmem>>, vector<128x512xbf16>,
    return
  }
  func.func @transform_0(%arg0: i32, %arg1: i32) -> (i32, i32) {
    %c0_i32 = arith.constant 0 : i32
    %c0_i32_0 = arith.constant 0 : i32
    return %arg0, %c0_i32 : i32, i32
  }
  func.func @transform_1(%arg0: i32, %arg1: i32) -> (i32, i32) {
    %c0_i32 = arith.constant 0 : i32
    %c0_i32_0 = arith.constant 0 : i32
    return %c0_i32, %arg1 : i32, i32
  }
  func.func @transform_2(%arg0: i32, %arg1: i32) -> (i32, i32) {
    %c0_i32 = arith.constant 0 : i32
    %c0_i32_0 = arith.constant 0 : i32
    return %c0_i32, %arg1 : i32, i32
  }
  func.func @transform_3(%arg0: i32, %arg1: i32) -> (i32, i32) {
    %c0_i32 = arith.constant 0 : i32
    return %arg0, %arg1 : i32, i32
  }
  func.func @transform_4(%arg0: i32, %arg1: i32) -> (i32, i32, i32) {
    %c0_i32 = arith.constant 0 : i32
    %c0_i32_0 = arith.constant 0 : i32
    return %arg0, %c0_i32, %arg1 : i32, i32, i32
  }
}

module attributes {stable_mosaic.version = 11 : i64} {
  func.func @_affine_kernel(%arg0: i32, %arg1: memref<128x512xbf16, #tpu.memory_space<vmem>>, %arg2: memref<1x512xf32, #tpu.memory_space<vmem>>, %arg3: memref<1x512xf32, #tpu.memory_space<vmem>>, %arg4: memref<128x512xbf16, #tpu.memory_space<vmem>>) attributes {dimension_semantics = [#tpu.dimension_semantics<parallel>], iteration_bounds = array<i64: 1>, scalar_prefetch = 0 : i64, scratch_operands = 0 : i64, tpu.core_type = #tpu.core_type<tc>, window_params = [{transform_indices = @transform_0, window_bounds = array<i64: 128, 512>}, {pipeline_mode = #tpu.pipeline_mode<synchronous>, transform_indices = @transform_1, window_bounds = array<i64: 1, 512>}, {pipeline_mode = #tpu.pipeline_mode<synchronous>, transform_indices = @transform_2, window_bounds = array<i64: 1, 512>}, {transform_indices = @transform_3, window_bounds = array<i64: 128, 512>}]} {
    %c0 = arith.constant 0 : index
    %c0_0 = arith.constant 0 : index
    %0 = vector.load %arg1[%c0, %c0_0] : memref<128x512xbf16, #tpu.memory_space<vmem>>, vector<128x512xbf16>
    %1 = arith.extf %0 : vector<128x512xbf16> to vector<128x512xf32>
    %c0_1 = arith.constant 0 : index
    %c0_2 = arith.constant 0 : index
    %2 = vector.load %arg2[%c0_1, %c0_2] : memref<1x512xf32, #tpu.memory_space<vmem>>, vector<1x512xf32>
    %3 = vector.broadcast %2 : vector<1x512xf32> to vector<128x512xf32>
    %4 = arith.mulf %1, %3 : vector<128x512xf32>
    %c0_3 = arith.constant 0 : index
    %c0_4 = arith.constant 0 : index
    %5 = vector.load %arg3[%c0_3, %c0_4] : memref<1x512xf32, #tpu.memory_space<vmem>>, vector<1x512xf32>
    %6 = vector.broadcast %5 : vector<1x512xf32> to vector<128x512xf32>
    %7 = arith.addf %4, %6 : vector<128x512xf32>
    %cst = arith.constant 0.000000e+00 : f32
    %8 = vector.broadcast %cst : f32 to vector<128x512xf32>
    %9 = arith.maximumf %7, %8 : vector<128x512xf32>
    %10 = arith.truncf %9 : vector<128x512xf32> to vector<128x512xbf16>
    %c0_5 = arith.constant 0 : index
    %c0_6 = arith.constant 0 : index
    %11 = vector.load %arg4[%c0_5, %c0_6] : memref<128x512xbf16, #tpu.memory_space<vmem>>, vector<128x512xbf16>
    tpu.vector_store %arg4[%c0_5, %c0_6], %10 {strides = array<i32>} : memref<128x512xbf16, #tpu.memory_space<vmem>>, vector<128x512xbf16>,
    return
  }
  func.func @transform_0(%arg0: i32) -> (i32, i32) {
    %c0_i32 = arith.constant 0 : i32
    %c0_i32_0 = arith.constant 0 : i32
    return %arg0, %c0_i32 : i32, i32
  }
  func.func @transform_1(%arg0: i32) -> (i32, i32) {
    %c0_i32 = arith.constant 0 : i32
    %c0_i32_0 = arith.constant 0 : i32
    %c0_i32_1 = arith.constant 0 : i32
    return %c0_i32, %c0_i32_0 : i32, i32
  }
  func.func @transform_2(%arg0: i32) -> (i32, i32) {
    %c0_i32 = arith.constant 0 : i32
    %c0_i32_0 = arith.constant 0 : i32
    %c0_i32_1 = arith.constant 0 : i32
    return %c0_i32, %c0_i32_0 : i32, i32
  }
  func.func @transform_3(%arg0: i32) -> (i32, i32) {
    %c0_i32 = arith.constant 0 : i32
    %c0_i32_0 = arith.constant 0 : i32
    return %arg0, %c0_i32 : i32, i32
  }
}

module attributes {stable_mosaic.version = 11 : i64} {
  func.func @_conv_kernel_direct(%arg0: i32, %arg1: i32, %arg2: memref<256x896xbf16, #tpu.memory_space<vmem>>, %arg3: memref<896x128xbf16, #tpu.memory_space<vmem>>, %arg4: memref<1x128xf32, #tpu.memory_space<vmem>>, %arg5: memref<256x128xf32, #tpu.memory_space<vmem>>, %arg6: memref<1x8x128xf32, #tpu.memory_space<vmem>>) attributes {dimension_semantics = [#tpu.dimension_semantics<parallel>, #tpu.dimension_semantics<parallel>], iteration_bounds = array<i64: 2, 1>, scalar_prefetch = 0 : i64, scratch_operands = 0 : i64, tpu.core_type = #tpu.core_type<tc>, window_params = [{transform_indices = @transform_0, window_bounds = array<i64: 256, 896>}, {transform_indices = @transform_1, window_bounds = array<i64: 896, 128>}, {transform_indices = @transform_2, window_bounds = array<i64: 1, 128>}, {transform_indices = @transform_3, window_bounds = array<i64: 256, 128>}, {transform_indices = @transform_4, window_bounds = array<i64: 1, 8, 128>}]} {
    %c0 = arith.constant 0 : index
    %c0_0 = arith.constant 0 : index
    %0 = vector.load %arg2[%c0, %c0_0] : memref<256x896xbf16, #tpu.memory_space<vmem>>, vector<256x896xbf16>
    %c0_1 = arith.constant 0 : index
    %c0_2 = arith.constant 0 : index
    %1 = vector.load %arg3[%c0_1, %c0_2] : memref<896x128xbf16, #tpu.memory_space<vmem>>, vector<896x128xbf16>
    %cst = arith.constant dense<0.000000e+00> : vector<256x128xf32>
    %2 = tpu.matmul %0, %1, %cst {dimension_numbers = #tpu.dot_dimension_numbers<[1], [0], [0], [1], [0, 0, 1, 1], [], []>} : vector<256x896xbf16>, vector<896x128xbf16>, vector<256x128xf32> -> vector<256x128xf32>
    %c0_3 = arith.constant 0 : index
    %c0_4 = arith.constant 0 : index
    %3 = vector.load %arg4[%c0_3, %c0_4] : memref<1x128xf32, #tpu.memory_space<vmem>>, vector<1x128xf32>
    %4 = vector.broadcast %3 : vector<1x128xf32> to vector<256x128xf32>
    %5 = arith.addf %2, %4 : vector<256x128xf32>
    %6 = math.tanh %5 : vector<256x128xf32>
    %c256_i32 = arith.constant 256 : i32
    %7 = arith.muli %arg0, %c256_i32 : i32
    %8 = tpu.iota {dimensions = array<i32: 0>} : vector<256x1xi32>
    %9 = vector.broadcast %7 : i32 to vector<256x1xi32>
    %10 = arith.addi %9, %8 : vector<256x1xi32>
    %c512_i32 = arith.constant 512 : i32
    %11 = vector.broadcast %c512_i32 : i32 to vector<256x1xi32>
    %12 = arith.cmpi slt, %10, %11 : vector<256x1xi32>
    %13 = arith.extui %12 : vector<256x1xi1> to vector<256x1xi32>
    %14 = arith.sitofp %13 : vector<256x1xi32> to vector<256x1xf32>
    %15 = vector.broadcast %14 : vector<256x1xf32> to vector<256x128xf32>
    %16 = arith.mulf %6, %15 : vector<256x128xf32>
    %cst_5 = arith.constant dense<0.000000e+00> : vector<128xf32>
    %17 = vector.multi_reduction <add>, %16, %cst_5 [0] : vector<256x128xf32> to vector<128xf32>
    %18 = vector.shape_cast %17 : vector<128xf32> to vector<1x128xf32>
    %19 = arith.mulf %16, %16 : vector<256x128xf32>
    %cst_6 = arith.constant dense<0.000000e+00> : vector<128xf32>
    %20 = vector.multi_reduction <add>, %19, %cst_6 [0] : vector<256x128xf32> to vector<128xf32>
    %21 = vector.shape_cast %20 : vector<128xf32> to vector<1x128xf32>
    %c0_7 = arith.constant 0 : index
    %c0_8 = arith.constant 0 : index
    %c0_9 = arith.constant 0 : index
    %22 = vector.load %arg6[%c0_7, %c0_8, %c0_9] : memref<1x8x128xf32, #tpu.memory_space<vmem>>, vector<1x1x128xf32>
    %23 = vector.shape_cast %22 : vector<1x1x128xf32> to vector<1x128xf32>
    %24 = vector.shape_cast %18 : vector<1x128xf32> to vector<1x1x128xf32>
    tpu.vector_store %arg6[%c0_7, %c0_8, %c0_9], %24 {strides = array<i32>} : memref<1x8x128xf32, #tpu.memory_space<vmem>>, vector<1x1x128xf32>,
    %c0_10 = arith.constant 0 : index
    %c1 = arith.constant 1 : index
    %c0_11 = arith.constant 0 : index
    %25 = vector.load %arg6[%c0_10, %c1, %c0_11] : memref<1x8x128xf32, #tpu.memory_space<vmem>>, vector<1x1x128xf32>
    %26 = vector.shape_cast %25 : vector<1x1x128xf32> to vector<1x128xf32>
    %27 = vector.shape_cast %21 : vector<1x128xf32> to vector<1x1x128xf32>
    tpu.vector_store %arg6[%c0_10, %c1, %c0_11], %27 {strides = array<i32>} : memref<1x8x128xf32, #tpu.memory_space<vmem>>, vector<1x1x128xf32>,
    %c0_12 = arith.constant 0 : index
    %c0_13 = arith.constant 0 : index
    %28 = vector.load %arg5[%c0_12, %c0_13] : memref<256x128xf32, #tpu.memory_space<vmem>>, vector<256x128xf32>
    tpu.vector_store %arg5[%c0_12, %c0_13], %6 {strides = array<i32>} : memref<256x128xf32, #tpu.memory_space<vmem>>, vector<256x128xf32>,
    return
  }
  func.func @transform_0(%arg0: i32, %arg1: i32) -> (i32, i32) {
    %c0_i32 = arith.constant 0 : i32
    %c0_i32_0 = arith.constant 0 : i32
    return %arg0, %c0_i32 : i32, i32
  }
  func.func @transform_1(%arg0: i32, %arg1: i32) -> (i32, i32) {
    %c0_i32 = arith.constant 0 : i32
    %c0_i32_0 = arith.constant 0 : i32
    return %c0_i32, %arg1 : i32, i32
  }
  func.func @transform_2(%arg0: i32, %arg1: i32) -> (i32, i32) {
    %c0_i32 = arith.constant 0 : i32
    %c0_i32_0 = arith.constant 0 : i32
    return %c0_i32, %arg1 : i32, i32
  }
  func.func @transform_3(%arg0: i32, %arg1: i32) -> (i32, i32) {
    %c0_i32 = arith.constant 0 : i32
    return %arg0, %arg1 : i32, i32
  }
  func.func @transform_4(%arg0: i32, %arg1: i32) -> (i32, i32, i32) {
    %c0_i32 = arith.constant 0 : i32
    %c0_i32_0 = arith.constant 0 : i32
    return %arg0, %c0_i32, %arg1 : i32, i32, i32
  }
}

</mosaic_0001>

<llo_original>
// kernel: global_generator_forward.24
$region0: #{global_generator_forward.24}
  #allocation0 [shape = 'u32[]', space=smem, size = 0x4, offset = 0x4, fixed_abs, tag = 'smem constant byte address 0x4 - core index']
  #allocation1 [shape = 'u32[144,128]{1,0:T(1,128)}', space=vmem, size = 0x12000, scoped, tag = 'internal scratch']
  %s0 = inlined_call_operand.vmem [shape: bf16[512,128], index: 0, kind: input, shape index: {}]
  %s1 = inlined_call_operand.vmem [shape: f32[1,128], index: 1, kind: input, shape index: {}]
  %s2 = inlined_call_operand.vmem [shape: f32[1,128], index: 2, kind: input, shape index: {}]
  %s3 = inlined_call_operand.vmem [shape: bf16[512,128], index: 3, kind: output, shape index: {}]
  %s4 = sld [smem:[#allocation0]]
  $region22: #{global_generator_forward.24} parent=0
    _
  %s6 = ssub.s32 1, %s4
  %s7 = scalar_select 0, %s6, %s4
  // Predicated region
  $region2: #{global_generator_forward.24} parent=0 // pred_check
    _
  $region3: #{global_generator_forward.24} parent=0 // pred_check_branch
    %9 = sbr.rel (0) target = $region5
  $region4: #{global_generator_forward.24} parent=0 // pred_region
    _
  $region5: #{global_generator_forward.24} parent=0 // pred_fallthru
    _
  // Predicated region
  $region6: #{global_generator_forward.24} parent=0 // pred_check
    _
  $region7: #{global_generator_forward.24} parent=0 // pred_check_branch
    %11 = sbr.rel (0) target = $region9
  $region8: #{global_generator_forward.24} parent=0 // pred_region
    _
  $region9: #{global_generator_forward.24} parent=0 // pred_fallthru
    _
  // Predicated region
  $region10: #{global_generator_forward.24} parent=0 // pred_check
    _
  $region11: #{global_generator_forward.24} parent=0 // pred_check_branch
    %13 = sbr.rel (0) target = $region13
  $region12: #{global_generator_forward.24} parent=0 // pred_region
    _
  $region13: #{global_generator_forward.24} parent=0 // pred_fallthru
    _
  %v14 = vld [vmem:[%s0] sm:$0xf]
  %v15 = vld [vmem:[%s0 + $0x4] sm:$0xf]
  %v16 = vld [vmem:[%s0 + $0x8] sm:$0xf]
  %v17 = vld [vmem:[%s0 + $0xc] sm:$0xf]
  %v18 = vld [vmem:[%s0 + $0x10] sm:$0xf]
  %v19 = vld [vmem:[%s0 + $0x14] sm:$0xf]
  %v20 = vld [vmem:[%s0 + $0x18] sm:$0xf]
  %v21 = vld [vmem:[%s0 + $0x1c] sm:$0xf]
  %v22 = vld [vmem:[%s0 + $0x20] sm:$0xf]
  %v23 = vld [vmem:[%s0 + $0x24] sm:$0xf]
  %v24 = vld [vmem:[%s0 + $0x28] sm:$0xf]
  %v25 = vld [vmem:[%s0 + $0x2c] sm:$0xf]
  %v26 = vld [vmem:[%s0 + $0x30] sm:$0xf]
  %v27 = vld [vmem:[%s0 + $0x34] sm:$0xf]
  %v28 = vld [vmem:[%s0 + $0x38] sm:$0xf]
  %v29 = vld [vmem:[%s0 + $0x3c] sm:$0xf]
  %v30 = vld [vmem:[%s0 + $0x40] sm:$0xf]
  %v31 = vld [vmem:[%s0 + $0x44] sm:$0xf]
  %v32 = vld [vmem:[%s0 + $0x48] sm:$0xf]
  %v33 = vld [vmem:[%s0 + $0x4c] sm:$0xf]
  %v34 = vld [vmem:[%s0 + $0x50] sm:$0xf]
  %v35 = vld [vmem:[%s0 + $0x54] sm:$0xf]
  %v36 = vld [vmem:[%s0 + $0x58] sm:$0xf]
  %v37 = vld [vmem:[%s0 + $0x5c] sm:$0xf]
  %v38 = vld [vmem:[%s0 + $0x60] sm:$0xf]
  %v39 = vld [vmem:[%s0 + $0x64] sm:$0xf]
  %v40 = vld [vmem:[%s0 + $0x68] sm:$0xf]
  %v41 = vld [vmem:[%s0 + $0x6c] sm:$0xf]
  %v42 = vld [vmem:[%s0 + $0x70] sm:$0xf]
  %v43 = vld [vmem:[%s0 + $0x74] sm:$0xf]
  %v44 = vld [vmem:[%s0 + $0x78] sm:$0xf]
  %v45 = vld [vmem:[%s0 + $0x7c] sm:$0xf]
  %v46 = vld [vmem:[%s0 + $0x80] sm:$0xf]
  %v47 = vld [vmem:[%s0 + $0x84] sm:$0xf]
  %v48 = vld [vmem:[%s0 + $0x88] sm:$0xf]
  %v49 = vld [vmem:[%s0 + $0x8c] sm:$0xf]
  %v50 = vld [vmem:[%s0 + $0x90] sm:$0xf]
  %v51 = vld [vmem:[%s0 + $0x94] sm:$0xf]
  %v52 = vld [vmem:[%s0 + $0x98] sm:$0xf]
  %v53 = vld [vmem:[%s0 + $0x9c] sm:$0xf]
  %v54 = vld [vmem:[%s0 + $0xa0] sm:$0xf]
  %v55 = vld [vmem:[%s0 + $0xa4] sm:$0xf]
  %v56 = vld [vmem:[%s0 + $0xa8] sm:$0xf]
  %v57 = vld [vmem:[%s0 + $0xac] sm:$0xf]
  %v58 = vld [vmem:[%s0 + $0xb0] sm:$0xf]
  %v59 = vld [vmem:[%s0 + $0xb4] sm:$0xf]
  %v60 = vld [vmem:[%s0 + $0xb8] sm:$0xf]
  %v61 = vld [vmem:[%s0 + $0xbc] sm:$0xf]
  %v62 = vld [vmem:[%s0 + $0xc0] sm:$0xf]
  %v63 = vld [vmem:[%s0 + $0xc4] sm:$0xf]
  %v64 = vld [vmem:[%s0 + $0xc8] sm:$0xf]
  %v65 = vld [vmem:[%s0 + $0xcc] sm:$0xf]
  %v66 = vld [vmem:[%s0 + $0xd0] sm:$0xf]
  %v67 = vld [vmem:[%s0 + $0xd4] sm:$0xf]
  %v68 = vld [vmem:[%s0 + $0xd8] sm:$0xf]
  %v69 = vld [vmem:[%s0 + $0xdc] sm:$0xf]
  %v70 = vld [vmem:[%s0 + $0xe0] sm:$0xf]
  %v71 = vld [vmem:[%s0 + $0xe4] sm:$0xf]
  %v72 = vld [vmem:[%s0 + $0xe8] sm:$0xf]
  %v73 = vld [vmem:[%s0 + $0xec] sm:$0xf]
  %v74 = vld [vmem:[%s0 + $0xf0] sm:$0xf]
  %v75 = vld [vmem:[%s0 + $0xf4] sm:$0xf]
  %v76 = vld [vmem:[%s0 + $0xf8] sm:$0xf]
  %v77 = vld [vmem:[%s0 + $0xfc] sm:$0xf]
  %v78 = vunpack.c.l.bf16 %v14
  %v79 = vunpack.c.l.bf16 %v15
  %v80 = vunpack.c.l.bf16 %v16
  %v81 = vunpack.c.l.bf16 %v17
  %v82 = vunpack.c.l.bf16 %v18
  %v83 = vunpack.c.l.bf16 %v19
  %v84 = vunpack.c.l.bf16 %v20
  %v85 = vunpack.c.l.bf16 %v21
  %v86 = vunpack.c.l.bf16 %v22
  %v87 = vunpack.c.l.bf16 %v23
  %v88 = vunpack.c.l.bf16 %v24
  %v89 = vunpack.c.l.bf16 %v25
  %v90 = vunpack.c.l.bf16 %v26
  %v91 = vunpack.c.l.bf16 %v27
  %v92 = vunpack.c.l.bf16 %v28
  %v93 = vunpack.c.l.bf16 %v29
  %v94 = vunpack.c.l.bf16 %v30
  %v95 = vunpack.c.l.bf16 %v31
  %v96 = vunpack.c.l.bf16 %v32
  %v97 = vunpack.c.l.bf16 %v33
  %v98 = vunpack.c.l.bf16 %v34
  %v99 = vunpack.c.l.bf16 %v35
  %v100 = vunpack.c.l.bf16 %v36
  %v101 = vunpack.c.l.bf16 %v37
  %v102 = vunpack.c.l.bf16 %v38
  %v103 = vunpack.c.l.bf16 %v39
  %v104 = vunpack.c.l.bf16 %v40
  %v105 = vunpack.c.l.bf16 %v41
  %v106 = vunpack.c.l.bf16 %v42
  %v107 = vunpack.c.l.bf16 %v43
  %v108 = vunpack.c.l.bf16 %v44
  %v109 = vunpack.c.l.bf16 %v45
  %v110 = vunpack.c.l.bf16 %v46
  %v111 = vunpack.c.l.bf16 %v47
  %v112 = vunpack.c.l.bf16 %v48
  %v113 = vunpack.c.l.bf16 %v49
  %v114 = vunpack.c.l.bf16 %v50
  %v115 = vunpack.c.l.bf16 %v51
  %v116 = vunpack.c.l.bf16 %v52
  %v117 = vunpack.c.l.bf16 %v53
  %v118 = vunpack.c.l.bf16 %v54
  %v119 = vunpack.c.l.bf16 %v55
  %v120 = vunpack.c.l.bf16 %v56
  %v121 = vunpack.c.l.bf16 %v57
  %v122 = vunpack.c.l.bf16 %v58
  %v123 = vunpack.c.l.bf16 %v59
  %v124 = vunpack.c.l.bf16 %v60
  %v125 = vunpack.c.l.bf16 %v61
  %v126 = vunpack.c.l.bf16 %v62
  %v127 = vunpack.c.l.bf16 %v63
  %v128 = vunpack.c.l.bf16 %v64
  %v129 = vunpack.c.l.bf16 %v65
  %v130 = vunpack.c.l.bf16 %v66
  %v131 = vunpack.c.l.bf16 %v67
  %v132 = vunpack.c.l.bf16 %v68
  %v133 = vunpack.c.l.bf16 %v69
  %v134 = vunpack.c.l.bf16 %v70
  %v135 = vunpack.c.l.bf16 %v71
  %v136 = vunpack.c.l.bf16 %v72
  %v137 = vunpack.c.l.bf16 %v73
  %v138 = vunpack.c.l.bf16 %v74
  %v139 = vunpack.c.l.bf16 %v75
  %v140 = vunpack.c.l.bf16 %v76
  %v141 = vunpack.c.l.bf16 %v77
  %v142 = vld [vmem:[%s1] sm:$0x1]
  %v144 = vlaneseq
  %v145 = vshrl.u32 %v144, 7
  %v146 = vsub.s32 0, %v145
  %v147 = vrot.slane %v142, %v146
  %v149 = vmul.f32 %v78, %v147
  %v150 = vmul.f32 %v79, %v147
  %v151 = vmul.f32 %v80, %v147
  %v152 = vmul.f32 %v81, %v147
  %v153 = vmul.f32 %v82, %v147
  %v154 = vmul.f32 %v83, %v147
  %v155 = vmul.f32 %v84, %v147
  %v156 = vmul.f32 %v85, %v147
  %v157 = vmul.f32 %v86, %v147
  %v158 = vmul.f32 %v87, %v147
  %v159 = vmul.f32 %v88, %v147
  %v160 = vmul.f32 %v89, %v147
  %v161 = vmul.f32 %v90, %v147
  %v162 = vmul.f32 %v91, %v147
  %v163 = vmul.f32 %v92, %v147
  %v164 = vmul.f32 %v93, %v147
  %v165 = vmul.f32 %v94, %v147
  %v166 = vmul.f32 %v95, %v147
  %v167 = vmul.f32 %v96, %v147
  %v168 = vmul.f32 %v97, %v147
  %v169 = vmul.f32 %v98, %v147
  %v170 = vmul.f32 %v99, %v147
  %v171 = vmul.f32 %v100, %v147
  %v172 = vmul.f32 %v101, %v147
  %v173 = vmul.f32 %v102, %v147
  %v174 = vmul.f32 %v103, %v147
  %v175 = vmul.f32 %v104, %v147
  %v176 = vmul.f32 %v105, %v147
  %v177 = vmul.f32 %v106, %v147
  %v178 = vmul.f32 %v107, %v147
  %v179 = vmul.f32 %v108, %v147
  %v180 = vmul.f32 %v109, %v147
  %v181 = vmul.f32 %v110, %v147
  %v182 = vmul.f32 %v111, %v147
  %v183 = vmul.f32 %v112, %v147
  %v184 = vmul.f32 %v113, %v147
  %v185 = vmul.f32 %v114, %v147
  %v186 = vmul.f32 %v115, %v147
  %v187 = vmul.f32 %v116, %v147
  %v188 = vmul.f32 %v117, %v147
  %v189 = vmul.f32 %v118, %v147
  %v190 = vmul.f32 %v119, %v147
  %v191 = vmul.f32 %v120, %v147
  %v192 = vmul.f32 %v121, %v147
  %v193 = vmul.f32 %v122, %v147
  %v194 = vmul.f32 %v123, %v147
  %v195 = vmul.f32 %v124, %v147
  %v196 = vmul.f32 %v125, %v147
  %v197 = vmul.f32 %v126, %v147
  %v198 = vmul.f32 %v127, %v147
  %v199 = vmul.f32 %v128, %v147
  %v200 = vmul.f32 %v129, %v147
  %v201 = vmul.f32 %v130, %v147
  %v202 = vmul.f32 %v131, %v147
  %v203 = vmul.f32 %v132, %v147
  %v204 = vmul.f32 %v133, %v147
  %v205 = vmul.f32 %v134, %v147
  %v206 = vmul.f32 %v135, %v147
  %v207 = vmul.f32 %v136, %v147
  %v208 = vmul.f32 %v137, %v147
  %v209 = vmul.f32 %v138, %v147
  %v210 = vmul.f32 %v139, %v147
  %v211 = vmul.f32 %v140, %v147
  %v212 = vmul.f32 %v141, %v147
  %v213 = vld [vmem:[%s2] sm:$0x1]
  %v215 = vlaneseq
  %v216 = vshrl.u32 %v215, 7
  %v217 = vsub.s32 0, %v216
  %v218 = vrot.slane %v213, %v217
  %v220 = vadd.f32 %v149, %v218
  %v221 = vadd.f32 %v150, %v218
  %v222 = vadd.f32 %v151, %v218
  %v223 = vadd.f32 %v152, %v218
  %v224 = vadd.f32 %v153, %v218
  %v225 = vadd.f32 %v154, %v218
  %v226 = vadd.f32 %v155, %v218
  %v227 = vadd.f32 %v156, %v218
  %v228 = vadd.f32 %v157, %v218
  %v229 = vadd.f32 %v158, %v218
  %v230 = vadd.f32 %v159, %v218
  %v231 = vadd.f32 %v160, %v218
  %v232 = vadd.f32 %v161, %v218
  %v233 = vadd.f32 %v162, %v218
  %v234 = vadd.f32 %v163, %v218
  %v235 = vadd.f32 %v164, %v218
  %v236 = vadd.f32 %v165, %v218
  %v237 = vadd.f32 %v166, %v218
  %v238 = vadd.f32 %v167, %v218
  %v239 = vadd.f32 %v168, %v218
  %v240 = vadd.f32 %v169, %v218
  %v241 = vadd.f32 %v170, %v218
  %v242 = vadd.f32 %v171, %v218
  %v243 = vadd.f32 %v172, %v218
  %v244 = vadd.f32 %v173, %v218
  %v245 = vadd.f32 %v174, %v218
  %v246 = vadd.f32 %v175, %v218
  %v247 = vadd.f32 %v176, %v218
  %v248 = vadd.f32 %v177, %v218
  %v249 = vadd.f32 %v178, %v218
  %v250 = vadd.f32 %v179, %v218
  %v251 = vadd.f32 %v180, %v218
  %v252 = vadd.f32 %v181, %v218
  %v253 = vadd.f32 %v182, %v218
  %v254 = vadd.f32 %v183, %v218
  %v255 = vadd.f32 %v184, %v218
  %v256 = vadd.f32 %v185, %v218
  %v257 = vadd.f32 %v186, %v218
  %v258 = vadd.f32 %v187, %v218
  %v259 = vadd.f32 %v188, %v218
  %v260 = vadd.f32 %v189, %v218
  %v261 = vadd.f32 %v190, %v218
  %v262 = vadd.f32 %v191, %v218
  %v263 = vadd.f32 %v192, %v218
  %v264 = vadd.f32 %v193, %v218
  %v265 = vadd.f32 %v194, %v218
  %v266 = vadd.f32 %v195, %v218
  %v267 = vadd.f32 %v196, %v218
  %v268 = vadd.f32 %v197, %v218
  %v269 = vadd.f32 %v198, %v218
  %v270 = vadd.f32 %v199, %v218
  %v271 = vadd.f32 %v200, %v218
  %v272 = vadd.f32 %v201, %v218
  %v273 = vadd.f32 %v202, %v218
  %v274 = vadd.f32 %v203, %v218
  %v275 = vadd.f32 %v204, %v218
  %v276 = vadd.f32 %v205, %v218
  %v277 = vadd.f32 %v206, %v218
  %v278 = vadd.f32 %v207, %v218
  %v279 = vadd.f32 %v208, %v218
  %v280 = vadd.f32 %v209, %v218
  %v281 = vadd.f32 %v210, %v218
  %v282 = vadd.f32 %v211, %v218
  %v283 = vadd.f32 %v212, %v218
  %v284 = vmax.f32 %v220, 0.0
  %v285 = vmax.f32 %v221, 0.0
  %v286 = vmax.f32 %v222, 0.0
  %v287 = vmax.f32 %v223, 0.0
  %v288 = vmax.f32 %v224, 0.0
  %v289 = vmax.f32 %v225, 0.0
  %v290 = vmax.f32 %v226, 0.0
  %v291 = vmax.f32 %v227, 0.0
  %v292 = vmax.f32 %v228, 0.0
  %v293 = vmax.f32 %v229, 0.0
  %v294 = vmax.f32 %v230, 0.0
  %v295 = vmax.f32 %v231, 0.0
  %v296 = vmax.f32 %v232, 0.0
  %v297 = vmax.f32 %v233, 0.0
  %v298 = vmax.f32 %v234, 0.0
  %v299 = vmax.f32 %v235, 0.0
  %v300 = vmax.f32 %v236, 0.0
  %v301 = vmax.f32 %v237, 0.0
  %v302 = vmax.f32 %v238, 0.0
  %v303 = vmax.f32 %v239, 0.0
  %v304 = vmax.f32 %v240, 0.0
  %v305 = vmax.f32 %v241, 0.0
  %v306 = vmax.f32 %v242, 0.0
  %v307 = vmax.f32 %v243, 0.0
  %v308 = vmax.f32 %v244, 0.0
  %v309 = vmax.f32 %v245, 0.0
  %v310 = vmax.f32 %v246, 0.0
  %v311 = vmax.f32 %v247, 0.0
  %v312 = vmax.f32 %v248, 0.0
  %v313 = vmax.f32 %v249, 0.0
  %v314 = vmax.f32 %v250, 0.0
  %v315 = vmax.f32 %v251, 0.0
  %v316 = vmax.f32 %v252, 0.0
  %v317 = vmax.f32 %v253, 0.0
  %v318 = vmax.f32 %v254, 0.0
  %v319 = vmax.f32 %v255, 0.0
  %v320 = vmax.f32 %v256, 0.0
  %v321 = vmax.f32 %v257, 0.0
  %v322 = vmax.f32 %v258, 0.0
  %v323 = vmax.f32 %v259, 0.0
  %v324 = vmax.f32 %v260, 0.0
  %v325 = vmax.f32 %v261, 0.0
  %v326 = vmax.f32 %v262, 0.0
  %v327 = vmax.f32 %v263, 0.0
  %v328 = vmax.f32 %v264, 0.0
  %v329 = vmax.f32 %v265, 0.0
  %v330 = vmax.f32 %v266, 0.0
  %v331 = vmax.f32 %v267, 0.0
  %v332 = vmax.f32 %v268, 0.0
  %v333 = vmax.f32 %v269, 0.0
  %v334 = vmax.f32 %v270, 0.0
  %v335 = vmax.f32 %v271, 0.0
  %v336 = vmax.f32 %v272, 0.0
  %v337 = vmax.f32 %v273, 0.0
  %v338 = vmax.f32 %v274, 0.0
  %v339 = vmax.f32 %v275, 0.0
  %v340 = vmax.f32 %v276, 0.0
  %v341 = vmax.f32 %v277, 0.0
  %v342 = vmax.f32 %v278, 0.0
  %v343 = vmax.f32 %v279, 0.0
  %v344 = vmax.f32 %v280, 0.0
  %v345 = vmax.f32 %v281, 0.0
  %v346 = vmax.f32 %v282, 0.0
  %v347 = vmax.f32 %v283, 0.0
  %v348 = vpack.c.bf16 %v285, %v284
  %v349 = vpack.c.bf16 %v287, %v286
  %v350 = vpack.c.bf16 %v289, %v288
  %v351 = vpack.c.bf16 %v291, %v290
  %v352 = vpack.c.bf16 %v293, %v292
  %v353 = vpack.c.bf16 %v295, %v294
  %v354 = vpack.c.bf16 %v297, %v296
  %v355 = vpack.c.bf16 %v299, %v298
  %v356 = vpack.c.bf16 %v301, %v300
  %v357 = vpack.c.bf16 %v303, %v302
  %v358 = vpack.c.bf16 %v305, %v304
  %v359 = vpack.c.bf16 %v307, %v306
  %v360 = vpack.c.bf16 %v309, %v308
  %v361 = vpack.c.bf16 %v311, %v310
  %v362 = vpack.c.bf16 %v313, %v312
  %v363 = vpack.c.bf16 %v315, %v314
  %v364 = vpack.c.bf16 %v317, %v316
  %v365 = vpack.c.bf16 %v319, %v318
  %v366 = vpack.c.bf16 %v321, %v320
  %v367 = vpack.c.bf16 %v323, %v322
  %v368 = vpack.c.bf16 %v325, %v324
  %v369 = vpack.c.bf16 %v327, %v326
  %v370 = vpack.c.bf16 %v329, %v328
  %v371 = vpack.c.bf16 %v331, %v330
  %v372 = vpack.c.bf16 %v333, %v332
  %v373 = vpack.c.bf16 %v335, %v334
  %v374 = vpack.c.bf16 %v337, %v336
  %v375 = vpack.c.bf16 %v339, %v338
  %v376 = vpack.c.bf16 %v341, %v340
  %v377 = vpack.c.bf16 %v343, %v342
  %v378 = vpack.c.bf16 %v345, %v344
  %v379 = vpack.c.bf16 %v347, %v346
  %v412 = vunpack.c.l.b16 %v348
  %v413 = vunpack.c.h.b16 %v348
  %v414 = vunpack.c.l.b16 %v349
  %v415 = vunpack.c.h.b16 %v349
  %v416 = vunpack.c.l.b16 %v350
  %v417 = vunpack.c.h.b16 %v350
  %v418 = vunpack.c.l.b16 %v351
  %v419 = vunpack.c.h.b16 %v351
  %v420 = vunpack.c.l.b16 %v352
  %v421 = vunpack.c.h.b16 %v352
  %v422 = vunpack.c.l.b16 %v353
  %v423 = vunpack.c.h.b16 %v353
  %v424 = vunpack.c.l.b16 %v354
  %v425 = vunpack.c.h.b16 %v354
  %v426 = vunpack.c.l.b16 %v355
  %v427 = vunpack.c.h.b16 %v355
  %v428 = vunpack.c.l.b16 %v356
  %v429 = vunpack.c.h.b16 %v356
  %v430 = vunpack.c.l.b16 %v357
  %v431 = vunpack.c.h.b16 %v357
  %v432 = vunpack.c.l.b16 %v358
  %v433 = vunpack.c.h.b16 %v358
  %v434 = vunpack.c.l.b16 %v359
  %v435 = vunpack.c.h.b16 %v359
  %v436 = vunpack.c.l.b16 %v360
  %v437 = vunpack.c.h.b16 %v360
  %v438 = vunpack.c.l.b16 %v361
  %v439 = vunpack.c.h.b16 %v361
  %v440 = vunpack.c.l.b16 %v362
  %v441 = vunpack.c.h.b16 %v362
  %v442 = vunpack.c.l.b16 %v363
  %v443 = vunpack.c.h.b16 %v363
  %v444 = vunpack.c.l.b16 %v364
  %v445 = vunpack.c.h.b16 %v364
  %v446 = vunpack.c.l.b16 %v365
  %v447 = vunpack.c.h.b16 %v365
  %v448 = vunpack.c.l.b16 %v366
  %v449 = vunpack.c.h.b16 %v366
  %v450 = vunpack.c.l.b16 %v367
  %v451 = vunpack.c.h.b16 %v367
  %v452 = vunpack.c.l.b16 %v368
  %v453 = vunpack.c.h.b16 %v368
  %v454 = vunpack.c.l.b16 %v369
  %v455 = vunpack.c.h.b16 %v369
  %v456 = vunpack.c.l.b16 %v370
  %v457 = vunpack.c.h.b16 %v370
  %v458 = vunpack.c.l.b16 %v371
  %v459 = vunpack.c.h.b16 %v371
  %v460 = vunpack.c.l.b16 %v372
  %v461 = vunpack.c.h.b16 %v372
  %v462 = vunpack.c.l.b16 %v373
  %v463 = vunpack.c.h.b16 %v373
  %v464 = vunpack.c.l.b16 %v374
  %v465 = vunpack.c.h.b16 %v374
  %v466 = vunpack.c.l.b16 %v375
  %v467 = vunpack.c.h.b16 %v375
  %v468 = vunpack.c.l.b16 %v376
  %v469 = vunpack.c.h.b16 %v376
  %v470 = vunpack.c.l.b16 %v377
  %v471 = vunpack.c.h.b16 %v377
  %v472 = vunpack.c.l.b16 %v378
  %v473 = vunpack.c.h.b16 %v378
  %v474 = vunpack.c.l.b16 %v379
  %v475 = vunpack.c.h.b16 %v379
  %v476 = vpack.c.b16 %v412, %v412
  %v477 = vpack.c.b16 %v413, %v413
  %v478 = vpack.c.b16 %v414, %v414
  %v479 = vpack.c.b16 %v415, %v415
  %v480 = vpack.c.b16 %v416, %v416
  %v481 = vpack.c.b16 %v417, %v417
  %v482 = vpack.c.b16 %v418, %v418
  %v483 = vpack.c.b16 %v419, %v419
  %v484 = vpack.c.b16 %v420, %v420
  %v485 = vpack.c.b16 %v421, %v421
  %v486 = vpack.c.b16 %v422, %v422
  %v487 = vpack.c.b16 %v423, %v423
  %v488 = vpack.c.b16 %v424, %v424
  %v489 = vpack.c.b16 %v425, %v425
  %v490 = vpack.c.b16 %v426, %v426
  %v491 = vpack.c.b16 %v427, %v427
  %v492 = vpack.c.b16 %v428, %v428
  %v493 = vpack.c.b16 %v429, %v429
  %v494 = vpack.c.b16 %v430, %v430
  %v495 = vpack.c.b16 %v431, %v431
  %v496 = vpack.c.b16 %v432, %v432
  %v497 = vpack.c.b16 %v433, %v433
  %v498 = vpack.c.b16 %v434, %v434
  %v499 = vpack.c.b16 %v435, %v435
  %v500 = vpack.c.b16 %v436, %v436
  %v501 = vpack.c.b16 %v437, %v437
  %v502 = vpack.c.b16 %v438, %v438
  %v503 = vpack.c.b16 %v439, %v439
  %v504 = vpack.c.b16 %v440, %v440
  %v505 = vpack.c.b16 %v441, %v441
  %v506 = vpack.c.b16 %v442, %v442
  %v507 = vpack.c.b16 %v443, %v443
  %v508 = vpack.c.b16 %v444, %v444
  %v509 = vpack.c.b16 %v445, %v445
  %v510 = vpack.c.b16 %v446, %v446
  %v511 = vpack.c.b16 %v447, %v447
  %v512 = vpack.c.b16 %v448, %v448
  %v513 = vpack.c.b16 %v449, %v449
  %v514 = vpack.c.b16 %v450, %v450
  %v515 = vpack.c.b16 %v451, %v451
  %v516 = vpack.c.b16 %v452, %v452
  %v517 = vpack.c.b16 %v453, %v453
  %v518 = vpack.c.b16 %v454, %v454
  %v519 = vpack.c.b16 %v455, %v455
  %v520 = vpack.c.b16 %v456, %v456
  %v521 = vpack.c.b16 %v457, %v457
  %v522 = vpack.c.b16 %v458, %v458
  %v523 = vpack.c.b16 %v459, %v459
  %v524 = vpack.c.b16 %v460, %v460
  %v525 = vpack.c.b16 %v461, %v461
  %v526 = vpack.c.b16 %v462, %v462
  %v527 = vpack.c.b16 %v463, %v463
  %v528 = vpack.c.b16 %v464, %v464
  %v529 = vpack.c.b16 %v465, %v465
  %v530 = vpack.c.b16 %v466, %v466
  %v531 = vpack.c.b16 %v467, %v467
  %v532 = vpack.c.b16 %v468, %v468
  %v533 = vpack.c.b16 %v469, %v469
  %v534 = vpack.c.b16 %v470, %v470
  %v535 = vpack.c.b16 %v471, %v471
  %v536 = vpack.c.b16 %v472, %v472
  %v537 = vpack.c.b16 %v473, %v473
  %v538 = vpack.c.b16 %v474, %v474
  %v539 = vpack.c.b16 %v475, %v475
  %604 = vst [vmem:[%s3] sm:$0xf] %v476
  %605 = vst [vmem:[%s3 + $0x4] sm:$0xf] %v477
  %606 = vst [vmem:[%s3 + $0x8] sm:$0xf] %v478
  %607 = vst [vmem:[%s3 + $0xc] sm:$0xf] %v479
  %608 = vst [vmem:[%s3 + $0x10] sm:$0xf] %v480
  %609 = vst [vmem:[%s3 + $0x14] sm:$0xf] %v481
  %610 = vst [vmem:[%s3 + $0x18] sm:$0xf] %v482
  %611 = vst [vmem:[%s3 + $0x1c] sm:$0xf] %v483
  %612 = vst [vmem:[%s3 + $0x20] sm:$0xf] %v484
  %613 = vst [vmem:[%s3 + $0x24] sm:$0xf] %v485
  %614 = vst [vmem:[%s3 + $0x28] sm:$0xf] %v486
  %615 = vst [vmem:[%s3 + $0x2c] sm:$0xf] %v487
  %616 = vst [vmem:[%s3 + $0x30] sm:$0xf] %v488
  %617 = vst [vmem:[%s3 + $0x34] sm:$0xf] %v489
  %618 = vst [vmem:[%s3 + $0x38] sm:$0xf] %v490
  %619 = vst [vmem:[%s3 + $0x3c] sm:$0xf] %v491
  %620 = vst [vmem:[%s3 + $0x40] sm:$0xf] %v492
  %621 = vst [vmem:[%s3 + $0x44] sm:$0xf] %v493
  %622 = vst [vmem:[%s3 + $0x48] sm:$0xf] %v494
  %623 = vst [vmem:[%s3 + $0x4c] sm:$0xf] %v495
  %624 = vst [vmem:[%s3 + $0x50] sm:$0xf] %v496
  %625 = vst [vmem:[%s3 + $0x54] sm:$0xf] %v497
  %626 = vst [vmem:[%s3 + $0x58] sm:$0xf] %v498
  %627 = vst [vmem:[%s3 + $0x5c] sm:$0xf] %v499
  %628 = vst [vmem:[%s3 + $0x60] sm:$0xf] %v500
  %629 = vst [vmem:[%s3 + $0x64] sm:$0xf] %v501
  %630 = vst [vmem:[%s3 + $0x68] sm:$0xf] %v502
  %631 = vst [vmem:[%s3 + $0x6c] sm:$0xf] %v503
  %632 = vst [vmem:[%s3 + $0x70] sm:$0xf] %v504
  %633 = vst [vmem:[%s3 + $0x74] sm:$0xf] %v505
  %634 = vst [vmem:[%s3 + $0x78] sm:$0xf] %v506
  %635 = vst [vmem:[%s3 + $0x7c] sm:$0xf] %v507
  %636 = vst [vmem:[%s3 + $0x80] sm:$0xf] %v508
  %637 = vst [vmem:[%s3 + $0x84] sm:$0xf] %v509
  %638 = vst [vmem:[%s3 + $0x88] sm:$0xf] %v510
  %639 = vst [vmem:[%s3 + $0x8c] sm:$0xf] %v511
  %640 = vst [vmem:[%s3 + $0x90] sm:$0xf] %v512
  %641 = vst [vmem:[%s3 + $0x94] sm:$0xf] %v513
  %642 = vst [vmem:[%s3 + $0x98] sm:$0xf] %v514
  %643 = vst [vmem:[%s3 + $0x9c] sm:$0xf] %v515
  %644 = vst [vmem:[%s3 + $0xa0] sm:$0xf] %v516
  %645 = vst [vmem:[%s3 + $0xa4] sm:$0xf] %v517
  %646 = vst [vmem:[%s3 + $0xa8] sm:$0xf] %v518
  %647 = vst [vmem:[%s3 + $0xac] sm:$0xf] %v519
  %648 = vst [vmem:[%s3 + $0xb0] sm:$0xf] %v520
  %649 = vst [vmem:[%s3 + $0xb4] sm:$0xf] %v521
  %650 = vst [vmem:[%s3 + $0xb8] sm:$0xf] %v522
  %651 = vst [vmem:[%s3 + $0xbc] sm:$0xf] %v523
  %652 = vst [vmem:[%s3 + $0xc0] sm:$0xf] %v524
  %653 = vst [vmem:[%s3 + $0xc4] sm:$0xf] %v525
  %654 = vst [vmem:[%s3 + $0xc8] sm:$0xf] %v526
  %655 = vst [vmem:[%s3 + $0xcc] sm:$0xf] %v527
  %656 = vst [vmem:[%s3 + $0xd0] sm:$0xf] %v528
  %657 = vst [vmem:[%s3 + $0xd4] sm:$0xf] %v529
  %658 = vst [vmem:[%s3 + $0xd8] sm:$0xf] %v530
  %659 = vst [vmem:[%s3 + $0xdc] sm:$0xf] %v531
  %660 = vst [vmem:[%s3 + $0xe0] sm:$0xf] %v532
  %661 = vst [vmem:[%s3 + $0xe4] sm:$0xf] %v533
  %662 = vst [vmem:[%s3 + $0xe8] sm:$0xf] %v534
  %663 = vst [vmem:[%s3 + $0xec] sm:$0xf] %v535
  %664 = vst [vmem:[%s3 + $0xf0] sm:$0xf] %v536
  %665 = vst [vmem:[%s3 + $0xf4] sm:$0xf] %v537
  %666 = vst [vmem:[%s3 + $0xf8] sm:$0xf] %v538
  %667 = vst [vmem:[%s3 + $0xfc] sm:$0xf] %v539
  // Predicated region
  $region14: #{global_generator_forward.24} parent=0 // pred_check
    _
  $region15: #{global_generator_forward.24} parent=0 // pred_check_branch
    %669 = sbr.rel (0) target = $region17
  $region16: #{global_generator_forward.24} parent=0 // pred_region
    _
  $region17: #{global_generator_forward.24} parent=0 // pred_fallthru
    _
  // Predicated region
  $region18: #{global_generator_forward.24} parent=0 // pred_check
    _
  $region19: #{global_generator_forward.24} parent=0 // pred_check_branch
    %671 = sbr.rel (0) target = $region21
  $region20: #{global_generator_forward.24} parent=0 // pred_region
    _
  $region21: #{global_generator_forward.24} parent=0 // pred_fallthru
    _

// kernel: global_generator_forward.23
$region0: #{global_generator_forward.23}
  #allocation0 [shape = 'u32[]', space=smem, size = 0x4, offset = 0x4, fixed_abs, tag = 'smem constant byte address 0x4 - core index']
  #allocation1 [shape = 'u32[144,128]{1,0:T(1,128)}', space=vmem, size = 0x12000, scoped, tag = 'internal scratch']
  %s0 = inlined_call_operand.vmem [shape: bf16[512,256], index: 0, kind: input, shape index: {}]
  %s1 = inlined_call_operand.vmem [shape: bf16[256,128], index: 1, kind: input, shape index: {}]
  %s2 = inlined_call_operand.vmem [shape: f32[1,128], index: 2, kind: input, shape index: {}]
  %s3 = inlined_call_operand.vmem [shape: bf16[512,128], index: 3, kind: output, shape index: {0}]
  %s4 = inlined_call_operand.vmem [shape: f32[2,8,128], index: 4, kind: output, shape index: {1}]
  %5 = xla_tuple %s3, %s4
  %s6 = sld [smem:[#allocation0]]
  $region53: #{global_generator_forward.23} parent=0
    _
  %s8 = ssub.s32 1, %s6
  %s9 = scalar_select 0, %s8, %s6
  loop: start=0, step=1, limit=4
  $region2: #{global_generator_forward.23} parent=0 // loop_pre_header
    _
  $region3: #{global_generator_forward.23} parent=0 // loop_header
    %s11 = sphi 0, %s15
    %p12 = scmp.ge.s32.totalorder %s11, 4
    %s18 = sphi 0, %s30
    %s19 = sphi 0, %s26
    %s20 = sphi 0, %s18
    %s21 = sphi 0, %s19
    %s22 = sphi 0, %s20
    %s23 = sphi 0, %s21
    %s33 = sphi 0, %s35
    %s36 = sphi 0, %s33
    %s37 = sphi 0, %s36
    %s53 = sphi 0, %s37
    %s59 = sphi 0, %s61
    %s62 = sphi 0, %s59
    %s63 = sphi 0, %s62
    %s79 = sphi 0, %s63
    %s85 = sphi 0, %s87
    %s88 = sphi 0, %s85
    %s89 = sphi 0, %s88
    %s105 = sphi 0, %s89
    %s113 = sphi 0, %s115
    %s116 = sphi 0, %s113
    %s117 = sphi 0, %s116
    %s133 = sphi 0, %s117
    %s141 = sphi 0, %s143
    %s144 = sphi 0, %s141
    %s145 = sphi 0, %s144
    %s161 = sphi 0, %s145
  $region4: #{global_generator_forward.23} parent=0 // loop_header_branch
    %14 = sbr.rel (%p12) target = $region8
  $region5: #{global_generator_forward.23} parent=0 // loop_body
    %s16 = ssub.s32 %s11, 1
    %s17 = ssub.s32 %s11, 2
    %s24 = sadd.s32 1, %s19
    %p25 = scmp.ge.s32.totalorder %s24, 1
    %s26 = scalar_select %p25, 0, %s24
    %s27 = sadd.s32 1, %s18
    %s28 = scalar_select %p25, %s27, %s18
    %p29 = scmp.ge.s32.totalorder %s28, 2
    %s30 = scalar_select %p29, 0, %s28
    %s31 = ssub.s32 %s18, %s30
    %p32 = scmp.eq.s32.totalorder %s31, 0
    %s34 = sadd.s32 %s33, 1
    %s35 = scalar_select %p32, %s33, %s34
    %p38 = pneg %p32
    %p39 = scmp.eq.s32.totalorder %s11, 1
    %p40 = por %p38, %p39
    %p41 = scmp.ne.s32.totalorder %s33, %s36
    %p42 = scmp.eq.s32.totalorder %s11, 0
    %p43 = por %p41, %p42
    %p44 = scmp.ne.s32.totalorder %s33, %s36
    %p45 = scmp.eq.s32.totalorder %s16, 1
    %p46 = por %p44, %p45
    %p47 = scmp.ne.s32.totalorder %s36, %s37
    %p48 = scmp.eq.s32.totalorder %s16, 0
    %p49 = por %p47, %p48
    %p50 = scmp.ne.s32.totalorder %s36, %s37
    %p51 = scmp.eq.s32.totalorder %s17, 1
    %p52 = por %p50, %p51
    %p54 = scmp.ne.s32.totalorder %s37, %s53
    %p55 = scmp.eq.s32.totalorder %s17, 0
    %p56 = por %p54, %p55
    %s57 = ssub.s32 %s19, %s26
    %p58 = scmp.eq.s32.totalorder %s57, 0
    %s60 = sadd.s32 %s59, 1
    %s61 = scalar_select %p58, %s59, %s60
    %p64 = pneg %p58
    %p65 = scmp.eq.s32.totalorder %s11, 1
    %p66 = por %p64, %p65
    %p67 = scmp.ne.s32.totalorder %s59, %s62
    %p68 = scmp.eq.s32.totalorder %s11, 0
    %p69 = por %p67, %p68
    %p70 = scmp.ne.s32.totalorder %s59, %s62
    %p71 = scmp.eq.s32.totalorder %s16, 1
    %p72 = por %p70, %p71
    %p73 = scmp.ne.s32.totalorder %s62, %s63
    %p74 = scmp.eq.s32.totalorder %s16, 0
    %p75 = por %p73, %p74
    %p76 = scmp.ne.s32.totalorder %s62, %s63
    %p77 = scmp.eq.s32.totalorder %s17, 1
    %p78 = por %p76, %p77
    %p80 = scmp.ne.s32.totalorder %s63, %s79
    %p81 = scmp.eq.s32.totalorder %s17, 0
    %p82 = por %p80, %p81
    %s83 = ssub.s32 %s19, %s26
    %p84 = scmp.eq.s32.totalorder %s83, 0
    %s86 = sadd.s32 %s85, 1
    %s87 = scalar_select %p84, %s85, %s86
    %p90 = pneg %p84
    %p91 = scmp.eq.s32.totalorder %s11, 1
    %p92 = por %p90, %p91
    %p93 = scmp.ne.s32.totalorder %s85, %s88
    %p94 = scmp.eq.s32.totalorder %s11, 0
    %p95 = por %p93, %p94
    %p96 = scmp.ne.s32.totalorder %s85, %s88
    %p97 = scmp.eq.s32.totalorder %s16, 1
    %p98 = por %p96, %p97
    %p99 = scmp.ne.s32.totalorder %s88, %s89
    %p100 = scmp.eq.s32.totalorder %s16, 0
    %p101 = por %p99, %p100
    %p102 = scmp.ne.s32.totalorder %s88, %s89
    %p103 = scmp.eq.s32.totalorder %s17, 1
    %p104 = por %p102, %p103
    %p106 = scmp.ne.s32.totalorder %s89, %s105
    %p107 = scmp.eq.s32.totalorder %s17, 0
    %p108 = por %p106, %p107
    %s109 = ssub.s32 %s18, %s30
    %s110 = ssub.s32 %s19, %s26
    %s111 = sor.u32 %s109, %s110
    %p112 = scmp.eq.s32.totalorder %s111, 0
    %s114 = sadd.s32 %s113, 1
    %s115 = scalar_select %p112, %s113, %s114
    %p118 = pneg %p112
    %p119 = scmp.eq.s32.totalorder %s11, 1
    %p120 = por %p118, %p119
    %p121 = scmp.ne.s32.totalorder %s113, %s116
    %p122 = scmp.eq.s32.totalorder %s11, 0
    %p123 = por %p121, %p122
    %p124 = scmp.ne.s32.totalorder %s113, %s116
    %p125 = scmp.eq.s32.totalorder %s16, 1
    %p126 = por %p124, %p125
    %p127 = scmp.ne.s32.totalorder %s116, %s117
    %p128 = scmp.eq.s32.totalorder %s16, 0
    %p129 = por %p127, %p128
    %p130 = scmp.ne.s32.totalorder %s116, %s117
    %p131 = scmp.eq.s32.totalorder %s17, 1
    %p132 = por %p130, %p131
    %p134 = scmp.ne.s32.totalorder %s117, %s133
    %p135 = scmp.eq.s32.totalorder %s17, 0
    %p136 = por %p134, %p135
    %s137 = ssub.s32 %s18, %s30
    %s138 = ssub.s32 %s19, %s26
    %s139 = sor.u32 %s137, %s138
    %p140 = scmp.eq.s32.totalorder %s139, 0
    %s142 = sadd.s32 %s141, 1
    %s143 = scalar_select %p140, %s141, %s142
    %p146 = pneg %p140
    %p147 = scmp.eq.s32.totalorder %s11, 1
    %p148 = por %p146, %p147
    %p149 = scmp.ne.s32.totalorder %s141, %s144
    %p150 = scmp.eq.s32.totalorder %s11, 0
    %p151 = por %p149, %p150
    %p152 = scmp.ne.s32.totalorder %s141, %s144
    %p153 = scmp.eq.s32.totalorder %s16, 1
    %p154 = por %p152, %p153
    %p155 = scmp.ne.s32.totalorder %s144, %s145
    %p156 = scmp.eq.s32.totalorder %s16, 0
    %p157 = por %p155, %p156
    %p158 = scmp.ne.s32.totalorder %s144, %s145
    %p159 = scmp.eq.s32.totalorder %s17, 1
    %p160 = por %p158, %p159
    %p162 = scmp.ne.s32.totalorder %s145, %s161
    %p163 = scmp.eq.s32.totalorder %s17, 0
    %p164 = por %p162, %p163
    %p165 = scmp.le.s32.totalorder 1, %s11
    %p166 = scmp.lt.s32.totalorder %s11, 3
    %p167 = pnand %p165, %p166
    %p168 = pneg %p167
    // Predicated region
    $region9: #{global_generator_forward.23} parent=5 // pred_check
      _
    $region10: #{global_generator_forward.23} parent=5 // pred_check_branch
      %170 = sbr.rel (%p167) target = $region12
    $region11: #{global_generator_forward.23} parent=5 // pred_region
      %s171 = ssub.s32 %s11, 1
      // Predicated region
      $region13: #{global_generator_forward.23} parent=11 // pred_check
        %p172 = pneg %p75
      $region14: #{global_generator_forward.23} parent=11 // pred_check_branch
        %174 = sbr.rel (%p172) target = $region16
      $region15: #{global_generator_forward.23} parent=11 // pred_region
        %p175 = scmp.lt.s32.totalorder %s21, 0
        %s176 = scalar_select %p175, %s21, 0
        %s177 = smul.addr %s176, 4
        %s178 = scalar_lea.vmem %s1, %s177
      $region16: #{global_generator_forward.23} parent=11 // pred_fallthru
        _
      // Predicated region
      $region17: #{global_generator_forward.23} parent=11 // pred_check
        %p179 = pneg %p101
      $region18: #{global_generator_forward.23} parent=11 // pred_check_branch
        %181 = sbr.rel (%p179) target = $region20
      $region19: #{global_generator_forward.23} parent=11 // pred_region
        %p182 = scmp.lt.s32.totalorder %s21, 0
        %s183 = scalar_select %p182, %s21, 0
        %s184 = scalar_lea.vmem %s2, %s183
      $region20: #{global_generator_forward.23} parent=11 // pred_fallthru
        _
    $region12: #{global_generator_forward.23} parent=5 // pred_fallthru
      _
    %p185 = scmp.lt.s32.totalorder %s11, 2
    // Predicated region
    $region21: #{global_generator_forward.23} parent=5 // pred_check
      %p186 = pneg %p185
    $region22: #{global_generator_forward.23} parent=5 // pred_check_branch
      %188 = sbr.rel (%p186) target = $region24
    $region23: #{global_generator_forward.23} parent=5 // pred_region
      // Predicated region
      $region25: #{global_generator_forward.23} parent=23 // pred_check
        %p189 = pneg %p43
      $region26: #{global_generator_forward.23} parent=23 // pred_check_branch
        %191 = sbr.rel (%p189) target = $region28
      $region27: #{global_generator_forward.23} parent=23 // pred_region
        %s192 = smul.u32 32, %s18
        %p193 = scmp.lt.s32.totalorder %s192, 63
        %s194 = scalar_select %p193, %s192, 63
        %s195 = smul.addr %s194, 2
        %s196 = smul.addr %s195, 4
        %s197 = scalar_lea.vmem %s0, %s196
        %s198 = smul.u32 32, %s18
      $region28: #{global_generator_forward.23} parent=23 // pred_fallthru
        _
    $region24: #{global_generator_forward.23} parent=5 // pred_fallthru
      _
    %p199 = scmp.le.s32.totalorder 1, %s11
    %p200 = scmp.lt.s32.totalorder %s11, 3
    %p201 = pnand %p199, %p200
    %p202 = pneg %p201
    // Predicated region
    $region29: #{global_generator_forward.23} parent=5 // pred_check
      _
    $region30: #{global_generator_forward.23} parent=5 // pred_check_branch
      %204 = sbr.rel (%p201) target = $region32
    $region31: #{global_generator_forward.23} parent=5 // pred_region
      %s205 = ssub.s32 %s11, 1
      %s206 = smul.u32 32, %s20
      %p207 = scmp.lt.s32.totalorder %s206, 63
      %s208 = scalar_select %p207, %s206, 63
      %s209 = smul.addr %s208, 2
      %s210 = smul.addr %s209, 4
      %s211 = scalar_lea.vmem %s0, %s210
      %p212 = pneg %p49
      %p213 = pneg %p46
      %p214 = scmp.lt.s32.totalorder %s21, 0
      %s215 = scalar_select %p214, %s21, 0
      %s216 = smul.addr %s215, 4
      %s217 = scalar_lea.vmem %s1, %s216
      %p218 = pneg %p75
      %p219 = pneg %p72
      %p220 = scmp.lt.s32.totalorder %s21, 0
      %s221 = scalar_select %p220, %s21, 0
      %s222 = scalar_lea.vmem %s2, %s221
      %p223 = pneg %p101
      %p224 = pneg %p98
      %p225 = pneg %p129
      %p226 = pneg %p126
      %s227 = smul.u32 32, %s20
      %p228 = scmp.lt.s32.totalorder %s227, 63
      %s229 = scalar_select %p228, %s227, 63
      %p230 = scmp.lt.s32.totalorder %s21, 0
      %s231 = scalar_select %p230, %s21, 0
      %s232 = sadd.s32 %s231, %s229
      %s233 = smul.addr %s232, 4
      %s234 = scalar_lea.vmem %s3, %s233
      %p235 = pneg %p157
      %p236 = pneg %p154
      %p237 = scmp.lt.s32.totalorder %s20, 1
      %s238 = scalar_select %p237, %s20, 1
      %p239 = scmp.lt.s32.totalorder %s21, 0
      %s240 = scalar_select %p239, %s21, 0
      %s241 = sadd.s32 %s240, %s238
      %s242 = smul.addr %s241, 8
      %s243 = scalar_lea.vmem %s4, %s242
      %s244 = smul.u32 32, %s20
      %p245 = scmp.lt.s32.totalorder %s244, 63
      %s246 = scalar_select %p245, %s244, 63
      %s247 = smul.addr %s246, 2
      %s248 = smul.addr %s247, 4
      %s249 = scalar_lea.vmem %s0, %s248
      %s250 = smul.u32 32, %s20
      %p251 = scmp.lt.s32.totalorder %s21, 0
      %s252 = scalar_select %p251, %s21, 0
      %s253 = smul.addr %s252, 4
      %s254 = scalar_lea.vmem %s1, %s253
      %p255 = scmp.lt.s32.totalorder %s21, 0
      %s256 = scalar_select %p255, %s21, 0
      %s257 = scalar_lea.vmem %s2, %s256
      %s258 = smul.u32 32, %s20
      %p259 = scmp.lt.s32.totalorder %s258, 63
      %s260 = scalar_select %p259, %s258, 63
      %p261 = scmp.lt.s32.totalorder %s21, 0
      %s262 = scalar_select %p261, %s21, 0
      %s263 = sadd.s32 %s262, %s260
      %s264 = smul.addr %s263, 4
      %s265 = scalar_lea.vmem %s3, %s264
      %s266 = smul.u32 32, %s20
      %p267 = scmp.lt.s32.totalorder %s20, 1
      %s268 = scalar_select %p267, %s20, 1
      %p269 = scmp.lt.s32.totalorder %s21, 0
      %s270 = scalar_select %p269, %s21, 0
      %s271 = sadd.s32 %s270, %s268
      %s272 = smul.addr %s271, 8
      %s273 = scalar_lea.vmem %s4, %s272
      %v275 = vld [vmem:[%s249] sm:$0xff]
      %v276 = vld [vmem:[%s249 + $0x8] sm:$0xff]
      %v277 = vld [vmem:[%s249 + $0x10] sm:$0xff]
      %v278 = vld [vmem:[%s249 + $0x18] sm:$0xff]
      %v279 = vld [vmem:[%s249 + $0x20] sm:$0xff]
      %v280 = vld [vmem:[%s249 + $0x28] sm:$0xff]
      %v281 = vld [vmem:[%s249 + $0x30] sm:$0xff]
      %v282 = vld [vmem:[%s249 + $0x38] sm:$0xff]
      %v283 = vld [vmem:[%s249 + $0x40] sm:$0xff]
      %v284 = vld [vmem:[%s249 + $0x48] sm:$0xff]
      %v285 = vld [vmem:[%s249 + $0x50] sm:$0xff]
      %v286 = vld [vmem:[%s249 + $0x58] sm:$0xff]
      %v287 = vld [vmem:[%s249 + $0x60] sm:$0xff]
      %v288 = vld [vmem:[%s249 + $0x68] sm:$0xff]
      %v289 = vld [vmem:[%s249 + $0x70] sm:$0xff]
      %v290 = vld [vmem:[%s249 + $0x78] sm:$0xff]
      %v291 = vld [vmem:[%s249 + $0x80] sm:$0xff]
      %v292 = vld [vmem:[%s249 + $0x88] sm:$0xff]
      %v293 = vld [vmem:[%s249 + $0x90] sm:$0xff]
      %v294 = vld [vmem:[%s249 + $0x98] sm:$0xff]
      %v295 = vld [vmem:[%s249 + $0xa0] sm:$0xff]
      %v296 = vld [vmem:[%s249 + $0xa8] sm:$0xff]
      %v297 = vld [vmem:[%s249 + $0xb0] sm:$0xff]
      %v298 = vld [vmem:[%s249 + $0xb8] sm:$0xff]
      %v299 = vld [vmem:[%s249 + $0xc0] sm:$0xff]
      %v300 = vld [vmem:[%s249 + $0xc8] sm:$0xff]
      %v301 = vld [vmem:[%s249 + $0xd0] sm:$0xff]
      %v302 = vld [vmem:[%s249 + $0xd8] sm:$0xff]
      %v303 = vld [vmem:[%s249 + $0xe0] sm:$0xff]
      %v304 = vld [vmem:[%s249 + $0xe8] sm:$0xff]
      %v305 = vld [vmem:[%s249 + $0xf0] sm:$0xff]
      %v306 = vld [vmem:[%s249 + $0xf8] sm:$0xff]
      %v307 = vld [vmem:[%s254] sm:$0xf]
      %v308 = vld [vmem:[%s254 + $0x4] sm:$0xf]
      %v309 = vld [vmem:[%s254 + $0x8] sm:$0xf]
      %v310 = vld [vmem:[%s254 + $0xc] sm:$0xf]
      %v311 = vld [vmem:[%s254 + $0x10] sm:$0xf]
      %v312 = vld [vmem:[%s254 + $0x14] sm:$0xf]
      %v313 = vld [vmem:[%s254 + $0x18] sm:$0xf]
      %v314 = vld [vmem:[%s254 + $0x1c] sm:$0xf]
      %v315 = vld [vmem:[%s254 + $0x20] sm:$0xf]
      %v316 = vld [vmem:[%s254 + $0x24] sm:$0xf]
      %v317 = vld [vmem:[%s254 + $0x28] sm:$0xf]
      %v318 = vld [vmem:[%s254 + $0x2c] sm:$0xf]
      %v319 = vld [vmem:[%s254 + $0x30] sm:$0xf]
      %v320 = vld [vmem:[%s254 + $0x34] sm:$0xf]
      %v321 = vld [vmem:[%s254 + $0x38] sm:$0xf]
      %v322 = vld [vmem:[%s254 + $0x3c] sm:$0xf]
      %v323 = vld [vmem:[%s254 + $0x40] sm:$0xf]
      %v324 = vld [vmem:[%s254 + $0x44] sm:$0xf]
      %v325 = vld [vmem:[%s254 + $0x48] sm:$0xf]
      %v326 = vld [vmem:[%s254 + $0x4c] sm:$0xf]
      %v327 = vld [vmem:[%s254 + $0x50] sm:$0xf]
      %v328 = vld [vmem:[%s254 + $0x54] sm:$0xf]
      %v329 = vld [vmem:[%s254 + $0x58] sm:$0xf]
      %v330 = vld [vmem:[%s254 + $0x5c] sm:$0xf]
      %v331 = vld [vmem:[%s254 + $0x60] sm:$0xf]
      %v332 = vld [vmem:[%s254 + $0x64] sm:$0xf]
      %v333 = vld [vmem:[%s254 + $0x68] sm:$0xf]
      %v334 = vld [vmem:[%s254 + $0x6c] sm:$0xf]
      %v335 = vld [vmem:[%s254 + $0x70] sm:$0xf]
      %v336 = vld [vmem:[%s254 + $0x74] sm:$0xf]
      %v337 = vld [vmem:[%s254 + $0x78] sm:$0xf]
      %v338 = vld [vmem:[%s254 + $0x7c] sm:$0xf]
      %v339 = vld [vmem:[%s257] sm:$0x1]
      %v341 = vlaneseq
      %v342 = vshrl.u32 %v341, 7
      %v343 = vsub.s32 0, %v342
      %v344 = vrot.slane %v339, %v343
      %v378 = vunpack.c.l.b16 %v275
      %v379 = vunpack.c.h.b16 %v275
      %v380 = vunpack.c.l.b16 %v276
      %v381 = vunpack.c.h.b16 %v276
      %v382 = vunpack.c.l.b16 %v277
      %v383 = vunpack.c.h.b16 %v277
      %v384 = vunpack.c.l.b16 %v278
      %v385 = vunpack.c.h.b16 %v278
      %v386 = vunpack.c.l.b16 %v279
      %v387 = vunpack.c.h.b16 %v279
      %v388 = vunpack.c.l.b16 %v280
      %v389 = vunpack.c.h.b16 %v280
      %v390 = vunpack.c.l.b16 %v281
      %v391 = vunpack.c.h.b16 %v281
      %v392 = vunpack.c.l.b16 %v282
      %v393 = vunpack.c.h.b16 %v282
      %v394 = vunpack.c.l.b16 %v283
      %v395 = vunpack.c.h.b16 %v283
      %v396 = vunpack.c.l.b16 %v284
      %v397 = vunpack.c.h.b16 %v284
      %v398 = vunpack.c.l.b16 %v285
      %v399 = vunpack.c.h.b16 %v285
      %v400 = vunpack.c.l.b16 %v286
      %v401 = vunpack.c.h.b16 %v286
      %v402 = vunpack.c.l.b16 %v287
      %v403 = vunpack.c.h.b16 %v287
      %v404 = vunpack.c.l.b16 %v288
      %v405 = vunpack.c.h.b16 %v288
      %v406 = vunpack.c.l.b16 %v289
      %v407 = vunpack.c.h.b16 %v289
      %v408 = vunpack.c.l.b16 %v290
      %v409 = vunpack.c.h.b16 %v290
      %v410 = vunpack.c.l.b16 %v291
      %v411 = vunpack.c.h.b16 %v291
      %v412 = vunpack.c.l.b16 %v292
      %v413 = vunpack.c.h.b16 %v292
      %v414 = vunpack.c.l.b16 %v293
      %v415 = vunpack.c.h.b16 %v293
      %v416 = vunpack.c.l.b16 %v294
      %v417 = vunpack.c.h.b16 %v294
      %v418 = vunpack.c.l.b16 %v295
      %v419 = vunpack.c.h.b16 %v295
      %v420 = vunpack.c.l.b16 %v296
      %v421 = vunpack.c.h.b16 %v296
      %v422 = vunpack.c.l.b16 %v297
      %v423 = vunpack.c.h.b16 %v297
      %v424 = vunpack.c.l.b16 %v298
      %v425 = vunpack.c.h.b16 %v298
      %v426 = vunpack.c.l.b16 %v299
      %v427 = vunpack.c.h.b16 %v299
      %v428 = vunpack.c.l.b16 %v300
      %v429 = vunpack.c.h.b16 %v300
      %v430 = vunpack.c.l.b16 %v301
      %v431 = vunpack.c.h.b16 %v301
      %v432 = vunpack.c.l.b16 %v302
      %v433 = vunpack.c.h.b16 %v302
      %v434 = vunpack.c.l.b16 %v303
      %v435 = vunpack.c.h.b16 %v303
      %v436 = vunpack.c.l.b16 %v304
      %v437 = vunpack.c.h.b16 %v304
      %v438 = vunpack.c.l.b16 %v305
      %v439 = vunpack.c.h.b16 %v305
      %v440 = vunpack.c.l.b16 %v306
      %v441 = vunpack.c.h.b16 %v306
      %v442 = vpack.c.b16 %v380, %v378
      %v443 = vpack.c.b16 %v381, %v379
      %v444 = vpack.c.b16 %v384, %v382
      %v445 = vpack.c.b16 %v385, %v383
      %v446 = vpack.c.b16 %v388, %v386
      %v447 = vpack.c.b16 %v389, %v387
      %v448 = vpack.c.b16 %v392, %v390
      %v449 = vpack.c.b16 %v393, %v391
      %v450 = vpack.c.b16 %v396, %v394
      %v451 = vpack.c.b16 %v397, %v395
      %v452 = vpack.c.b16 %v400, %v398
      %v453 = vpack.c.b16 %v401, %v399
      %v454 = vpack.c.b16 %v404, %v402
      %v455 = vpack.c.b16 %v405, %v403
      %v456 = vpack.c.b16 %v408, %v406
      %v457 = vpack.c.b16 %v409, %v407
      %v458 = vpack.c.b16 %v412, %v410
      %v459 = vpack.c.b16 %v413, %v411
      %v460 = vpack.c.b16 %v416, %v414
      %v461 = vpack.c.b16 %v417, %v415
      %v462 = vpack.c.b16 %v420, %v418
      %v463 = vpack.c.b16 %v421, %v419
      %v464 = vpack.c.b16 %v424, %v422
      %v465 = vpack.c.b16 %v425, %v423
      %v466 = vpack.c.b16 %v428, %v426
      %v467 = vpack.c.b16 %v429, %v427
      %v468 = vpack.c.b16 %v432, %v430
      %v469 = vpack.c.b16 %v433, %v431
      %v470 = vpack.c.b16 %v436, %v434
      %v471 = vpack.c.b16 %v437, %v435
      %v472 = vpack.c.b16 %v440, %v438
      %v473 = vpack.c.b16 %v441, %v439
      %v538 = vunpack.c.l.b16 %v307
      %v539 = vunpack.c.l.b16 %v308
      %v540 = vunpack.c.l.b16 %v309
      %v541 = vunpack.c.l.b16 %v310
      %v542 = vunpack.c.l.b16 %v311
      %v543 = vunpack.c.l.b16 %v312
      %v544 = vunpack.c.l.b16 %v313
      %v545 = vunpack.c.l.b16 %v314
      %v546 = vunpack.c.l.b16 %v315
      %v547 = vunpack.c.l.b16 %v316
      %v548 = vunpack.c.l.b16 %v317
      %v549 = vunpack.c.l.b16 %v318
      %v550 = vunpack.c.l.b16 %v319
      %v551 = vunpack.c.l.b16 %v320
      %v552 = vunpack.c.l.b16 %v321
      %v553 = vunpack.c.l.b16 %v322
      %v554 = vunpack.c.l.b16 %v323
      %v555 = vunpack.c.l.b16 %v324
      %v556 = vunpack.c.l.b16 %v325
      %v557 = vunpack.c.l.b16 %v326
      %v558 = vunpack.c.l.b16 %v327
      %v559 = vunpack.c.l.b16 %v328
      %v560 = vunpack.c.l.b16 %v329
      %v561 = vunpack.c.l.b16 %v330
      %v562 = vunpack.c.l.b16 %v331
      %v563 = vunpack.c.l.b16 %v332
      %v564 = vunpack.c.l.b16 %v333
      %v565 = vunpack.c.l.b16 %v334
      %v566 = vunpack.c.l.b16 %v335
      %v567 = vunpack.c.l.b16 %v336
      %v568 = vunpack.c.l.b16 %v337
      %v569 = vunpack.c.l.b16 %v338
      %v570 = vpack.c.b16 %v539, %v538
      %v571 = vpack.c.b16 %v541, %v540
      %v572 = vpack.c.b16 %v543, %v542
      %v573 = vpack.c.b16 %v545, %v544
      %v574 = vpack.c.b16 %v547, %v546
      %v575 = vpack.c.b16 %v549, %v548
      %v576 = vpack.c.b16 %v551, %v550
      %v577 = vpack.c.b16 %v553, %v552
      %v578 = vpack.c.b16 %v555, %v554
      %v579 = vpack.c.b16 %v557, %v556
      %v580 = vpack.c.b16 %v559, %v558
      %v581 = vpack.c.b16 %v561, %v560
      %v582 = vpack.c.b16 %v563, %v562
      %v583 = vpack.c.b16 %v565, %v564
      %v584 = vpack.c.b16 %v567, %v566
      %v585 = vpack.c.b16 %v569, %v568
      %602 = vmatprep.subr.bf16.mxu0 0
      %603 = vmatpush1.bf16.msra.mxu0 %v577
      %604 = vmatprep.subr.bf16.mxu0 0
      %605 = vmatpush1.bf16.msra.mxu0 %v576
      %606 = vmatprep.subr.bf16.mxu0 0
      %607 = vmatpush1.bf16.msra.mxu0 %v575
      %608 = vmatprep.subr.bf16.mxu0 0
      %609 = vmatpush1.bf16.msra.mxu0 %v574
      %610 = vmatprep.subr.bf16.mxu0 0
      %611 = vmatpush1.bf16.msra.mxu0 %v573
      %612 = vmatprep.subr.bf16.mxu0 0
      %613 = vmatpush1.bf16.msra.mxu0 %v572
      %614 = vmatprep.subr.bf16.mxu0 0
      %615 = vmatpush1.bf16.msra.mxu0 %v571
      %616 = vmatprep.subr.bf16.mxu0 0
      %617 = vmatpush1.bf16.msra.mxu0 %v570
      %618 = vmatprep.subr.bf16.mxu0 0
      %619 = vmatpush2.bf16.msra.mxu0 %v585
      %620 = vmatprep.subr.bf16.mxu0 0
      %621 = vmatpush2.bf16.msra.mxu0 %v584
      %622 = vmatprep.subr.bf16.mxu0 0
      %623 = vmatpush2.bf16.msra.mxu0 %v583
      %624 = vmatprep.subr.bf16.mxu0 0
      %625 = vmatpush2.bf16.msra.mxu0 %v582
      %626 = vmatprep.subr.bf16.mxu0 0
      %627 = vmatpush2.bf16.msra.mxu0 %v581
      %628 = vmatprep.subr.bf16.mxu0 0
      %629 = vmatpush2.bf16.msra.mxu0 %v580
      %630 = vmatprep.subr.bf16.mxu0 0
      %631 = vmatpush2.bf16.msra.mxu0 %v579
      %632 = vmatprep.subr.bf16.mxu0 0
      %633 = vmatpush2.bf16.msra.mxu0 %v578
      %634 = vmatprep.mubr.bf16.mxu0 %v443
      %635 = vmatmul.mubr.bf16.gmra.mxu0 %v442
      %v636 = vpop.f32.mrf.mxu0
      %v637 = vadd.f32 %v344, %v636
      %v638 = vpop.f32.mrf.mxu0
      %v639 = vpop.f32.mrf.mxu0
      %v640 = vadd.f32 %v344, %v639
      %v641 = vpop.f32.mrf.mxu0
      %642 = vmatprep.mubr.bf16.mxu0 %v445
      %643 = vmatmul.mubr.bf16.gmra.mxu0 %v444
      %v644 = vpop.f32.mrf.mxu0
      %v645 = vadd.f32 %v344, %v644
      %v646 = vpop.f32.mrf.mxu0
      %v647 = vpop.f32.mrf.mxu0
      %v648 = vadd.f32 %v344, %v647
      %v649 = vpop.f32.mrf.mxu0
      %650 = vmatprep.mubr.bf16.mxu0 %v447
      %651 = vmatmul.mubr.bf16.gmra.mxu0 %v446
      %v652 = vpop.f32.mrf.mxu0
      %v653 = vadd.f32 %v344, %v652
      %v654 = vpop.f32.mrf.mxu0
      %v655 = vpop.f32.mrf.mxu0
      %v656 = vadd.f32 %v344, %v655
      %v657 = vpop.f32.mrf.mxu0
      %658 = vmatprep.mubr.bf16.mxu0 %v449
      %659 = vmatmul.mubr.bf16.gmra.mxu0 %v448
      %v660 = vpop.f32.mrf.mxu0
      %v661 = vadd.f32 %v344, %v660
      %v662 = vpop.f32.mrf.mxu0
      %v663 = vpop.f32.mrf.mxu0
      %v664 = vadd.f32 %v344, %v663
      %v665 = vpop.f32.mrf.mxu0
      %666 = vmatprep.mubr.bf16.mxu0 %v451
      %667 = vmatmul.mubr.bf16.gmra.mxu0 %v450
      %v668 = vpop.f32.mrf.mxu0
      %v669 = vadd.f32 %v344, %v668
      %v670 = vpop.f32.mrf.mxu0
      %v671 = vpop.f32.mrf.mxu0
      %v672 = vadd.f32 %v344, %v671
      %v673 = vpop.f32.mrf.mxu0
      %674 = vmatprep.mubr.bf16.mxu0 %v453
      %675 = vmatmul.mubr.bf16.gmra.mxu0 %v452
      %v676 = vpop.f32.mrf.mxu0
      %v677 = vadd.f32 %v344, %v676
      %v678 = vpop.f32.mrf.mxu0
      %v679 = vpop.f32.mrf.mxu0
      %v680 = vadd.f32 %v344, %v679
      %v681 = vpop.f32.mrf.mxu0
      %682 = vmatprep.mubr.bf16.mxu0 %v455
      %683 = vmatmul.mubr.bf16.gmra.mxu0 %v454
      %v684 = vpop.f32.mrf.mxu0
      %v685 = vadd.f32 %v344, %v684
      %v686 = vpop.f32.mrf.mxu0
      %v687 = vpop.f32.mrf.mxu0
      %v688 = vadd.f32 %v344, %v687
      %v689 = vpop.f32.mrf.mxu0
      %690 = vmatprep.mubr.bf16.mxu0 %v457
      %691 = vmatmul.mubr.bf16.gmra.mxu0 %v456
      %v692 = vpop.f32.mrf.mxu0
      %v693 = vadd.f32 %v344, %v692
      %v694 = vpop.f32.mrf.mxu0
      %v695 = vpop.f32.mrf.mxu0
      %v696 = vadd.f32 %v344, %v695
      %v697 = vpop.f32.mrf.mxu0
      %698 = vmatprep.mubr.bf16.mxu0 %v459
      %699 = vmatmul.mubr.bf16.gmra.mxu0 %v458
      %v700 = vpop.f32.mrf.mxu0
      %v701 = vadd.f32 %v344, %v700
      %v702 = vpop.f32.mrf.mxu0
      %v703 = vpop.f32.mrf.mxu0
      %v704 = vadd.f32 %v344, %v703
      %v705 = vpop.f32.mrf.mxu0
      %706 = vmatprep.mubr.bf16.mxu0 %v461
      %707 = vmatmul.mubr.bf16.gmra.mxu0 %v460
      %v708 = vpop.f32.mrf.mxu0
      %v709 = vadd.f32 %v344, %v708
      %v710 = vpop.f32.mrf.mxu0
      %v711 = vpop.f32.mrf.mxu0
      %v712 = vadd.f32 %v344, %v711
      %v713 = vpop.f32.mrf.mxu0
      %714 = vmatprep.mubr.bf16.mxu0 %v463
      %715 = vmatmul.mubr.bf16.gmra.mxu0 %v462
      %v716 = vpop.f32.mrf.mxu0
      %v717 = vadd.f32 %v344, %v716
      %v718 = vpop.f32.mrf.mxu0
      %v719 = vpop.f32.mrf.mxu0
      %v720 = vadd.f32 %v344, %v719
      %v721 = vpop.f32.mrf.mxu0
      %722 = vmatprep.mubr.bf16.mxu0 %v465
      %723 = vmatmul.mubr.bf16.gmra.mxu0 %v464
      %v724 = vpop.f32.mrf.mxu0
      %v725 = vadd.f32 %v344, %v724
      %v726 = vpop.f32.mrf.mxu0
      %v727 = vpop.f32.mrf.mxu0
      %v728 = vadd.f32 %v344, %v727
      %v729 = vpop.f32.mrf.mxu0
      %730 = vmatprep.mubr.bf16.mxu0 %v467
      %731 = vmatmul.mubr.bf16.gmra.mxu0 %v466
      %v732 = vpop.f32.mrf.mxu0
      %v733 = vadd.f32 %v344, %v732
      %v734 = vpop.f32.mrf.mxu0
      %v735 = vpop.f32.mrf.mxu0
      %v736 = vadd.f32 %v344, %v735
      %v737 = vpop.f32.mrf.mxu0
      %738 = vmatprep.mubr.bf16.mxu0 %v469
      %739 = vmatmul.mubr.bf16.gmra.mxu0 %v468
      %v740 = vpop.f32.mrf.mxu0
      %v741 = vadd.f32 %v344, %v740
      %v742 = vpop.f32.mrf.mxu0
      %v743 = vpop.f32.mrf.mxu0
      %v744 = vadd.f32 %v344, %v743
      %v745 = vpop.f32.mrf.mxu0
      %746 = vmatprep.mubr.bf16.mxu0 %v471
      %747 = vmatmul.mubr.bf16.gmra.mxu0 %v470
      %v748 = vpop.f32.mrf.mxu0
      %v749 = vadd.f32 %v344, %v748
      %v750 = vpop.f32.mrf.mxu0
      %v751 = vpop.f32.mrf.mxu0
      %v752 = vadd.f32 %v344, %v751
      %v753 = vpop.f32.mrf.mxu0
      %754 = vmatprep.mubr.bf16.mxu0 %v473
      %755 = vmatmul.mubr.bf16.gmra.mxu0 %v472
      %v756 = vpop.f32.mrf.mxu0
      %v757 = vadd.f32 %v344, %v756
      %v758 = vpop.f32.mrf.mxu0
      %v759 = vpop.f32.mrf.mxu0
      %v760 = vadd.f32 %v344, %v759
      %v761 = vpop.f32.mrf.mxu0
      %762 = vdwg.mxu0
      %s763 = smul.u32 %s20, 256
      %v764 = vlaneseq
      %v765 = vshrl.u32 %v764, 7
      %v766 = vadd.s32 %v765, 8
      %v767 = vadd.s32 %v765, 16
      %v768 = vadd.s32 %v765, 24
      %v769 = vadd.s32 %v765, 32
      %v770 = vadd.s32 %v765, 40
      %v771 = vadd.s32 %v765, 48
      %v772 = vadd.s32 %v765, 56
      %v773 = vadd.s32 %v765, 64
      %v774 = vadd.s32 %v765, 72
      %v775 = vadd.s32 %v765, 80
      %v776 = vadd.s32 %v765, 88
      %v777 = vadd.s32 %v765, 96
      %v778 = vadd.s32 %v765, 104
      %v779 = vadd.s32 %v765, 112
      %v780 = vadd.s32 %v765, 120
      %v781 = vadd.s32 %v765, 128
      %v782 = vadd.s32 %v765, 136
      %v783 = vadd.s32 %v765, 144
      %v784 = vadd.s32 %v765, 152
      %v785 = vadd.s32 %v765, 160
      %v786 = vadd.s32 %v765, 168
      %v787 = vadd.s32 %v765, 176
      %v788 = vadd.s32 %v765, 184
      %v789 = vadd.s32 %v765, 192
      %v790 = vadd.s32 %v765, 200
      %v791 = vadd.s32 %v765, 208
      %v792 = vadd.s32 %v765, 216
      %v793 = vadd.s32 %v765, 224
      %v794 = vadd.s32 %v765, 232
      %v795 = vadd.s32 %v765, 240
      %v796 = vadd.s32 %v765, 248
      %v797 = vstv %s763
      %v798 = vadd.s32 %v797, %v765
      %v799 = vadd.s32 %v797, %v766
      %v800 = vadd.s32 %v797, %v767
      %v801 = vadd.s32 %v797, %v768
      %v802 = vadd.s32 %v797, %v769
      %v803 = vadd.s32 %v797, %v770
      %v804 = vadd.s32 %v797, %v771
      %v805 = vadd.s32 %v797, %v772
      %v806 = vadd.s32 %v797, %v773
      %v807 = vadd.s32 %v797, %v774
      %v808 = vadd.s32 %v797, %v775
      %v809 = vadd.s32 %v797, %v776
      %v810 = vadd.s32 %v797, %v777
      %v811 = vadd.s32 %v797, %v778
      %v812 = vadd.s32 %v797, %v779
      %v813 = vadd.s32 %v797, %v780
      %v814 = vadd.s32 %v797, %v781
      %v815 = vadd.s32 %v797, %v782
      %v816 = vadd.s32 %v797, %v783
      %v817 = vadd.s32 %v797, %v784
      %v818 = vadd.s32 %v797, %v785
      %v819 = vadd.s32 %v797, %v786
      %v820 = vadd.s32 %v797, %v787
      %v821 = vadd.s32 %v797, %v788
      %v822 = vadd.s32 %v797, %v789
      %v823 = vadd.s32 %v797, %v790
      %v824 = vadd.s32 %v797, %v791
      %v825 = vadd.s32 %v797, %v792
      %v826 = vadd.s32 %v797, %v793
      %v827 = vadd.s32 %v797, %v794
      %v828 = vadd.s32 %v797, %v795
      %v829 = vadd.s32 %v797, %v796
      %vm830 = vcmp.lt.s32.totalorder %v798, 512
      %vm831 = vcmp.lt.s32.totalorder %v799, 512
      %vm832 = vcmp.lt.s32.totalorder %v800, 512
      %vm833 = vcmp.lt.s32.totalorder %v801, 512
      %vm834 = vcmp.lt.s32.totalorder %v802, 512
      %vm835 = vcmp.lt.s32.totalorder %v803, 512
      %vm836 = vcmp.lt.s32.totalorder %v804, 512
      %vm837 = vcmp.lt.s32.totalorder %v805, 512
      %vm838 = vcmp.lt.s32.totalorder %v806, 512
      %vm839 = vcmp.lt.s32.totalorder %v807, 512
      %vm840 = vcmp.lt.s32.totalorder %v808, 512
      %vm841 = vcmp.lt.s32.totalorder %v809, 512
      %vm842 = vcmp.lt.s32.totalorder %v810, 512
      %vm843 = vcmp.lt.s32.totalorder %v811, 512
      %vm844 = vcmp.lt.s32.totalorder %v812, 512
      %vm845 = vcmp.lt.s32.totalorder %v813, 512
      %vm846 = vcmp.lt.s32.totalorder %v814, 512
      %vm847 = vcmp.lt.s32.totalorder %v815, 512
      %vm848 = vcmp.lt.s32.totalorder %v816, 512
      %vm849 = vcmp.lt.s32.totalorder %v817, 512
      %vm850 = vcmp.lt.s32.totalorder %v818, 512
      %vm851 = vcmp.lt.s32.totalorder %v819, 512
      %vm852 = vcmp.lt.s32.totalorder %v820, 512
      %vm853 = vcmp.lt.s32.totalorder %v821, 512
      %vm854 = vcmp.lt.s32.totalorder %v822, 512
      %vm855 = vcmp.lt.s32.totalorder %v823, 512
      %vm856 = vcmp.lt.s32.totalorder %v824, 512
      %vm857 = vcmp.lt.s32.totalorder %v825, 512
      %vm858 = vcmp.lt.s32.totalorder %v826, 512
      %vm859 = vcmp.lt.s32.totalorder %v827, 512
      %vm860 = vcmp.lt.s32.totalorder %v828, 512
      %vm861 = vcmp.lt.s32.totalorder %v829, 512
      %v862 = vsel %vm830, 1, 0
      %v863 = vsel %vm831, 1, 0
      %v864 = vsel %vm832, 1, 0
      %v865 = vsel %vm833, 1, 0
      %v866 = vsel %vm834, 1, 0
      %v867 = vsel %vm835, 1, 0
      %v868 = vsel %vm836, 1, 0
      %v869 = vsel %vm837, 1, 0
      %v870 = vsel %vm838, 1, 0
      %v871 = vsel %vm839, 1, 0
      %v872 = vsel %vm840, 1, 0
      %v873 = vsel %vm841, 1, 0
      %v874 = vsel %vm842, 1, 0
      %v875 = vsel %vm843, 1, 0
      %v876 = vsel %vm844, 1, 0
      %v877 = vsel %vm845, 1, 0
      %v878 = vsel %vm846, 1, 0
      %v879 = vsel %vm847, 1, 0
      %v880 = vsel %vm848, 1, 0
      %v881 = vsel %vm849, 1, 0
      %v882 = vsel %vm850, 1, 0
      %v883 = vsel %vm851, 1, 0
      %v884 = vsel %vm852, 1, 0
      %v885 = vsel %vm853, 1, 0
      %v886 = vsel %vm854, 1, 0
      %v887 = vsel %vm855, 1, 0
      %v888 = vsel %vm856, 1, 0
      %v889 = vsel %vm857, 1, 0
      %v890 = vsel %vm858, 1, 0
      %v891 = vsel %vm859, 1, 0
      %v892 = vsel %vm860, 1, 0
      %v893 = vsel %vm861, 1, 0
      %v894 = vcvt.s32.f32 %v862
      %v895 = vcvt.s32.f32 %v863
      %v896 = vcvt.s32.f32 %v864
      %v897 = vcvt.s32.f32 %v865
      %v898 = vcvt.s32.f32 %v866
      %v899 = vcvt.s32.f32 %v867
      %v900 = vcvt.s32.f32 %v868
      %v901 = vcvt.s32.f32 %v869
      %v902 = vcvt.s32.f32 %v870
      %v903 = vcvt.s32.f32 %v871
      %v904 = vcvt.s32.f32 %v872
      %v905 = vcvt.s32.f32 %v873
      %v906 = vcvt.s32.f32 %v874
      %v907 = vcvt.s32.f32 %v875
      %v908 = vcvt.s32.f32 %v876
      %v909 = vcvt.s32.f32 %v877
      %v910 = vcvt.s32.f32 %v878
      %v911 = vcvt.s32.f32 %v879
      %v912 = vcvt.s32.f32 %v880
      %v913 = vcvt.s32.f32 %v881
      %v914 = vcvt.s32.f32 %v882
      %v915 = vcvt.s32.f32 %v883
      %v916 = vcvt.s32.f32 %v884
      %v917 = vcvt.s32.f32 %v885
      %v918 = vcvt.s32.f32 %v886
      %v919 = vcvt.s32.f32 %v887
      %v920 = vcvt.s32.f32 %v888
      %v921 = vcvt.s32.f32 %v889
      %v922 = vcvt.s32.f32 %v890
      %v923 = vcvt.s32.f32 %v891
      %v924 = vcvt.s32.f32 %v892
      %v925 = vcvt.s32.f32 %v893
      %v926 = vmul.f32 %v637, %v894
      %v927 = vmul.f32 %v640, %v895
      %v928 = vmul.f32 %v645, %v896
      %v929 = vmul.f32 %v648, %v897
      %v930 = vmul.f32 %v653, %v898
      %v931 = vmul.f32 %v656, %v899
      %v932 = vmul.f32 %v661, %v900
      %v933 = vmul.f32 %v664, %v901
      %v934 = vmul.f32 %v669, %v902
      %v935 = vmul.f32 %v672, %v903
      %v936 = vmul.f32 %v677, %v904
      %v937 = vmul.f32 %v680, %v905
      %v938 = vmul.f32 %v685, %v906
      %v939 = vmul.f32 %v688, %v907
      %v940 = vmul.f32 %v693, %v908
      %v941 = vmul.f32 %v696, %v909
      %v942 = vmul.f32 %v701, %v910
      %v943 = vmul.f32 %v704, %v911
      %v944 = vmul.f32 %v709, %v912
      %v945 = vmul.f32 %v712, %v913
      %v946 = vmul.f32 %v717, %v914
      %v947 = vmul.f32 %v720, %v915
      %v948 = vmul.f32 %v725, %v916
      %v949 = vmul.f32 %v728, %v917
      %v950 = vmul.f32 %v733, %v918
      %v951 = vmul.f32 %v736, %v919
      %v952 = vmul.f32 %v741, %v920
      %v953 = vmul.f32 %v744, %v921
      %v954 = vmul.f32 %v749, %v922
      %v955 = vmul.f32 %v752, %v923
      %v956 = vmul.f32 %v757, %v924
      %v957 = vmul.f32 %v760, %v925
      %v958 = vadd.f32 %v926, %v927
      %v959 = vadd.f32 %v958, %v928
      %v960 = vadd.f32 %v959, %v929
      %v961 = vadd.f32 %v960, %v930
      %v962 = vadd.f32 %v961, %v931
      %v963 = vadd.f32 %v962, %v932
      %v964 = vadd.f32 %v963, %v933
      %v965 = vadd.f32 %v964, %v934
      %v966 = vadd.f32 %v965, %v935
      %v967 = vadd.f32 %v966, %v936
      %v968 = vadd.f32 %v967, %v937
      %v969 = vadd.f32 %v968, %v938
      %v970 = vadd.f32 %v969, %v939
      %v971 = vadd.f32 %v970, %v940
      %v972 = vadd.f32 %v971, %v941
      %v973 = vadd.f32 %v972, %v942
      %v974 = vadd.f32 %v973, %v943
      %v975 = vadd.f32 %v974, %v944
      %v976 = vadd.f32 %v975, %v945
      %v977 = vadd.f32 %v976, %v946
      %v978 = vadd.f32 %v977, %v947
      %v979 = vadd.f32 %v978, %v948
      %v980 = vadd.f32 %v979, %v949
      %v981 = vadd.f32 %v980, %v950
      %v982 = vadd.f32 %v981, %v951
      %v983 = vadd.f32 %v982, %v952
      %v984 = vadd.f32 %v983, %v953
      %v985 = vadd.f32 %v984, %v954
      %v986 = vadd.f32 %v985, %v955
      %v987 = vadd.f32 %v986, %v956
      %v988 = vadd.f32 %v987, %v957
      %v989 = vrot.slane %v988, 4
      %v990 = vadd.f32 %v988, %v989
      %v991 = vrot.slane %v990, 2
      %v992 = vadd.f32 %v990, %v991
      %v993 = vrot.slane %v992, 1
      %v994 = vadd.f32 %v992, %v993
      %v995 = vmul.f32 %v926, %v926
      %v996 = vmul.f32 %v927, %v927
      %v997 = vmul.f32 %v928, %v928
      %v998 = vmul.f32 %v929, %v929
      %v999 = vmul.f32 %v930, %v930
      %v1000 = vmul.f32 %v931, %v931
      %v1001 = vmul.f32 %v932, %v932
      %v1002 = vmul.f32 %v933, %v933
      %v1003 = vmul.f32 %v934, %v934
      %v1004 = vmul.f32 %v935, %v935
      %v1005 = vmul.f32 %v936, %v936
      %v1006 = vmul.f32 %v937, %v937
      %v1007 = vmul.f32 %v938, %v938
      %v1008 = vmul.f32 %v939, %v939
      %v1009 = vmul.f32 %v940, %v940
      %v1010 = vmul.f32 %v941, %v941
      %v1011 = vmul.f32 %v942, %v942
      %v1012 = vmul.f32 %v943, %v943
      %v1013 = vmul.f32 %v944, %v944
      %v1014 = vmul.f32 %v945, %v945
      %v1015 = vmul.f32 %v946, %v946
      %v1016 = vmul.f32 %v947, %v947
      %v1017 = vmul.f32 %v948, %v948
      %v1018 = vmul.f32 %v949, %v949
      %v1019 = vmul.f32 %v950, %v950
      %v1020 = vmul.f32 %v951, %v951
      %v1021 = vmul.f32 %v952, %v952
      %v1022 = vmul.f32 %v953, %v953
      %v1023 = vmul.f32 %v954, %v954
      %v1024 = vmul.f32 %v955, %v955
      %v1025 = vmul.f32 %v956, %v956
      %v1026 = vmul.f32 %v957, %v957
      %v1027 = vadd.f32 %v995, %v996
      %v1028 = vadd.f32 %v1027, %v997
      %v1029 = vadd.f32 %v1028, %v998
      %v1030 = vadd.f32 %v1029, %v999
      %v1031 = vadd.f32 %v1030, %v1000
      %v1032 = vadd.f32 %v1031, %v1001
      %v1033 = vadd.f32 %v1032, %v1002
      %v1034 = vadd.f32 %v1033, %v1003
      %v1035 = vadd.f32 %v1034, %v1004
      %v1036 = vadd.f32 %v1035, %v1005
      %v1037 = vadd.f32 %v1036, %v1006
      %v1038 = vadd.f32 %v1037, %v1007
      %v1039 = vadd.f32 %v1038, %v1008
      %v1040 = vadd.f32 %v1039, %v1009
      %v1041 = vadd.f32 %v1040, %v1010
      %v1042 = vadd.f32 %v1041, %v1011
      %v1043 = vadd.f32 %v1042, %v1012
      %v1044 = vadd.f32 %v1043, %v1013
      %v1045 = vadd.f32 %v1044, %v1014
      %v1046 = vadd.f32 %v1045, %v1015
      %v1047 = vadd.f32 %v1046, %v1016
      %v1048 = vadd.f32 %v1047, %v1017
      %v1049 = vadd.f32 %v1048, %v1018
      %v1050 = vadd.f32 %v1049, %v1019
      %v1051 = vadd.f32 %v1050, %v1020
      %v1052 = vadd.f32 %v1051, %v1021
      %v1053 = vadd.f32 %v1052, %v1022
      %v1054 = vadd.f32 %v1053, %v1023
      %v1055 = vadd.f32 %v1054, %v1024
      %v1056 = vadd.f32 %v1055, %v1025
      %v1057 = vadd.f32 %v1056, %v1026
      %v1058 = vrot.slane %v1057, 4
      %v1059 = vadd.f32 %v1057, %v1058
      %v1060 = vrot.slane %v1059, 2
      %v1061 = vadd.f32 %v1059, %v1060
      %v1062 = vrot.slane %v1061, 1
      %v1063 = vadd.f32 %v1061, %v1062
      %1064 = vst [vmem:[%s273] sm:$0x1] %v994
      %1065 = vst [vmem:[%s273 + $0x1] sm:$0x1] %v1063
      %v1066 = vpack.c.bf16 %v640, %v637
      %v1067 = vpack.c.bf16 %v648, %v645
      %v1068 = vpack.c.bf16 %v656, %v653
      %v1069 = vpack.c.bf16 %v664, %v661
      %v1070 = vpack.c.bf16 %v672, %v669
      %v1071 = vpack.c.bf16 %v680, %v677
      %v1072 = vpack.c.bf16 %v688, %v685
      %v1073 = vpack.c.bf16 %v696, %v693
      %v1074 = vpack.c.bf16 %v704, %v701
      %v1075 = vpack.c.bf16 %v712, %v709
      %v1076 = vpack.c.bf16 %v720, %v717
      %v1077 = vpack.c.bf16 %v728, %v725
      %v1078 = vpack.c.bf16 %v736, %v733
      %v1079 = vpack.c.bf16 %v744, %v741
      %v1080 = vpack.c.bf16 %v752, %v749
      %v1081 = vpack.c.bf16 %v760, %v757
      %v1098 = vunpack.c.l.b16 %v1066
      %v1099 = vunpack.c.h.b16 %v1066
      %v1100 = vunpack.c.l.b16 %v1067
      %v1101 = vunpack.c.h.b16 %v1067
      %v1102 = vunpack.c.l.b16 %v1068
      %v1103 = vunpack.c.h.b16 %v1068
      %v1104 = vunpack.c.l.b16 %v1069
      %v1105 = vunpack.c.h.b16 %v1069
      %v1106 = vunpack.c.l.b16 %v1070
      %v1107 = vunpack.c.h.b16 %v1070
      %v1108 = vunpack.c.l.b16 %v1071
      %v1109 = vunpack.c.h.b16 %v1071
      %v1110 = vunpack.c.l.b16 %v1072
      %v1111 = vunpack.c.h.b16 %v1072
      %v1112 = vunpack.c.l.b16 %v1073
      %v1113 = vunpack.c.h.b16 %v1073
      %v1114 = vunpack.c.l.b16 %v1074
      %v1115 = vunpack.c.h.b16 %v1074
      %v1116 = vunpack.c.l.b16 %v1075
      %v1117 = vunpack.c.h.b16 %v1075
      %v1118 = vunpack.c.l.b16 %v1076
      %v1119 = vunpack.c.h.b16 %v1076
      %v1120 = vunpack.c.l.b16 %v1077
      %v1121 = vunpack.c.h.b16 %v1077
      %v1122 = vunpack.c.l.b16 %v1078
      %v1123 = vunpack.c.h.b16 %v1078
      %v1124 = vunpack.c.l.b16 %v1079
      %v1125 = vunpack.c.h.b16 %v1079
      %v1126 = vunpack.c.l.b16 %v1080
      %v1127 = vunpack.c.h.b16 %v1080
      %v1128 = vunpack.c.l.b16 %v1081
      %v1129 = vunpack.c.h.b16 %v1081
      %v1130 = vpack.c.b16 %v1098, %v1098
      %v1131 = vpack.c.b16 %v1099, %v1099
      %v1132 = vpack.c.b16 %v1100, %v1100
      %v1133 = vpack.c.b16 %v1101, %v1101
      %v1134 = vpack.c.b16 %v1102, %v1102
      %v1135 = vpack.c.b16 %v1103, %v1103
      %v1136 = vpack.c.b16 %v1104, %v1104
      %v1137 = vpack.c.b16 %v1105, %v1105
      %v1138 = vpack.c.b16 %v1106, %v1106
      %v1139 = vpack.c.b16 %v1107, %v1107
      %v1140 = vpack.c.b16 %v1108, %v1108
      %v1141 = vpack.c.b16 %v1109, %v1109
      %v1142 = vpack.c.b16 %v1110, %v1110
      %v1143 = vpack.c.b16 %v1111, %v1111
      %v1144 = vpack.c.b16 %v1112, %v1112
      %v1145 = vpack.c.b16 %v1113, %v1113
      %v1146 = vpack.c.b16 %v1114, %v1114
      %v1147 = vpack.c.b16 %v1115, %v1115
      %v1148 = vpack.c.b16 %v1116, %v1116
      %v1149 = vpack.c.b16 %v1117, %v1117
      %v1150 = vpack.c.b16 %v1118, %v1118
      %v1151 = vpack.c.b16 %v1119, %v1119
      %v1152 = vpack.c.b16 %v1120, %v1120
      %v1153 = vpack.c.b16 %v1121, %v1121
      %v1154 = vpack.c.b16 %v1122, %v1122
      %v1155 = vpack.c.b16 %v1123, %v1123
      %v1156 = vpack.c.b16 %v1124, %v1124
      %v1157 = vpack.c.b16 %v1125, %v1125
      %v1158 = vpack.c.b16 %v1126, %v1126
      %v1159 = vpack.c.b16 %v1127, %v1127
      %v1160 = vpack.c.b16 %v1128, %v1128
      %v1161 = vpack.c.b16 %v1129, %v1129
      %1194 = vst [vmem:[%s265] sm:$0xf] %v1130
      %1195 = vst [vmem:[%s265 + $0x4] sm:$0xf] %v1131
      %1196 = vst [vmem:[%s265 + $0x8] sm:$0xf] %v1132
      %1197 = vst [vmem:[%s265 + $0xc] sm:$0xf] %v1133
      %1198 = vst [vmem:[%s265 + $0x10] sm:$0xf] %v1134
      %1199 = vst [vmem:[%s265 + $0x14] sm:$0xf] %v1135
      %1200 = vst [vmem:[%s265 + $0x18] sm:$0xf] %v1136
      %1201 = vst [vmem:[%s265 + $0x1c] sm:$0xf] %v1137
      %1202 = vst [vmem:[%s265 + $0x20] sm:$0xf] %v1138
      %1203 = vst [vmem:[%s265 + $0x24] sm:$0xf] %v1139
      %1204 = vst [vmem:[%s265 + $0x28] sm:$0xf] %v1140
      %1205 = vst [vmem:[%s265 + $0x2c] sm:$0xf] %v1141
      %1206 = vst [vmem:[%s265 + $0x30] sm:$0xf] %v1142
      %1207 = vst [vmem:[%s265 + $0x34] sm:$0xf] %v1143
      %1208 = vst [vmem:[%s265 + $0x38] sm:$0xf] %v1144
      %1209 = vst [vmem:[%s265 + $0x3c] sm:$0xf] %v1145
      %1210 = vst [vmem:[%s265 + $0x40] sm:$0xf] %v1146
      %1211 = vst [vmem:[%s265 + $0x44] sm:$0xf] %v1147
      %1212 = vst [vmem:[%s265 + $0x48] sm:$0xf] %v1148
      %1213 = vst [vmem:[%s265 + $0x4c] sm:$0xf] %v1149
      %1214 = vst [vmem:[%s265 + $0x50] sm:$0xf] %v1150
      %1215 = vst [vmem:[%s265 + $0x54] sm:$0xf] %v1151
      %1216 = vst [vmem:[%s265 + $0x58] sm:$0xf] %v1152
      %1217 = vst [vmem:[%s265 + $0x5c] sm:$0xf] %v1153
      %1218 = vst [vmem:[%s265 + $0x60] sm:$0xf] %v1154
      %1219 = vst [vmem:[%s265 + $0x64] sm:$0xf] %v1155
      %1220 = vst [vmem:[%s265 + $0x68] sm:$0xf] %v1156
      %1221 = vst [vmem:[%s265 + $0x6c] sm:$0xf] %v1157
      %1222 = vst [vmem:[%s265 + $0x70] sm:$0xf] %v1158
      %1223 = vst [vmem:[%s265 + $0x74] sm:$0xf] %v1159
      %1224 = vst [vmem:[%s265 + $0x78] sm:$0xf] %v1160
      %1225 = vst [vmem:[%s265 + $0x7c] sm:$0xf] %v1161
      %s1226 = smul.u32 32, %s20
      %p1227 = scmp.lt.s32.totalorder %s1226, 63
      %s1228 = scalar_select %p1227, %s1226, 63
      %p1229 = scmp.lt.s32.totalorder %s21, 0
      %s1230 = scalar_select %p1229, %s21, 0
      %s1231 = sadd.s32 %s1230, %s1228
      %s1232 = smul.addr %s1231, 4
      %s1233 = scalar_lea.vmem %s3, %s1232
      %p1234 = scmp.lt.s32.totalorder %s20, 1
      %s1235 = scalar_select %p1234, %s20, 1
      %p1236 = scmp.lt.s32.totalorder %s21, 0
      %s1237 = scalar_select %p1236, %s21, 0
      %s1238 = sadd.s32 %s1237, %s1235
      %s1239 = smul.addr %s1238, 8
      %s1240 = scalar_lea.vmem %s4, %s1239
      // Predicated region
      $region33: #{global_generator_forward.23} parent=31 // pred_check
        %p1241 = pneg %p126
      $region34: #{global_generator_forward.23} parent=31 // pred_check_branch
        %1243 = sbr.rel (%p1241) target = $region36
      $region35: #{global_generator_forward.23} parent=31 // pred_region
        %s1244 = smul.u32 32, %s20
      $region36: #{global_generator_forward.23} parent=31 // pred_fallthru
        _
      // Predicated region
      $region37: #{global_generator_forward.23} parent=31 // pred_check
        %p1245 = pneg %p154
      $region38: #{global_generator_forward.23} parent=31 // pred_check_branch
        %1247 = sbr.rel (%p1245) target = $region40
      $region39: #{global_generator_forward.23} parent=31 // pred_region
        _
      $region40: #{global_generator_forward.23} parent=31 // pred_fallthru
        _
    $region32: #{global_generator_forward.23} parent=5 // pred_fallthru
      _
    %p1248 = scmp.le.s32.totalorder 2, %s11
    // Predicated region
    $region41: #{global_generator_forward.23} parent=5 // pred_check
      %p1249 = pneg %p1248
    $region42: #{global_generator_forward.23} parent=5 // pred_check_branch
      %1251 = sbr.rel (%p1249) target = $region44
    $region43: #{global_generator_forward.23} parent=5 // pred_region
      %s1252 = ssub.s32 %s11, 2
      // Predicated region
      $region45: #{global_generator_forward.23} parent=43 // pred_check
        %p1253 = pneg %p132
      $region46: #{global_generator_forward.23} parent=43 // pred_check_branch
        %1255 = sbr.rel (%p1253) target = $region48
      $region47: #{global_generator_forward.23} parent=43 // pred_region
        %s1256 = smul.u32 32, %s22
        %p1257 = scmp.lt.s32.totalorder %s1256, 63
        %s1258 = scalar_select %p1257, %s1256, 63
        %p1259 = scmp.lt.s32.totalorder %s23, 0
        %s1260 = scalar_select %p1259, %s23, 0
        %s1261 = sadd.s32 %s1260, %s1258
        %s1262 = smul.addr %s1261, 4
        %s1263 = scalar_lea.vmem %s3, %s1262
      $region48: #{global_generator_forward.23} parent=43 // pred_fallthru
        _
      // Predicated region
      $region49: #{global_generator_forward.23} parent=43 // pred_check
        %p1264 = pneg %p160
      $region50: #{global_generator_forward.23} parent=43 // pred_check_branch
        %1266 = sbr.rel (%p1264) target = $region52
      $region51: #{global_generator_forward.23} parent=43 // pred_region
        %p1267 = scmp.lt.s32.totalorder %s22, 1
        %s1268 = scalar_select %p1267, %s22, 1
        %p1269 = scmp.lt.s32.totalorder %s23, 0
        %s1270 = scalar_select %p1269, %s23, 0
        %s1271 = sadd.s32 %s1270, %s1268
        %s1272 = smul.addr %s1271, 8
        %s1273 = scalar_lea.vmem %s4, %s1272
      $region52: #{global_generator_forward.23} parent=43 // pred_fallthru
        _
    $region44: #{global_generator_forward.23} parent=5 // pred_fallthru
      _
  $region6: #{global_generator_forward.23} parent=0 // loop_footer
    %s15 = sadd.s32 1, %s11
  $region7: #{global_generator_forward.23} parent=0 // loop_footer_branch
    %10 = sbr.rel target = $region3
  $region8: #{global_generator_forward.23} parent=0 // loop_exit
    _

// kernel: global_generator_forward.25
$region0: #{global_generator_forward.25}
  #allocation0 [shape = 'u32[]', space=smem, size = 0x4, offset = 0x4, fixed_abs, tag = 'smem constant byte address 0x4 - core index']
  #allocation1 [shape = 'u32[144,128]{1,0:T(1,128)}', space=vmem, size = 0x12000, scoped, tag = 'internal scratch']
  %s0 = inlined_call_operand.vmem [shape: bf16[128,256], index: 0, kind: input, shape index: {}]
  %s1 = inlined_call_operand.vmem [shape: bf16[256,128], index: 1, kind: input, shape index: {}]
  %s2 = inlined_call_operand.vmem [shape: f32[1,128], index: 2, kind: input, shape index: {}]
  %s3 = inlined_call_operand.vmem [shape: bf16[128,128], index: 3, kind: output, shape index: {0}]
  %s4 = inlined_call_operand.vmem [shape: f32[1,8,128], index: 4, kind: output, shape index: {1}]
  %5 = xla_tuple %s3, %s4
  %s6 = sld [smem:[#allocation0]]
  $region30: #{global_generator_forward.25} parent=0
    _
  %s8 = ssub.s32 1, %s6
  %s9 = scalar_select 0, %s8, %s6
  // Predicated region
  $region2: #{global_generator_forward.25} parent=0 // pred_check
    _
  $region3: #{global_generator_forward.25} parent=0 // pred_check_branch
    %11 = sbr.rel (0) target = $region5
  $region4: #{global_generator_forward.25} parent=0 // pred_region
    _
  $region5: #{global_generator_forward.25} parent=0 // pred_fallthru
    _
  // Predicated region
  $region6: #{global_generator_forward.25} parent=0 // pred_check
    _
  $region7: #{global_generator_forward.25} parent=0 // pred_check_branch
    %13 = sbr.rel (0) target = $region9
  $region8: #{global_generator_forward.25} parent=0 // pred_region
    _
  $region9: #{global_generator_forward.25} parent=0 // pred_fallthru
    _
  // Predicated region
  $region10: #{global_generator_forward.25} parent=0 // pred_check
    _
  $region11: #{global_generator_forward.25} parent=0 // pred_check_branch
    %15 = sbr.rel (0) target = $region13
  $region12: #{global_generator_forward.25} parent=0 // pred_region
    _
  $region13: #{global_generator_forward.25} parent=0 // pred_fallthru
    _
  %v17 = vld [vmem:[%s0] sm:$0xff]
  %v18 = vld [vmem:[%s0 + $0x8] sm:$0xff]
  %v19 = vld [vmem:[%s0 + $0x10] sm:$0xff]
  %v20 = vld [vmem:[%s0 + $0x18] sm:$0xff]
  %v21 = vld [vmem:[%s0 + $0x20] sm:$0xff]
  %v22 = vld [vmem:[%s0 + $0x28] sm:$0xff]
  %v23 = vld [vmem:[%s0 + $0x30] sm:$0xff]
  %v24 = vld [vmem:[%s0 + $0x38] sm:$0xff]
  %v25 = vld [vmem:[%s0 + $0x40] sm:$0xff]
  %v26 = vld [vmem:[%s0 + $0x48] sm:$0xff]
  %v27 = vld [vmem:[%s0 + $0x50] sm:$0xff]
  %v28 = vld [vmem:[%s0 + $0x58] sm:$0xff]
  %v29 = vld [vmem:[%s0 + $0x60] sm:$0xff]
  %v30 = vld [vmem:[%s0 + $0x68] sm:$0xff]
  %v31 = vld [vmem:[%s0 + $0x70] sm:$0xff]
  %v32 = vld [vmem:[%s0 + $0x78] sm:$0xff]
  %v33 = vld [vmem:[%s1] sm:$0xf]
  %v34 = vld [vmem:[%s1 + $0x4] sm:$0xf]
  %v35 = vld [vmem:[%s1 + $0x8] sm:$0xf]
  %v36 = vld [vmem:[%s1 + $0xc] sm:$0xf]
  %v37 = vld [vmem:[%s1 + $0x10] sm:$0xf]
  %v38 = vld [vmem:[%s1 + $0x14] sm:$0xf]
  %v39 = vld [vmem:[%s1 + $0x18] sm:$0xf]
  %v40 = vld [vmem:[%s1 + $0x1c] sm:$0xf]
  %v41 = vld [vmem:[%s1 + $0x20] sm:$0xf]
  %v42 = vld [vmem:[%s1 + $0x24] sm:$0xf]
  %v43 = vld [vmem:[%s1 + $0x28] sm:$0xf]
  %v44 = vld [vmem:[%s1 + $0x2c] sm:$0xf]
  %v45 = vld [vmem:[%s1 + $0x30] sm:$0xf]
  %v46 = vld [vmem:[%s1 + $0x34] sm:$0xf]
  %v47 = vld [vmem:[%s1 + $0x38] sm:$0xf]
  %v48 = vld [vmem:[%s1 + $0x3c] sm:$0xf]
  %v49 = vld [vmem:[%s1 + $0x40] sm:$0xf]
  %v50 = vld [vmem:[%s1 + $0x44] sm:$0xf]
  %v51 = vld [vmem:[%s1 + $0x48] sm:$0xf]
  %v52 = vld [vmem:[%s1 + $0x4c] sm:$0xf]
  %v53 = vld [vmem:[%s1 + $0x50] sm:$0xf]
  %v54 = vld [vmem:[%s1 + $0x54] sm:$0xf]
  %v55 = vld [vmem:[%s1 + $0x58] sm:$0xf]
  %v56 = vld [vmem:[%s1 + $0x5c] sm:$0xf]
  %v57 = vld [vmem:[%s1 + $0x60] sm:$0xf]
  %v58 = vld [vmem:[%s1 + $0x64] sm:$0xf]
  %v59 = vld [vmem:[%s1 + $0x68] sm:$0xf]
  %v60 = vld [vmem:[%s1 + $0x6c] sm:$0xf]
  %v61 = vld [vmem:[%s1 + $0x70] sm:$0xf]
  %v62 = vld [vmem:[%s1 + $0x74] sm:$0xf]
  %v63 = vld [vmem:[%s1 + $0x78] sm:$0xf]
  %v64 = vld [vmem:[%s1 + $0x7c] sm:$0xf]
  %v65 = vld [vmem:[%s2] sm:$0x1]
  %v67 = vlaneseq
  %v68 = vshrl.u32 %v67, 7
  %v69 = vsub.s32 0, %v68
  %v70 = vrot.slane %v65, %v69
  %v88 = vunpack.c.l.b16 %v17
  %v89 = vunpack.c.h.b16 %v17
  %v90 = vunpack.c.l.b16 %v18
  %v91 = vunpack.c.h.b16 %v18
  %v92 = vunpack.c.l.b16 %v19
  %v93 = vunpack.c.h.b16 %v19
  %v94 = vunpack.c.l.b16 %v20
  %v95 = vunpack.c.h.b16 %v20
  %v96 = vunpack.c.l.b16 %v21
  %v97 = vunpack.c.h.b16 %v21
  %v98 = vunpack.c.l.b16 %v22
  %v99 = vunpack.c.h.b16 %v22
  %v100 = vunpack.c.l.b16 %v23
  %v101 = vunpack.c.h.b16 %v23
  %v102 = vunpack.c.l.b16 %v24
  %v103 = vunpack.c.h.b16 %v24
  %v104 = vunpack.c.l.b16 %v25
  %v105 = vunpack.c.h.b16 %v25
  %v106 = vunpack.c.l.b16 %v26
  %v107 = vunpack.c.h.b16 %v26
  %v108 = vunpack.c.l.b16 %v27
  %v109 = vunpack.c.h.b16 %v27
  %v110 = vunpack.c.l.b16 %v28
  %v111 = vunpack.c.h.b16 %v28
  %v112 = vunpack.c.l.b16 %v29
  %v113 = vunpack.c.h.b16 %v29
  %v114 = vunpack.c.l.b16 %v30
  %v115 = vunpack.c.h.b16 %v30
  %v116 = vunpack.c.l.b16 %v31
  %v117 = vunpack.c.h.b16 %v31
  %v118 = vunpack.c.l.b16 %v32
  %v119 = vunpack.c.h.b16 %v32
  %v120 = vpack.c.b16 %v90, %v88
  %v121 = vpack.c.b16 %v91, %v89
  %v122 = vpack.c.b16 %v94, %v92
  %v123 = vpack.c.b16 %v95, %v93
  %v124 = vpack.c.b16 %v98, %v96
  %v125 = vpack.c.b16 %v99, %v97
  %v126 = vpack.c.b16 %v102, %v100
  %v127 = vpack.c.b16 %v103, %v101
  %v128 = vpack.c.b16 %v106, %v104
  %v129 = vpack.c.b16 %v107, %v105
  %v130 = vpack.c.b16 %v110, %v108
  %v131 = vpack.c.b16 %v111, %v109
  %v132 = vpack.c.b16 %v114, %v112
  %v133 = vpack.c.b16 %v115, %v113
  %v134 = vpack.c.b16 %v118, %v116
  %v135 = vpack.c.b16 %v119, %v117
  %v184 = vunpack.c.l.b16 %v33
  %v185 = vunpack.c.l.b16 %v34
  %v186 = vunpack.c.l.b16 %v35
  %v187 = vunpack.c.l.b16 %v36
  %v188 = vunpack.c.l.b16 %v37
  %v189 = vunpack.c.l.b16 %v38
  %v190 = vunpack.c.l.b16 %v39
  %v191 = vunpack.c.l.b16 %v40
  %v192 = vunpack.c.l.b16 %v41
  %v193 = vunpack.c.l.b16 %v42
  %v194 = vunpack.c.l.b16 %v43
  %v195 = vunpack.c.l.b16 %v44
  %v196 = vunpack.c.l.b16 %v45
  %v197 = vunpack.c.l.b16 %v46
  %v198 = vunpack.c.l.b16 %v47
  %v199 = vunpack.c.l.b16 %v48
  %v200 = vunpack.c.l.b16 %v49
  %v201 = vunpack.c.l.b16 %v50
  %v202 = vunpack.c.l.b16 %v51
  %v203 = vunpack.c.l.b16 %v52
  %v204 = vunpack.c.l.b16 %v53
  %v205 = vunpack.c.l.b16 %v54
  %v206 = vunpack.c.l.b16 %v55
  %v207 = vunpack.c.l.b16 %v56
  %v208 = vunpack.c.l.b16 %v57
  %v209 = vunpack.c.l.b16 %v58
  %v210 = vunpack.c.l.b16 %v59
  %v211 = vunpack.c.l.b16 %v60
  %v212 = vunpack.c.l.b16 %v61
  %v213 = vunpack.c.l.b16 %v62
  %v214 = vunpack.c.l.b16 %v63
  %v215 = vunpack.c.l.b16 %v64
  %v216 = vpack.c.b16 %v185, %v184
  %v217 = vpack.c.b16 %v187, %v186
  %v218 = vpack.c.b16 %v189, %v188
  %v219 = vpack.c.b16 %v191, %v190
  %v220 = vpack.c.b16 %v193, %v192
  %v221 = vpack.c.b16 %v195, %v194
  %v222 = vpack.c.b16 %v197, %v196
  %v223 = vpack.c.b16 %v199, %v198
  %v224 = vpack.c.b16 %v201, %v200
  %v225 = vpack.c.b16 %v203, %v202
  %v226 = vpack.c.b16 %v205, %v204
  %v227 = vpack.c.b16 %v207, %v206
  %v228 = vpack.c.b16 %v209, %v208
  %v229 = vpack.c.b16 %v211, %v210
  %v230 = vpack.c.b16 %v213, %v212
  %v231 = vpack.c.b16 %v215, %v214
  %248 = vmatprep.subr.bf16.mxu0 0
  %249 = vmatpush1.bf16.msra.mxu0 %v223
  %250 = vmatprep.subr.bf16.mxu0 0
  %251 = vmatpush1.bf16.msra.mxu0 %v222
  %252 = vmatprep.subr.bf16.mxu0 0
  %253 = vmatpush1.bf16.msra.mxu0 %v221
  %254 = vmatprep.subr.bf16.mxu0 0
  %255 = vmatpush1.bf16.msra.mxu0 %v220
  %256 = vmatprep.subr.bf16.mxu0 0
  %257 = vmatpush1.bf16.msra.mxu0 %v219
  %258 = vmatprep.subr.bf16.mxu0 0
  %259 = vmatpush1.bf16.msra.mxu0 %v218
  %260 = vmatprep.subr.bf16.mxu0 0
  %261 = vmatpush1.bf16.msra.mxu0 %v217
  %262 = vmatprep.subr.bf16.mxu0 0
  %263 = vmatpush1.bf16.msra.mxu0 %v216
  %264 = vmatprep.subr.bf16.mxu0 0
  %265 = vmatpush2.bf16.msra.mxu0 %v231
  %266 = vmatprep.subr.bf16.mxu0 0
  %267 = vmatpush2.bf16.msra.mxu0 %v230
  %268 = vmatprep.subr.bf16.mxu0 0
  %269 = vmatpush2.bf16.msra.mxu0 %v229
  %270 = vmatprep.subr.bf16.mxu0 0
  %271 = vmatpush2.bf16.msra.mxu0 %v228
  %272 = vmatprep.subr.bf16.mxu0 0
  %273 = vmatpush2.bf16.msra.mxu0 %v227
  %274 = vmatprep.subr.bf16.mxu0 0
  %275 = vmatpush2.bf16.msra.mxu0 %v226
  %276 = vmatprep.subr.bf16.mxu0 0
  %277 = vmatpush2.bf16.msra.mxu0 %v225
  %278 = vmatprep.subr.bf16.mxu0 0
  %279 = vmatpush2.bf16.msra.mxu0 %v224
  %280 = vmatprep.mubr.bf16.mxu0 %v121
  %281 = vmatmul.mubr.bf16.gmra.mxu0 %v120
  %v282 = vpop.f32.mrf.mxu0
  %v283 = vadd.f32 %v70, %v282
  %v284 = vpop.f32.mrf.mxu0
  %v285 = vpop.f32.mrf.mxu0
  %v286 = vadd.f32 %v70, %v285
  %v287 = vpop.f32.mrf.mxu0
  %288 = vmatprep.mubr.bf16.mxu0 %v123
  %289 = vmatmul.mubr.bf16.gmra.mxu0 %v122
  %v290 = vpop.f32.mrf.mxu0
  %v291 = vadd.f32 %v70, %v290
  %v292 = vpop.f32.mrf.mxu0
  %v293 = vpop.f32.mrf.mxu0
  %v294 = vadd.f32 %v70, %v293
  %v295 = vpop.f32.mrf.mxu0
  %296 = vmatprep.mubr.bf16.mxu0 %v125
  %297 = vmatmul.mubr.bf16.gmra.mxu0 %v124
  %v298 = vpop.f32.mrf.mxu0
  %v299 = vadd.f32 %v70, %v298
  %v300 = vpop.f32.mrf.mxu0
  %v301 = vpop.f32.mrf.mxu0
  %v302 = vadd.f32 %v70, %v301
  %v303 = vpop.f32.mrf.mxu0
  %304 = vmatprep.mubr.bf16.mxu0 %v127
  %305 = vmatmul.mubr.bf16.gmra.mxu0 %v126
  %v306 = vpop.f32.mrf.mxu0
  %v307 = vadd.f32 %v70, %v306
  %v308 = vpop.f32.mrf.mxu0
  %v309 = vpop.f32.mrf.mxu0
  %v310 = vadd.f32 %v70, %v309
  %v311 = vpop.f32.mrf.mxu0
  %312 = vmatprep.mubr.bf16.mxu0 %v129
  %313 = vmatmul.mubr.bf16.gmra.mxu0 %v128
  %v314 = vpop.f32.mrf.mxu0
  %v315 = vadd.f32 %v70, %v314
  %v316 = vpop.f32.mrf.mxu0
  %v317 = vpop.f32.mrf.mxu0
  %v318 = vadd.f32 %v70, %v317
  %v319 = vpop.f32.mrf.mxu0
  %320 = vmatprep.mubr.bf16.mxu0 %v131
  %321 = vmatmul.mubr.bf16.gmra.mxu0 %v130
  %v322 = vpop.f32.mrf.mxu0
  %v323 = vadd.f32 %v70, %v322
  %v324 = vpop.f32.mrf.mxu0
  %v325 = vpop.f32.mrf.mxu0
  %v326 = vadd.f32 %v70, %v325
  %v327 = vpop.f32.mrf.mxu0
  %328 = vmatprep.mubr.bf16.mxu0 %v133
  %329 = vmatmul.mubr.bf16.gmra.mxu0 %v132
  %v330 = vpop.f32.mrf.mxu0
  %v331 = vadd.f32 %v70, %v330
  %v332 = vpop.f32.mrf.mxu0
  %v333 = vpop.f32.mrf.mxu0
  %v334 = vadd.f32 %v70, %v333
  %v335 = vpop.f32.mrf.mxu0
  %336 = vmatprep.mubr.bf16.mxu0 %v135
  %337 = vmatmul.mubr.bf16.gmra.mxu0 %v134
  %v338 = vpop.f32.mrf.mxu0
  %v339 = vadd.f32 %v70, %v338
  %v340 = vpop.f32.mrf.mxu0
  %v341 = vpop.f32.mrf.mxu0
  %v342 = vadd.f32 %v70, %v341
  %v343 = vpop.f32.mrf.mxu0
  %344 = vdwg.mxu0
  %s345 = smul.u32 0, 128
  %v346 = vlaneseq
  %v347 = vshrl.u32 %v346, 7
  %v348 = vadd.s32 %v347, 8
  %v349 = vadd.s32 %v347, 16
  %v350 = vadd.s32 %v347, 24
  %v351 = vadd.s32 %v347, 32
  %v352 = vadd.s32 %v347, 40
  %v353 = vadd.s32 %v347, 48
  %v354 = vadd.s32 %v347, 56
  %v355 = vadd.s32 %v347, 64
  %v356 = vadd.s32 %v347, 72
  %v357 = vadd.s32 %v347, 80
  %v358 = vadd.s32 %v347, 88
  %v359 = vadd.s32 %v347, 96
  %v360 = vadd.s32 %v347, 104
  %v361 = vadd.s32 %v347, 112
  %v362 = vadd.s32 %v347, 120
  %v363 = vstv %s345
  %v364 = vadd.s32 %v363, %v347
  %v365 = vadd.s32 %v363, %v348
  %v366 = vadd.s32 %v363, %v349
  %v367 = vadd.s32 %v363, %v350
  %v368 = vadd.s32 %v363, %v351
  %v369 = vadd.s32 %v363, %v352
  %v370 = vadd.s32 %v363, %v353
  %v371 = vadd.s32 %v363, %v354
  %v372 = vadd.s32 %v363, %v355
  %v373 = vadd.s32 %v363, %v356
  %v374 = vadd.s32 %v363, %v357
  %v375 = vadd.s32 %v363, %v358
  %v376 = vadd.s32 %v363, %v359
  %v377 = vadd.s32 %v363, %v360
  %v378 = vadd.s32 %v363, %v361
  %v379 = vadd.s32 %v363, %v362
  %vm380 = vcmp.lt.s32.totalorder %v364, 128
  %vm381 = vcmp.lt.s32.totalorder %v365, 128
  %vm382 = vcmp.lt.s32.totalorder %v366, 128
  %vm383 = vcmp.lt.s32.totalorder %v367, 128
  %vm384 = vcmp.lt.s32.totalorder %v368, 128
  %vm385 = vcmp.lt.s32.totalorder %v369, 128
  %vm386 = vcmp.lt.s32.totalorder %v370, 128
  %vm387 = vcmp.lt.s32.totalorder %v371, 128
  %vm388 = vcmp.lt.s32.totalorder %v372, 128
  %vm389 = vcmp.lt.s32.totalorder %v373, 128
  %vm390 = vcmp.lt.s32.totalorder %v374, 128
  %vm391 = vcmp.lt.s32.totalorder %v375, 128
  %vm392 = vcmp.lt.s32.totalorder %v376, 128
  %vm393 = vcmp.lt.s32.totalorder %v377, 128
  %vm394 = vcmp.lt.s32.totalorder %v378, 128
  %vm395 = vcmp.lt.s32.totalorder %v379, 128
  %v396 = vsel %vm380, 1, 0
  %v397 = vsel %vm381, 1, 0
  %v398 = vsel %vm382, 1, 0
  %v399 = vsel %vm383, 1, 0
  %v400 = vsel %vm384, 1, 0
  %v401 = vsel %vm385, 1, 0
  %v402 = vsel %vm386, 1, 0
  %v403 = vsel %vm387, 1, 0
  %v404 = vsel %vm388, 1, 0
  %v405 = vsel %vm389, 1, 0
  %v406 = vsel %vm390, 1, 0
  %v407 = vsel %vm391, 1, 0
  %v408 = vsel %vm392, 1, 0
  %v409 = vsel %vm393, 1, 0
  %v410 = vsel %vm394, 1, 0
  %v411 = vsel %vm395, 1, 0
  %v412 = vcvt.s32.f32 %v396
  %v413 = vcvt.s32.f32 %v397
  %v414 = vcvt.s32.f32 %v398
  %v415 = vcvt.s32.f32 %v399
  %v416 = vcvt.s32.f32 %v400
  %v417 = vcvt.s32.f32 %v401
  %v418 = vcvt.s32.f32 %v402
  %v419 = vcvt.s32.f32 %v403
  %v420 = vcvt.s32.f32 %v404
  %v421 = vcvt.s32.f32 %v405
  %v422 = vcvt.s32.f32 %v406
  %v423 = vcvt.s32.f32 %v407
  %v424 = vcvt.s32.f32 %v408
  %v425 = vcvt.s32.f32 %v409
  %v426 = vcvt.s32.f32 %v410
  %v427 = vcvt.s32.f32 %v411
  %v428 = vmul.f32 %v283, %v412
  %v429 = vmul.f32 %v286, %v413
  %v430 = vmul.f32 %v291, %v414
  %v431 = vmul.f32 %v294, %v415
  %v432 = vmul.f32 %v299, %v416
  %v433 = vmul.f32 %v302, %v417
  %v434 = vmul.f32 %v307, %v418
  %v435 = vmul.f32 %v310, %v419
  %v436 = vmul.f32 %v315, %v420
  %v437 = vmul.f32 %v318, %v421
  %v438 = vmul.f32 %v323, %v422
  %v439 = vmul.f32 %v326, %v423
  %v440 = vmul.f32 %v331, %v424
  %v441 = vmul.f32 %v334, %v425
  %v442 = vmul.f32 %v339, %v426
  %v443 = vmul.f32 %v342, %v427
  %v444 = vadd.f32 %v428, %v429
  %v445 = vadd.f32 %v444, %v430
  %v446 = vadd.f32 %v445, %v431
  %v447 = vadd.f32 %v446, %v432
  %v448 = vadd.f32 %v447, %v433
  %v449 = vadd.f32 %v448, %v434
  %v450 = vadd.f32 %v449, %v435
  %v451 = vadd.f32 %v450, %v436
  %v452 = vadd.f32 %v451, %v437
  %v453 = vadd.f32 %v452, %v438
  %v454 = vadd.f32 %v453, %v439
  %v455 = vadd.f32 %v454, %v440
  %v456 = vadd.f32 %v455, %v441
  %v457 = vadd.f32 %v456, %v442
  %v458 = vadd.f32 %v457, %v443
  %v459 = vrot.slane %v458, 4
  %v460 = vadd.f32 %v458, %v459
  %v461 = vrot.slane %v460, 2
  %v462 = vadd.f32 %v460, %v461
  %v463 = vrot.slane %v462, 1
  %v464 = vadd.f32 %v462, %v463
  %v465 = vmul.f32 %v428, %v428
  %v466 = vmul.f32 %v429, %v429
  %v467 = vmul.f32 %v430, %v430
  %v468 = vmul.f32 %v431, %v431
  %v469 = vmul.f32 %v432, %v432
  %v470 = vmul.f32 %v433, %v433
  %v471 = vmul.f32 %v434, %v434
  %v472 = vmul.f32 %v435, %v435
  %v473 = vmul.f32 %v436, %v436
  %v474 = vmul.f32 %v437, %v437
  %v475 = vmul.f32 %v438, %v438
  %v476 = vmul.f32 %v439, %v439
  %v477 = vmul.f32 %v440, %v440
  %v478 = vmul.f32 %v441, %v441
  %v479 = vmul.f32 %v442, %v442
  %v480 = vmul.f32 %v443, %v443
  %v481 = vadd.f32 %v465, %v466
  %v482 = vadd.f32 %v481, %v467
  %v483 = vadd.f32 %v482, %v468
  %v484 = vadd.f32 %v483, %v469
  %v485 = vadd.f32 %v484, %v470
  %v486 = vadd.f32 %v485, %v471
  %v487 = vadd.f32 %v486, %v472
  %v488 = vadd.f32 %v487, %v473
  %v489 = vadd.f32 %v488, %v474
  %v490 = vadd.f32 %v489, %v475
  %v491 = vadd.f32 %v490, %v476
  %v492 = vadd.f32 %v491, %v477
  %v493 = vadd.f32 %v492, %v478
  %v494 = vadd.f32 %v493, %v479
  %v495 = vadd.f32 %v494, %v480
  %v496 = vrot.slane %v495, 4
  %v497 = vadd.f32 %v495, %v496
  %v498 = vrot.slane %v497, 2
  %v499 = vadd.f32 %v497, %v498
  %v500 = vrot.slane %v499, 1
  %v501 = vadd.f32 %v499, %v500
  %502 = vst [vmem:[%s4] sm:$0x1] %v464
  %503 = vst [vmem:[%s4 + $0x1] sm:$0x1] %v501
  %v504 = vpack.c.bf16 %v286, %v283
  %v505 = vpack.c.bf16 %v294, %v291
  %v506 = vpack.c.bf16 %v302, %v299
  %v507 = vpack.c.bf16 %v310, %v307
  %v508 = vpack.c.bf16 %v318, %v315
  %v509 = vpack.c.bf16 %v326, %v323
  %v510 = vpack.c.bf16 %v334, %v331
  %v511 = vpack.c.bf16 %v342, %v339
  %v520 = vunpack.c.l.b16 %v504
  %v521 = vunpack.c.h.b16 %v504
  %v522 = vunpack.c.l.b16 %v505
  %v523 = vunpack.c.h.b16 %v505
  %v524 = vunpack.c.l.b16 %v506
  %v525 = vunpack.c.h.b16 %v506
  %v526 = vunpack.c.l.b16 %v507
  %v527 = vunpack.c.h.b16 %v507
  %v528 = vunpack.c.l.b16 %v508
  %v529 = vunpack.c.h.b16 %v508
  %v530 = vunpack.c.l.b16 %v509
  %v531 = vunpack.c.h.b16 %v509
  %v532 = vunpack.c.l.b16 %v510
  %v533 = vunpack.c.h.b16 %v510
  %v534 = vunpack.c.l.b16 %v511
  %v535 = vunpack.c.h.b16 %v511
  %v536 = vpack.c.b16 %v520, %v520
  %v537 = vpack.c.b16 %v521, %v521
  %v538 = vpack.c.b16 %v522, %v522
  %v539 = vpack.c.b16 %v523, %v523
  %v540 = vpack.c.b16 %v524, %v524
  %v541 = vpack.c.b16 %v525, %v525
  %v542 = vpack.c.b16 %v526, %v526
  %v543 = vpack.c.b16 %v527, %v527
  %v544 = vpack.c.b16 %v528, %v528
  %v545 = vpack.c.b16 %v529, %v529
  %v546 = vpack.c.b16 %v530, %v530
  %v547 = vpack.c.b16 %v531, %v531
  %v548 = vpack.c.b16 %v532, %v532
  %v549 = vpack.c.b16 %v533, %v533
  %v550 = vpack.c.b16 %v534, %v534
  %v551 = vpack.c.b16 %v535, %v535
  %568 = vst [vmem:[%s3] sm:$0xf] %v536
  %569 = vst [vmem:[%s3 + $0x4] sm:$0xf] %v537
  %570 = vst [vmem:[%s3 + $0x8] sm:$0xf] %v538
  %571 = vst [vmem:[%s3 + $0xc] sm:$0xf] %v539
  %572 = vst [vmem:[%s3 + $0x10] sm:$0xf] %v540
  %573 = vst [vmem:[%s3 + $0x14] sm:$0xf] %v541
  %574 = vst [vmem:[%s3 + $0x18] sm:$0xf] %v542
  %575 = vst [vmem:[%s3 + $0x1c] sm:$0xf] %v543
  %576 = vst [vmem:[%s3 + $0x20] sm:$0xf] %v544
  %577 = vst [vmem:[%s3 + $0x24] sm:$0xf] %v545
  %578 = vst [vmem:[%s3 + $0x28] sm:$0xf] %v546
  %579 = vst [vmem:[%s3 + $0x2c] sm:$0xf] %v547
  %580 = vst [vmem:[%s3 + $0x30] sm:$0xf] %v548
  %581 = vst [vmem:[%s3 + $0x34] sm:$0xf] %v549
  %582 = vst [vmem:[%s3 + $0x38] sm:$0xf] %v550
  %583 = vst [vmem:[%s3 + $0x3c] sm:$0xf] %v551
  // Predicated region
  $region14: #{global_generator_forward.25} parent=0 // pred_check
    _
  $region15: #{global_generator_forward.25} parent=0 // pred_check_branch
    %585 = sbr.rel (0) target = $region17
  $region16: #{global_generator_forward.25} parent=0 // pred_region
    _
  $region17: #{global_generator_forward.25} parent=0 // pred_fallthru
    _
  // Predicated region
  $region18: #{global_generator_forward.25} parent=0 // pred_check
    _
  $region19: #{global_generator_forward.25} parent=0 // pred_check_branch
    %587 = sbr.rel (0) target = $region21
  $region20: #{global_generator_forward.25} parent=0 // pred_region
    _
  $region21: #{global_generator_forward.25} parent=0 // pred_fallthru
    _
  // Predicated region
  $region22: #{global_generator_forward.25} parent=0 // pred_check
    _
  $region23: #{global_generator_forward.25} parent=0 // pred_check_branch
    %589 = sbr.rel (0) target = $region25
  $region24: #{global_generator_forward.25} parent=0 // pred_region
    _
  $region25: #{global_generator_forward.25} parent=0 // pred_fallthru
    _
  // Predicated region
  $region26: #{global_generator_forward.25} parent=0 // pred_check
    _
  $region27: #{global_generator_forward.25} parent=0 // pred_check_branch
    %591 = sbr.rel (0) target = $region29
  $region28: #{global_generator_forward.25} parent=0 // pred_region
    _
  $region29: #{global_generator_forward.25} parent=0 // pred_fallthru
    _

// kernel: global_generator_forward.26
$region0: #{global_generator_forward.26}
  #allocation0 [shape = 'u32[]', space=smem, size = 0x4, offset = 0x4, fixed_abs, tag = 'smem constant byte address 0x4 - core index']
  #allocation1 [shape = 'u32[144,128]{1,0:T(1,128)}', space=vmem, size = 0x12000, scoped, tag = 'internal scratch']
  %s0 = inlined_call_operand.vmem [shape: bf16[128,128], index: 0, kind: input, shape index: {}]
  %s1 = inlined_call_operand.vmem [shape: f32[1,128], index: 1, kind: input, shape index: {}]
  %s2 = inlined_call_operand.vmem [shape: f32[1,128], index: 2, kind: input, shape index: {}]
  %s3 = inlined_call_operand.vmem [shape: bf16[128,128], index: 3, kind: output, shape index: {}]
  %s4 = sld [smem:[#allocation0]]
  $region22: #{global_generator_forward.26} parent=0
    _
  %s6 = ssub.s32 1, %s4
  %s7 = scalar_select 0, %s6, %s4
  // Predicated region
  $region2: #{global_generator_forward.26} parent=0 // pred_check
    _
  $region3: #{global_generator_forward.26} parent=0 // pred_check_branch
    %9 = sbr.rel (0) target = $region5
  $region4: #{global_generator_forward.26} parent=0 // pred_region
    _
  $region5: #{global_generator_forward.26} parent=0 // pred_fallthru
    _
  // Predicated region
  $region6: #{global_generator_forward.26} parent=0 // pred_check
    _
  $region7: #{global_generator_forward.26} parent=0 // pred_check_branch
    %11 = sbr.rel (0) target = $region9
  $region8: #{global_generator_forward.26} parent=0 // pred_region
    _
  $region9: #{global_generator_forward.26} parent=0 // pred_fallthru
    _
  // Predicated region
  $region10: #{global_generator_forward.26} parent=0 // pred_check
    _
  $region11: #{global_generator_forward.26} parent=0 // pred_check_branch
    %13 = sbr.rel (0) target = $region13
  $region12: #{global_generator_forward.26} parent=0 // pred_region
    _
  $region13: #{global_generator_forward.26} parent=0 // pred_fallthru
    _
  %v14 = vld [vmem:[%s0] sm:$0xf]
  %v15 = vld [vmem:[%s0 + $0x4] sm:$0xf]
  %v16 = vld [vmem:[%s0 + $0x8] sm:$0xf]
  %v17 = vld [vmem:[%s0 + $0xc] sm:$0xf]
  %v18 = vld [vmem:[%s0 + $0x10] sm:$0xf]
  %v19 = vld [vmem:[%s0 + $0x14] sm:$0xf]
  %v20 = vld [vmem:[%s0 + $0x18] sm:$0xf]
  %v21 = vld [vmem:[%s0 + $0x1c] sm:$0xf]
  %v22 = vld [vmem:[%s0 + $0x20] sm:$0xf]
  %v23 = vld [vmem:[%s0 + $0x24] sm:$0xf]
  %v24 = vld [vmem:[%s0 + $0x28] sm:$0xf]
  %v25 = vld [vmem:[%s0 + $0x2c] sm:$0xf]
  %v26 = vld [vmem:[%s0 + $0x30] sm:$0xf]
  %v27 = vld [vmem:[%s0 + $0x34] sm:$0xf]
  %v28 = vld [vmem:[%s0 + $0x38] sm:$0xf]
  %v29 = vld [vmem:[%s0 + $0x3c] sm:$0xf]
  %v30 = vunpack.c.l.bf16 %v14
  %v31 = vunpack.c.l.bf16 %v15
  %v32 = vunpack.c.l.bf16 %v16
  %v33 = vunpack.c.l.bf16 %v17
  %v34 = vunpack.c.l.bf16 %v18
  %v35 = vunpack.c.l.bf16 %v19
  %v36 = vunpack.c.l.bf16 %v20
  %v37 = vunpack.c.l.bf16 %v21
  %v38 = vunpack.c.l.bf16 %v22
  %v39 = vunpack.c.l.bf16 %v23
  %v40 = vunpack.c.l.bf16 %v24
  %v41 = vunpack.c.l.bf16 %v25
  %v42 = vunpack.c.l.bf16 %v26
  %v43 = vunpack.c.l.bf16 %v27
  %v44 = vunpack.c.l.bf16 %v28
  %v45 = vunpack.c.l.bf16 %v29
  %v46 = vld [vmem:[%s1] sm:$0x1]
  %v48 = vlaneseq
  %v49 = vshrl.u32 %v48, 7
  %v50 = vsub.s32 0, %v49
  %v51 = vrot.slane %v46, %v50
  %v53 = vmul.f32 %v30, %v51
  %v54 = vmul.f32 %v31, %v51
  %v55 = vmul.f32 %v32, %v51
  %v56 = vmul.f32 %v33, %v51
  %v57 = vmul.f32 %v34, %v51
  %v58 = vmul.f32 %v35, %v51
  %v59 = vmul.f32 %v36, %v51
  %v60 = vmul.f32 %v37, %v51
  %v61 = vmul.f32 %v38, %v51
  %v62 = vmul.f32 %v39, %v51
  %v63 = vmul.f32 %v40, %v51
  %v64 = vmul.f32 %v41, %v51
  %v65 = vmul.f32 %v42, %v51
  %v66 = vmul.f32 %v43, %v51
  %v67 = vmul.f32 %v44, %v51
  %v68 = vmul.f32 %v45, %v51
  %v69 = vld [vmem:[%s2] sm:$0x1]
  %v71 = vlaneseq
  %v72 = vshrl.u32 %v71, 7
  %v73 = vsub.s32 0, %v72
  %v74 = vrot.slane %v69, %v73
  %v76 = vadd.f32 %v53, %v74
  %v77 = vadd.f32 %v54, %v74
  %v78 = vadd.f32 %v55, %v74
  %v79 = vadd.f32 %v56, %v74
  %v80 = vadd.f32 %v57, %v74
  %v81 = vadd.f32 %v58, %v74
  %v82 = vadd.f32 %v59, %v74
  %v83 = vadd.f32 %v60, %v74
  %v84 = vadd.f32 %v61, %v74
  %v85 = vadd.f32 %v62, %v74
  %v86 = vadd.f32 %v63, %v74
  %v87 = vadd.f32 %v64, %v74
  %v88 = vadd.f32 %v65, %v74
  %v89 = vadd.f32 %v66, %v74
  %v90 = vadd.f32 %v67, %v74
  %v91 = vadd.f32 %v68, %v74
  %v92 = vmax.f32 %v76, 0.0
  %v93 = vmax.f32 %v77, 0.0
  %v94 = vmax.f32 %v78, 0.0
  %v95 = vmax.f32 %v79, 0.0
  %v96 = vmax.f32 %v80, 0.0
  %v97 = vmax.f32 %v81, 0.0
  %v98 = vmax.f32 %v82, 0.0
  %v99 = vmax.f32 %v83, 0.0
  %v100 = vmax.f32 %v84, 0.0
  %v101 = vmax.f32 %v85, 0.0
  %v102 = vmax.f32 %v86, 0.0
  %v103 = vmax.f32 %v87, 0.0
  %v104 = vmax.f32 %v88, 0.0
  %v105 = vmax.f32 %v89, 0.0
  %v106 = vmax.f32 %v90, 0.0
  %v107 = vmax.f32 %v91, 0.0
  %v108 = vpack.c.bf16 %v93, %v92
  %v109 = vpack.c.bf16 %v95, %v94
  %v110 = vpack.c.bf16 %v97, %v96
  %v111 = vpack.c.bf16 %v99, %v98
  %v112 = vpack.c.bf16 %v101, %v100
  %v113 = vpack.c.bf16 %v103, %v102
  %v114 = vpack.c.bf16 %v105, %v104
  %v115 = vpack.c.bf16 %v107, %v106
  %v124 = vunpack.c.l.b16 %v108
  %v125 = vunpack.c.h.b16 %v108
  %v126 = vunpack.c.l.b16 %v109
  %v127 = vunpack.c.h.b16 %v109
  %v128 = vunpack.c.l.b16 %v110
  %v129 = vunpack.c.h.b16 %v110
  %v130 = vunpack.c.l.b16 %v111
  %v131 = vunpack.c.h.b16 %v111
  %v132 = vunpack.c.l.b16 %v112
  %v133 = vunpack.c.h.b16 %v112
  %v134 = vunpack.c.l.b16 %v113
  %v135 = vunpack.c.h.b16 %v113
  %v136 = vunpack.c.l.b16 %v114
  %v137 = vunpack.c.h.b16 %v114
  %v138 = vunpack.c.l.b16 %v115
  %v139 = vunpack.c.h.b16 %v115
  %v140 = vpack.c.b16 %v124, %v124
  %v141 = vpack.c.b16 %v125, %v125
  %v142 = vpack.c.b16 %v126, %v126
  %v143 = vpack.c.b16 %v127, %v127
  %v144 = vpack.c.b16 %v128, %v128
  %v145 = vpack.c.b16 %v129, %v129
  %v146 = vpack.c.b16 %v130, %v130
  %v147 = vpack.c.b16 %v131, %v131
  %v148 = vpack.c.b16 %v132, %v132
  %v149 = vpack.c.b16 %v133, %v133
  %v150 = vpack.c.b16 %v134, %v134
  %v151 = vpack.c.b16 %v135, %v135
  %v152 = vpack.c.b16 %v136, %v136
  %v153 = vpack.c.b16 %v137, %v137
  %v154 = vpack.c.b16 %v138, %v138
  %v155 = vpack.c.b16 %v139, %v139
  %172 = vst [vmem:[%s3] sm:$0xf] %v140
  %173 = vst [vmem:[%s3 + $0x4] sm:$0xf] %v141
  %174 = vst [vmem:[%s3 + $0x8] sm:$0xf] %v142
  %175 = vst [vmem:[%s3 + $0xc] sm:$0xf] %v143
  %176 = vst [vmem:[%s3 + $0x10] sm:$0xf] %v144
  %177 = vst [vmem:[%s3 + $0x14] sm:$0xf] %v145
  %178 = vst [vmem:[%s3 + $0x18] sm:$0xf] %v146
  %179 = vst [vmem:[%s3 + $0x1c] sm:$0xf] %v147
  %180 = vst [vmem:[%s3 + $0x20] sm:$0xf] %v148
  %181 = vst [vmem:[%s3 + $0x24] sm:$0xf] %v149
  %182 = vst [vmem:[%s3 + $0x28] sm:$0xf] %v150
  %183 = vst [vmem:[%s3 + $0x2c] sm:$0xf] %v151
  %184 = vst [vmem:[%s3 + $0x30] sm:$0xf] %v152
  %185 = vst [vmem:[%s3 + $0x34] sm:$0xf] %v153
  %186 = vst [vmem:[%s3 + $0x38] sm:$0xf] %v154
  %187 = vst [vmem:[%s3 + $0x3c] sm:$0xf] %v155
  // Predicated region
  $region14: #{global_generator_forward.26} parent=0 // pred_check
    _
  $region15: #{global_generator_forward.26} parent=0 // pred_check_branch
    %189 = sbr.rel (0) target = $region17
  $region16: #{global_generator_forward.26} parent=0 // pred_region
    _
  $region17: #{global_generator_forward.26} parent=0 // pred_fallthru
    _
  // Predicated region
  $region18: #{global_generator_forward.26} parent=0 // pred_check
    _
  $region19: #{global_generator_forward.26} parent=0 // pred_check_branch
    %191 = sbr.rel (0) target = $region21
  $region20: #{global_generator_forward.26} parent=0 // pred_region
    _
  $region21: #{global_generator_forward.26} parent=0 // pred_fallthru
    _

// kernel: global_generator_forward.28
$region0: #{global_generator_forward.28}
  #allocation0 [shape = 'u32[]', space=smem, size = 0x4, offset = 0x4, fixed_abs, tag = 'smem constant byte address 0x4 - core index']
  #allocation1 [shape = 'u32[144,128]{1,0:T(1,128)}', space=vmem, size = 0x12000, scoped, tag = 'internal scratch']
  %s0 = inlined_call_operand.vmem [shape: bf16[32,128], index: 0, kind: input, shape index: {}]
  %s1 = inlined_call_operand.vmem [shape: f32[1,128], index: 1, kind: input, shape index: {}]
  %s2 = inlined_call_operand.vmem [shape: f32[1,128], index: 2, kind: input, shape index: {}]
  %s3 = inlined_call_operand.vmem [shape: bf16[32,128], index: 3, kind: output, shape index: {}]
  %s4 = sld [smem:[#allocation0]]
  $region22: #{global_generator_forward.28} parent=0
    _
  %s6 = ssub.s32 1, %s4
  %s7 = scalar_select 0, %s6, %s4
  // Predicated region
  $region2: #{global_generator_forward.28} parent=0 // pred_check
    _
  $region3: #{global_generator_forward.28} parent=0 // pred_check_branch
    %9 = sbr.rel (0) target = $region5
  $region4: #{global_generator_forward.28} parent=0 // pred_region
    _
  $region5: #{global_generator_forward.28} parent=0 // pred_fallthru
    _
  // Predicated region
  $region6: #{global_generator_forward.28} parent=0 // pred_check
    _
  $region7: #{global_generator_forward.28} parent=0 // pred_check_branch
    %11 = sbr.rel (0) target = $region9
  $region8: #{global_generator_forward.28} parent=0 // pred_region
    _
  $region9: #{global_generator_forward.28} parent=0 // pred_fallthru
    _
  // Predicated region
  $region10: #{global_generator_forward.28} parent=0 // pred_check
    _
  $region11: #{global_generator_forward.28} parent=0 // pred_check_branch
    %13 = sbr.rel (0) target = $region13
  $region12: #{global_generator_forward.28} parent=0 // pred_region
    _
  $region13: #{global_generator_forward.28} parent=0 // pred_fallthru
    _
  %v14 = vld [vmem:[%s0] sm:$0xf]
  %v15 = vld [vmem:[%s0 + $0x4] sm:$0xf]
  %v16 = vld [vmem:[%s0 + $0x8] sm:$0xf]
  %v17 = vld [vmem:[%s0 + $0xc] sm:$0xf]
  %v18 = vunpack.c.l.bf16 %v14
  %v19 = vunpack.c.l.bf16 %v15
  %v20 = vunpack.c.l.bf16 %v16
  %v21 = vunpack.c.l.bf16 %v17
  %v22 = vld [vmem:[%s1] sm:$0x1]
  %v24 = vlaneseq
  %v25 = vshrl.u32 %v24, 7
  %v26 = vsub.s32 0, %v25
  %v27 = vrot.slane %v22, %v26
  %v29 = vmul.f32 %v18, %v27
  %v30 = vmul.f32 %v19, %v27
  %v31 = vmul.f32 %v20, %v27
  %v32 = vmul.f32 %v21, %v27
  %v33 = vld [vmem:[%s2] sm:$0x1]
  %v35 = vlaneseq
  %v36 = vshrl.u32 %v35, 7
  %v37 = vsub.s32 0, %v36
  %v38 = vrot.slane %v33, %v37
  %v40 = vadd.f32 %v29, %v38
  %v41 = vadd.f32 %v30, %v38
  %v42 = vadd.f32 %v31, %v38
  %v43 = vadd.f32 %v32, %v38
  %v44 = vmax.f32 %v40, 0.0
  %v45 = vmax.f32 %v41, 0.0
  %v46 = vmax.f32 %v42, 0.0
  %v47 = vmax.f32 %v43, 0.0
  %v48 = vpack.c.bf16 %v45, %v44
  %v49 = vpack.c.bf16 %v47, %v46
  %v52 = vunpack.c.l.b16 %v48
  %v53 = vunpack.c.h.b16 %v48
  %v54 = vunpack.c.l.b16 %v49
  %v55 = vunpack.c.h.b16 %v49
  %v56 = vpack.c.b16 %v52, %v52
  %v57 = vpack.c.b16 %v53, %v53
  %v58 = vpack.c.b16 %v54, %v54
  %v59 = vpack.c.b16 %v55, %v55
  %64 = vst [vmem:[%s3] sm:$0xf] %v56
  %65 = vst [vmem:[%s3 + $0x4] sm:$0xf] %v57
  %66 = vst [vmem:[%s3 + $0x8] sm:$0xf] %v58
  %67 = vst [vmem:[%s3 + $0xc] sm:$0xf] %v59
  // Predicated region
  $region14: #{global_generator_forward.28} parent=0 // pred_check
    _
  $region15: #{global_generator_forward.28} parent=0 // pred_check_branch
    %69 = sbr.rel (0) target = $region17
  $region16: #{global_generator_forward.28} parent=0 // pred_region
    _
  $region17: #{global_generator_forward.28} parent=0 // pred_fallthru
    _
  // Predicated region
  $region18: #{global_generator_forward.28} parent=0 // pred_check
    _
  $region19: #{global_generator_forward.28} parent=0 // pred_check_branch
    %71 = sbr.rel (0) target = $region21
  $region20: #{global_generator_forward.28} parent=0 // pred_region
    _
  $region21: #{global_generator_forward.28} parent=0 // pred_fallthru
    _

// kernel: global_generator_forward.27
$region0: #{global_generator_forward.27}
  #allocation0 [shape = 'u32[]', space=smem, size = 0x4, offset = 0x4, fixed_abs, tag = 'smem constant byte address 0x4 - core index']
  #allocation1 [shape = 'u32[144,128]{1,0:T(1,128)}', space=vmem, size = 0x12000, scoped, tag = 'internal scratch']
  %s0 = inlined_call_operand.vmem [shape: bf16[32,384], index: 0, kind: input, shape index: {}]
  %s1 = inlined_call_operand.vmem [shape: bf16[384,128], index: 1, kind: input, shape index: {}]
  %s2 = inlined_call_operand.vmem [shape: f32[1,128], index: 2, kind: input, shape index: {}]
  %s3 = inlined_call_operand.vmem [shape: bf16[32,128], index: 3, kind: output, shape index: {0}]
  %s4 = inlined_call_operand.vmem [shape: f32[1,8,128], index: 4, kind: output, shape index: {1}]
  %5 = xla_tuple %s3, %s4
  %s6 = sld [smem:[#allocation0]]
  $region30: #{global_generator_forward.27} parent=0
    _
  %s8 = ssub.s32 1, %s6
  %s9 = scalar_select 0, %s8, %s6
  // Predicated region
  $region2: #{global_generator_forward.27} parent=0 // pred_check
    _
  $region3: #{global_generator_forward.27} parent=0 // pred_check_branch
    %11 = sbr.rel (0) target = $region5
  $region4: #{global_generator_forward.27} parent=0 // pred_region
    _
  $region5: #{global_generator_forward.27} parent=0 // pred_fallthru
    _
  // Predicated region
  $region6: #{global_generator_forward.27} parent=0 // pred_check
    _
  $region7: #{global_generator_forward.27} parent=0 // pred_check_branch
    %13 = sbr.rel (0) target = $region9
  $region8: #{global_generator_forward.27} parent=0 // pred_region
    _
  $region9: #{global_generator_forward.27} parent=0 // pred_fallthru
    _
  // Predicated region
  $region10: #{global_generator_forward.27} parent=0 // pred_check
    _
  $region11: #{global_generator_forward.27} parent=0 // pred_check_branch
    %15 = sbr.rel (0) target = $region13
  $region12: #{global_generator_forward.27} parent=0 // pred_region
    _
  $region13: #{global_generator_forward.27} parent=0 // pred_fallthru
    _
  %v17 = vld [vmem:[%s0] sm:$0xff]
  %v18 = vld [vmem:[%s0 + $0x8] sm:$0xf]
  %v19 = vld [vmem:[%s0 + $0xc] sm:$0xff]
  %v20 = vld [vmem:[%s0 + $0x14] sm:$0xf]
  %v21 = vld [vmem:[%s0 + $0x18] sm:$0xff]
  %v22 = vld [vmem:[%s0 + $0x20] sm:$0xf]
  %v23 = vld [vmem:[%s0 + $0x24] sm:$0xff]
  %v24 = vld [vmem:[%s0 + $0x2c] sm:$0xf]
  %v25 = vld [vmem:[%s1] sm:$0xf]
  %v26 = vld [vmem:[%s1 + $0x4] sm:$0xf]
  %v27 = vld [vmem:[%s1 + $0x8] sm:$0xf]
  %v28 = vld [vmem:[%s1 + $0xc] sm:$0xf]
  %v29 = vld [vmem:[%s1 + $0x10] sm:$0xf]
  %v30 = vld [vmem:[%s1 + $0x14] sm:$0xf]
  %v31 = vld [vmem:[%s1 + $0x18] sm:$0xf]
  %v32 = vld [vmem:[%s1 + $0x1c] sm:$0xf]
  %v33 = vld [vmem:[%s1 + $0x20] sm:$0xf]
  %v34 = vld [vmem:[%s1 + $0x24] sm:$0xf]
  %v35 = vld [vmem:[%s1 + $0x28] sm:$0xf]
  %v36 = vld [vmem:[%s1 + $0x2c] sm:$0xf]
  %v37 = vld [vmem:[%s1 + $0x30] sm:$0xf]
  %v38 = vld [vmem:[%s1 + $0x34] sm:$0xf]
  %v39 = vld [vmem:[%s1 + $0x38] sm:$0xf]
  %v40 = vld [vmem:[%s1 + $0x3c] sm:$0xf]
  %v41 = vld [vmem:[%s1 + $0x40] sm:$0xf]
  %v42 = vld [vmem:[%s1 + $0x44] sm:$0xf]
  %v43 = vld [vmem:[%s1 + $0x48] sm:$0xf]
  %v44 = vld [vmem:[%s1 + $0x4c] sm:$0xf]
  %v45 = vld [vmem:[%s1 + $0x50] sm:$0xf]
  %v46 = vld [vmem:[%s1 + $0x54] sm:$0xf]
  %v47 = vld [vmem:[%s1 + $0x58] sm:$0xf]
  %v48 = vld [vmem:[%s1 + $0x5c] sm:$0xf]
  %v49 = vld [vmem:[%s1 + $0x60] sm:$0xf]
  %v50 = vld [vmem:[%s1 + $0x64] sm:$0xf]
  %v51 = vld [vmem:[%s1 + $0x68] sm:$0xf]
  %v52 = vld [vmem:[%s1 + $0x6c] sm:$0xf]
  %v53 = vld [vmem:[%s1 + $0x70] sm:$0xf]
  %v54 = vld [vmem:[%s1 + $0x74] sm:$0xf]
  %v55 = vld [vmem:[%s1 + $0x78] sm:$0xf]
  %v56 = vld [vmem:[%s1 + $0x7c] sm:$0xf]
  %v57 = vld [vmem:[%s1 + $0x80] sm:$0xf]
  %v58 = vld [vmem:[%s1 + $0x84] sm:$0xf]
  %v59 = vld [vmem:[%s1 + $0x88] sm:$0xf]
  %v60 = vld [vmem:[%s1 + $0x8c] sm:$0xf]
  %v61 = vld [vmem:[%s1 + $0x90] sm:$0xf]
  %v62 = vld [vmem:[%s1 + $0x94] sm:$0xf]
  %v63 = vld [vmem:[%s1 + $0x98] sm:$0xf]
  %v64 = vld [vmem:[%s1 + $0x9c] sm:$0xf]
  %v65 = vld [vmem:[%s1 + $0xa0] sm:$0xf]
  %v66 = vld [vmem:[%s1 + $0xa4] sm:$0xf]
  %v67 = vld [vmem:[%s1 + $0xa8] sm:$0xf]
  %v68 = vld [vmem:[%s1 + $0xac] sm:$0xf]
  %v69 = vld [vmem:[%s1 + $0xb0] sm:$0xf]
  %v70 = vld [vmem:[%s1 + $0xb4] sm:$0xf]
  %v71 = vld [vmem:[%s1 + $0xb8] sm:$0xf]
  %v72 = vld [vmem:[%s1 + $0xbc] sm:$0xf]
  %v73 = vld [vmem:[%s2] sm:$0x1]
  %v75 = vlaneseq
  %v76 = vshrl.u32 %v75, 7
  %v77 = vsub.s32 0, %v76
  %v78 = vrot.slane %v73, %v77
  %v88 = vunpack.c.l.b16 %v17
  %v89 = vunpack.c.h.b16 %v17
  %v90 = vunpack.c.l.b16 %v18
  %v91 = vunpack.c.l.b16 %v19
  %v92 = vunpack.c.h.b16 %v19
  %v93 = vunpack.c.l.b16 %v20
  %v94 = vunpack.c.l.b16 %v21
  %v95 = vunpack.c.h.b16 %v21
  %v96 = vunpack.c.l.b16 %v22
  %v97 = vunpack.c.l.b16 %v23
  %v98 = vunpack.c.h.b16 %v23
  %v99 = vunpack.c.l.b16 %v24
  %v100 = vpack.c.b16 %v91, %v88
  %v101 = vpack.c.b16 %v92, %v89
  %v102 = vpack.c.b16 %v93, %v90
  %v103 = vpack.c.b16 %v97, %v94
  %v104 = vpack.c.b16 %v98, %v95
  %v105 = vpack.c.b16 %v99, %v96
  %v160 = vunpack.c.l.b16 %v25
  %v161 = vunpack.c.l.b16 %v26
  %v162 = vunpack.c.l.b16 %v27
  %v163 = vunpack.c.l.b16 %v28
  %v164 = vunpack.c.l.b16 %v29
  %v165 = vunpack.c.l.b16 %v30
  %v166 = vunpack.c.l.b16 %v31
  %v167 = vunpack.c.l.b16 %v32
  %v168 = vunpack.c.l.b16 %v33
  %v169 = vunpack.c.l.b16 %v34
  %v170 = vunpack.c.l.b16 %v35
  %v171 = vunpack.c.l.b16 %v36
  %v172 = vunpack.c.l.b16 %v37
  %v173 = vunpack.c.l.b16 %v38
  %v174 = vunpack.c.l.b16 %v39
  %v175 = vunpack.c.l.b16 %v40
  %v176 = vunpack.c.l.b16 %v41
  %v177 = vunpack.c.l.b16 %v42
  %v178 = vunpack.c.l.b16 %v43
  %v179 = vunpack.c.l.b16 %v44
  %v180 = vunpack.c.l.b16 %v45
  %v181 = vunpack.c.l.b16 %v46
  %v182 = vunpack.c.l.b16 %v47
  %v183 = vunpack.c.l.b16 %v48
  %v184 = vunpack.c.l.b16 %v49
  %v185 = vunpack.c.l.b16 %v50
  %v186 = vunpack.c.l.b16 %v51
  %v187 = vunpack.c.l.b16 %v52
  %v188 = vunpack.c.l.b16 %v53
  %v189 = vunpack.c.l.b16 %v54
  %v190 = vunpack.c.l.b16 %v55
  %v191 = vunpack.c.l.b16 %v56
  %v192 = vunpack.c.l.b16 %v57
  %v193 = vunpack.c.l.b16 %v58
  %v194 = vunpack.c.l.b16 %v59
  %v195 = vunpack.c.l.b16 %v60
  %v196 = vunpack.c.l.b16 %v61
  %v197 = vunpack.c.l.b16 %v62
  %v198 = vunpack.c.l.b16 %v63
  %v199 = vunpack.c.l.b16 %v64
  %v200 = vunpack.c.l.b16 %v65
  %v201 = vunpack.c.l.b16 %v66
  %v202 = vunpack.c.l.b16 %v67
  %v203 = vunpack.c.l.b16 %v68
  %v204 = vunpack.c.l.b16 %v69
  %v205 = vunpack.c.l.b16 %v70
  %v206 = vunpack.c.l.b16 %v71
  %v207 = vunpack.c.l.b16 %v72
  %v208 = vpack.c.b16 %v161, %v160
  %v209 = vpack.c.b16 %v163, %v162
  %v210 = vpack.c.b16 %v165, %v164
  %v211 = vpack.c.b16 %v167, %v166
  %v212 = vpack.c.b16 %v169, %v168
  %v213 = vpack.c.b16 %v171, %v170
  %v214 = vpack.c.b16 %v173, %v172
  %v215 = vpack.c.b16 %v175, %v174
  %v216 = vpack.c.b16 %v177, %v176
  %v217 = vpack.c.b16 %v179, %v178
  %v218 = vpack.c.b16 %v181, %v180
  %v219 = vpack.c.b16 %v183, %v182
  %v220 = vpack.c.b16 %v185, %v184
  %v221 = vpack.c.b16 %v187, %v186
  %v222 = vpack.c.b16 %v189, %v188
  %v223 = vpack.c.b16 %v191, %v190
  %v224 = vpack.c.b16 %v193, %v192
  %v225 = vpack.c.b16 %v195, %v194
  %v226 = vpack.c.b16 %v197, %v196
  %v227 = vpack.c.b16 %v199, %v198
  %v228 = vpack.c.b16 %v201, %v200
  %v229 = vpack.c.b16 %v203, %v202
  %v230 = vpack.c.b16 %v205, %v204
  %v231 = vpack.c.b16 %v207, %v206
  %256 = vmatprep.subr.bf16.mxu0 0
  %257 = vmatpush1.bf16.msra.mxu0 %v215
  %258 = vmatprep.subr.bf16.mxu0 0
  %259 = vmatpush1.bf16.msra.mxu0 %v214
  %260 = vmatprep.subr.bf16.mxu0 0
  %261 = vmatpush1.bf16.msra.mxu0 %v213
  %262 = vmatprep.subr.bf16.mxu0 0
  %263 = vmatpush1.bf16.msra.mxu0 %v212
  %264 = vmatprep.subr.bf16.mxu0 0
  %265 = vmatpush1.bf16.msra.mxu0 %v211
  %266 = vmatprep.subr.bf16.mxu0 0
  %267 = vmatpush1.bf16.msra.mxu0 %v210
  %268 = vmatprep.subr.bf16.mxu0 0
  %269 = vmatpush1.bf16.msra.mxu0 %v209
  %270 = vmatprep.subr.bf16.mxu0 0
  %271 = vmatpush1.bf16.msra.mxu0 %v208
  %272 = vmatprep.subr.bf16.mxu0 0
  %273 = vmatpush2.bf16.msra.mxu0 %v223
  %274 = vmatprep.subr.bf16.mxu0 0
  %275 = vmatpush2.bf16.msra.mxu0 %v222
  %276 = vmatprep.subr.bf16.mxu0 0
  %277 = vmatpush2.bf16.msra.mxu0 %v221
  %278 = vmatprep.subr.bf16.mxu0 0
  %279 = vmatpush2.bf16.msra.mxu0 %v220
  %280 = vmatprep.subr.bf16.mxu0 0
  %281 = vmatpush2.bf16.msra.mxu0 %v219
  %282 = vmatprep.subr.bf16.mxu0 0
  %283 = vmatpush2.bf16.msra.mxu0 %v218
  %284 = vmatprep.subr.bf16.mxu0 0
  %285 = vmatpush2.bf16.msra.mxu0 %v217
  %286 = vmatprep.subr.bf16.mxu0 0
  %287 = vmatpush2.bf16.msra.mxu0 %v216
  %288 = vmatprep.mubr.bf16.mxu0 %v101
  %289 = vmatmul.mubr.bf16.gmra.mxu0 %v100
  %v290 = vpop.f32.mrf.mxu0
  %v291 = vadd.f32 %v78, %v290
  %v292 = vpop.f32.mrf.mxu0
  %v293 = vpop.f32.mrf.mxu0
  %v294 = vadd.f32 %v78, %v293
  %v295 = vpop.f32.mrf.mxu0
  %296 = vmatprep.mubr.bf16.mxu0 %v104
  %297 = vmatmul.mubr.bf16.gmra.mxu0 %v103
  %v298 = vpop.f32.mrf.mxu0
  %v299 = vadd.f32 %v78, %v298
  %v300 = vpop.f32.mrf.mxu0
  %v301 = vpop.f32.mrf.mxu0
  %v302 = vadd.f32 %v78, %v301
  %v303 = vpop.f32.mrf.mxu0
  %304 = vdwg.mxu0
  %305 = vmatprep.subr.bf16.mxu0 0
  %306 = vmatpush1.bf16.msra.mxu0 %v231
  %307 = vmatprep.subr.bf16.mxu0 0
  %308 = vmatpush1.bf16.msra.mxu0 %v230
  %309 = vmatprep.subr.bf16.mxu0 0
  %310 = vmatpush1.bf16.msra.mxu0 %v229
  %311 = vmatprep.subr.bf16.mxu0 0
  %312 = vmatpush1.bf16.msra.mxu0 %v228
  %313 = vmatprep.subr.bf16.mxu0 0
  %314 = vmatpush1.bf16.msra.mxu0 %v227
  %315 = vmatprep.subr.bf16.mxu0 0
  %316 = vmatpush1.bf16.msra.mxu0 %v226
  %317 = vmatprep.subr.bf16.mxu0 0
  %318 = vmatpush1.bf16.msra.mxu0 %v225
  %319 = vmatprep.subr.bf16.mxu0 0
  %320 = vmatpush1.bf16.msra.mxu0 %v224
  %321 = vmatprep.subr.bf16.mxu0 0
  %322 = vmatpush2.bf16.msra.mxu0 0
  %323 = vmatprep.subr.bf16.mxu0 0
  %324 = vmatpush2.bf16.msra.mxu0 0
  %325 = vmatprep.subr.bf16.mxu0 0
  %326 = vmatpush2.bf16.msra.mxu0 0
  %327 = vmatprep.subr.bf16.mxu0 0
  %328 = vmatpush2.bf16.msra.mxu0 0
  %329 = vmatprep.subr.bf16.mxu0 0
  %330 = vmatpush2.bf16.msra.mxu0 0
  %331 = vmatprep.subr.bf16.mxu0 0
  %332 = vmatpush2.bf16.msra.mxu0 0
  %333 = vmatprep.subr.bf16.mxu0 0
  %334 = vmatpush2.bf16.msra.mxu0 0
  %335 = vmatprep.subr.bf16.mxu0 0
  %336 = vmatpush2.bf16.msra.mxu0 0
  %337 = vmatprep.mubr.bf16.mxu0 0
  %338 = vmatmul.mubr.bf16.gmra.mxu0 %v102
  %v339 = vpop.f32.mrf.mxu0
  %v340 = vadd.f32 %v291, %v339
  %v341 = vpop.f32.mrf.mxu0
  %v342 = vpop.f32.mrf.mxu0
  %v343 = vadd.f32 %v294, %v342
  %v344 = vpop.f32.mrf.mxu0
  %345 = vmatprep.mubr.bf16.mxu0 0
  %346 = vmatmul.mubr.bf16.gmra.mxu0 %v105
  %v347 = vpop.f32.mrf.mxu0
  %v348 = vadd.f32 %v299, %v347
  %v349 = vpop.f32.mrf.mxu0
  %v350 = vpop.f32.mrf.mxu0
  %v351 = vadd.f32 %v302, %v350
  %v352 = vpop.f32.mrf.mxu0
  %353 = vdwg.mxu0
  %s354 = smul.u32 0, 32
  %v355 = vlaneseq
  %v356 = vshrl.u32 %v355, 7
  %v357 = vadd.s32 %v356, 8
  %v358 = vadd.s32 %v356, 16
  %v359 = vadd.s32 %v356, 24
  %v360 = vstv %s354
  %v361 = vadd.s32 %v360, %v356
  %v362 = vadd.s32 %v360, %v357
  %v363 = vadd.s32 %v360, %v358
  %v364 = vadd.s32 %v360, %v359
  %vm365 = vcmp.lt.s32.totalorder %v361, 32
  %vm366 = vcmp.lt.s32.totalorder %v362, 32
  %vm367 = vcmp.lt.s32.totalorder %v363, 32
  %vm368 = vcmp.lt.s32.totalorder %v364, 32
  %v369 = vsel %vm365, 1, 0
  %v370 = vsel %vm366, 1, 0
  %v371 = vsel %vm367, 1, 0
  %v372 = vsel %vm368, 1, 0
  %v373 = vcvt.s32.f32 %v369
  %v374 = vcvt.s32.f32 %v370
  %v375 = vcvt.s32.f32 %v371
  %v376 = vcvt.s32.f32 %v372
  %v377 = vmul.f32 %v340, %v373
  %v378 = vmul.f32 %v343, %v374
  %v379 = vmul.f32 %v348, %v375
  %v380 = vmul.f32 %v351, %v376
  %v381 = vadd.f32 %v377, %v378
  %v382 = vadd.f32 %v381, %v379
  %v383 = vadd.f32 %v382, %v380
  %v384 = vrot.slane %v383, 4
  %v385 = vadd.f32 %v383, %v384
  %v386 = vrot.slane %v385, 2
  %v387 = vadd.f32 %v385, %v386
  %v388 = vrot.slane %v387, 1
  %v389 = vadd.f32 %v387, %v388
  %v390 = vmul.f32 %v377, %v377
  %v391 = vmul.f32 %v378, %v378
  %v392 = vmul.f32 %v379, %v379
  %v393 = vmul.f32 %v380, %v380
  %v394 = vadd.f32 %v390, %v391
  %v395 = vadd.f32 %v394, %v392
  %v396 = vadd.f32 %v395, %v393
  %v397 = vrot.slane %v396, 4
  %v398 = vadd.f32 %v396, %v397
  %v399 = vrot.slane %v398, 2
  %v400 = vadd.f32 %v398, %v399
  %v401 = vrot.slane %v400, 1
  %v402 = vadd.f32 %v400, %v401
  %403 = vst [vmem:[%s4] sm:$0x1] %v389
  %404 = vst [vmem:[%s4 + $0x1] sm:$0x1] %v402
  %v405 = vpack.c.bf16 %v343, %v340
  %v406 = vpack.c.bf16 %v351, %v348
  %v409 = vunpack.c.l.b16 %v405
  %v410 = vunpack.c.h.b16 %v405
  %v411 = vunpack.c.l.b16 %v406
  %v412 = vunpack.c.h.b16 %v406
  %v413 = vpack.c.b16 %v409, %v409
  %v414 = vpack.c.b16 %v410, %v410
  %v415 = vpack.c.b16 %v411, %v411
  %v416 = vpack.c.b16 %v412, %v412
  %421 = vst [vmem:[%s3] sm:$0xf] %v413
  %422 = vst [vmem:[%s3 + $0x4] sm:$0xf] %v414
  %423 = vst [vmem:[%s3 + $0x8] sm:$0xf] %v415
  %424 = vst [vmem:[%s3 + $0xc] sm:$0xf] %v416
  // Predicated region
  $region14: #{global_generator_forward.27} parent=0 // pred_check
    _
  $region15: #{global_generator_forward.27} parent=0 // pred_check_branch
    %426 = sbr.rel (0) target = $region17
  $region16: #{global_generator_forward.27} parent=0 // pred_region
    _
  $region17: #{global_generator_forward.27} parent=0 // pred_fallthru
    _
  // Predicated region
  $region18: #{global_generator_forward.27} parent=0 // pred_check
    _
  $region19: #{global_generator_forward.27} parent=0 // pred_check_branch
    %428 = sbr.rel (0) target = $region21
  $region20: #{global_generator_forward.27} parent=0 // pred_region
    _
  $region21: #{global_generator_forward.27} parent=0 // pred_fallthru
    _
  // Predicated region
  $region22: #{global_generator_forward.27} parent=0 // pred_check
    _
  $region23: #{global_generator_forward.27} parent=0 // pred_check_branch
    %430 = sbr.rel (0) target = $region25
  $region24: #{global_generator_forward.27} parent=0 // pred_region
    _
  $region25: #{global_generator_forward.27} parent=0 // pred_fallthru
    _
  // Predicated region
  $region26: #{global_generator_forward.27} parent=0 // pred_check
    _
  $region27: #{global_generator_forward.27} parent=0 // pred_check_branch
    %432 = sbr.rel (0) target = $region29
  $region28: #{global_generator_forward.27} parent=0 // pred_region
    _
  $region29: #{global_generator_forward.27} parent=0 // pred_fallthru
    _

// kernel: global_generator_forward.32
$region0: #{global_generator_forward.32}
  #allocation0 [shape = 'u32[]', space=smem, size = 0x4, offset = 0x4, fixed_abs, tag = 'smem constant byte address 0x4 - core index']
  #allocation1 [shape = 'u32[144,128]{1,0:T(1,128)}', space=vmem, size = 0x12000, scoped, tag = 'internal scratch']
  %s0 = inlined_call_operand.vmem [shape: bf16[32,128], index: 0, kind: input, shape index: {}]
  %s1 = inlined_call_operand.vmem [shape: f32[1,128], index: 1, kind: input, shape index: {}]
  %s2 = inlined_call_operand.vmem [shape: f32[1,128], index: 2, kind: input, shape index: {}]
  %s3 = inlined_call_operand.vmem [shape: bf16[32,128], index: 3, kind: input, shape index: {}]
  %s4 = inlined_call_operand.vmem [shape: bf16[32,128], index: 4, kind: output, shape index: {}]
  %s5 = sld [smem:[#allocation0]]
  $region26: #{global_generator_forward.32} parent=0
    _
  %s7 = ssub.s32 1, %s5
  %s8 = scalar_select 0, %s7, %s5
  // Predicated region
  $region2: #{global_generator_forward.32} parent=0 // pred_check
    _
  $region3: #{global_generator_forward.32} parent=0 // pred_check_branch
    %10 = sbr.rel (0) target = $region5
  $region4: #{global_generator_forward.32} parent=0 // pred_region
    _
  $region5: #{global_generator_forward.32} parent=0 // pred_fallthru
    _
  // Predicated region
  $region6: #{global_generator_forward.32} parent=0 // pred_check
    _
  $region7: #{global_generator_forward.32} parent=0 // pred_check_branch
    %12 = sbr.rel (0) target = $region9
  $region8: #{global_generator_forward.32} parent=0 // pred_region
    _
  $region9: #{global_generator_forward.32} parent=0 // pred_fallthru
    _
  // Predicated region
  $region10: #{global_generator_forward.32} parent=0 // pred_check
    _
  $region11: #{global_generator_forward.32} parent=0 // pred_check_branch
    %14 = sbr.rel (0) target = $region13
  $region12: #{global_generator_forward.32} parent=0 // pred_region
    _
  $region13: #{global_generator_forward.32} parent=0 // pred_fallthru
    _
  // Predicated region
  $region14: #{global_generator_forward.32} parent=0 // pred_check
    _
  $region15: #{global_generator_forward.32} parent=0 // pred_check_branch
    %16 = sbr.rel (0) target = $region17
  $region16: #{global_generator_forward.32} parent=0 // pred_region
    _
  $region17: #{global_generator_forward.32} parent=0 // pred_fallthru
    _
  %v17 = vld [vmem:[%s0] sm:$0xf]
  %v18 = vld [vmem:[%s0 + $0x4] sm:$0xf]
  %v19 = vld [vmem:[%s0 + $0x8] sm:$0xf]
  %v20 = vld [vmem:[%s0 + $0xc] sm:$0xf]
  %v21 = vunpack.c.l.bf16 %v17
  %v22 = vunpack.c.l.bf16 %v18
  %v23 = vunpack.c.l.bf16 %v19
  %v24 = vunpack.c.l.bf16 %v20
  %v25 = vld [vmem:[%s1] sm:$0x1]
  %v27 = vlaneseq
  %v28 = vshrl.u32 %v27, 7
  %v29 = vsub.s32 0, %v28
  %v30 = vrot.slane %v25, %v29
  %v32 = vmul.f32 %v21, %v30
  %v33 = vmul.f32 %v22, %v30
  %v34 = vmul.f32 %v23, %v30
  %v35 = vmul.f32 %v24, %v30
  %v36 = vld [vmem:[%s2] sm:$0x1]
  %v38 = vlaneseq
  %v39 = vshrl.u32 %v38, 7
  %v40 = vsub.s32 0, %v39
  %v41 = vrot.slane %v36, %v40
  %v43 = vadd.f32 %v32, %v41
  %v44 = vadd.f32 %v33, %v41
  %v45 = vadd.f32 %v34, %v41
  %v46 = vadd.f32 %v35, %v41
  %v47 = vld [vmem:[%s3] sm:$0xf]
  %v48 = vld [vmem:[%s3 + $0x4] sm:$0xf]
  %v49 = vld [vmem:[%s3 + $0x8] sm:$0xf]
  %v50 = vld [vmem:[%s3 + $0xc] sm:$0xf]
  %v51 = vunpack.c.l.bf16 %v47
  %v52 = vunpack.c.l.bf16 %v48
  %v53 = vunpack.c.l.bf16 %v49
  %v54 = vunpack.c.l.bf16 %v50
  %v55 = vadd.f32 %v43, %v51
  %v56 = vadd.f32 %v44, %v52
  %v57 = vadd.f32 %v45, %v53
  %v58 = vadd.f32 %v46, %v54
  %v59 = vpack.c.bf16 %v56, %v55
  %v60 = vpack.c.bf16 %v58, %v57
  %v63 = vunpack.c.l.b16 %v59
  %v64 = vunpack.c.h.b16 %v59
  %v65 = vunpack.c.l.b16 %v60
  %v66 = vunpack.c.h.b16 %v60
  %v67 = vpack.c.b16 %v63, %v63
  %v68 = vpack.c.b16 %v64, %v64
  %v69 = vpack.c.b16 %v65, %v65
  %v70 = vpack.c.b16 %v66, %v66
  %75 = vst [vmem:[%s4] sm:$0xf] %v67
  %76 = vst [vmem:[%s4 + $0x4] sm:$0xf] %v68
  %77 = vst [vmem:[%s4 + $0x8] sm:$0xf] %v69
  %78 = vst [vmem:[%s4 + $0xc] sm:$0xf] %v70
  // Predicated region
  $region18: #{global_generator_forward.32} parent=0 // pred_check
    _
  $region19: #{global_generator_forward.32} parent=0 // pred_check_branch
    %80 = sbr.rel (0) target = $region21
  $region20: #{global_generator_forward.32} parent=0 // pred_region
    _
  $region21: #{global_generator_forward.32} parent=0 // pred_fallthru
    _
  // Predicated region
  $region22: #{global_generator_forward.32} parent=0 // pred_check
    _
  $region23: #{global_generator_forward.32} parent=0 // pred_check_branch
    %82 = sbr.rel (0) target = $region25
  $region24: #{global_generator_forward.32} parent=0 // pred_region
    _
  $region25: #{global_generator_forward.32} parent=0 // pred_fallthru
    _

// kernel: global_generator_forward.29
$region0: #{global_generator_forward.29}
  #allocation0 [shape = 'u32[]', space=smem, size = 0x4, offset = 0x4, fixed_abs, tag = 'smem constant byte address 0x4 - core index']
  #allocation1 [shape = 'u32[144,128]{1,0:T(1,128)}', space=vmem, size = 0x12000, scoped, tag = 'internal scratch']
  %s0 = inlined_call_operand.vmem [shape: bf16[32,640], index: 0, kind: input, shape index: {}]
  %s1 = inlined_call_operand.vmem [shape: bf16[640,128], index: 1, kind: input, shape index: {}]
  %s2 = inlined_call_operand.vmem [shape: f32[1,128], index: 2, kind: input, shape index: {}]
  %s3 = inlined_call_operand.vmem [shape: bf16[32,128], index: 3, kind: output, shape index: {0}]
  %s4 = inlined_call_operand.vmem [shape: f32[1,8,128], index: 4, kind: output, shape index: {1}]
  %5 = xla_tuple %s3, %s4
  %s6 = sld [smem:[#allocation0]]
  $region30: #{global_generator_forward.29} parent=0
    _
  %s8 = ssub.s32 1, %s6
  %s9 = scalar_select 0, %s8, %s6
  // Predicated region
  $region2: #{global_generator_forward.29} parent=0 // pred_check
    _
  $region3: #{global_generator_forward.29} parent=0 // pred_check_branch
    %11 = sbr.rel (0) target = $region5
  $region4: #{global_generator_forward.29} parent=0 // pred_region
    _
  $region5: #{global_generator_forward.29} parent=0 // pred_fallthru
    _
  // Predicated region
  $region6: #{global_generator_forward.29} parent=0 // pred_check
    _
  $region7: #{global_generator_forward.29} parent=0 // pred_check_branch
    %13 = sbr.rel (0) target = $region9
  $region8: #{global_generator_forward.29} parent=0 // pred_region
    _
  $region9: #{global_generator_forward.29} parent=0 // pred_fallthru
    _
  // Predicated region
  $region10: #{global_generator_forward.29} parent=0 // pred_check
    _
  $region11: #{global_generator_forward.29} parent=0 // pred_check_branch
    %15 = sbr.rel (0) target = $region13
  $region12: #{global_generator_forward.29} parent=0 // pred_region
    _
  $region13: #{global_generator_forward.29} parent=0 // pred_fallthru
    _
  %v17 = vld [vmem:[%s0] sm:$0xff]
  %v18 = vld [vmem:[%s0 + $0x8] sm:$0xff]
  %v19 = vld [vmem:[%s0 + $0x10] sm:$0xf]
  %v20 = vld [vmem:[%s0 + $0x14] sm:$0xff]
  %v21 = vld [vmem:[%s0 + $0x1c] sm:$0xff]
  %v22 = vld [vmem:[%s0 + $0x24] sm:$0xf]
  %v23 = vld [vmem:[%s0 + $0x28] sm:$0xff]
  %v24 = vld [vmem:[%s0 + $0x30] sm:$0xff]
  %v25 = vld [vmem:[%s0 + $0x38] sm:$0xf]
  %v26 = vld [vmem:[%s0 + $0x3c] sm:$0xff]
  %v27 = vld [vmem:[%s0 + $0x44] sm:$0xff]
  %v28 = vld [vmem:[%s0 + $0x4c] sm:$0xf]
  %v29 = vld [vmem:[%s1] sm:$0xf]
  %v30 = vld [vmem:[%s1 + $0x4] sm:$0xf]
  %v31 = vld [vmem:[%s1 + $0x8] sm:$0xf]
  %v32 = vld [vmem:[%s1 + $0xc] sm:$0xf]
  %v33 = vld [vmem:[%s1 + $0x10] sm:$0xf]
  %v34 = vld [vmem:[%s1 + $0x14] sm:$0xf]
  %v35 = vld [vmem:[%s1 + $0x18] sm:$0xf]
  %v36 = vld [vmem:[%s1 + $0x1c] sm:$0xf]
  %v37 = vld [vmem:[%s1 + $0x20] sm:$0xf]
  %v38 = vld [vmem:[%s1 + $0x24] sm:$0xf]
  %v39 = vld [vmem:[%s1 + $0x28] sm:$0xf]
  %v40 = vld [vmem:[%s1 + $0x2c] sm:$0xf]
  %v41 = vld [vmem:[%s1 + $0x30] sm:$0xf]
  %v42 = vld [vmem:[%s1 + $0x34] sm:$0xf]
  %v43 = vld [vmem:[%s1 + $0x38] sm:$0xf]
  %v44 = vld [vmem:[%s1 + $0x3c] sm:$0xf]
  %v45 = vld [vmem:[%s1 + $0x40] sm:$0xf]
  %v46 = vld [vmem:[%s1 + $0x44] sm:$0xf]
  %v47 = vld [vmem:[%s1 + $0x48] sm:$0xf]
  %v48 = vld [vmem:[%s1 + $0x4c] sm:$0xf]
  %v49 = vld [vmem:[%s1 + $0x50] sm:$0xf]
  %v50 = vld [vmem:[%s1 + $0x54] sm:$0xf]
  %v51 = vld [vmem:[%s1 + $0x58] sm:$0xf]
  %v52 = vld [vmem:[%s1 + $0x5c] sm:$0xf]
  %v53 = vld [vmem:[%s1 + $0x60] sm:$0xf]
  %v54 = vld [vmem:[%s1 + $0x64] sm:$0xf]
  %v55 = vld [vmem:[%s1 + $0x68] sm:$0xf]
  %v56 = vld [vmem:[%s1 + $0x6c] sm:$0xf]
  %v57 = vld [vmem:[%s1 + $0x70] sm:$0xf]
  %v58 = vld [vmem:[%s1 + $0x74] sm:$0xf]
  %v59 = vld [vmem:[%s1 + $0x78] sm:$0xf]
  %v60 = vld [vmem:[%s1 + $0x7c] sm:$0xf]
  %v61 = vld [vmem:[%s1 + $0x80] sm:$0xf]
  %v62 = vld [vmem:[%s1 + $0x84] sm:$0xf]
  %v63 = vld [vmem:[%s1 + $0x88] sm:$0xf]
  %v64 = vld [vmem:[%s1 + $0x8c] sm:$0xf]
  %v65 = vld [vmem:[%s1 + $0x90] sm:$0xf]
  %v66 = vld [vmem:[%s1 + $0x94] sm:$0xf]
  %v67 = vld [vmem:[%s1 + $0x98] sm:$0xf]
  %v68 = vld [vmem:[%s1 + $0x9c] sm:$0xf]
  %v69 = vld [vmem:[%s1 + $0xa0] sm:$0xf]
  %v70 = vld [vmem:[%s1 + $0xa4] sm:$0xf]
  %v71 = vld [vmem:[%s1 + $0xa8] sm:$0xf]
  %v72 = vld [vmem:[%s1 + $0xac] sm:$0xf]
  %v73 = vld [vmem:[%s1 + $0xb0] sm:$0xf]
  %v74 = vld [vmem:[%s1 + $0xb4] sm:$0xf]
  %v75 = vld [vmem:[%s1 + $0xb8] sm:$0xf]
  %v76 = vld [vmem:[%s1 + $0xbc] sm:$0xf]
  %v77 = vld [vmem:[%s1 + $0xc0] sm:$0xf]
  %v78 = vld [vmem:[%s1 + $0xc4] sm:$0xf]
  %v79 = vld [vmem:[%s1 + $0xc8] sm:$0xf]
  %v80 = vld [vmem:[%s1 + $0xcc] sm:$0xf]
  %v81 = vld [vmem:[%s1 + $0xd0] sm:$0xf]
  %v82 = vld [vmem:[%s1 + $0xd4] sm:$0xf]
  %v83 = vld [vmem:[%s1 + $0xd8] sm:$0xf]
  %v84 = vld [vmem:[%s1 + $0xdc] sm:$0xf]
  %v85 = vld [vmem:[%s1 + $0xe0] sm:$0xf]
  %v86 = vld [vmem:[%s1 + $0xe4] sm:$0xf]
  %v87 = vld [vmem:[%s1 + $0xe8] sm:$0xf]
  %v88 = vld [vmem:[%s1 + $0xec] sm:$0xf]
  %v89 = vld [vmem:[%s1 + $0xf0] sm:$0xf]
  %v90 = vld [vmem:[%s1 + $0xf4] sm:$0xf]
  %v91 = vld [vmem:[%s1 + $0xf8] sm:$0xf]
  %v92 = vld [vmem:[%s1 + $0xfc] sm:$0xf]
  %v93 = vld [vmem:[%s1 + $0x100] sm:$0xf]
  %v94 = vld [vmem:[%s1 + $0x104] sm:$0xf]
  %v95 = vld [vmem:[%s1 + $0x108] sm:$0xf]
  %v96 = vld [vmem:[%s1 + $0x10c] sm:$0xf]
  %v97 = vld [vmem:[%s1 + $0x110] sm:$0xf]
  %v98 = vld [vmem:[%s1 + $0x114] sm:$0xf]
  %v99 = vld [vmem:[%s1 + $0x118] sm:$0xf]
  %v100 = vld [vmem:[%s1 + $0x11c] sm:$0xf]
  %v101 = vld [vmem:[%s1 + $0x120] sm:$0xf]
  %v102 = vld [vmem:[%s1 + $0x124] sm:$0xf]
  %v103 = vld [vmem:[%s1 + $0x128] sm:$0xf]
  %v104 = vld [vmem:[%s1 + $0x12c] sm:$0xf]
  %v105 = vld [vmem:[%s1 + $0x130] sm:$0xf]
  %v106 = vld [vmem:[%s1 + $0x134] sm:$0xf]
  %v107 = vld [vmem:[%s1 + $0x138] sm:$0xf]
  %v108 = vld [vmem:[%s1 + $0x13c] sm:$0xf]
  %v109 = vld [vmem:[%s2] sm:$0x1]
  %v111 = vlaneseq
  %v112 = vshrl.u32 %v111, 7
  %v113 = vsub.s32 0, %v112
  %v114 = vrot.slane %v109, %v113
  %v128 = vunpack.c.l.b16 %v17
  %v129 = vunpack.c.h.b16 %v17
  %v130 = vunpack.c.l.b16 %v18
  %v131 = vunpack.c.h.b16 %v18
  %v132 = vunpack.c.l.b16 %v19
  %v133 = vunpack.c.l.b16 %v20
  %v134 = vunpack.c.h.b16 %v20
  %v135 = vunpack.c.l.b16 %v21
  %v136 = vunpack.c.h.b16 %v21
  %v137 = vunpack.c.l.b16 %v22
  %v138 = vunpack.c.l.b16 %v23
  %v139 = vunpack.c.h.b16 %v23
  %v140 = vunpack.c.l.b16 %v24
  %v141 = vunpack.c.h.b16 %v24
  %v142 = vunpack.c.l.b16 %v25
  %v143 = vunpack.c.l.b16 %v26
  %v144 = vunpack.c.h.b16 %v26
  %v145 = vunpack.c.l.b16 %v27
  %v146 = vunpack.c.h.b16 %v27
  %v147 = vunpack.c.l.b16 %v28
  %v148 = vpack.c.b16 %v133, %v128
  %v149 = vpack.c.b16 %v134, %v129
  %v150 = vpack.c.b16 %v135, %v130
  %v151 = vpack.c.b16 %v136, %v131
  %v152 = vpack.c.b16 %v137, %v132
  %v153 = vpack.c.b16 %v143, %v138
  %v154 = vpack.c.b16 %v144, %v139
  %v155 = vpack.c.b16 %v145, %v140
  %v156 = vpack.c.b16 %v146, %v141
  %v157 = vpack.c.b16 %v147, %v142
  %v248 = vunpack.c.l.b16 %v29
  %v249 = vunpack.c.l.b16 %v30
  %v250 = vunpack.c.l.b16 %v31
  %v251 = vunpack.c.l.b16 %v32
  %v252 = vunpack.c.l.b16 %v33
  %v253 = vunpack.c.l.b16 %v34
  %v254 = vunpack.c.l.b16 %v35
  %v255 = vunpack.c.l.b16 %v36
  %v256 = vunpack.c.l.b16 %v37
  %v257 = vunpack.c.l.b16 %v38
  %v258 = vunpack.c.l.b16 %v39
  %v259 = vunpack.c.l.b16 %v40
  %v260 = vunpack.c.l.b16 %v41
  %v261 = vunpack.c.l.b16 %v42
  %v262 = vunpack.c.l.b16 %v43
  %v263 = vunpack.c.l.b16 %v44
  %v264 = vunpack.c.l.b16 %v45
  %v265 = vunpack.c.l.b16 %v46
  %v266 = vunpack.c.l.b16 %v47
  %v267 = vunpack.c.l.b16 %v48
  %v268 = vunpack.c.l.b16 %v49
  %v269 = vunpack.c.l.b16 %v50
  %v270 = vunpack.c.l.b16 %v51
  %v271 = vunpack.c.l.b16 %v52
  %v272 = vunpack.c.l.b16 %v53
  %v273 = vunpack.c.l.b16 %v54
  %v274 = vunpack.c.l.b16 %v55
  %v275 = vunpack.c.l.b16 %v56
  %v276 = vunpack.c.l.b16 %v57
  %v277 = vunpack.c.l.b16 %v58
  %v278 = vunpack.c.l.b16 %v59
  %v279 = vunpack.c.l.b16 %v60
  %v280 = vunpack.c.l.b16 %v61
  %v281 = vunpack.c.l.b16 %v62
  %v282 = vunpack.c.l.b16 %v63
  %v283 = vunpack.c.l.b16 %v64
  %v284 = vunpack.c.l.b16 %v65
  %v285 = vunpack.c.l.b16 %v66
  %v286 = vunpack.c.l.b16 %v67
  %v287 = vunpack.c.l.b16 %v68
  %v288 = vunpack.c.l.b16 %v69
  %v289 = vunpack.c.l.b16 %v70
  %v290 = vunpack.c.l.b16 %v71
  %v291 = vunpack.c.l.b16 %v72
  %v292 = vunpack.c.l.b16 %v73
  %v293 = vunpack.c.l.b16 %v74
  %v294 = vunpack.c.l.b16 %v75
  %v295 = vunpack.c.l.b16 %v76
  %v296 = vunpack.c.l.b16 %v77
  %v297 = vunpack.c.l.b16 %v78
  %v298 = vunpack.c.l.b16 %v79
  %v299 = vunpack.c.l.b16 %v80
  %v300 = vunpack.c.l.b16 %v81
  %v301 = vunpack.c.l.b16 %v82
  %v302 = vunpack.c.l.b16 %v83
  %v303 = vunpack.c.l.b16 %v84
  %v304 = vunpack.c.l.b16 %v85
  %v305 = vunpack.c.l.b16 %v86
  %v306 = vunpack.c.l.b16 %v87
  %v307 = vunpack.c.l.b16 %v88
  %v308 = vunpack.c.l.b16 %v89
  %v309 = vunpack.c.l.b16 %v90
  %v310 = vunpack.c.l.b16 %v91
  %v311 = vunpack.c.l.b16 %v92
  %v312 = vunpack.c.l.b16 %v93
  %v313 = vunpack.c.l.b16 %v94
  %v314 = vunpack.c.l.b16 %v95
  %v315 = vunpack.c.l.b16 %v96
  %v316 = vunpack.c.l.b16 %v97
  %v317 = vunpack.c.l.b16 %v98
  %v318 = vunpack.c.l.b16 %v99
  %v319 = vunpack.c.l.b16 %v100
  %v320 = vunpack.c.l.b16 %v101
  %v321 = vunpack.c.l.b16 %v102
  %v322 = vunpack.c.l.b16 %v103
  %v323 = vunpack.c.l.b16 %v104
  %v324 = vunpack.c.l.b16 %v105
  %v325 = vunpack.c.l.b16 %v106
  %v326 = vunpack.c.l.b16 %v107
  %v327 = vunpack.c.l.b16 %v108
  %v328 = vpack.c.b16 %v249, %v248
  %v329 = vpack.c.b16 %v251, %v250
  %v330 = vpack.c.b16 %v253, %v252
  %v331 = vpack.c.b16 %v255, %v254
  %v332 = vpack.c.b16 %v257, %v256
  %v333 = vpack.c.b16 %v259, %v258
  %v334 = vpack.c.b16 %v261, %v260
  %v335 = vpack.c.b16 %v263, %v262
  %v336 = vpack.c.b16 %v265, %v264
  %v337 = vpack.c.b16 %v267, %v266
  %v338 = vpack.c.b16 %v269, %v268
  %v339 = vpack.c.b16 %v271, %v270
  %v340 = vpack.c.b16 %v273, %v272
  %v341 = vpack.c.b16 %v275, %v274
  %v342 = vpack.c.b16 %v277, %v276
  %v343 = vpack.c.b16 %v279, %v278
  %v344 = vpack.c.b16 %v281, %v280
  %v345 = vpack.c.b16 %v283, %v282
  %v346 = vpack.c.b16 %v285, %v284
  %v347 = vpack.c.b16 %v287, %v286
  %v348 = vpack.c.b16 %v289, %v288
  %v349 = vpack.c.b16 %v291, %v290
  %v350 = vpack.c.b16 %v293, %v292
  %v351 = vpack.c.b16 %v295, %v294
  %v352 = vpack.c.b16 %v297, %v296
  %v353 = vpack.c.b16 %v299, %v298
  %v354 = vpack.c.b16 %v301, %v300
  %v355 = vpack.c.b16 %v303, %v302
  %v356 = vpack.c.b16 %v305, %v304
  %v357 = vpack.c.b16 %v307, %v306
  %v358 = vpack.c.b16 %v309, %v308
  %v359 = vpack.c.b16 %v311, %v310
  %v360 = vpack.c.b16 %v313, %v312
  %v361 = vpack.c.b16 %v315, %v314
  %v362 = vpack.c.b16 %v317, %v316
  %v363 = vpack.c.b16 %v319, %v318
  %v364 = vpack.c.b16 %v321, %v320
  %v365 = vpack.c.b16 %v323, %v322
  %v366 = vpack.c.b16 %v325, %v324
  %v367 = vpack.c.b16 %v327, %v326
  %408 = vmatprep.subr.bf16.mxu0 0
  %409 = vmatpush1.bf16.msra.mxu0 %v335
  %410 = vmatprep.subr.bf16.mxu0 0
  %411 = vmatpush1.bf16.msra.mxu0 %v334
  %412 = vmatprep.subr.bf16.mxu0 0
  %413 = vmatpush1.bf16.msra.mxu0 %v333
  %414 = vmatprep.subr.bf16.mxu0 0
  %415 = vmatpush1.bf16.msra.mxu0 %v332
  %416 = vmatprep.subr.bf16.mxu0 0
  %417 = vmatpush1.bf16.msra.mxu0 %v331
  %418 = vmatprep.subr.bf16.mxu0 0
  %419 = vmatpush1.bf16.msra.mxu0 %v330
  %420 = vmatprep.subr.bf16.mxu0 0
  %421 = vmatpush1.bf16.msra.mxu0 %v329
  %422 = vmatprep.subr.bf16.mxu0 0
  %423 = vmatpush1.bf16.msra.mxu0 %v328
  %424 = vmatprep.subr.bf16.mxu0 0
  %425 = vmatpush2.bf16.msra.mxu0 %v343
  %426 = vmatprep.subr.bf16.mxu0 0
  %427 = vmatpush2.bf16.msra.mxu0 %v342
  %428 = vmatprep.subr.bf16.mxu0 0
  %429 = vmatpush2.bf16.msra.mxu0 %v341
  %430 = vmatprep.subr.bf16.mxu0 0
  %431 = vmatpush2.bf16.msra.mxu0 %v340
  %432 = vmatprep.subr.bf16.mxu0 0
  %433 = vmatpush2.bf16.msra.mxu0 %v339
  %434 = vmatprep.subr.bf16.mxu0 0
  %435 = vmatpush2.bf16.msra.mxu0 %v338
  %436 = vmatprep.subr.bf16.mxu0 0
  %437 = vmatpush2.bf16.msra.mxu0 %v337
  %438 = vmatprep.subr.bf16.mxu0 0
  %439 = vmatpush2.bf16.msra.mxu0 %v336
  %440 = vmatprep.mubr.bf16.mxu0 %v149
  %441 = vmatmul.mubr.bf16.gmra.mxu0 %v148
  %v442 = vpop.f32.mrf.mxu0
  %v443 = vadd.f32 %v114, %v442
  %v444 = vpop.f32.mrf.mxu0
  %v445 = vpop.f32.mrf.mxu0
  %v446 = vadd.f32 %v114, %v445
  %v447 = vpop.f32.mrf.mxu0
  %448 = vmatprep.mubr.bf16.mxu0 %v154
  %449 = vmatmul.mubr.bf16.gmra.mxu0 %v153
  %v450 = vpop.f32.mrf.mxu0
  %v451 = vadd.f32 %v114, %v450
  %v452 = vpop.f32.mrf.mxu0
  %v453 = vpop.f32.mrf.mxu0
  %v454 = vadd.f32 %v114, %v453
  %v455 = vpop.f32.mrf.mxu0
  %456 = vdwg.mxu0
  %457 = vmatprep.subr.bf16.mxu0 0
  %458 = vmatpush1.bf16.msra.mxu0 %v351
  %459 = vmatprep.subr.bf16.mxu0 0
  %460 = vmatpush1.bf16.msra.mxu0 %v350
  %461 = vmatprep.subr.bf16.mxu0 0
  %462 = vmatpush1.bf16.msra.mxu0 %v349
  %463 = vmatprep.subr.bf16.mxu0 0
  %464 = vmatpush1.bf16.msra.mxu0 %v348
  %465 = vmatprep.subr.bf16.mxu0 0
  %466 = vmatpush1.bf16.msra.mxu0 %v347
  %467 = vmatprep.subr.bf16.mxu0 0
  %468 = vmatpush1.bf16.msra.mxu0 %v346
  %469 = vmatprep.subr.bf16.mxu0 0
  %470 = vmatpush1.bf16.msra.mxu0 %v345
  %471 = vmatprep.subr.bf16.mxu0 0
  %472 = vmatpush1.bf16.msra.mxu0 %v344
  %473 = vmatprep.subr.bf16.mxu0 0
  %474 = vmatpush2.bf16.msra.mxu0 %v359
  %475 = vmatprep.subr.bf16.mxu0 0
  %476 = vmatpush2.bf16.msra.mxu0 %v358
  %477 = vmatprep.subr.bf16.mxu0 0
  %478 = vmatpush2.bf16.msra.mxu0 %v357
  %479 = vmatprep.subr.bf16.mxu0 0
  %480 = vmatpush2.bf16.msra.mxu0 %v356
  %481 = vmatprep.subr.bf16.mxu0 0
  %482 = vmatpush2.bf16.msra.mxu0 %v355
  %483 = vmatprep.subr.bf16.mxu0 0
  %484 = vmatpush2.bf16.msra.mxu0 %v354
  %485 = vmatprep.subr.bf16.mxu0 0
  %486 = vmatpush2.bf16.msra.mxu0 %v353
  %487 = vmatprep.subr.bf16.mxu0 0
  %488 = vmatpush2.bf16.msra.mxu0 %v352
  %489 = vmatprep.mubr.bf16.mxu0 %v151
  %490 = vmatmul.mubr.bf16.gmra.mxu0 %v150
  %v491 = vpop.f32.mrf.mxu0
  %v492 = vadd.f32 %v443, %v491
  %v493 = vpop.f32.mrf.mxu0
  %v494 = vpop.f32.mrf.mxu0
  %v495 = vadd.f32 %v446, %v494
  %v496 = vpop.f32.mrf.mxu0
  %497 = vmatprep.mubr.bf16.mxu0 %v156
  %498 = vmatmul.mubr.bf16.gmra.mxu0 %v155
  %v499 = vpop.f32.mrf.mxu0
  %v500 = vadd.f32 %v451, %v499
  %v501 = vpop.f32.mrf.mxu0
  %v502 = vpop.f32.mrf.mxu0
  %v503 = vadd.f32 %v454, %v502
  %v504 = vpop.f32.mrf.mxu0
  %505 = vdwg.mxu0
  %506 = vmatprep.subr.bf16.mxu0 0
  %507 = vmatpush1.bf16.msra.mxu0 %v367
  %508 = vmatprep.subr.bf16.mxu0 0
  %509 = vmatpush1.bf16.msra.mxu0 %v366
  %510 = vmatprep.subr.bf16.mxu0 0
  %511 = vmatpush1.bf16.msra.mxu0 %v365
  %512 = vmatprep.subr.bf16.mxu0 0
  %513 = vmatpush1.bf16.msra.mxu0 %v364
  %514 = vmatprep.subr.bf16.mxu0 0
  %515 = vmatpush1.bf16.msra.mxu0 %v363
  %516 = vmatprep.subr.bf16.mxu0 0
  %517 = vmatpush1.bf16.msra.mxu0 %v362
  %518 = vmatprep.subr.bf16.mxu0 0
  %519 = vmatpush1.bf16.msra.mxu0 %v361
  %520 = vmatprep.subr.bf16.mxu0 0
  %521 = vmatpush1.bf16.msra.mxu0 %v360
  %522 = vmatprep.subr.bf16.mxu0 0
  %523 = vmatpush2.bf16.msra.mxu0 0
  %524 = vmatprep.subr.bf16.mxu0 0
  %525 = vmatpush2.bf16.msra.mxu0 0
  %526 = vmatprep.subr.bf16.mxu0 0
  %527 = vmatpush2.bf16.msra.mxu0 0
  %528 = vmatprep.subr.bf16.mxu0 0
  %529 = vmatpush2.bf16.msra.mxu0 0
  %530 = vmatprep.subr.bf16.mxu0 0
  %531 = vmatpush2.bf16.msra.mxu0 0
  %532 = vmatprep.subr.bf16.mxu0 0
  %533 = vmatpush2.bf16.msra.mxu0 0
  %534 = vmatprep.subr.bf16.mxu0 0
  %535 = vmatpush2.bf16.msra.mxu0 0
  %536 = vmatprep.subr.bf16.mxu0 0
  %537 = vmatpush2.bf16.msra.mxu0 0
  %538 = vmatprep.mubr.bf16.mxu0 0
  %539 = vmatmul.mubr.bf16.gmra.mxu0 %v152
  %v540 = vpop.f32.mrf.mxu0
  %v541 = vadd.f32 %v492, %v540
  %v542 = vpop.f32.mrf.mxu0
  %v543 = vpop.f32.mrf.mxu0
  %v544 = vadd.f32 %v495, %v543
  %v545 = vpop.f32.mrf.mxu0
  %546 = vmatprep.mubr.bf16.mxu0 0
  %547 = vmatmul.mubr.bf16.gmra.mxu0 %v157
  %v548 = vpop.f32.mrf.mxu0
  %v549 = vadd.f32 %v500, %v548
  %v550 = vpop.f32.mrf.mxu0
  %v551 = vpop.f32.mrf.mxu0
  %v552 = vadd.f32 %v503, %v551
  %v553 = vpop.f32.mrf.mxu0
  %554 = vdwg.mxu0
  %s555 = smul.u32 0, 32
  %v556 = vlaneseq
  %v557 = vshrl.u32 %v556, 7
  %v558 = vadd.s32 %v557, 8
  %v559 = vadd.s32 %v557, 16
  %v560 = vadd.s32 %v557, 24
  %v561 = vstv %s555
  %v562 = vadd.s32 %v561, %v557
  %v563 = vadd.s32 %v561, %v558
  %v564 = vadd.s32 %v561, %v559
  %v565 = vadd.s32 %v561, %v560
  %vm566 = vcmp.lt.s32.totalorder %v562, 32
  %vm567 = vcmp.lt.s32.totalorder %v563, 32
  %vm568 = vcmp.lt.s32.totalorder %v564, 32
  %vm569 = vcmp.lt.s32.totalorder %v565, 32
  %v570 = vsel %vm566, 1, 0
  %v571 = vsel %vm567, 1, 0
  %v572 = vsel %vm568, 1, 0
  %v573 = vsel %vm569, 1, 0
  %v574 = vcvt.s32.f32 %v570
  %v575 = vcvt.s32.f32 %v571
  %v576 = vcvt.s32.f32 %v572
  %v577 = vcvt.s32.f32 %v573
  %v578 = vmul.f32 %v541, %v574
  %v579 = vmul.f32 %v544, %v575
  %v580 = vmul.f32 %v549, %v576
  %v581 = vmul.f32 %v552, %v577
  %v582 = vadd.f32 %v578, %v579
  %v583 = vadd.f32 %v582, %v580
  %v584 = vadd.f32 %v583, %v581
  %v585 = vrot.slane %v584, 4
  %v586 = vadd.f32 %v584, %v585
  %v587 = vrot.slane %v586, 2
  %v588 = vadd.f32 %v586, %v587
  %v589 = vrot.slane %v588, 1
  %v590 = vadd.f32 %v588, %v589
  %v591 = vmul.f32 %v578, %v578
  %v592 = vmul.f32 %v579, %v579
  %v593 = vmul.f32 %v580, %v580
  %v594 = vmul.f32 %v581, %v581
  %v595 = vadd.f32 %v591, %v592
  %v596 = vadd.f32 %v595, %v593
  %v597 = vadd.f32 %v596, %v594
  %v598 = vrot.slane %v597, 4
  %v599 = vadd.f32 %v597, %v598
  %v600 = vrot.slane %v599, 2
  %v601 = vadd.f32 %v599, %v600
  %v602 = vrot.slane %v601, 1
  %v603 = vadd.f32 %v601, %v602
  %604 = vst [vmem:[%s4] sm:$0x1] %v590
  %605 = vst [vmem:[%s4 + $0x1] sm:$0x1] %v603
  %v606 = vpack.c.bf16 %v544, %v541
  %v607 = vpack.c.bf16 %v552, %v549
  %v610 = vunpack.c.l.b16 %v606
  %v611 = vunpack.c.h.b16 %v606
  %v612 = vunpack.c.l.b16 %v607
  %v613 = vunpack.c.h.b16 %v607
  %v614 = vpack.c.b16 %v610, %v610
  %v615 = vpack.c.b16 %v611, %v611
  %v616 = vpack.c.b16 %v612, %v612
  %v617 = vpack.c.b16 %v613, %v613
  %622 = vst [vmem:[%s3] sm:$0xf] %v614
  %623 = vst [vmem:[%s3 + $0x4] sm:$0xf] %v615
  %624 = vst [vmem:[%s3 + $0x8] sm:$0xf] %v616
  %625 = vst [vmem:[%s3 + $0xc] sm:$0xf] %v617
  // Predicated region
  $region14: #{global_generator_forward.29} parent=0 // pred_check
    _
  $region15: #{global_generator_forward.29} parent=0 // pred_check_branch
    %627 = sbr.rel (0) target = $region17
  $region16: #{global_generator_forward.29} parent=0 // pred_region
    _
  $region17: #{global_generator_forward.29} parent=0 // pred_fallthru
    _
  // Predicated region
  $region18: #{global_generator_forward.29} parent=0 // pred_check
    _
  $region19: #{global_generator_forward.29} parent=0 // pred_check_branch
    %629 = sbr.rel (0) target = $region21
  $region20: #{global_generator_forward.29} parent=0 // pred_region
    _
  $region21: #{global_generator_forward.29} parent=0 // pred_fallthru
    _
  // Predicated region
  $region22: #{global_generator_forward.29} parent=0 // pred_check
    _
  $region23: #{global_generator_forward.29} parent=0 // pred_check_branch
    %631 = sbr.rel (0) target = $region25
  $region24: #{global_generator_forward.29} parent=0 // pred_region
    _
  $region25: #{global_generator_forward.29} parent=0 // pred_fallthru
    _
  // Predicated region
  $region26: #{global_generator_forward.29} parent=0 // pred_check
    _
  $region27: #{global_generator_forward.29} parent=0 // pred_check_branch
    %633 = sbr.rel (0) target = $region29
  $region28: #{global_generator_forward.29} parent=0 // pred_region
    _
  $region29: #{global_generator_forward.29} parent=0 // pred_fallthru
    _

// kernel: tile.29
$region0: #{tile.29}
  #allocation0 [shape = 's32[1]{0}', space=sflag, size = 0x4, scoped, tag = 'scoped memory for tile.29']
  %s0 = inlined_call_operand.vmem [shape: f32[128], index: 0, kind: input, shape index: {}]
  %s1 = inlined_call_operand.vmem [shape: f32[4,128], index: 1, kind: output, shape index: {}]
  // Predicated region
  $region2: #{tile.29} parent=0 // pred_check
    _
  $region3: #{tile.29} parent=0 // pred_check_branch
    %3 = sbr.rel (0) target = $region5
  $region4: #{tile.29} parent=0 // pred_region
    _
  $region5: #{tile.29} parent=0 // pred_fallthru
    _
  %v4 = vld [vmem:[%s0] ss:$0 sm:$0xff]
  %5 = vst [vmem:[%s1] sm:$0xf] %v4

// kernel: global_generator_forward.41
$region0: #{global_generator_forward.41}
  #allocation0 [shape = 'u32[]', space=smem, size = 0x4, offset = 0x4, fixed_abs, tag = 'smem constant byte address 0x4 - core index']
  #allocation1 [shape = 'u32[144,128]{1,0:T(1,128)}', space=vmem, size = 0x12000, scoped, tag = 'internal scratch']
  %s0 = inlined_call_operand.vmem [shape: bf16[32,256], index: 0, kind: input, shape index: {}]
  %s1 = inlined_call_operand.vmem [shape: bf16[256,512], index: 1, kind: input, shape index: {}]
  %s2 = inlined_call_operand.vmem [shape: f32[1,512], index: 2, kind: input, shape index: {}]
  %s3 = inlined_call_operand.vmem [shape: bf16[32,512], index: 3, kind: output, shape index: {0}]
  %s4 = inlined_call_operand.vmem [shape: f32[1,8,512], index: 4, kind: output, shape index: {1}]
  %5 = xla_tuple %s3, %s4
  %s6 = sld [smem:[#allocation0]]
  $region30: #{global_generator_forward.41} parent=0
    _
  %s8 = ssub.s32 1, %s6
  %s9 = scalar_select 0, %s8, %s6
  // Predicated region
  $region2: #{global_generator_forward.41} parent=0 // pred_check
    _
  $region3: #{global_generator_forward.41} parent=0 // pred_check_branch
    %11 = sbr.rel (0) target = $region5
  $region4: #{global_generator_forward.41} parent=0 // pred_region
    _
  $region5: #{global_generator_forward.41} parent=0 // pred_fallthru
    _
  // Predicated region
  $region6: #{global_generator_forward.41} parent=0 // pred_check
    _
  $region7: #{global_generator_forward.41} parent=0 // pred_check_branch
    %13 = sbr.rel (0) target = $region9
  $region8: #{global_generator_forward.41} parent=0 // pred_region
    _
  $region9: #{global_generator_forward.41} parent=0 // pred_fallthru
    _
  // Predicated region
  $region10: #{global_generator_forward.41} parent=0 // pred_check
    _
  $region11: #{global_generator_forward.41} parent=0 // pred_check_branch
    %15 = sbr.rel (0) target = $region13
  $region12: #{global_generator_forward.41} parent=0 // pred_region
    _
  $region13: #{global_generator_forward.41} parent=0 // pred_fallthru
    _
  %v16 = vld [vmem:[%s0] sm:$0xff]
  %v17 = vld [vmem:[%s0 + $0x8] sm:$0xff]
  %v18 = vld [vmem:[%s0 + $0x10] sm:$0xff]
  %v19 = vld [vmem:[%s0 + $0x18] sm:$0xff]
  %v20 = vld [vmem:[%s1] sm:$0xff]
  %v21 = vld [vmem:[%s1 + $0x8] sm:$0xff]
  %v22 = vld [vmem:[%s1 + $0x10] sm:$0xff]
  %v23 = vld [vmem:[%s1 + $0x18] sm:$0xff]
  %v24 = vld [vmem:[%s1 + $0x20] sm:$0xff]
  %v25 = vld [vmem:[%s1 + $0x28] sm:$0xff]
  %v26 = vld [vmem:[%s1 + $0x30] sm:$0xff]
  %v27 = vld [vmem:[%s1 + $0x38] sm:$0xff]
  %v28 = vld [vmem:[%s1 + $0x40] sm:$0xff]
  %v29 = vld [vmem:[%s1 + $0x48] sm:$0xff]
  %v30 = vld [vmem:[%s1 + $0x50] sm:$0xff]
  %v31 = vld [vmem:[%s1 + $0x58] sm:$0xff]
  %v32 = vld [vmem:[%s1 + $0x60] sm:$0xff]
  %v33 = vld [vmem:[%s1 + $0x68] sm:$0xff]
  %v34 = vld [vmem:[%s1 + $0x70] sm:$0xff]
  %v35 = vld [vmem:[%s1 + $0x78] sm:$0xff]
  %v36 = vld [vmem:[%s1 + $0x80] sm:$0xff]
  %v37 = vld [vmem:[%s1 + $0x88] sm:$0xff]
  %v38 = vld [vmem:[%s1 + $0x90] sm:$0xff]
  %v39 = vld [vmem:[%s1 + $0x98] sm:$0xff]
  %v40 = vld [vmem:[%s1 + $0xa0] sm:$0xff]
  %v41 = vld [vmem:[%s1 + $0xa8] sm:$0xff]
  %v42 = vld [vmem:[%s1 + $0xb0] sm:$0xff]
  %v43 = vld [vmem:[%s1 + $0xb8] sm:$0xff]
  %v44 = vld [vmem:[%s1 + $0xc0] sm:$0xff]
  %v45 = vld [vmem:[%s1 + $0xc8] sm:$0xff]
  %v46 = vld [vmem:[%s1 + $0xd0] sm:$0xff]
  %v47 = vld [vmem:[%s1 + $0xd8] sm:$0xff]
  %v48 = vld [vmem:[%s1 + $0xe0] sm:$0xff]
  %v49 = vld [vmem:[%s1 + $0xe8] sm:$0xff]
  %v50 = vld [vmem:[%s1 + $0xf0] sm:$0xff]
  %v51 = vld [vmem:[%s1 + $0xf8] sm:$0xff]
  %v52 = vld [vmem:[%s1 + $0x100] sm:$0xff]
  %v53 = vld [vmem:[%s1 + $0x108] sm:$0xff]
  %v54 = vld [vmem:[%s1 + $0x110] sm:$0xff]
  %v55 = vld [vmem:[%s1 + $0x118] sm:$0xff]
  %v56 = vld [vmem:[%s1 + $0x120] sm:$0xff]
  %v57 = vld [vmem:[%s1 + $0x128] sm:$0xff]
  %v58 = vld [vmem:[%s1 + $0x130] sm:$0xff]
  %v59 = vld [vmem:[%s1 + $0x138] sm:$0xff]
  %v60 = vld [vmem:[%s1 + $0x140] sm:$0xff]
  %v61 = vld [vmem:[%s1 + $0x148] sm:$0xff]
  %v62 = vld [vmem:[%s1 + $0x150] sm:$0xff]
  %v63 = vld [vmem:[%s1 + $0x158] sm:$0xff]
  %v64 = vld [vmem:[%s1 + $0x160] sm:$0xff]
  %v65 = vld [vmem:[%s1 + $0x168] sm:$0xff]
  %v66 = vld [vmem:[%s1 + $0x170] sm:$0xff]
  %v67 = vld [vmem:[%s1 + $0x178] sm:$0xff]
  %v68 = vld [vmem:[%s1 + $0x180] sm:$0xff]
  %v69 = vld [vmem:[%s1 + $0x188] sm:$0xff]
  %v70 = vld [vmem:[%s1 + $0x190] sm:$0xff]
  %v71 = vld [vmem:[%s1 + $0x198] sm:$0xff]
  %v72 = vld [vmem:[%s1 + $0x1a0] sm:$0xff]
  %v73 = vld [vmem:[%s1 + $0x1a8] sm:$0xff]
  %v74 = vld [vmem:[%s1 + $0x1b0] sm:$0xff]
  %v75 = vld [vmem:[%s1 + $0x1b8] sm:$0xff]
  %v76 = vld [vmem:[%s1 + $0x1c0] sm:$0xff]
  %v77 = vld [vmem:[%s1 + $0x1c8] sm:$0xff]
  %v78 = vld [vmem:[%s1 + $0x1d0] sm:$0xff]
  %v79 = vld [vmem:[%s1 + $0x1d8] sm:$0xff]
  %v80 = vld [vmem:[%s1 + $0x1e0] sm:$0xff]
  %v81 = vld [vmem:[%s1 + $0x1e8] sm:$0xff]
  %v82 = vld [vmem:[%s1 + $0x1f0] sm:$0xff]
  %v83 = vld [vmem:[%s1 + $0x1f8] sm:$0xff]
  %v84 = vld [vmem:[%s2] sm:$0xf]
  %v86 = vlaneseq
  %v87 = vshrl.u32 %v86, 7
  %v88 = vsub.s32 0, %v87
  %v89 = vrot.slane %v84, %v88
  %v90 = vlaneseq
  %v91 = vshrl.u32 %v90, 7
  %v92 = vsub.s32 1, %v91
  %v93 = vrot.slane %v84, %v92
  %v94 = vlaneseq
  %v95 = vshrl.u32 %v94, 7
  %v96 = vsub.s32 2, %v95
  %v97 = vrot.slane %v84, %v96
  %v98 = vlaneseq
  %v99 = vshrl.u32 %v98, 7
  %v100 = vsub.s32 3, %v99
  %v101 = vrot.slane %v84, %v100
  %v110 = vunpack.c.l.b16 %v16
  %v111 = vunpack.c.h.b16 %v16
  %v112 = vunpack.c.l.b16 %v17
  %v113 = vunpack.c.h.b16 %v17
  %v114 = vunpack.c.l.b16 %v18
  %v115 = vunpack.c.h.b16 %v18
  %v116 = vunpack.c.l.b16 %v19
  %v117 = vunpack.c.h.b16 %v19
  %v118 = vpack.c.b16 %v112, %v110
  %v119 = vpack.c.b16 %v113, %v111
  %v120 = vpack.c.b16 %v116, %v114
  %v121 = vpack.c.b16 %v117, %v115
  %v190 = vunpack.c.l.b16 %v20
  %v191 = vunpack.c.h.b16 %v20
  %v192 = vunpack.c.l.b16 %v21
  %v193 = vunpack.c.h.b16 %v21
  %v194 = vunpack.c.l.b16 %v22
  %v195 = vunpack.c.h.b16 %v22
  %v196 = vunpack.c.l.b16 %v23
  %v197 = vunpack.c.h.b16 %v23
  %v198 = vunpack.c.l.b16 %v24
  %v199 = vunpack.c.h.b16 %v24
  %v200 = vunpack.c.l.b16 %v25
  %v201 = vunpack.c.h.b16 %v25
  %v202 = vunpack.c.l.b16 %v26
  %v203 = vunpack.c.h.b16 %v26
  %v204 = vunpack.c.l.b16 %v27
  %v205 = vunpack.c.h.b16 %v27
  %v206 = vunpack.c.l.b16 %v28
  %v207 = vunpack.c.h.b16 %v28
  %v208 = vunpack.c.l.b16 %v29
  %v209 = vunpack.c.h.b16 %v29
  %v210 = vunpack.c.l.b16 %v30
  %v211 = vunpack.c.h.b16 %v30
  %v212 = vunpack.c.l.b16 %v31
  %v213 = vunpack.c.h.b16 %v31
  %v214 = vunpack.c.l.b16 %v32
  %v215 = vunpack.c.h.b16 %v32
  %v216 = vunpack.c.l.b16 %v33
  %v217 = vunpack.c.h.b16 %v33
  %v218 = vunpack.c.l.b16 %v34
  %v219 = vunpack.c.h.b16 %v34
  %v220 = vunpack.c.l.b16 %v35
  %v221 = vunpack.c.h.b16 %v35
  %v222 = vunpack.c.l.b16 %v36
  %v223 = vunpack.c.h.b16 %v36
  %v224 = vunpack.c.l.b16 %v37
  %v225 = vunpack.c.h.b16 %v37
  %v226 = vunpack.c.l.b16 %v38
  %v227 = vunpack.c.h.b16 %v38
  %v228 = vunpack.c.l.b16 %v39
  %v229 = vunpack.c.h.b16 %v39
  %v230 = vunpack.c.l.b16 %v40
  %v231 = vunpack.c.h.b16 %v40
  %v232 = vunpack.c.l.b16 %v41
  %v233 = vunpack.c.h.b16 %v41
  %v234 = vunpack.c.l.b16 %v42
  %v235 = vunpack.c.h.b16 %v42
  %v236 = vunpack.c.l.b16 %v43
  %v237 = vunpack.c.h.b16 %v43
  %v238 = vunpack.c.l.b16 %v44
  %v239 = vunpack.c.h.b16 %v44
  %v240 = vunpack.c.l.b16 %v45
  %v241 = vunpack.c.h.b16 %v45
  %v242 = vunpack.c.l.b16 %v46
  %v243 = vunpack.c.h.b16 %v46
  %v244 = vunpack.c.l.b16 %v47
  %v245 = vunpack.c.h.b16 %v47
  %v246 = vunpack.c.l.b16 %v48
  %v247 = vunpack.c.h.b16 %v48
  %v248 = vunpack.c.l.b16 %v49
  %v249 = vunpack.c.h.b16 %v49
  %v250 = vunpack.c.l.b16 %v50
  %v251 = vunpack.c.h.b16 %v50
  %v252 = vunpack.c.l.b16 %v51
  %v253 = vunpack.c.h.b16 %v51
  %v254 = vunpack.c.l.b16 %v52
  %v255 = vunpack.c.h.b16 %v52
  %v256 = vunpack.c.l.b16 %v53
  %v257 = vunpack.c.h.b16 %v53
  %v258 = vunpack.c.l.b16 %v54
  %v259 = vunpack.c.h.b16 %v54
  %v260 = vunpack.c.l.b16 %v55
  %v261 = vunpack.c.h.b16 %v55
  %v262 = vunpack.c.l.b16 %v56
  %v263 = vunpack.c.h.b16 %v56
  %v264 = vunpack.c.l.b16 %v57
  %v265 = vunpack.c.h.b16 %v57
  %v266 = vunpack.c.l.b16 %v58
  %v267 = vunpack.c.h.b16 %v58
  %v268 = vunpack.c.l.b16 %v59
  %v269 = vunpack.c.h.b16 %v59
  %v270 = vunpack.c.l.b16 %v60
  %v271 = vunpack.c.h.b16 %v60
  %v272 = vunpack.c.l.b16 %v61
  %v273 = vunpack.c.h.b16 %v61
  %v274 = vunpack.c.l.b16 %v62
  %v275 = vunpack.c.h.b16 %v62
  %v276 = vunpack.c.l.b16 %v63
  %v277 = vunpack.c.h.b16 %v63
  %v278 = vunpack.c.l.b16 %v64
  %v279 = vunpack.c.h.b16 %v64
  %v280 = vunpack.c.l.b16 %v65
  %v281 = vunpack.c.h.b16 %v65
  %v282 = vunpack.c.l.b16 %v66
  %v283 = vunpack.c.h.b16 %v66
  %v284 = vunpack.c.l.b16 %v67
  %v285 = vunpack.c.h.b16 %v67
  %v286 = vunpack.c.l.b16 %v68
  %v287 = vunpack.c.h.b16 %v68
  %v288 = vunpack.c.l.b16 %v69
  %v289 = vunpack.c.h.b16 %v69
  %v290 = vunpack.c.l.b16 %v70
  %v291 = vunpack.c.h.b16 %v70
  %v292 = vunpack.c.l.b16 %v71
  %v293 = vunpack.c.h.b16 %v71
  %v294 = vunpack.c.l.b16 %v72
  %v295 = vunpack.c.h.b16 %v72
  %v296 = vunpack.c.l.b16 %v73
  %v297 = vunpack.c.h.b16 %v73
  %v298 = vunpack.c.l.b16 %v74
  %v299 = vunpack.c.h.b16 %v74
  %v300 = vunpack.c.l.b16 %v75
  %v301 = vunpack.c.h.b16 %v75
  %v302 = vunpack.c.l.b16 %v76
  %v303 = vunpack.c.h.b16 %v76
  %v304 = vunpack.c.l.b16 %v77
  %v305 = vunpack.c.h.b16 %v77
  %v306 = vunpack.c.l.b16 %v78
  %v307 = vunpack.c.h.b16 %v78
  %v308 = vunpack.c.l.b16 %v79
  %v309 = vunpack.c.h.b16 %v79
  %v310 = vunpack.c.l.b16 %v80
  %v311 = vunpack.c.h.b16 %v80
  %v312 = vunpack.c.l.b16 %v81
  %v313 = vunpack.c.h.b16 %v81
  %v314 = vunpack.c.l.b16 %v82
  %v315 = vunpack.c.h.b16 %v82
  %v316 = vunpack.c.l.b16 %v83
  %v317 = vunpack.c.h.b16 %v83
  %v318 = vpack.c.b16 %v194, %v190
  %v319 = vpack.c.b16 %v195, %v191
  %v320 = vpack.c.b16 %v196, %v192
  %v321 = vpack.c.b16 %v197, %v193
  %v322 = vpack.c.b16 %v202, %v198
  %v323 = vpack.c.b16 %v203, %v199
  %v324 = vpack.c.b16 %v204, %v200
  %v325 = vpack.c.b16 %v205, %v201
  %v326 = vpack.c.b16 %v210, %v206
  %v327 = vpack.c.b16 %v211, %v207
  %v328 = vpack.c.b16 %v212, %v208
  %v329 = vpack.c.b16 %v213, %v209
  %v330 = vpack.c.b16 %v218, %v214
  %v331 = vpack.c.b16 %v219, %v215
  %v332 = vpack.c.b16 %v220, %v216
  %v333 = vpack.c.b16 %v221, %v217
  %v334 = vpack.c.b16 %v226, %v222
  %v335 = vpack.c.b16 %v227, %v223
  %v336 = vpack.c.b16 %v228, %v224
  %v337 = vpack.c.b16 %v229, %v225
  %v338 = vpack.c.b16 %v234, %v230
  %v339 = vpack.c.b16 %v235, %v231
  %v340 = vpack.c.b16 %v236, %v232
  %v341 = vpack.c.b16 %v237, %v233
  %v342 = vpack.c.b16 %v242, %v238
  %v343 = vpack.c.b16 %v243, %v239
  %v344 = vpack.c.b16 %v244, %v240
  %v345 = vpack.c.b16 %v245, %v241
  %v346 = vpack.c.b16 %v250, %v246
  %v347 = vpack.c.b16 %v251, %v247
  %v348 = vpack.c.b16 %v252, %v248
  %v349 = vpack.c.b16 %v253, %v249
  %v350 = vpack.c.b16 %v258, %v254
  %v351 = vpack.c.b16 %v259, %v255
  %v352 = vpack.c.b16 %v260, %v256
  %v353 = vpack.c.b16 %v261, %v257
  %v354 = vpack.c.b16 %v266, %v262
  %v355 = vpack.c.b16 %v267, %v263
  %v356 = vpack.c.b16 %v268, %v264
  %v357 = vpack.c.b16 %v269, %v265
  %v358 = vpack.c.b16 %v274, %v270
  %v359 = vpack.c.b16 %v275, %v271
  %v360 = vpack.c.b16 %v276, %v272
  %v361 = vpack.c.b16 %v277, %v273
  %v362 = vpack.c.b16 %v282, %v278
  %v363 = vpack.c.b16 %v283, %v279
  %v364 = vpack.c.b16 %v284, %v280
  %v365 = vpack.c.b16 %v285, %v281
  %v366 = vpack.c.b16 %v290, %v286
  %v367 = vpack.c.b16 %v291, %v287
  %v368 = vpack.c.b16 %v292, %v288
  %v369 = vpack.c.b16 %v293, %v289
  %v370 = vpack.c.b16 %v298, %v294
  %v371 = vpack.c.b16 %v299, %v295
  %v372 = vpack.c.b16 %v300, %v296
  %v373 = vpack.c.b16 %v301, %v297
  %v374 = vpack.c.b16 %v306, %v302
  %v375 = vpack.c.b16 %v307, %v303
  %v376 = vpack.c.b16 %v308, %v304
  %v377 = vpack.c.b16 %v309, %v305
  %v378 = vpack.c.b16 %v314, %v310
  %v379 = vpack.c.b16 %v315, %v311
  %v380 = vpack.c.b16 %v316, %v312
  %v381 = vpack.c.b16 %v317, %v313
  %446 = vmatprep.subr.bf16.mxu0 %v347
  %447 = vmatpush1.bf16.msra.mxu0 %v346
  %448 = vmatprep.subr.bf16.mxu0 %v343
  %449 = vmatpush1.bf16.msra.mxu0 %v342
  %450 = vmatprep.subr.bf16.mxu0 %v339
  %451 = vmatpush1.bf16.msra.mxu0 %v338
  %452 = vmatprep.subr.bf16.mxu0 %v335
  %453 = vmatpush1.bf16.msra.mxu0 %v334
  %454 = vmatprep.subr.bf16.mxu0 %v331
  %455 = vmatpush1.bf16.msra.mxu0 %v330
  %456 = vmatprep.subr.bf16.mxu0 %v327
  %457 = vmatpush1.bf16.msra.mxu0 %v326
  %458 = vmatprep.subr.bf16.mxu0 %v323
  %459 = vmatpush1.bf16.msra.mxu0 %v322
  %460 = vmatprep.subr.bf16.mxu0 %v319
  %461 = vmatpush1.bf16.msra.mxu0 %v318
  %462 = vmatprep.subr.bf16.mxu0 %v379
  %463 = vmatpush2.bf16.msra.mxu0 %v378
  %464 = vmatprep.subr.bf16.mxu0 %v375
  %465 = vmatpush2.bf16.msra.mxu0 %v374
  %466 = vmatprep.subr.bf16.mxu0 %v371
  %467 = vmatpush2.bf16.msra.mxu0 %v370
  %468 = vmatprep.subr.bf16.mxu0 %v367
  %469 = vmatpush2.bf16.msra.mxu0 %v366
  %470 = vmatprep.subr.bf16.mxu0 %v363
  %471 = vmatpush2.bf16.msra.mxu0 %v362
  %472 = vmatprep.subr.bf16.mxu0 %v359
  %473 = vmatpush2.bf16.msra.mxu0 %v358
  %474 = vmatprep.subr.bf16.mxu0 %v355
  %475 = vmatpush2.bf16.msra.mxu0 %v354
  %476 = vmatprep.subr.bf16.mxu0 %v351
  %477 = vmatpush2.bf16.msra.mxu0 %v350
  %478 = vmatprep.mubr.bf16.mxu0 %v119
  %479 = vmatmul.mubr.bf16.gmra.mxu0 %v118
  %v480 = vpop.f32.mrf.mxu0
  %v481 = vadd.f32 %v89, %v480
  %v482 = vpop.f32.mrf.mxu0
  %v483 = vadd.f32 %v93, %v482
  %v484 = vpop.f32.mrf.mxu0
  %v485 = vadd.f32 %v89, %v484
  %v486 = vpop.f32.mrf.mxu0
  %v487 = vadd.f32 %v93, %v486
  %488 = vmatprep.mubr.bf16.mxu0 %v121
  %489 = vmatmul.mubr.bf16.gmra.mxu0 %v120
  %v490 = vpop.f32.mrf.mxu0
  %v491 = vadd.f32 %v89, %v490
  %v492 = vpop.f32.mrf.mxu0
  %v493 = vadd.f32 %v93, %v492
  %v494 = vpop.f32.mrf.mxu0
  %v495 = vadd.f32 %v89, %v494
  %v496 = vpop.f32.mrf.mxu0
  %v497 = vadd.f32 %v93, %v496
  %498 = vdwg.mxu0
  %499 = vmatprep.subr.bf16.mxu0 %v349
  %500 = vmatpush1.bf16.msra.mxu0 %v348
  %501 = vmatprep.subr.bf16.mxu0 %v345
  %502 = vmatpush1.bf16.msra.mxu0 %v344
  %503 = vmatprep.subr.bf16.mxu0 %v341
  %504 = vmatpush1.bf16.msra.mxu0 %v340
  %505 = vmatprep.subr.bf16.mxu0 %v337
  %506 = vmatpush1.bf16.msra.mxu0 %v336
  %507 = vmatprep.subr.bf16.mxu0 %v333
  %508 = vmatpush1.bf16.msra.mxu0 %v332
  %509 = vmatprep.subr.bf16.mxu0 %v329
  %510 = vmatpush1.bf16.msra.mxu0 %v328
  %511 = vmatprep.subr.bf16.mxu0 %v325
  %512 = vmatpush1.bf16.msra.mxu0 %v324
  %513 = vmatprep.subr.bf16.mxu0 %v321
  %514 = vmatpush1.bf16.msra.mxu0 %v320
  %515 = vmatprep.subr.bf16.mxu0 %v381
  %516 = vmatpush2.bf16.msra.mxu0 %v380
  %517 = vmatprep.subr.bf16.mxu0 %v377
  %518 = vmatpush2.bf16.msra.mxu0 %v376
  %519 = vmatprep.subr.bf16.mxu0 %v373
  %520 = vmatpush2.bf16.msra.mxu0 %v372
  %521 = vmatprep.subr.bf16.mxu0 %v369
  %522 = vmatpush2.bf16.msra.mxu0 %v368
  %523 = vmatprep.subr.bf16.mxu0 %v365
  %524 = vmatpush2.bf16.msra.mxu0 %v364
  %525 = vmatprep.subr.bf16.mxu0 %v361
  %526 = vmatpush2.bf16.msra.mxu0 %v360
  %527 = vmatprep.subr.bf16.mxu0 %v357
  %528 = vmatpush2.bf16.msra.mxu0 %v356
  %529 = vmatprep.subr.bf16.mxu0 %v353
  %530 = vmatpush2.bf16.msra.mxu0 %v352
  %531 = vmatprep.mubr.bf16.mxu0 %v119
  %532 = vmatmul.mubr.bf16.gmra.mxu0 %v118
  %v533 = vpop.f32.mrf.mxu0
  %v534 = vadd.f32 %v97, %v533
  %v535 = vpop.f32.mrf.mxu0
  %v536 = vadd.f32 %v101, %v535
  %v537 = vpop.f32.mrf.mxu0
  %v538 = vadd.f32 %v97, %v537
  %v539 = vpop.f32.mrf.mxu0
  %v540 = vadd.f32 %v101, %v539
  %541 = vmatprep.mubr.bf16.mxu0 %v121
  %542 = vmatmul.mubr.bf16.gmra.mxu0 %v120
  %v543 = vpop.f32.mrf.mxu0
  %v544 = vadd.f32 %v97, %v543
  %v545 = vpop.f32.mrf.mxu0
  %v546 = vadd.f32 %v101, %v545
  %v547 = vpop.f32.mrf.mxu0
  %v548 = vadd.f32 %v97, %v547
  %v549 = vpop.f32.mrf.mxu0
  %v550 = vadd.f32 %v101, %v549
  %551 = vdwg.mxu0
  %s552 = smul.u32 0, 32
  %v553 = vlaneseq
  %v554 = vshrl.u32 %v553, 7
  %v555 = vadd.s32 %v554, 8
  %v556 = vadd.s32 %v554, 16
  %v557 = vadd.s32 %v554, 24
  %v558 = vstv %s552
  %v559 = vadd.s32 %v558, %v554
  %v560 = vadd.s32 %v558, %v555
  %v561 = vadd.s32 %v558, %v556
  %v562 = vadd.s32 %v558, %v557
  %vm563 = vcmp.lt.s32.totalorder %v559, 32
  %vm564 = vcmp.lt.s32.totalorder %v560, 32
  %vm565 = vcmp.lt.s32.totalorder %v561, 32
  %vm566 = vcmp.lt.s32.totalorder %v562, 32
  %v567 = vsel %vm563, 1, 0
  %v568 = vsel %vm564, 1, 0
  %v569 = vsel %vm565, 1, 0
  %v570 = vsel %vm566, 1, 0
  %v571 = vcvt.s32.f32 %v567
  %v572 = vcvt.s32.f32 %v568
  %v573 = vcvt.s32.f32 %v569
  %v574 = vcvt.s32.f32 %v570
  %v575 = vmul.f32 %v481, %v571
  %v576 = vmul.f32 %v483, %v571
  %v577 = vmul.f32 %v534, %v571
  %v578 = vmul.f32 %v536, %v571
  %v579 = vmul.f32 %v485, %v572
  %v580 = vmul.f32 %v487, %v572
  %v581 = vmul.f32 %v538, %v572
  %v582 = vmul.f32 %v540, %v572
  %v583 = vmul.f32 %v491, %v573
  %v584 = vmul.f32 %v493, %v573
  %v585 = vmul.f32 %v544, %v573
  %v586 = vmul.f32 %v546, %v573
  %v587 = vmul.f32 %v495, %v574
  %v588 = vmul.f32 %v497, %v574
  %v589 = vmul.f32 %v548, %v574
  %v590 = vmul.f32 %v550, %v574
  %v591 = vadd.f32 %v575, %v579
  %v592 = vadd.f32 %v591, %v583
  %v593 = vadd.f32 %v592, %v587
  %v594 = vrot.slane %v593, 4
  %v595 = vadd.f32 %v593, %v594
  %v596 = vrot.slane %v595, 2
  %v597 = vadd.f32 %v595, %v596
  %v598 = vrot.slane %v597, 1
  %v599 = vadd.f32 %v597, %v598
  %v600 = vadd.f32 %v576, %v580
  %v601 = vadd.f32 %v600, %v584
  %v602 = vadd.f32 %v601, %v588
  %v603 = vrot.slane %v602, 4
  %v604 = vadd.f32 %v602, %v603
  %v605 = vrot.slane %v604, 2
  %v606 = vadd.f32 %v604, %v605
  %v607 = vrot.slane %v606, 1
  %v608 = vadd.f32 %v606, %v607
  %v609 = vadd.f32 %v577, %v581
  %v610 = vadd.f32 %v609, %v585
  %v611 = vadd.f32 %v610, %v589
  %v612 = vrot.slane %v611, 4
  %v613 = vadd.f32 %v611, %v612
  %v614 = vrot.slane %v613, 2
  %v615 = vadd.f32 %v613, %v614
  %v616 = vrot.slane %v615, 1
  %v617 = vadd.f32 %v615, %v616
  %v618 = vadd.f32 %v578, %v582
  %v619 = vadd.f32 %v618, %v586
  %v620 = vadd.f32 %v619, %v590
  %v621 = vrot.slane %v620, 4
  %v622 = vadd.f32 %v620, %v621
  %v623 = vrot.slane %v622, 2
  %v624 = vadd.f32 %v622, %v623
  %v625 = vrot.slane %v624, 1
  %v626 = vadd.f32 %v624, %v625
  %v627 = vmul.f32 %v575, %v575
  %v628 = vmul.f32 %v576, %v576
  %v629 = vmul.f32 %v577, %v577
  %v630 = vmul.f32 %v578, %v578
  %v631 = vmul.f32 %v579, %v579
  %v632 = vmul.f32 %v580, %v580
  %v633 = vmul.f32 %v581, %v581
  %v634 = vmul.f32 %v582, %v582
  %v635 = vmul.f32 %v583, %v583
  %v636 = vmul.f32 %v584, %v584
  %v637 = vmul.f32 %v585, %v585
  %v638 = vmul.f32 %v586, %v586
  %v639 = vmul.f32 %v587, %v587
  %v640 = vmul.f32 %v588, %v588
  %v641 = vmul.f32 %v589, %v589
  %v642 = vmul.f32 %v590, %v590
  %v643 = vadd.f32 %v627, %v631
  %v644 = vadd.f32 %v643, %v635
  %v645 = vadd.f32 %v644, %v639
  %v646 = vrot.slane %v645, 4
  %v647 = vadd.f32 %v645, %v646
  %v648 = vrot.slane %v647, 2
  %v649 = vadd.f32 %v647, %v648
  %v650 = vrot.slane %v649, 1
  %v651 = vadd.f32 %v649, %v650
  %v652 = vadd.f32 %v628, %v632
  %v653 = vadd.f32 %v652, %v636
  %v654 = vadd.f32 %v653, %v640
  %v655 = vrot.slane %v654, 4
  %v656 = vadd.f32 %v654, %v655
  %v657 = vrot.slane %v656, 2
  %v658 = vadd.f32 %v656, %v657
  %v659 = vrot.slane %v658, 1
  %v660 = vadd.f32 %v658, %v659
  %v661 = vadd.f32 %v629, %v633
  %v662 = vadd.f32 %v661, %v637
  %v663 = vadd.f32 %v662, %v641
  %v664 = vrot.slane %v663, 4
  %v665 = vadd.f32 %v663, %v664
  %v666 = vrot.slane %v665, 2
  %v667 = vadd.f32 %v665, %v666
  %v668 = vrot.slane %v667, 1
  %v669 = vadd.f32 %v667, %v668
  %v670 = vadd.f32 %v630, %v634
  %v671 = vadd.f32 %v670, %v638
  %v672 = vadd.f32 %v671, %v642
  %v673 = vrot.slane %v672, 4
  %v674 = vadd.f32 %v672, %v673
  %v675 = vrot.slane %v674, 2
  %v676 = vadd.f32 %v674, %v675
  %v677 = vrot.slane %v676, 1
  %v678 = vadd.f32 %v676, %v677
  %v683 = vcombine.low %v599, %v608
  %v684 = vcombine.low %v617, %v626
  %v686 = vunpack.c.l.s4 1966171168
  %v687 = vunpack.c.0.s8 %v686
  %v688 = vlaneseq
  %v689 = vshrl.u32 %v688, 7
  %v690 = vsub.s32 %v687, %v689
  %v691 = vrot.slane %v683, %v690
  %v693 = vunpack.c.l.s4 1966171168
  %v694 = vunpack.c.0.s8 %v693
  %v695 = vlaneseq
  %v696 = vshrl.u32 %v695, 7
  %v697 = vsub.s32 %v694, %v696
  %v698 = vrot.slane %v684, %v697
  %v699 = vcombine.low %v691, %v698
  %v701 = vunpack.c.l.s4 1966171168
  %v702 = vunpack.c.0.s8 %v701
  %v703 = vlaneseq
  %v704 = vshrl.u32 %v703, 7
  %v705 = vsub.s32 %v702, %v704
  %v706 = vrot.slane %v699, %v705
  %v708 = vlaneseq
  %vm709 = vcmp.ge.s32.totalorder %v708, 0
  %vm710 = vcmp.lt.s32.totalorder %v708, 512
  %vm711 = vmand %vm709, %vm710
  %712 = vst.msk [vmem:[%s4] ss:$8 sm:$0xf] %vm711, %v706
  %713 = vst.msk [vmem:[%s4] ss:$8 sm:$0x0] %vm711, %v706
  %v718 = vcombine.low %v651, %v660
  %v719 = vcombine.low %v669, %v678
  %v721 = vunpack.c.l.s4 1966171168
  %v722 = vunpack.c.0.s8 %v721
  %v723 = vlaneseq
  %v724 = vshrl.u32 %v723, 7
  %v725 = vsub.s32 %v722, %v724
  %v726 = vrot.slane %v718, %v725
  %v728 = vunpack.c.l.s4 1966171168
  %v729 = vunpack.c.0.s8 %v728
  %v730 = vlaneseq
  %v731 = vshrl.u32 %v730, 7
  %v732 = vsub.s32 %v729, %v731
  %v733 = vrot.slane %v719, %v732
  %v734 = vcombine.low %v726, %v733
  %v736 = vunpack.c.l.s4 1966171168
  %v737 = vunpack.c.0.s8 %v736
  %v738 = vlaneseq
  %v739 = vshrl.u32 %v738, 7
  %v740 = vsub.s32 %v737, %v739
  %v741 = vrot.slane %v734, %v740
  %s743 = scalar_lea.vmem %s4, 1
  %744 = vst.msk [vmem:[%s743] ss:$8 sm:$0xf] %vm711, %v741
  %745 = vst.msk [vmem:[%s743] ss:$8 sm:$0x0] %vm711, %v741
  %v746 = vpack.c.bf16 %v485, %v481
  %v747 = vpack.c.bf16 %v487, %v483
  %v748 = vpack.c.bf16 %v538, %v534
  %v749 = vpack.c.bf16 %v540, %v536
  %v750 = vpack.c.bf16 %v495, %v491
  %v751 = vpack.c.bf16 %v497, %v493
  %v752 = vpack.c.bf16 %v548, %v544
  %v753 = vpack.c.bf16 %v550, %v546
  %v762 = vunpack.c.l.b16 %v746
  %v763 = vunpack.c.l.b16 %v747
  %v764 = vunpack.c.l.b16 %v748
  %v765 = vunpack.c.l.b16 %v749
  %v766 = vunpack.c.h.b16 %v746
  %v767 = vunpack.c.h.b16 %v747
  %v768 = vunpack.c.h.b16 %v748
  %v769 = vunpack.c.h.b16 %v749
  %v770 = vunpack.c.l.b16 %v750
  %v771 = vunpack.c.l.b16 %v751
  %v772 = vunpack.c.l.b16 %v752
  %v773 = vunpack.c.l.b16 %v753
  %v774 = vunpack.c.h.b16 %v750
  %v775 = vunpack.c.h.b16 %v751
  %v776 = vunpack.c.h.b16 %v752
  %v777 = vunpack.c.h.b16 %v753
  %v778 = vpack.c.b16 %v763, %v762
  %v779 = vpack.c.b16 %v765, %v764
  %v780 = vpack.c.b16 %v767, %v766
  %v781 = vpack.c.b16 %v769, %v768
  %v782 = vpack.c.b16 %v771, %v770
  %v783 = vpack.c.b16 %v773, %v772
  %v784 = vpack.c.b16 %v775, %v774
  %v785 = vpack.c.b16 %v777, %v776
  %794 = vst [vmem:[%s3] sm:$0xff] %v778
  %795 = vst [vmem:[%s3 + $0x8] sm:$0xff] %v779
  %796 = vst [vmem:[%s3 + $0x10] sm:$0xff] %v780
  %797 = vst [vmem:[%s3 + $0x18] sm:$0xff] %v781
  %798 = vst [vmem:[%s3 + $0x20] sm:$0xff] %v782
  %799 = vst [vmem:[%s3 + $0x28] sm:$0xff] %v783
  %800 = vst [vmem:[%s3 + $0x30] sm:$0xff] %v784
  %801 = vst [vmem:[%s3 + $0x38] sm:$0xff] %v785
  // Predicated region
  $region14: #{global_generator_forward.41} parent=0 // pred_check
    _
  $region15: #{global_generator_forward.41} parent=0 // pred_check_branch
    %803 = sbr.rel (0) target = $region17
  $region16: #{global_generator_forward.41} parent=0 // pred_region
    _
  $region17: #{global_generator_forward.41} parent=0 // pred_fallthru
    _
  // Predicated region
  $region18: #{global_generator_forward.41} parent=0 // pred_check
    _
  $region19: #{global_generator_forward.41} parent=0 // pred_check_branch
    %805 = sbr.rel (0) target = $region21
  $region20: #{global_generator_forward.41} parent=0 // pred_region
    _
  $region21: #{global_generator_forward.41} parent=0 // pred_fallthru
    _
  // Predicated region
  $region22: #{global_generator_forward.41} parent=0 // pred_check
    _
  $region23: #{global_generator_forward.41} parent=0 // pred_check_branch
    %807 = sbr.rel (0) target = $region25
  $region24: #{global_generator_forward.41} parent=0 // pred_region
    _
  $region25: #{global_generator_forward.41} parent=0 // pred_fallthru
    _
  // Predicated region
  $region26: #{global_generator_forward.41} parent=0 // pred_check
    _
  $region27: #{global_generator_forward.41} parent=0 // pred_check_branch
    %809 = sbr.rel (0) target = $region29
  $region28: #{global_generator_forward.41} parent=0 // pred_region
    _
  $region29: #{global_generator_forward.41} parent=0 // pred_fallthru
    _

// kernel: global_generator_forward.42
$region0: #{global_generator_forward.42}
  #allocation0 [shape = 'u32[]', space=smem, size = 0x4, offset = 0x4, fixed_abs, tag = 'smem constant byte address 0x4 - core index']
  #allocation1 [shape = 'u32[144,128]{1,0:T(1,128)}', space=vmem, size = 0x12000, scoped, tag = 'internal scratch']
  %s0 = inlined_call_operand.vmem [shape: bf16[32,512], index: 0, kind: input, shape index: {}]
  %s1 = inlined_call_operand.vmem [shape: f32[1,512], index: 1, kind: input, shape index: {}]
  %s2 = inlined_call_operand.vmem [shape: f32[1,512], index: 2, kind: input, shape index: {}]
  %s3 = inlined_call_operand.vmem [shape: bf16[32,512], index: 3, kind: output, shape index: {}]
  %s4 = sld [smem:[#allocation0]]
  $region22: #{global_generator_forward.42} parent=0
    _
  %s6 = ssub.s32 1, %s4
  %s7 = scalar_select 0, %s6, %s4
  // Predicated region
  $region2: #{global_generator_forward.42} parent=0 // pred_check
    _
  $region3: #{global_generator_forward.42} parent=0 // pred_check_branch
    %9 = sbr.rel (0) target = $region5
  $region4: #{global_generator_forward.42} parent=0 // pred_region
    _
  $region5: #{global_generator_forward.42} parent=0 // pred_fallthru
    _
  // Predicated region
  $region6: #{global_generator_forward.42} parent=0 // pred_check
    _
  $region7: #{global_generator_forward.42} parent=0 // pred_check_branch
    %11 = sbr.rel (0) target = $region9
  $region8: #{global_generator_forward.42} parent=0 // pred_region
    _
  $region9: #{global_generator_forward.42} parent=0 // pred_fallthru
    _
  // Predicated region
  $region10: #{global_generator_forward.42} parent=0 // pred_check
    _
  $region11: #{global_generator_forward.42} parent=0 // pred_check_branch
    %13 = sbr.rel (0) target = $region13
  $region12: #{global_generator_forward.42} parent=0 // pred_region
    _
  $region13: #{global_generator_forward.42} parent=0 // pred_fallthru
    _
  %v14 = vld [vmem:[%s0] sm:$0xff]
  %v15 = vld [vmem:[%s0 + $0x8] sm:$0xff]
  %v16 = vld [vmem:[%s0 + $0x10] sm:$0xff]
  %v17 = vld [vmem:[%s0 + $0x18] sm:$0xff]
  %v18 = vld [vmem:[%s0 + $0x20] sm:$0xff]
  %v19 = vld [vmem:[%s0 + $0x28] sm:$0xff]
  %v20 = vld [vmem:[%s0 + $0x30] sm:$0xff]
  %v21 = vld [vmem:[%s0 + $0x38] sm:$0xff]
  %v22 = vunpack.c.l.bf16 %v14
  %v23 = vunpack.c.h.bf16 %v14
  %v24 = vunpack.c.l.bf16 %v15
  %v25 = vunpack.c.h.bf16 %v15
  %v26 = vunpack.c.l.bf16 %v16
  %v27 = vunpack.c.h.bf16 %v16
  %v28 = vunpack.c.l.bf16 %v17
  %v29 = vunpack.c.h.bf16 %v17
  %v30 = vunpack.c.l.bf16 %v18
  %v31 = vunpack.c.h.bf16 %v18
  %v32 = vunpack.c.l.bf16 %v19
  %v33 = vunpack.c.h.bf16 %v19
  %v34 = vunpack.c.l.bf16 %v20
  %v35 = vunpack.c.h.bf16 %v20
  %v36 = vunpack.c.l.bf16 %v21
  %v37 = vunpack.c.h.bf16 %v21
  %v38 = vld [vmem:[%s1] sm:$0xf]
  %v40 = vlaneseq
  %v41 = vshrl.u32 %v40, 7
  %v42 = vsub.s32 0, %v41
  %v43 = vrot.slane %v38, %v42
  %v44 = vlaneseq
  %v45 = vshrl.u32 %v44, 7
  %v46 = vsub.s32 1, %v45
  %v47 = vrot.slane %v38, %v46
  %v48 = vlaneseq
  %v49 = vshrl.u32 %v48, 7
  %v50 = vsub.s32 2, %v49
  %v51 = vrot.slane %v38, %v50
  %v52 = vlaneseq
  %v53 = vshrl.u32 %v52, 7
  %v54 = vsub.s32 3, %v53
  %v55 = vrot.slane %v38, %v54
  %v60 = vmul.f32 %v22, %v43
  %v61 = vmul.f32 %v23, %v47
  %v62 = vmul.f32 %v24, %v51
  %v63 = vmul.f32 %v25, %v55
  %v64 = vmul.f32 %v26, %v43
  %v65 = vmul.f32 %v27, %v47
  %v66 = vmul.f32 %v28, %v51
  %v67 = vmul.f32 %v29, %v55
  %v68 = vmul.f32 %v30, %v43
  %v69 = vmul.f32 %v31, %v47
  %v70 = vmul.f32 %v32, %v51
  %v71 = vmul.f32 %v33, %v55
  %v72 = vmul.f32 %v34, %v43
  %v73 = vmul.f32 %v35, %v47
  %v74 = vmul.f32 %v36, %v51
  %v75 = vmul.f32 %v37, %v55
  %v76 = vld [vmem:[%s2] sm:$0xf]
  %v78 = vlaneseq
  %v79 = vshrl.u32 %v78, 7
  %v80 = vsub.s32 0, %v79
  %v81 = vrot.slane %v76, %v80
  %v82 = vlaneseq
  %v83 = vshrl.u32 %v82, 7
  %v84 = vsub.s32 1, %v83
  %v85 = vrot.slane %v76, %v84
  %v86 = vlaneseq
  %v87 = vshrl.u32 %v86, 7
  %v88 = vsub.s32 2, %v87
  %v89 = vrot.slane %v76, %v88
  %v90 = vlaneseq
  %v91 = vshrl.u32 %v90, 7
  %v92 = vsub.s32 3, %v91
  %v93 = vrot.slane %v76, %v92
  %v98 = vadd.f32 %v60, %v81
  %v99 = vadd.f32 %v61, %v85
  %v100 = vadd.f32 %v62, %v89
  %v101 = vadd.f32 %v63, %v93
  %v102 = vadd.f32 %v64, %v81
  %v103 = vadd.f32 %v65, %v85
  %v104 = vadd.f32 %v66, %v89
  %v105 = vadd.f32 %v67, %v93
  %v106 = vadd.f32 %v68, %v81
  %v107 = vadd.f32 %v69, %v85
  %v108 = vadd.f32 %v70, %v89
  %v109 = vadd.f32 %v71, %v93
  %v110 = vadd.f32 %v72, %v81
  %v111 = vadd.f32 %v73, %v85
  %v112 = vadd.f32 %v74, %v89
  %v113 = vadd.f32 %v75, %v93
  %v114 = vmax.f32 %v98, 0.0
  %v115 = vmax.f32 %v99, 0.0
  %v116 = vmax.f32 %v100, 0.0
  %v117 = vmax.f32 %v101, 0.0
  %v118 = vmax.f32 %v102, 0.0
  %v119 = vmax.f32 %v103, 0.0
  %v120 = vmax.f32 %v104, 0.0
  %v121 = vmax.f32 %v105, 0.0
  %v122 = vmax.f32 %v106, 0.0
  %v123 = vmax.f32 %v107, 0.0
  %v124 = vmax.f32 %v108, 0.0
  %v125 = vmax.f32 %v109, 0.0
  %v126 = vmax.f32 %v110, 0.0
  %v127 = vmax.f32 %v111, 0.0
  %v128 = vmax.f32 %v112, 0.0
  %v129 = vmax.f32 %v113, 0.0
  %v130 = vpack.c.bf16 %v118, %v114
  %v131 = vpack.c.bf16 %v119, %v115
  %v132 = vpack.c.bf16 %v120, %v116
  %v133 = vpack.c.bf16 %v121, %v117
  %v134 = vpack.c.bf16 %v126, %v122
  %v135 = vpack.c.bf16 %v127, %v123
  %v136 = vpack.c.bf16 %v128, %v124
  %v137 = vpack.c.bf16 %v129, %v125
  %v146 = vunpack.c.l.b16 %v130
  %v147 = vunpack.c.l.b16 %v131
  %v148 = vunpack.c.l.b16 %v132
  %v149 = vunpack.c.l.b16 %v133
  %v150 = vunpack.c.h.b16 %v130
  %v151 = vunpack.c.h.b16 %v131
  %v152 = vunpack.c.h.b16 %v132
  %v153 = vunpack.c.h.b16 %v133
  %v154 = vunpack.c.l.b16 %v134
  %v155 = vunpack.c.l.b16 %v135
  %v156 = vunpack.c.l.b16 %v136
  %v157 = vunpack.c.l.b16 %v137
  %v158 = vunpack.c.h.b16 %v134
  %v159 = vunpack.c.h.b16 %v135
  %v160 = vunpack.c.h.b16 %v136
  %v161 = vunpack.c.h.b16 %v137
  %v162 = vpack.c.b16 %v147, %v146
  %v163 = vpack.c.b16 %v149, %v148
  %v164 = vpack.c.b16 %v151, %v150
  %v165 = vpack.c.b16 %v153, %v152
  %v166 = vpack.c.b16 %v155, %v154
  %v167 = vpack.c.b16 %v157, %v156
  %v168 = vpack.c.b16 %v159, %v158
  %v169 = vpack.c.b16 %v161, %v160
  %178 = vst [vmem:[%s3] sm:$0xff] %v162
  %179 = vst [vmem:[%s3 + $0x8] sm:$0xff] %v163
  %180 = vst [vmem:[%s3 + $0x10] sm:$0xff] %v164
  %181 = vst [vmem:[%s3 + $0x18] sm:$0xff] %v165
  %182 = vst [vmem:[%s3 + $0x20] sm:$0xff] %v166
  %183 = vst [vmem:[%s3 + $0x28] sm:$0xff] %v167
  %184 = vst [vmem:[%s3 + $0x30] sm:$0xff] %v168
  %185 = vst [vmem:[%s3 + $0x38] sm:$0xff] %v169
  // Predicated region
  $region14: #{global_generator_forward.42} parent=0 // pred_check
    _
  $region15: #{global_generator_forward.42} parent=0 // pred_check_branch
    %187 = sbr.rel (0) target = $region17
  $region16: #{global_generator_forward.42} parent=0 // pred_region
    _
  $region17: #{global_generator_forward.42} parent=0 // pred_fallthru
    _
  // Predicated region
  $region18: #{global_generator_forward.42} parent=0 // pred_check
    _
  $region19: #{global_generator_forward.42} parent=0 // pred_check_branch
    %189 = sbr.rel (0) target = $region21
  $region20: #{global_generator_forward.42} parent=0 // pred_region
    _
  $region21: #{global_generator_forward.42} parent=0 // pred_fallthru
    _

// kernel: global_generator_forward.44
$region0: #{global_generator_forward.44}
  #allocation0 [shape = 'u32[]', space=smem, size = 0x4, offset = 0x4, fixed_abs, tag = 'smem constant byte address 0x4 - core index']
  #allocation1 [shape = 'u32[144,128]{1,0:T(1,128)}', space=vmem, size = 0x12000, scoped, tag = 'internal scratch']
  %s0 = inlined_call_operand.vmem [shape: bf16[128,512], index: 0, kind: input, shape index: {}]
  %s1 = inlined_call_operand.vmem [shape: f32[1,512], index: 1, kind: input, shape index: {}]
  %s2 = inlined_call_operand.vmem [shape: f32[1,512], index: 2, kind: input, shape index: {}]
  %s3 = inlined_call_operand.vmem [shape: bf16[128,512], index: 3, kind: output, shape index: {}]
  %s4 = sld [smem:[#allocation0]]
  $region22: #{global_generator_forward.44} parent=0
    _
  %s6 = ssub.s32 1, %s4
  %s7 = scalar_select 0, %s6, %s4
  // Predicated region
  $region2: #{global_generator_forward.44} parent=0 // pred_check
    _
  $region3: #{global_generator_forward.44} parent=0 // pred_check_branch
    %9 = sbr.rel (0) target = $region5
  $region4: #{global_generator_forward.44} parent=0 // pred_region
    _
  $region5: #{global_generator_forward.44} parent=0 // pred_fallthru
    _
  // Predicated region
  $region6: #{global_generator_forward.44} parent=0 // pred_check
    _
  $region7: #{global_generator_forward.44} parent=0 // pred_check_branch
    %11 = sbr.rel (0) target = $region9
  $region8: #{global_generator_forward.44} parent=0 // pred_region
    _
  $region9: #{global_generator_forward.44} parent=0 // pred_fallthru
    _
  // Predicated region
  $region10: #{global_generator_forward.44} parent=0 // pred_check
    _
  $region11: #{global_generator_forward.44} parent=0 // pred_check_branch
    %13 = sbr.rel (0) target = $region13
  $region12: #{global_generator_forward.44} parent=0 // pred_region
    _
  $region13: #{global_generator_forward.44} parent=0 // pred_fallthru
    _
  %v14 = vld [vmem:[%s0] sm:$0xff]
  %v15 = vld [vmem:[%s0 + $0x8] sm:$0xff]
  %v16 = vld [vmem:[%s0 + $0x10] sm:$0xff]
  %v17 = vld [vmem:[%s0 + $0x18] sm:$0xff]
  %v18 = vld [vmem:[%s0 + $0x20] sm:$0xff]
  %v19 = vld [vmem:[%s0 + $0x28] sm:$0xff]
  %v20 = vld [vmem:[%s0 + $0x30] sm:$0xff]
  %v21 = vld [vmem:[%s0 + $0x38] sm:$0xff]
  %v22 = vld [vmem:[%s0 + $0x40] sm:$0xff]
  %v23 = vld [vmem:[%s0 + $0x48] sm:$0xff]
  %v24 = vld [vmem:[%s0 + $0x50] sm:$0xff]
  %v25 = vld [vmem:[%s0 + $0x58] sm:$0xff]
  %v26 = vld [vmem:[%s0 + $0x60] sm:$0xff]
  %v27 = vld [vmem:[%s0 + $0x68] sm:$0xff]
  %v28 = vld [vmem:[%s0 + $0x70] sm:$0xff]
  %v29 = vld [vmem:[%s0 + $0x78] sm:$0xff]
  %v30 = vld [vmem:[%s0 + $0x80] sm:$0xff]
  %v31 = vld [vmem:[%s0 + $0x88] sm:$0xff]
  %v32 = vld [vmem:[%s0 + $0x90] sm:$0xff]
  %v33 = vld [vmem:[%s0 + $0x98] sm:$0xff]
  %v34 = vld [vmem:[%s0 + $0xa0] sm:$0xff]
  %v35 = vld [vmem:[%s0 + $0xa8] sm:$0xff]
  %v36 = vld [vmem:[%s0 + $0xb0] sm:$0xff]
  %v37 = vld [vmem:[%s0 + $0xb8] sm:$0xff]
  %v38 = vld [vmem:[%s0 + $0xc0] sm:$0xff]
  %v39 = vld [vmem:[%s0 + $0xc8] sm:$0xff]
  %v40 = vld [vmem:[%s0 + $0xd0] sm:$0xff]
  %v41 = vld [vmem:[%s0 + $0xd8] sm:$0xff]
  %v42 = vld [vmem:[%s0 + $0xe0] sm:$0xff]
  %v43 = vld [vmem:[%s0 + $0xe8] sm:$0xff]
  %v44 = vld [vmem:[%s0 + $0xf0] sm:$0xff]
  %v45 = vld [vmem:[%s0 + $0xf8] sm:$0xff]
  %v46 = vunpack.c.l.bf16 %v14
  %v47 = vunpack.c.h.bf16 %v14
  %v48 = vunpack.c.l.bf16 %v15
  %v49 = vunpack.c.h.bf16 %v15
  %v50 = vunpack.c.l.bf16 %v16
  %v51 = vunpack.c.h.bf16 %v16
  %v52 = vunpack.c.l.bf16 %v17
  %v53 = vunpack.c.h.bf16 %v17
  %v54 = vunpack.c.l.bf16 %v18
  %v55 = vunpack.c.h.bf16 %v18
  %v56 = vunpack.c.l.bf16 %v19
  %v57 = vunpack.c.h.bf16 %v19
  %v58 = vunpack.c.l.bf16 %v20
  %v59 = vunpack.c.h.bf16 %v20
  %v60 = vunpack.c.l.bf16 %v21
  %v61 = vunpack.c.h.bf16 %v21
  %v62 = vunpack.c.l.bf16 %v22
  %v63 = vunpack.c.h.bf16 %v22
  %v64 = vunpack.c.l.bf16 %v23
  %v65 = vunpack.c.h.bf16 %v23
  %v66 = vunpack.c.l.bf16 %v24
  %v67 = vunpack.c.h.bf16 %v24
  %v68 = vunpack.c.l.bf16 %v25
  %v69 = vunpack.c.h.bf16 %v25
  %v70 = vunpack.c.l.bf16 %v26
  %v71 = vunpack.c.h.bf16 %v26
  %v72 = vunpack.c.l.bf16 %v27
  %v73 = vunpack.c.h.bf16 %v27
  %v74 = vunpack.c.l.bf16 %v28
  %v75 = vunpack.c.h.bf16 %v28
  %v76 = vunpack.c.l.bf16 %v29
  %v77 = vunpack.c.h.bf16 %v29
  %v78 = vunpack.c.l.bf16 %v30
  %v79 = vunpack.c.h.bf16 %v30
  %v80 = vunpack.c.l.bf16 %v31
  %v81 = vunpack.c.h.bf16 %v31
  %v82 = vunpack.c.l.bf16 %v32
  %v83 = vunpack.c.h.bf16 %v32
  %v84 = vunpack.c.l.bf16 %v33
  %v85 = vunpack.c.h.bf16 %v33
  %v86 = vunpack.c.l.bf16 %v34
  %v87 = vunpack.c.h.bf16 %v34
  %v88 = vunpack.c.l.bf16 %v35
  %v89 = vunpack.c.h.bf16 %v35
  %v90 = vunpack.c.l.bf16 %v36
  %v91 = vunpack.c.h.bf16 %v36
  %v92 = vunpack.c.l.bf16 %v37
  %v93 = vunpack.c.h.bf16 %v37
  %v94 = vunpack.c.l.bf16 %v38
  %v95 = vunpack.c.h.bf16 %v38
  %v96 = vunpack.c.l.bf16 %v39
  %v97 = vunpack.c.h.bf16 %v39
  %v98 = vunpack.c.l.bf16 %v40
  %v99 = vunpack.c.h.bf16 %v40
  %v100 = vunpack.c.l.bf16 %v41
  %v101 = vunpack.c.h.bf16 %v41
  %v102 = vunpack.c.l.bf16 %v42
  %v103 = vunpack.c.h.bf16 %v42
  %v104 = vunpack.c.l.bf16 %v43
  %v105 = vunpack.c.h.bf16 %v43
  %v106 = vunpack.c.l.bf16 %v44
  %v107 = vunpack.c.h.bf16 %v44
  %v108 = vunpack.c.l.bf16 %v45
  %v109 = vunpack.c.h.bf16 %v45
  %v110 = vld [vmem:[%s1] sm:$0xf]
  %v112 = vlaneseq
  %v113 = vshrl.u32 %v112, 7
  %v114 = vsub.s32 0, %v113
  %v115 = vrot.slane %v110, %v114
  %v116 = vlaneseq
  %v117 = vshrl.u32 %v116, 7
  %v118 = vsub.s32 1, %v117
  %v119 = vrot.slane %v110, %v118
  %v120 = vlaneseq
  %v121 = vshrl.u32 %v120, 7
  %v122 = vsub.s32 2, %v121
  %v123 = vrot.slane %v110, %v122
  %v124 = vlaneseq
  %v125 = vshrl.u32 %v124, 7
  %v126 = vsub.s32 3, %v125
  %v127 = vrot.slane %v110, %v126
  %v132 = vmul.f32 %v46, %v115
  %v133 = vmul.f32 %v47, %v119
  %v134 = vmul.f32 %v48, %v123
  %v135 = vmul.f32 %v49, %v127
  %v136 = vmul.f32 %v50, %v115
  %v137 = vmul.f32 %v51, %v119
  %v138 = vmul.f32 %v52, %v123
  %v139 = vmul.f32 %v53, %v127
  %v140 = vmul.f32 %v54, %v115
  %v141 = vmul.f32 %v55, %v119
  %v142 = vmul.f32 %v56, %v123
  %v143 = vmul.f32 %v57, %v127
  %v144 = vmul.f32 %v58, %v115
  %v145 = vmul.f32 %v59, %v119
  %v146 = vmul.f32 %v60, %v123
  %v147 = vmul.f32 %v61, %v127
  %v148 = vmul.f32 %v62, %v115
  %v149 = vmul.f32 %v63, %v119
  %v150 = vmul.f32 %v64, %v123
  %v151 = vmul.f32 %v65, %v127
  %v152 = vmul.f32 %v66, %v115
  %v153 = vmul.f32 %v67, %v119
  %v154 = vmul.f32 %v68, %v123
  %v155 = vmul.f32 %v69, %v127
  %v156 = vmul.f32 %v70, %v115
  %v157 = vmul.f32 %v71, %v119
  %v158 = vmul.f32 %v72, %v123
  %v159 = vmul.f32 %v73, %v127
  %v160 = vmul.f32 %v74, %v115
  %v161 = vmul.f32 %v75, %v119
  %v162 = vmul.f32 %v76, %v123
  %v163 = vmul.f32 %v77, %v127
  %v164 = vmul.f32 %v78, %v115
  %v165 = vmul.f32 %v79, %v119
  %v166 = vmul.f32 %v80, %v123
  %v167 = vmul.f32 %v81, %v127
  %v168 = vmul.f32 %v82, %v115
  %v169 = vmul.f32 %v83, %v119
  %v170 = vmul.f32 %v84, %v123
  %v171 = vmul.f32 %v85, %v127
  %v172 = vmul.f32 %v86, %v115
  %v173 = vmul.f32 %v87, %v119
  %v174 = vmul.f32 %v88, %v123
  %v175 = vmul.f32 %v89, %v127
  %v176 = vmul.f32 %v90, %v115
  %v177 = vmul.f32 %v91, %v119
  %v178 = vmul.f32 %v92, %v123
  %v179 = vmul.f32 %v93, %v127
  %v180 = vmul.f32 %v94, %v115
  %v181 = vmul.f32 %v95, %v119
  %v182 = vmul.f32 %v96, %v123
  %v183 = vmul.f32 %v97, %v127
  %v184 = vmul.f32 %v98, %v115
  %v185 = vmul.f32 %v99, %v119
  %v186 = vmul.f32 %v100, %v123
  %v187 = vmul.f32 %v101, %v127
  %v188 = vmul.f32 %v102, %v115
  %v189 = vmul.f32 %v103, %v119
  %v190 = vmul.f32 %v104, %v123
  %v191 = vmul.f32 %v105, %v127
  %v192 = vmul.f32 %v106, %v115
  %v193 = vmul.f32 %v107, %v119
  %v194 = vmul.f32 %v108, %v123
  %v195 = vmul.f32 %v109, %v127
  %v196 = vld [vmem:[%s2] sm:$0xf]
  %v198 = vlaneseq
  %v199 = vshrl.u32 %v198, 7
  %v200 = vsub.s32 0, %v199
  %v201 = vrot.slane %v196, %v200
  %v202 = vlaneseq
  %v203 = vshrl.u32 %v202, 7
  %v204 = vsub.s32 1, %v203
  %v205 = vrot.slane %v196, %v204
  %v206 = vlaneseq
  %v207 = vshrl.u32 %v206, 7
  %v208 = vsub.s32 2, %v207
  %v209 = vrot.slane %v196, %v208
  %v210 = vlaneseq
  %v211 = vshrl.u32 %v210, 7
  %v212 = vsub.s32 3, %v211
  %v213 = vrot.slane %v196, %v212
  %v218 = vadd.f32 %v132, %v201
  %v219 = vadd.f32 %v133, %v205
  %v220 = vadd.f32 %v134, %v209
  %v221 = vadd.f32 %v135, %v213
  %v222 = vadd.f32 %v136, %v201
  %v223 = vadd.f32 %v137, %v205
  %v224 = vadd.f32 %v138, %v209
  %v225 = vadd.f32 %v139, %v213
  %v226 = vadd.f32 %v140, %v201
  %v227 = vadd.f32 %v141, %v205
  %v228 = vadd.f32 %v142, %v209
  %v229 = vadd.f32 %v143, %v213
  %v230 = vadd.f32 %v144, %v201
  %v231 = vadd.f32 %v145, %v205
  %v232 = vadd.f32 %v146, %v209
  %v233 = vadd.f32 %v147, %v213
  %v234 = vadd.f32 %v148, %v201
  %v235 = vadd.f32 %v149, %v205
  %v236 = vadd.f32 %v150, %v209
  %v237 = vadd.f32 %v151, %v213
  %v238 = vadd.f32 %v152, %v201
  %v239 = vadd.f32 %v153, %v205
  %v240 = vadd.f32 %v154, %v209
  %v241 = vadd.f32 %v155, %v213
  %v242 = vadd.f32 %v156, %v201
  %v243 = vadd.f32 %v157, %v205
  %v244 = vadd.f32 %v158, %v209
  %v245 = vadd.f32 %v159, %v213
  %v246 = vadd.f32 %v160, %v201
  %v247 = vadd.f32 %v161, %v205
  %v248 = vadd.f32 %v162, %v209
  %v249 = vadd.f32 %v163, %v213
  %v250 = vadd.f32 %v164, %v201
  %v251 = vadd.f32 %v165, %v205
  %v252 = vadd.f32 %v166, %v209
  %v253 = vadd.f32 %v167, %v213
  %v254 = vadd.f32 %v168, %v201
  %v255 = vadd.f32 %v169, %v205
  %v256 = vadd.f32 %v170, %v209
  %v257 = vadd.f32 %v171, %v213
  %v258 = vadd.f32 %v172, %v201
  %v259 = vadd.f32 %v173, %v205
  %v260 = vadd.f32 %v174, %v209
  %v261 = vadd.f32 %v175, %v213
  %v262 = vadd.f32 %v176, %v201
  %v263 = vadd.f32 %v177, %v205
  %v264 = vadd.f32 %v178, %v209
  %v265 = vadd.f32 %v179, %v213
  %v266 = vadd.f32 %v180, %v201
  %v267 = vadd.f32 %v181, %v205
  %v268 = vadd.f32 %v182, %v209
  %v269 = vadd.f32 %v183, %v213
  %v270 = vadd.f32 %v184, %v201
  %v271 = vadd.f32 %v185, %v205
  %v272 = vadd.f32 %v186, %v209
  %v273 = vadd.f32 %v187, %v213
  %v274 = vadd.f32 %v188, %v201
  %v275 = vadd.f32 %v189, %v205
  %v276 = vadd.f32 %v190, %v209
  %v277 = vadd.f32 %v191, %v213
  %v278 = vadd.f32 %v192, %v201
  %v279 = vadd.f32 %v193, %v205
  %v280 = vadd.f32 %v194, %v209
  %v281 = vadd.f32 %v195, %v213
  %v282 = vmax.f32 %v218, 0.0
  %v283 = vmax.f32 %v219, 0.0
  %v284 = vmax.f32 %v220, 0.0
  %v285 = vmax.f32 %v221, 0.0
  %v286 = vmax.f32 %v222, 0.0
  %v287 = vmax.f32 %v223, 0.0
  %v288 = vmax.f32 %v224, 0.0
  %v289 = vmax.f32 %v225, 0.0
  %v290 = vmax.f32 %v226, 0.0
  %v291 = vmax.f32 %v227, 0.0
  %v292 = vmax.f32 %v228, 0.0
  %v293 = vmax.f32 %v229, 0.0
  %v294 = vmax.f32 %v230, 0.0
  %v295 = vmax.f32 %v231, 0.0
  %v296 = vmax.f32 %v232, 0.0
  %v297 = vmax.f32 %v233, 0.0
  %v298 = vmax.f32 %v234, 0.0
  %v299 = vmax.f32 %v235, 0.0
  %v300 = vmax.f32 %v236, 0.0
  %v301 = vmax.f32 %v237, 0.0
  %v302 = vmax.f32 %v238, 0.0
  %v303 = vmax.f32 %v239, 0.0
  %v304 = vmax.f32 %v240, 0.0
  %v305 = vmax.f32 %v241, 0.0
  %v306 = vmax.f32 %v242, 0.0
  %v307 = vmax.f32 %v243, 0.0
  %v308 = vmax.f32 %v244, 0.0
  %v309 = vmax.f32 %v245, 0.0
  %v310 = vmax.f32 %v246, 0.0
  %v311 = vmax.f32 %v247, 0.0
  %v312 = vmax.f32 %v248, 0.0
  %v313 = vmax.f32 %v249, 0.0
  %v314 = vmax.f32 %v250, 0.0
  %v315 = vmax.f32 %v251, 0.0
  %v316 = vmax.f32 %v252, 0.0
  %v317 = vmax.f32 %v253, 0.0
  %v318 = vmax.f32 %v254, 0.0
  %v319 = vmax.f32 %v255, 0.0
  %v320 = vmax.f32 %v256, 0.0
  %v321 = vmax.f32 %v257, 0.0
  %v322 = vmax.f32 %v258, 0.0
  %v323 = vmax.f32 %v259, 0.0
  %v324 = vmax.f32 %v260, 0.0
  %v325 = vmax.f32 %v261, 0.0
  %v326 = vmax.f32 %v262, 0.0
  %v327 = vmax.f32 %v263, 0.0
  %v328 = vmax.f32 %v264, 0.0
  %v329 = vmax.f32 %v265, 0.0
  %v330 = vmax.f32 %v266, 0.0
  %v331 = vmax.f32 %v267, 0.0
  %v332 = vmax.f32 %v268, 0.0
  %v333 = vmax.f32 %v269, 0.0
  %v334 = vmax.f32 %v270, 0.0
  %v335 = vmax.f32 %v271, 0.0
  %v336 = vmax.f32 %v272, 0.0
  %v337 = vmax.f32 %v273, 0.0
  %v338 = vmax.f32 %v274, 0.0
  %v339 = vmax.f32 %v275, 0.0
  %v340 = vmax.f32 %v276, 0.0
  %v341 = vmax.f32 %v277, 0.0
  %v342 = vmax.f32 %v278, 0.0
  %v343 = vmax.f32 %v279, 0.0
  %v344 = vmax.f32 %v280, 0.0
  %v345 = vmax.f32 %v281, 0.0
  %v346 = vpack.c.bf16 %v286, %v282
  %v347 = vpack.c.bf16 %v287, %v283
  %v348 = vpack.c.bf16 %v288, %v284
  %v349 = vpack.c.bf16 %v289, %v285
  %v350 = vpack.c.bf16 %v294, %v290
  %v351 = vpack.c.bf16 %v295, %v291
  %v352 = vpack.c.bf16 %v296, %v292
  %v353 = vpack.c.bf16 %v297, %v293
  %v354 = vpack.c.bf16 %v302, %v298
  %v355 = vpack.c.bf16 %v303, %v299
  %v356 = vpack.c.bf16 %v304, %v300
  %v357 = vpack.c.bf16 %v305, %v301
  %v358 = vpack.c.bf16 %v310, %v306
  %v359 = vpack.c.bf16 %v311, %v307
  %v360 = vpack.c.bf16 %v312, %v308
  %v361 = vpack.c.bf16 %v313, %v309
  %v362 = vpack.c.bf16 %v318, %v314
  %v363 = vpack.c.bf16 %v319, %v315
  %v364 = vpack.c.bf16 %v320, %v316
  %v365 = vpack.c.bf16 %v321, %v317
  %v366 = vpack.c.bf16 %v326, %v322
  %v367 = vpack.c.bf16 %v327, %v323
  %v368 = vpack.c.bf16 %v328, %v324
  %v369 = vpack.c.bf16 %v329, %v325
  %v370 = vpack.c.bf16 %v334, %v330
  %v371 = vpack.c.bf16 %v335, %v331
  %v372 = vpack.c.bf16 %v336, %v332
  %v373 = vpack.c.bf16 %v337, %v333
  %v374 = vpack.c.bf16 %v342, %v338
  %v375 = vpack.c.bf16 %v343, %v339
  %v376 = vpack.c.bf16 %v344, %v340
  %v377 = vpack.c.bf16 %v345, %v341
  %v410 = vunpack.c.l.b16 %v346
  %v411 = vunpack.c.l.b16 %v347
  %v412 = vunpack.c.l.b16 %v348
  %v413 = vunpack.c.l.b16 %v349
  %v414 = vunpack.c.h.b16 %v346
  %v415 = vunpack.c.h.b16 %v347
  %v416 = vunpack.c.h.b16 %v348
  %v417 = vunpack.c.h.b16 %v349
  %v418 = vunpack.c.l.b16 %v350
  %v419 = vunpack.c.l.b16 %v351
  %v420 = vunpack.c.l.b16 %v352
  %v421 = vunpack.c.l.b16 %v353
  %v422 = vunpack.c.h.b16 %v350
  %v423 = vunpack.c.h.b16 %v351
  %v424 = vunpack.c.h.b16 %v352
  %v425 = vunpack.c.h.b16 %v353
  %v426 = vunpack.c.l.b16 %v354
  %v427 = vunpack.c.l.b16 %v355
  %v428 = vunpack.c.l.b16 %v356
  %v429 = vunpack.c.l.b16 %v357
  %v430 = vunpack.c.h.b16 %v354
  %v431 = vunpack.c.h.b16 %v355
  %v432 = vunpack.c.h.b16 %v356
  %v433 = vunpack.c.h.b16 %v357
  %v434 = vunpack.c.l.b16 %v358
  %v435 = vunpack.c.l.b16 %v359
  %v436 = vunpack.c.l.b16 %v360
  %v437 = vunpack.c.l.b16 %v361
  %v438 = vunpack.c.h.b16 %v358
  %v439 = vunpack.c.h.b16 %v359
  %v440 = vunpack.c.h.b16 %v360
  %v441 = vunpack.c.h.b16 %v361
  %v442 = vunpack.c.l.b16 %v362
  %v443 = vunpack.c.l.b16 %v363
  %v444 = vunpack.c.l.b16 %v364
  %v445 = vunpack.c.l.b16 %v365
  %v446 = vunpack.c.h.b16 %v362
  %v447 = vunpack.c.h.b16 %v363
  %v448 = vunpack.c.h.b16 %v364
  %v449 = vunpack.c.h.b16 %v365
  %v450 = vunpack.c.l.b16 %v366
  %v451 = vunpack.c.l.b16 %v367
  %v452 = vunpack.c.l.b16 %v368
  %v453 = vunpack.c.l.b16 %v369
  %v454 = vunpack.c.h.b16 %v366
  %v455 = vunpack.c.h.b16 %v367
  %v456 = vunpack.c.h.b16 %v368
  %v457 = vunpack.c.h.b16 %v369
  %v458 = vunpack.c.l.b16 %v370
  %v459 = vunpack.c.l.b16 %v371
  %v460 = vunpack.c.l.b16 %v372
  %v461 = vunpack.c.l.b16 %v373
  %v462 = vunpack.c.h.b16 %v370
  %v463 = vunpack.c.h.b16 %v371
  %v464 = vunpack.c.h.b16 %v372
  %v465 = vunpack.c.h.b16 %v373
  %v466 = vunpack.c.l.b16 %v374
  %v467 = vunpack.c.l.b16 %v375
  %v468 = vunpack.c.l.b16 %v376
  %v469 = vunpack.c.l.b16 %v377
  %v470 = vunpack.c.h.b16 %v374
  %v471 = vunpack.c.h.b16 %v375
  %v472 = vunpack.c.h.b16 %v376
  %v473 = vunpack.c.h.b16 %v377
  %v474 = vpack.c.b16 %v411, %v410
  %v475 = vpack.c.b16 %v413, %v412
  %v476 = vpack.c.b16 %v415, %v414
  %v477 = vpack.c.b16 %v417, %v416
  %v478 = vpack.c.b16 %v419, %v418
  %v479 = vpack.c.b16 %v421, %v420
  %v480 = vpack.c.b16 %v423, %v422
  %v481 = vpack.c.b16 %v425, %v424
  %v482 = vpack.c.b16 %v427, %v426
  %v483 = vpack.c.b16 %v429, %v428
  %v484 = vpack.c.b16 %v431, %v430
  %v485 = vpack.c.b16 %v433, %v432
  %v486 = vpack.c.b16 %v435, %v434
  %v487 = vpack.c.b16 %v437, %v436
  %v488 = vpack.c.b16 %v439, %v438
  %v489 = vpack.c.b16 %v441, %v440
  %v490 = vpack.c.b16 %v443, %v442
  %v491 = vpack.c.b16 %v445, %v444
  %v492 = vpack.c.b16 %v447, %v446
  %v493 = vpack.c.b16 %v449, %v448
  %v494 = vpack.c.b16 %v451, %v450
  %v495 = vpack.c.b16 %v453, %v452
  %v496 = vpack.c.b16 %v455, %v454
  %v497 = vpack.c.b16 %v457, %v456
  %v498 = vpack.c.b16 %v459, %v458
  %v499 = vpack.c.b16 %v461, %v460
  %v500 = vpack.c.b16 %v463, %v462
  %v501 = vpack.c.b16 %v465, %v464
  %v502 = vpack.c.b16 %v467, %v466
  %v503 = vpack.c.b16 %v469, %v468
  %v504 = vpack.c.b16 %v471, %v470
  %v505 = vpack.c.b16 %v473, %v472
  %538 = vst [vmem:[%s3] sm:$0xff] %v474
  %539 = vst [vmem:[%s3 + $0x8] sm:$0xff] %v475
  %540 = vst [vmem:[%s3 + $0x10] sm:$0xff] %v476
  %541 = vst [vmem:[%s3 + $0x18] sm:$0xff] %v477
  %542 = vst [vmem:[%s3 + $0x20] sm:$0xff] %v478
  %543 = vst [vmem:[%s3 + $0x28] sm:$0xff] %v479
  %544 = vst [vmem:[%s3 + $0x30] sm:$0xff] %v480
  %545 = vst [vmem:[%s3 + $0x38] sm:$0xff] %v481
  %546 = vst [vmem:[%s3 + $0x40] sm:$0xff] %v482
  %547 = vst [vmem:[%s3 + $0x48] sm:$0xff] %v483
  %548 = vst [vmem:[%s3 + $0x50] sm:$0xff] %v484
  %549 = vst [vmem:[%s3 + $0x58] sm:$0xff] %v485
  %550 = vst [vmem:[%s3 + $0x60] sm:$0xff] %v486
  %551 = vst [vmem:[%s3 + $0x68] sm:$0xff] %v487
  %552 = vst [vmem:[%s3 + $0x70] sm:$0xff] %v488
  %553 = vst [vmem:[%s3 + $0x78] sm:$0xff] %v489
  %554 = vst [vmem:[%s3 + $0x80] sm:$0xff] %v490
  %555 = vst [vmem:[%s3 + $0x88] sm:$0xff] %v491
  %556 = vst [vmem:[%s3 + $0x90] sm:$0xff] %v492
  %557 = vst [vmem:[%s3 + $0x98] sm:$0xff] %v493
  %558 = vst [vmem:[%s3 + $0xa0] sm:$0xff] %v494
  %559 = vst [vmem:[%s3 + $0xa8] sm:$0xff] %v495
  %560 = vst [vmem:[%s3 + $0xb0] sm:$0xff] %v496
  %561 = vst [vmem:[%s3 + $0xb8] sm:$0xff] %v497
  %562 = vst [vmem:[%s3 + $0xc0] sm:$0xff] %v498
  %563 = vst [vmem:[%s3 + $0xc8] sm:$0xff] %v499
  %564 = vst [vmem:[%s3 + $0xd0] sm:$0xff] %v500
  %565 = vst [vmem:[%s3 + $0xd8] sm:$0xff] %v501
  %566 = vst [vmem:[%s3 + $0xe0] sm:$0xff] %v502
  %567 = vst [vmem:[%s3 + $0xe8] sm:$0xff] %v503
  %568 = vst [vmem:[%s3 + $0xf0] sm:$0xff] %v504
  %569 = vst [vmem:[%s3 + $0xf8] sm:$0xff] %v505
  // Predicated region
  $region14: #{global_generator_forward.44} parent=0 // pred_check
    _
  $region15: #{global_generator_forward.44} parent=0 // pred_check_branch
    %571 = sbr.rel (0) target = $region17
  $region16: #{global_generator_forward.44} parent=0 // pred_region
    _
  $region17: #{global_generator_forward.44} parent=0 // pred_fallthru
    _
  // Predicated region
  $region18: #{global_generator_forward.44} parent=0 // pred_check
    _
  $region19: #{global_generator_forward.44} parent=0 // pred_check_branch
    %573 = sbr.rel (0) target = $region21
  $region20: #{global_generator_forward.44} parent=0 // pred_region
    _
  $region21: #{global_generator_forward.44} parent=0 // pred_fallthru
    _

// kernel: global_generator_forward.43
$region0: #{global_generator_forward.43}
  #allocation0 [shape = 'u32[]', space=smem, size = 0x4, offset = 0x4, fixed_abs, tag = 'smem constant byte address 0x4 - core index']
  #allocation1 [shape = 'u32[144,128]{1,0:T(1,128)}', space=vmem, size = 0x12000, scoped, tag = 'internal scratch']
  %s0 = inlined_call_operand.vmem [shape: bf16[128,128], index: 0, kind: input, shape index: {}]
  %s1 = inlined_call_operand.vmem [shape: bf16[128,512], index: 1, kind: input, shape index: {}]
  %s2 = inlined_call_operand.vmem [shape: f32[1,512], index: 2, kind: input, shape index: {}]
  %s3 = inlined_call_operand.vmem [shape: bf16[128,512], index: 3, kind: output, shape index: {0}]
  %s4 = inlined_call_operand.vmem [shape: f32[1,8,512], index: 4, kind: output, shape index: {1}]
  %5 = xla_tuple %s3, %s4
  %s6 = sld [smem:[#allocation0]]
  $region30: #{global_generator_forward.43} parent=0
    _
  %s8 = ssub.s32 1, %s6
  %s9 = scalar_select 0, %s8, %s6
  // Predicated region
  $region2: #{global_generator_forward.43} parent=0 // pred_check
    _
  $region3: #{global_generator_forward.43} parent=0 // pred_check_branch
    %11 = sbr.rel (0) target = $region5
  $region4: #{global_generator_forward.43} parent=0 // pred_region
    _
  $region5: #{global_generator_forward.43} parent=0 // pred_fallthru
    _
  // Predicated region
  $region6: #{global_generator_forward.43} parent=0 // pred_check
    _
  $region7: #{global_generator_forward.43} parent=0 // pred_check_branch
    %13 = sbr.rel (0) target = $region9
  $region8: #{global_generator_forward.43} parent=0 // pred_region
    _
  $region9: #{global_generator_forward.43} parent=0 // pred_fallthru
    _
  // Predicated region
  $region10: #{global_generator_forward.43} parent=0 // pred_check
    _
  $region11: #{global_generator_forward.43} parent=0 // pred_check_branch
    %15 = sbr.rel (0) target = $region13
  $region12: #{global_generator_forward.43} parent=0 // pred_region
    _
  $region13: #{global_generator_forward.43} parent=0 // pred_fallthru
    _
  %v17 = vld [vmem:[%s0] sm:$0xf]
  %v18 = vld [vmem:[%s0 + $0x4] sm:$0xf]
  %v19 = vld [vmem:[%s0 + $0x8] sm:$0xf]
  %v20 = vld [vmem:[%s0 + $0xc] sm:$0xf]
  %v21 = vld [vmem:[%s0 + $0x10] sm:$0xf]
  %v22 = vld [vmem:[%s0 + $0x14] sm:$0xf]
  %v23 = vld [vmem:[%s0 + $0x18] sm:$0xf]
  %v24 = vld [vmem:[%s0 + $0x1c] sm:$0xf]
  %v25 = vld [vmem:[%s0 + $0x20] sm:$0xf]
  %v26 = vld [vmem:[%s0 + $0x24] sm:$0xf]
  %v27 = vld [vmem:[%s0 + $0x28] sm:$0xf]
  %v28 = vld [vmem:[%s0 + $0x2c] sm:$0xf]
  %v29 = vld [vmem:[%s0 + $0x30] sm:$0xf]
  %v30 = vld [vmem:[%s0 + $0x34] sm:$0xf]
  %v31 = vld [vmem:[%s0 + $0x38] sm:$0xf]
  %v32 = vld [vmem:[%s0 + $0x3c] sm:$0xf]
  %v33 = vld [vmem:[%s1] sm:$0xff]
  %v34 = vld [vmem:[%s1 + $0x8] sm:$0xff]
  %v35 = vld [vmem:[%s1 + $0x10] sm:$0xff]
  %v36 = vld [vmem:[%s1 + $0x18] sm:$0xff]
  %v37 = vld [vmem:[%s1 + $0x20] sm:$0xff]
  %v38 = vld [vmem:[%s1 + $0x28] sm:$0xff]
  %v39 = vld [vmem:[%s1 + $0x30] sm:$0xff]
  %v40 = vld [vmem:[%s1 + $0x38] sm:$0xff]
  %v41 = vld [vmem:[%s1 + $0x40] sm:$0xff]
  %v42 = vld [vmem:[%s1 + $0x48] sm:$0xff]
  %v43 = vld [vmem:[%s1 + $0x50] sm:$0xff]
  %v44 = vld [vmem:[%s1 + $0x58] sm:$0xff]
  %v45 = vld [vmem:[%s1 + $0x60] sm:$0xff]
  %v46 = vld [vmem:[%s1 + $0x68] sm:$0xff]
  %v47 = vld [vmem:[%s1 + $0x70] sm:$0xff]
  %v48 = vld [vmem:[%s1 + $0x78] sm:$0xff]
  %v49 = vld [vmem:[%s1 + $0x80] sm:$0xff]
  %v50 = vld [vmem:[%s1 + $0x88] sm:$0xff]
  %v51 = vld [vmem:[%s1 + $0x90] sm:$0xff]
  %v52 = vld [vmem:[%s1 + $0x98] sm:$0xff]
  %v53 = vld [vmem:[%s1 + $0xa0] sm:$0xff]
  %v54 = vld [vmem:[%s1 + $0xa8] sm:$0xff]
  %v55 = vld [vmem:[%s1 + $0xb0] sm:$0xff]
  %v56 = vld [vmem:[%s1 + $0xb8] sm:$0xff]
  %v57 = vld [vmem:[%s1 + $0xc0] sm:$0xff]
  %v58 = vld [vmem:[%s1 + $0xc8] sm:$0xff]
  %v59 = vld [vmem:[%s1 + $0xd0] sm:$0xff]
  %v60 = vld [vmem:[%s1 + $0xd8] sm:$0xff]
  %v61 = vld [vmem:[%s1 + $0xe0] sm:$0xff]
  %v62 = vld [vmem:[%s1 + $0xe8] sm:$0xff]
  %v63 = vld [vmem:[%s1 + $0xf0] sm:$0xff]
  %v64 = vld [vmem:[%s1 + $0xf8] sm:$0xff]
  %v65 = vld [vmem:[%s2] sm:$0xf]
  %v67 = vlaneseq
  %v68 = vshrl.u32 %v67, 7
  %v69 = vsub.s32 0, %v68
  %v70 = vrot.slane %v65, %v69
  %v71 = vlaneseq
  %v72 = vshrl.u32 %v71, 7
  %v73 = vsub.s32 1, %v72
  %v74 = vrot.slane %v65, %v73
  %v75 = vlaneseq
  %v76 = vshrl.u32 %v75, 7
  %v77 = vsub.s32 2, %v76
  %v78 = vrot.slane %v65, %v77
  %v79 = vlaneseq
  %v80 = vshrl.u32 %v79, 7
  %v81 = vsub.s32 3, %v80
  %v82 = vrot.slane %v65, %v81
  %v103 = vunpack.c.l.b16 %v17
  %v104 = vunpack.c.l.b16 %v18
  %v105 = vunpack.c.l.b16 %v19
  %v106 = vunpack.c.l.b16 %v20
  %v107 = vunpack.c.l.b16 %v21
  %v108 = vunpack.c.l.b16 %v22
  %v109 = vunpack.c.l.b16 %v23
  %v110 = vunpack.c.l.b16 %v24
  %v111 = vunpack.c.l.b16 %v25
  %v112 = vunpack.c.l.b16 %v26
  %v113 = vunpack.c.l.b16 %v27
  %v114 = vunpack.c.l.b16 %v28
  %v115 = vunpack.c.l.b16 %v29
  %v116 = vunpack.c.l.b16 %v30
  %v117 = vunpack.c.l.b16 %v31
  %v118 = vunpack.c.l.b16 %v32
  %v119 = vpack.c.b16 %v104, %v103
  %v120 = vpack.c.b16 %v106, %v105
  %v121 = vpack.c.b16 %v108, %v107
  %v122 = vpack.c.b16 %v110, %v109
  %v123 = vpack.c.b16 %v112, %v111
  %v124 = vpack.c.b16 %v114, %v113
  %v125 = vpack.c.b16 %v116, %v115
  %v126 = vpack.c.b16 %v118, %v117
  %v167 = vunpack.c.l.b16 %v33
  %v168 = vunpack.c.h.b16 %v33
  %v169 = vunpack.c.l.b16 %v34
  %v170 = vunpack.c.h.b16 %v34
  %v171 = vunpack.c.l.b16 %v35
  %v172 = vunpack.c.h.b16 %v35
  %v173 = vunpack.c.l.b16 %v36
  %v174 = vunpack.c.h.b16 %v36
  %v175 = vunpack.c.l.b16 %v37
  %v176 = vunpack.c.h.b16 %v37
  %v177 = vunpack.c.l.b16 %v38
  %v178 = vunpack.c.h.b16 %v38
  %v179 = vunpack.c.l.b16 %v39
  %v180 = vunpack.c.h.b16 %v39
  %v181 = vunpack.c.l.b16 %v40
  %v182 = vunpack.c.h.b16 %v40
  %v183 = vunpack.c.l.b16 %v41
  %v184 = vunpack.c.h.b16 %v41
  %v185 = vunpack.c.l.b16 %v42
  %v186 = vunpack.c.h.b16 %v42
  %v187 = vunpack.c.l.b16 %v43
  %v188 = vunpack.c.h.b16 %v43
  %v189 = vunpack.c.l.b16 %v44
  %v190 = vunpack.c.h.b16 %v44
  %v191 = vunpack.c.l.b16 %v45
  %v192 = vunpack.c.h.b16 %v45
  %v193 = vunpack.c.l.b16 %v46
  %v194 = vunpack.c.h.b16 %v46
  %v195 = vunpack.c.l.b16 %v47
  %v196 = vunpack.c.h.b16 %v47
  %v197 = vunpack.c.l.b16 %v48
  %v198 = vunpack.c.h.b16 %v48
  %v199 = vunpack.c.l.b16 %v49
  %v200 = vunpack.c.h.b16 %v49
  %v201 = vunpack.c.l.b16 %v50
  %v202 = vunpack.c.h.b16 %v50
  %v203 = vunpack.c.l.b16 %v51
  %v204 = vunpack.c.h.b16 %v51
  %v205 = vunpack.c.l.b16 %v52
  %v206 = vunpack.c.h.b16 %v52
  %v207 = vunpack.c.l.b16 %v53
  %v208 = vunpack.c.h.b16 %v53
  %v209 = vunpack.c.l.b16 %v54
  %v210 = vunpack.c.h.b16 %v54
  %v211 = vunpack.c.l.b16 %v55
  %v212 = vunpack.c.h.b16 %v55
  %v213 = vunpack.c.l.b16 %v56
  %v214 = vunpack.c.h.b16 %v56
  %v215 = vunpack.c.l.b16 %v57
  %v216 = vunpack.c.h.b16 %v57
  %v217 = vunpack.c.l.b16 %v58
  %v218 = vunpack.c.h.b16 %v58
  %v219 = vunpack.c.l.b16 %v59
  %v220 = vunpack.c.h.b16 %v59
  %v221 = vunpack.c.l.b16 %v60
  %v222 = vunpack.c.h.b16 %v60
  %v223 = vunpack.c.l.b16 %v61
  %v224 = vunpack.c.h.b16 %v61
  %v225 = vunpack.c.l.b16 %v62
  %v226 = vunpack.c.h.b16 %v62
  %v227 = vunpack.c.l.b16 %v63
  %v228 = vunpack.c.h.b16 %v63
  %v229 = vunpack.c.l.b16 %v64
  %v230 = vunpack.c.h.b16 %v64
  %v231 = vpack.c.b16 %v171, %v167
  %v232 = vpack.c.b16 %v172, %v168
  %v233 = vpack.c.b16 %v173, %v169
  %v234 = vpack.c.b16 %v174, %v170
  %v235 = vpack.c.b16 %v179, %v175
  %v236 = vpack.c.b16 %v180, %v176
  %v237 = vpack.c.b16 %v181, %v177
  %v238 = vpack.c.b16 %v182, %v178
  %v239 = vpack.c.b16 %v187, %v183
  %v240 = vpack.c.b16 %v188, %v184
  %v241 = vpack.c.b16 %v189, %v185
  %v242 = vpack.c.b16 %v190, %v186
  %v243 = vpack.c.b16 %v195, %v191
  %v244 = vpack.c.b16 %v196, %v192
  %v245 = vpack.c.b16 %v197, %v193
  %v246 = vpack.c.b16 %v198, %v194
  %v247 = vpack.c.b16 %v203, %v199
  %v248 = vpack.c.b16 %v204, %v200
  %v249 = vpack.c.b16 %v205, %v201
  %v250 = vpack.c.b16 %v206, %v202
  %v251 = vpack.c.b16 %v211, %v207
  %v252 = vpack.c.b16 %v212, %v208
  %v253 = vpack.c.b16 %v213, %v209
  %v254 = vpack.c.b16 %v214, %v210
  %v255 = vpack.c.b16 %v219, %v215
  %v256 = vpack.c.b16 %v220, %v216
  %v257 = vpack.c.b16 %v221, %v217
  %v258 = vpack.c.b16 %v222, %v218
  %v259 = vpack.c.b16 %v227, %v223
  %v260 = vpack.c.b16 %v228, %v224
  %v261 = vpack.c.b16 %v229, %v225
  %v262 = vpack.c.b16 %v230, %v226
  %295 = vmatprep.subr.bf16.mxu0 %v260
  %296 = vmatpush1.bf16.msra.mxu0 %v259
  %297 = vmatprep.subr.bf16.mxu0 %v256
  %298 = vmatpush1.bf16.msra.mxu0 %v255
  %299 = vmatprep.subr.bf16.mxu0 %v252
  %300 = vmatpush1.bf16.msra.mxu0 %v251
  %301 = vmatprep.subr.bf16.mxu0 %v248
  %302 = vmatpush1.bf16.msra.mxu0 %v247
  %303 = vmatprep.subr.bf16.mxu0 %v244
  %304 = vmatpush1.bf16.msra.mxu0 %v243
  %305 = vmatprep.subr.bf16.mxu0 %v240
  %306 = vmatpush1.bf16.msra.mxu0 %v239
  %307 = vmatprep.subr.bf16.mxu0 %v236
  %308 = vmatpush1.bf16.msra.mxu0 %v235
  %309 = vmatprep.subr.bf16.mxu0 %v232
  %310 = vmatpush1.bf16.msra.mxu0 %v231
  %311 = vmatprep.subr.bf16.mxu0 0
  %312 = vmatpush2.bf16.msra.mxu0 0
  %313 = vmatprep.subr.bf16.mxu0 0
  %314 = vmatpush2.bf16.msra.mxu0 0
  %315 = vmatprep.subr.bf16.mxu0 0
  %316 = vmatpush2.bf16.msra.mxu0 0
  %317 = vmatprep.subr.bf16.mxu0 0
  %318 = vmatpush2.bf16.msra.mxu0 0
  %319 = vmatprep.subr.bf16.mxu0 0
  %320 = vmatpush2.bf16.msra.mxu0 0
  %321 = vmatprep.subr.bf16.mxu0 0
  %322 = vmatpush2.bf16.msra.mxu0 0
  %323 = vmatprep.subr.bf16.mxu0 0
  %324 = vmatpush2.bf16.msra.mxu0 0
  %325 = vmatprep.subr.bf16.mxu0 0
  %326 = vmatpush2.bf16.msra.mxu0 0
  %327 = vmatprep.mubr.bf16.mxu0 0
  %328 = vmatmul.mubr.bf16.gmra.mxu0 %v119
  %v329 = vpop.f32.mrf.mxu0
  %v330 = vadd.f32 %v70, %v329
  %v331 = vpop.f32.mrf.mxu0
  %v332 = vadd.f32 %v74, %v331
  %v333 = vpop.f32.mrf.mxu0
  %v334 = vadd.f32 %v70, %v333
  %v335 = vpop.f32.mrf.mxu0
  %v336 = vadd.f32 %v74, %v335
  %337 = vmatprep.mubr.bf16.mxu0 0
  %338 = vmatmul.mubr.bf16.gmra.mxu0 %v120
  %v339 = vpop.f32.mrf.mxu0
  %v340 = vadd.f32 %v70, %v339
  %v341 = vpop.f32.mrf.mxu0
  %v342 = vadd.f32 %v74, %v341
  %v343 = vpop.f32.mrf.mxu0
  %v344 = vadd.f32 %v70, %v343
  %v345 = vpop.f32.mrf.mxu0
  %v346 = vadd.f32 %v74, %v345
  %347 = vmatprep.mubr.bf16.mxu0 0
  %348 = vmatmul.mubr.bf16.gmra.mxu0 %v121
  %v349 = vpop.f32.mrf.mxu0
  %v350 = vadd.f32 %v70, %v349
  %v351 = vpop.f32.mrf.mxu0
  %v352 = vadd.f32 %v74, %v351
  %v353 = vpop.f32.mrf.mxu0
  %v354 = vadd.f32 %v70, %v353
  %v355 = vpop.f32.mrf.mxu0
  %v356 = vadd.f32 %v74, %v355
  %357 = vmatprep.mubr.bf16.mxu0 0
  %358 = vmatmul.mubr.bf16.gmra.mxu0 %v122
  %v359 = vpop.f32.mrf.mxu0
  %v360 = vadd.f32 %v70, %v359
  %v361 = vpop.f32.mrf.mxu0
  %v362 = vadd.f32 %v74, %v361
  %v363 = vpop.f32.mrf.mxu0
  %v364 = vadd.f32 %v70, %v363
  %v365 = vpop.f32.mrf.mxu0
  %v366 = vadd.f32 %v74, %v365
  %367 = vmatprep.mubr.bf16.mxu0 0
  %368 = vmatmul.mubr.bf16.gmra.mxu0 %v123
  %v369 = vpop.f32.mrf.mxu0
  %v370 = vadd.f32 %v70, %v369
  %v371 = vpop.f32.mrf.mxu0
  %v372 = vadd.f32 %v74, %v371
  %v373 = vpop.f32.mrf.mxu0
  %v374 = vadd.f32 %v70, %v373
  %v375 = vpop.f32.mrf.mxu0
  %v376 = vadd.f32 %v74, %v375
  %377 = vmatprep.mubr.bf16.mxu0 0
  %378 = vmatmul.mubr.bf16.gmra.mxu0 %v124
  %v379 = vpop.f32.mrf.mxu0
  %v380 = vadd.f32 %v70, %v379
  %v381 = vpop.f32.mrf.mxu0
  %v382 = vadd.f32 %v74, %v381
  %v383 = vpop.f32.mrf.mxu0
  %v384 = vadd.f32 %v70, %v383
  %v385 = vpop.f32.mrf.mxu0
  %v386 = vadd.f32 %v74, %v385
  %387 = vmatprep.mubr.bf16.mxu0 0
  %388 = vmatmul.mubr.bf16.gmra.mxu0 %v125
  %v389 = vpop.f32.mrf.mxu0
  %v390 = vadd.f32 %v70, %v389
  %v391 = vpop.f32.mrf.mxu0
  %v392 = vadd.f32 %v74, %v391
  %v393 = vpop.f32.mrf.mxu0
  %v394 = vadd.f32 %v70, %v393
  %v395 = vpop.f32.mrf.mxu0
  %v396 = vadd.f32 %v74, %v395
  %397 = vmatprep.mubr.bf16.mxu0 0
  %398 = vmatmul.mubr.bf16.gmra.mxu0 %v126
  %v399 = vpop.f32.mrf.mxu0
  %v400 = vadd.f32 %v70, %v399
  %v401 = vpop.f32.mrf.mxu0
  %v402 = vadd.f32 %v74, %v401
  %v403 = vpop.f32.mrf.mxu0
  %v404 = vadd.f32 %v70, %v403
  %v405 = vpop.f32.mrf.mxu0
  %v406 = vadd.f32 %v74, %v405
  %407 = vdwg.mxu0
  %408 = vmatprep.subr.bf16.mxu0 %v262
  %409 = vmatpush1.bf16.msra.mxu0 %v261
  %410 = vmatprep.subr.bf16.mxu0 %v258
  %411 = vmatpush1.bf16.msra.mxu0 %v257
  %412 = vmatprep.subr.bf16.mxu0 %v254
  %413 = vmatpush1.bf16.msra.mxu0 %v253
  %414 = vmatprep.subr.bf16.mxu0 %v250
  %415 = vmatpush1.bf16.msra.mxu0 %v249
  %416 = vmatprep.subr.bf16.mxu0 %v246
  %417 = vmatpush1.bf16.msra.mxu0 %v245
  %418 = vmatprep.subr.bf16.mxu0 %v242
  %419 = vmatpush1.bf16.msra.mxu0 %v241
  %420 = vmatprep.subr.bf16.mxu0 %v238
  %421 = vmatpush1.bf16.msra.mxu0 %v237
  %422 = vmatprep.subr.bf16.mxu0 %v234
  %423 = vmatpush1.bf16.msra.mxu0 %v233
  %424 = vmatprep.subr.bf16.mxu0 0
  %425 = vmatpush2.bf16.msra.mxu0 0
  %426 = vmatprep.subr.bf16.mxu0 0
  %427 = vmatpush2.bf16.msra.mxu0 0
  %428 = vmatprep.subr.bf16.mxu0 0
  %429 = vmatpush2.bf16.msra.mxu0 0
  %430 = vmatprep.subr.bf16.mxu0 0
  %431 = vmatpush2.bf16.msra.mxu0 0
  %432 = vmatprep.subr.bf16.mxu0 0
  %433 = vmatpush2.bf16.msra.mxu0 0
  %434 = vmatprep.subr.bf16.mxu0 0
  %435 = vmatpush2.bf16.msra.mxu0 0
  %436 = vmatprep.subr.bf16.mxu0 0
  %437 = vmatpush2.bf16.msra.mxu0 0
  %438 = vmatprep.subr.bf16.mxu0 0
  %439 = vmatpush2.bf16.msra.mxu0 0
  %440 = vmatprep.mubr.bf16.mxu0 0
  %441 = vmatmul.mubr.bf16.gmra.mxu0 %v119
  %v442 = vpop.f32.mrf.mxu0
  %v443 = vadd.f32 %v78, %v442
  %v444 = vpop.f32.mrf.mxu0
  %v445 = vadd.f32 %v82, %v444
  %v446 = vpop.f32.mrf.mxu0
  %v447 = vadd.f32 %v78, %v446
  %v448 = vpop.f32.mrf.mxu0
  %v449 = vadd.f32 %v82, %v448
  %450 = vmatprep.mubr.bf16.mxu0 0
  %451 = vmatmul.mubr.bf16.gmra.mxu0 %v120
  %v452 = vpop.f32.mrf.mxu0
  %v453 = vadd.f32 %v78, %v452
  %v454 = vpop.f32.mrf.mxu0
  %v455 = vadd.f32 %v82, %v454
  %v456 = vpop.f32.mrf.mxu0
  %v457 = vadd.f32 %v78, %v456
  %v458 = vpop.f32.mrf.mxu0
  %v459 = vadd.f32 %v82, %v458
  %460 = vmatprep.mubr.bf16.mxu0 0
  %461 = vmatmul.mubr.bf16.gmra.mxu0 %v121
  %v462 = vpop.f32.mrf.mxu0
  %v463 = vadd.f32 %v78, %v462
  %v464 = vpop.f32.mrf.mxu0
  %v465 = vadd.f32 %v82, %v464
  %v466 = vpop.f32.mrf.mxu0
  %v467 = vadd.f32 %v78, %v466
  %v468 = vpop.f32.mrf.mxu0
  %v469 = vadd.f32 %v82, %v468
  %470 = vmatprep.mubr.bf16.mxu0 0
  %471 = vmatmul.mubr.bf16.gmra.mxu0 %v122
  %v472 = vpop.f32.mrf.mxu0
  %v473 = vadd.f32 %v78, %v472
  %v474 = vpop.f32.mrf.mxu0
  %v475 = vadd.f32 %v82, %v474
  %v476 = vpop.f32.mrf.mxu0
  %v477 = vadd.f32 %v78, %v476
  %v478 = vpop.f32.mrf.mxu0
  %v479 = vadd.f32 %v82, %v478
  %480 = vmatprep.mubr.bf16.mxu0 0
  %481 = vmatmul.mubr.bf16.gmra.mxu0 %v123
  %v482 = vpop.f32.mrf.mxu0
  %v483 = vadd.f32 %v78, %v482
  %v484 = vpop.f32.mrf.mxu0
  %v485 = vadd.f32 %v82, %v484
  %v486 = vpop.f32.mrf.mxu0
  %v487 = vadd.f32 %v78, %v486
  %v488 = vpop.f32.mrf.mxu0
  %v489 = vadd.f32 %v82, %v488
  %490 = vmatprep.mubr.bf16.mxu0 0
  %491 = vmatmul.mubr.bf16.gmra.mxu0 %v124
  %v492 = vpop.f32.mrf.mxu0
  %v493 = vadd.f32 %v78, %v492
  %v494 = vpop.f32.mrf.mxu0
  %v495 = vadd.f32 %v82, %v494
  %v496 = vpop.f32.mrf.mxu0
  %v497 = vadd.f32 %v78, %v496
  %v498 = vpop.f32.mrf.mxu0
  %v499 = vadd.f32 %v82, %v498
  %500 = vmatprep.mubr.bf16.mxu0 0
  %501 = vmatmul.mubr.bf16.gmra.mxu0 %v125
  %v502 = vpop.f32.mrf.mxu0
  %v503 = vadd.f32 %v78, %v502
  %v504 = vpop.f32.mrf.mxu0
  %v505 = vadd.f32 %v82, %v504
  %v506 = vpop.f32.mrf.mxu0
  %v507 = vadd.f32 %v78, %v506
  %v508 = vpop.f32.mrf.mxu0
  %v509 = vadd.f32 %v82, %v508
  %510 = vmatprep.mubr.bf16.mxu0 0
  %511 = vmatmul.mubr.bf16.gmra.mxu0 %v126
  %v512 = vpop.f32.mrf.mxu0
  %v513 = vadd.f32 %v78, %v512
  %v514 = vpop.f32.mrf.mxu0
  %v515 = vadd.f32 %v82, %v514
  %v516 = vpop.f32.mrf.mxu0
  %v517 = vadd.f32 %v78, %v516
  %v518 = vpop.f32.mrf.mxu0
  %v519 = vadd.f32 %v82, %v518
  %520 = vdwg.mxu0
  %s521 = smul.u32 0, 128
  %v522 = vlaneseq
  %v523 = vshrl.u32 %v522, 7
  %v524 = vadd.s32 %v523, 8
  %v525 = vadd.s32 %v523, 16
  %v526 = vadd.s32 %v523, 24
  %v527 = vadd.s32 %v523, 32
  %v528 = vadd.s32 %v523, 40
  %v529 = vadd.s32 %v523, 48
  %v530 = vadd.s32 %v523, 56
  %v531 = vadd.s32 %v523, 64
  %v532 = vadd.s32 %v523, 72
  %v533 = vadd.s32 %v523, 80
  %v534 = vadd.s32 %v523, 88
  %v535 = vadd.s32 %v523, 96
  %v536 = vadd.s32 %v523, 104
  %v537 = vadd.s32 %v523, 112
  %v538 = vadd.s32 %v523, 120
  %v539 = vstv %s521
  %v540 = vadd.s32 %v539, %v523
  %v541 = vadd.s32 %v539, %v524
  %v542 = vadd.s32 %v539, %v525
  %v543 = vadd.s32 %v539, %v526
  %v544 = vadd.s32 %v539, %v527
  %v545 = vadd.s32 %v539, %v528
  %v546 = vadd.s32 %v539, %v529
  %v547 = vadd.s32 %v539, %v530
  %v548 = vadd.s32 %v539, %v531
  %v549 = vadd.s32 %v539, %v532
  %v550 = vadd.s32 %v539, %v533
  %v551 = vadd.s32 %v539, %v534
  %v552 = vadd.s32 %v539, %v535
  %v553 = vadd.s32 %v539, %v536
  %v554 = vadd.s32 %v539, %v537
  %v555 = vadd.s32 %v539, %v538
  %vm556 = vcmp.lt.s32.totalorder %v540, 128
  %vm557 = vcmp.lt.s32.totalorder %v541, 128
  %vm558 = vcmp.lt.s32.totalorder %v542, 128
  %vm559 = vcmp.lt.s32.totalorder %v543, 128
  %vm560 = vcmp.lt.s32.totalorder %v544, 128
  %vm561 = vcmp.lt.s32.totalorder %v545, 128
  %vm562 = vcmp.lt.s32.totalorder %v546, 128
  %vm563 = vcmp.lt.s32.totalorder %v547, 128
  %vm564 = vcmp.lt.s32.totalorder %v548, 128
  %vm565 = vcmp.lt.s32.totalorder %v549, 128
  %vm566 = vcmp.lt.s32.totalorder %v550, 128
  %vm567 = vcmp.lt.s32.totalorder %v551, 128
  %vm568 = vcmp.lt.s32.totalorder %v552, 128
  %vm569 = vcmp.lt.s32.totalorder %v553, 128
  %vm570 = vcmp.lt.s32.totalorder %v554, 128
  %vm571 = vcmp.lt.s32.totalorder %v555, 128
  %v572 = vsel %vm556, 1, 0
  %v573 = vsel %vm557, 1, 0
  %v574 = vsel %vm558, 1, 0
  %v575 = vsel %vm559, 1, 0
  %v576 = vsel %vm560, 1, 0
  %v577 = vsel %vm561, 1, 0
  %v578 = vsel %vm562, 1, 0
  %v579 = vsel %vm563, 1, 0
  %v580 = vsel %vm564, 1, 0
  %v581 = vsel %vm565, 1, 0
  %v582 = vsel %vm566, 1, 0
  %v583 = vsel %vm567, 1, 0
  %v584 = vsel %vm568, 1, 0
  %v585 = vsel %vm569, 1, 0
  %v586 = vsel %vm570, 1, 0
  %v587 = vsel %vm571, 1, 0
  %v588 = vcvt.s32.f32 %v572
  %v589 = vcvt.s32.f32 %v573
  %v590 = vcvt.s32.f32 %v574
  %v591 = vcvt.s32.f32 %v575
  %v592 = vcvt.s32.f32 %v576
  %v593 = vcvt.s32.f32 %v577
  %v594 = vcvt.s32.f32 %v578
  %v595 = vcvt.s32.f32 %v579
  %v596 = vcvt.s32.f32 %v580
  %v597 = vcvt.s32.f32 %v581
  %v598 = vcvt.s32.f32 %v582
  %v599 = vcvt.s32.f32 %v583
  %v600 = vcvt.s32.f32 %v584
  %v601 = vcvt.s32.f32 %v585
  %v602 = vcvt.s32.f32 %v586
  %v603 = vcvt.s32.f32 %v587
  %v604 = vmul.f32 %v330, %v588
  %v605 = vmul.f32 %v332, %v588
  %v606 = vmul.f32 %v443, %v588
  %v607 = vmul.f32 %v445, %v588
  %v608 = vmul.f32 %v334, %v589
  %v609 = vmul.f32 %v336, %v589
  %v610 = vmul.f32 %v447, %v589
  %v611 = vmul.f32 %v449, %v589
  %v612 = vmul.f32 %v340, %v590
  %v613 = vmul.f32 %v342, %v590
  %v614 = vmul.f32 %v453, %v590
  %v615 = vmul.f32 %v455, %v590
  %v616 = vmul.f32 %v344, %v591
  %v617 = vmul.f32 %v346, %v591
  %v618 = vmul.f32 %v457, %v591
  %v619 = vmul.f32 %v459, %v591
  %v620 = vmul.f32 %v350, %v592
  %v621 = vmul.f32 %v352, %v592
  %v622 = vmul.f32 %v463, %v592
  %v623 = vmul.f32 %v465, %v592
  %v624 = vmul.f32 %v354, %v593
  %v625 = vmul.f32 %v356, %v593
  %v626 = vmul.f32 %v467, %v593
  %v627 = vmul.f32 %v469, %v593
  %v628 = vmul.f32 %v360, %v594
  %v629 = vmul.f32 %v362, %v594
  %v630 = vmul.f32 %v473, %v594
  %v631 = vmul.f32 %v475, %v594
  %v632 = vmul.f32 %v364, %v595
  %v633 = vmul.f32 %v366, %v595
  %v634 = vmul.f32 %v477, %v595
  %v635 = vmul.f32 %v479, %v595
  %v636 = vmul.f32 %v370, %v596
  %v637 = vmul.f32 %v372, %v596
  %v638 = vmul.f32 %v483, %v596
  %v639 = vmul.f32 %v485, %v596
  %v640 = vmul.f32 %v374, %v597
  %v641 = vmul.f32 %v376, %v597
  %v642 = vmul.f32 %v487, %v597
  %v643 = vmul.f32 %v489, %v597
  %v644 = vmul.f32 %v380, %v598
  %v645 = vmul.f32 %v382, %v598
  %v646 = vmul.f32 %v493, %v598
  %v647 = vmul.f32 %v495, %v598
  %v648 = vmul.f32 %v384, %v599
  %v649 = vmul.f32 %v386, %v599
  %v650 = vmul.f32 %v497, %v599
  %v651 = vmul.f32 %v499, %v599
  %v652 = vmul.f32 %v390, %v600
  %v653 = vmul.f32 %v392, %v600
  %v654 = vmul.f32 %v503, %v600
  %v655 = vmul.f32 %v505, %v600
  %v656 = vmul.f32 %v394, %v601
  %v657 = vmul.f32 %v396, %v601
  %v658 = vmul.f32 %v507, %v601
  %v659 = vmul.f32 %v509, %v601
  %v660 = vmul.f32 %v400, %v602
  %v661 = vmul.f32 %v402, %v602
  %v662 = vmul.f32 %v513, %v602
  %v663 = vmul.f32 %v515, %v602
  %v664 = vmul.f32 %v404, %v603
  %v665 = vmul.f32 %v406, %v603
  %v666 = vmul.f32 %v517, %v603
  %v667 = vmul.f32 %v519, %v603
  %v668 = vadd.f32 %v604, %v608
  %v669 = vadd.f32 %v668, %v612
  %v670 = vadd.f32 %v669, %v616
  %v671 = vadd.f32 %v670, %v620
  %v672 = vadd.f32 %v671, %v624
  %v673 = vadd.f32 %v672, %v628
  %v674 = vadd.f32 %v673, %v632
  %v675 = vadd.f32 %v674, %v636
  %v676 = vadd.f32 %v675, %v640
  %v677 = vadd.f32 %v676, %v644
  %v678 = vadd.f32 %v677, %v648
  %v679 = vadd.f32 %v678, %v652
  %v680 = vadd.f32 %v679, %v656
  %v681 = vadd.f32 %v680, %v660
  %v682 = vadd.f32 %v681, %v664
  %v683 = vrot.slane %v682, 4
  %v684 = vadd.f32 %v682, %v683
  %v685 = vrot.slane %v684, 2
  %v686 = vadd.f32 %v684, %v685
  %v687 = vrot.slane %v686, 1
  %v688 = vadd.f32 %v686, %v687
  %v689 = vadd.f32 %v605, %v609
  %v690 = vadd.f32 %v689, %v613
  %v691 = vadd.f32 %v690, %v617
  %v692 = vadd.f32 %v691, %v621
  %v693 = vadd.f32 %v692, %v625
  %v694 = vadd.f32 %v693, %v629
  %v695 = vadd.f32 %v694, %v633
  %v696 = vadd.f32 %v695, %v637
  %v697 = vadd.f32 %v696, %v641
  %v698 = vadd.f32 %v697, %v645
  %v699 = vadd.f32 %v698, %v649
  %v700 = vadd.f32 %v699, %v653
  %v701 = vadd.f32 %v700, %v657
  %v702 = vadd.f32 %v701, %v661
  %v703 = vadd.f32 %v702, %v665
  %v704 = vrot.slane %v703, 4
  %v705 = vadd.f32 %v703, %v704
  %v706 = vrot.slane %v705, 2
  %v707 = vadd.f32 %v705, %v706
  %v708 = vrot.slane %v707, 1
  %v709 = vadd.f32 %v707, %v708
  %v710 = vadd.f32 %v606, %v610
  %v711 = vadd.f32 %v710, %v614
  %v712 = vadd.f32 %v711, %v618
  %v713 = vadd.f32 %v712, %v622
  %v714 = vadd.f32 %v713, %v626
  %v715 = vadd.f32 %v714, %v630
  %v716 = vadd.f32 %v715, %v634
  %v717 = vadd.f32 %v716, %v638
  %v718 = vadd.f32 %v717, %v642
  %v719 = vadd.f32 %v718, %v646
  %v720 = vadd.f32 %v719, %v650
  %v721 = vadd.f32 %v720, %v654
  %v722 = vadd.f32 %v721, %v658
  %v723 = vadd.f32 %v722, %v662
  %v724 = vadd.f32 %v723, %v666
  %v725 = vrot.slane %v724, 4
  %v726 = vadd.f32 %v724, %v725
  %v727 = vrot.slane %v726, 2
  %v728 = vadd.f32 %v726, %v727
  %v729 = vrot.slane %v728, 1
  %v730 = vadd.f32 %v728, %v729
  %v731 = vadd.f32 %v607, %v611
  %v732 = vadd.f32 %v731, %v615
  %v733 = vadd.f32 %v732, %v619
  %v734 = vadd.f32 %v733, %v623
  %v735 = vadd.f32 %v734, %v627
  %v736 = vadd.f32 %v735, %v631
  %v737 = vadd.f32 %v736, %v635
  %v738 = vadd.f32 %v737, %v639
  %v739 = vadd.f32 %v738, %v643
  %v740 = vadd.f32 %v739, %v647
  %v741 = vadd.f32 %v740, %v651
  %v742 = vadd.f32 %v741, %v655
  %v743 = vadd.f32 %v742, %v659
  %v744 = vadd.f32 %v743, %v663
  %v745 = vadd.f32 %v744, %v667
  %v746 = vrot.slane %v745, 4
  %v747 = vadd.f32 %v745, %v746
  %v748 = vrot.slane %v747, 2
  %v749 = vadd.f32 %v747, %v748
  %v750 = vrot.slane %v749, 1
  %v751 = vadd.f32 %v749, %v750
  %v752 = vmul.f32 %v604, %v604
  %v753 = vmul.f32 %v605, %v605
  %v754 = vmul.f32 %v606, %v606
  %v755 = vmul.f32 %v607, %v607
  %v756 = vmul.f32 %v608, %v608
  %v757 = vmul.f32 %v609, %v609
  %v758 = vmul.f32 %v610, %v610
  %v759 = vmul.f32 %v611, %v611
  %v760 = vmul.f32 %v612, %v612
  %v761 = vmul.f32 %v613, %v613
  %v762 = vmul.f32 %v614, %v614
  %v763 = vmul.f32 %v615, %v615
  %v764 = vmul.f32 %v616, %v616
  %v765 = vmul.f32 %v617, %v617
  %v766 = vmul.f32 %v618, %v618
  %v767 = vmul.f32 %v619, %v619
  %v768 = vmul.f32 %v620, %v620
  %v769 = vmul.f32 %v621, %v621
  %v770 = vmul.f32 %v622, %v622
  %v771 = vmul.f32 %v623, %v623
  %v772 = vmul.f32 %v624, %v624
  %v773 = vmul.f32 %v625, %v625
  %v774 = vmul.f32 %v626, %v626
  %v775 = vmul.f32 %v627, %v627
  %v776 = vmul.f32 %v628, %v628
  %v777 = vmul.f32 %v629, %v629
  %v778 = vmul.f32 %v630, %v630
  %v779 = vmul.f32 %v631, %v631
  %v780 = vmul.f32 %v632, %v632
  %v781 = vmul.f32 %v633, %v633
  %v782 = vmul.f32 %v634, %v634
  %v783 = vmul.f32 %v635, %v635
  %v784 = vmul.f32 %v636, %v636
  %v785 = vmul.f32 %v637, %v637
  %v786 = vmul.f32 %v638, %v638
  %v787 = vmul.f32 %v639, %v639
  %v788 = vmul.f32 %v640, %v640
  %v789 = vmul.f32 %v641, %v641
  %v790 = vmul.f32 %v642, %v642
  %v791 = vmul.f32 %v643, %v643
  %v792 = vmul.f32 %v644, %v644
  %v793 = vmul.f32 %v645, %v645
  %v794 = vmul.f32 %v646, %v646
  %v795 = vmul.f32 %v647, %v647
  %v796 = vmul.f32 %v648, %v648
  %v797 = vmul.f32 %v649, %v649
  %v798 = vmul.f32 %v650, %v650
  %v799 = vmul.f32 %v651, %v651
  %v800 = vmul.f32 %v652, %v652
  %v801 = vmul.f32 %v653, %v653
  %v802 = vmul.f32 %v654, %v654
  %v803 = vmul.f32 %v655, %v655
  %v804 = vmul.f32 %v656, %v656
  %v805 = vmul.f32 %v657, %v657
  %v806 = vmul.f32 %v658, %v658
  %v807 = vmul.f32 %v659, %v659
  %v808 = vmul.f32 %v660, %v660
  %v809 = vmul.f32 %v661, %v661
  %v810 = vmul.f32 %v662, %v662
  %v811 = vmul.f32 %v663, %v663
  %v812 = vmul.f32 %v664, %v664
  %v813 = vmul.f32 %v665, %v665
  %v814 = vmul.f32 %v666, %v666
  %v815 = vmul.f32 %v667, %v667
  %v816 = vadd.f32 %v752, %v756
  %v817 = vadd.f32 %v816, %v760
  %v818 = vadd.f32 %v817, %v764
  %v819 = vadd.f32 %v818, %v768
  %v820 = vadd.f32 %v819, %v772
  %v821 = vadd.f32 %v820, %v776
  %v822 = vadd.f32 %v821, %v780
  %v823 = vadd.f32 %v822, %v784
  %v824 = vadd.f32 %v823, %v788
  %v825 = vadd.f32 %v824, %v792
  %v826 = vadd.f32 %v825, %v796
  %v827 = vadd.f32 %v826, %v800
  %v828 = vadd.f32 %v827, %v804
  %v829 = vadd.f32 %v828, %v808
  %v830 = vadd.f32 %v829, %v812
  %v831 = vrot.slane %v830, 4
  %v832 = vadd.f32 %v830, %v831
  %v833 = vrot.slane %v832, 2
  %v834 = vadd.f32 %v832, %v833
  %v835 = vrot.slane %v834, 1
  %v836 = vadd.f32 %v834, %v835
  %v837 = vadd.f32 %v753, %v757
  %v838 = vadd.f32 %v837, %v761
  %v839 = vadd.f32 %v838, %v765
  %v840 = vadd.f32 %v839, %v769
  %v841 = vadd.f32 %v840, %v773
  %v842 = vadd.f32 %v841, %v777
  %v843 = vadd.f32 %v842, %v781
  %v844 = vadd.f32 %v843, %v785
  %v845 = vadd.f32 %v844, %v789
  %v846 = vadd.f32 %v845, %v793
  %v847 = vadd.f32 %v846, %v797
  %v848 = vadd.f32 %v847, %v801
  %v849 = vadd.f32 %v848, %v805
  %v850 = vadd.f32 %v849, %v809
  %v851 = vadd.f32 %v850, %v813
  %v852 = vrot.slane %v851, 4
  %v853 = vadd.f32 %v851, %v852
  %v854 = vrot.slane %v853, 2
  %v855 = vadd.f32 %v853, %v854
  %v856 = vrot.slane %v855, 1
  %v857 = vadd.f32 %v855, %v856
  %v858 = vadd.f32 %v754, %v758
  %v859 = vadd.f32 %v858, %v762
  %v860 = vadd.f32 %v859, %v766
  %v861 = vadd.f32 %v860, %v770
  %v862 = vadd.f32 %v861, %v774
  %v863 = vadd.f32 %v862, %v778
  %v864 = vadd.f32 %v863, %v782
  %v865 = vadd.f32 %v864, %v786
  %v866 = vadd.f32 %v865, %v790
  %v867 = vadd.f32 %v866, %v794
  %v868 = vadd.f32 %v867, %v798
  %v869 = vadd.f32 %v868, %v802
  %v870 = vadd.f32 %v869, %v806
  %v871 = vadd.f32 %v870, %v810
  %v872 = vadd.f32 %v871, %v814
  %v873 = vrot.slane %v872, 4
  %v874 = vadd.f32 %v872, %v873
  %v875 = vrot.slane %v874, 2
  %v876 = vadd.f32 %v874, %v875
  %v877 = vrot.slane %v876, 1
  %v878 = vadd.f32 %v876, %v877
  %v879 = vadd.f32 %v755, %v759
  %v880 = vadd.f32 %v879, %v763
  %v881 = vadd.f32 %v880, %v767
  %v882 = vadd.f32 %v881, %v771
  %v883 = vadd.f32 %v882, %v775
  %v884 = vadd.f32 %v883, %v779
  %v885 = vadd.f32 %v884, %v783
  %v886 = vadd.f32 %v885, %v787
  %v887 = vadd.f32 %v886, %v791
  %v888 = vadd.f32 %v887, %v795
  %v889 = vadd.f32 %v888, %v799
  %v890 = vadd.f32 %v889, %v803
  %v891 = vadd.f32 %v890, %v807
  %v892 = vadd.f32 %v891, %v811
  %v893 = vadd.f32 %v892, %v815
  %v894 = vrot.slane %v893, 4
  %v895 = vadd.f32 %v893, %v894
  %v896 = vrot.slane %v895, 2
  %v897 = vadd.f32 %v895, %v896
  %v898 = vrot.slane %v897, 1
  %v899 = vadd.f32 %v897, %v898
  %v904 = vcombine.low %v688, %v709
  %v905 = vcombine.low %v730, %v751
  %v907 = vunpack.c.l.s4 1966171168
  %v908 = vunpack.c.0.s8 %v907
  %v909 = vlaneseq
  %v910 = vshrl.u32 %v909, 7
  %v911 = vsub.s32 %v908, %v910
  %v912 = vrot.slane %v904, %v911
  %v914 = vunpack.c.l.s4 1966171168
  %v915 = vunpack.c.0.s8 %v914
  %v916 = vlaneseq
  %v917 = vshrl.u32 %v916, 7
  %v918 = vsub.s32 %v915, %v917
  %v919 = vrot.slane %v905, %v918
  %v920 = vcombine.low %v912, %v919
  %v922 = vunpack.c.l.s4 1966171168
  %v923 = vunpack.c.0.s8 %v922
  %v924 = vlaneseq
  %v925 = vshrl.u32 %v924, 7
  %v926 = vsub.s32 %v923, %v925
  %v927 = vrot.slane %v920, %v926
  %v929 = vlaneseq
  %vm930 = vcmp.ge.s32.totalorder %v929, 0
  %vm931 = vcmp.lt.s32.totalorder %v929, 512
  %vm932 = vmand %vm930, %vm931
  %933 = vst.msk [vmem:[%s4] ss:$8 sm:$0xf] %vm932, %v927
  %934 = vst.msk [vmem:[%s4] ss:$8 sm:$0x0] %vm932, %v927
  %v939 = vcombine.low %v836, %v857
  %v940 = vcombine.low %v878, %v899
  %v942 = vunpack.c.l.s4 1966171168
  %v943 = vunpack.c.0.s8 %v942
  %v944 = vlaneseq
  %v945 = vshrl.u32 %v944, 7
  %v946 = vsub.s32 %v943, %v945
  %v947 = vrot.slane %v939, %v946
  %v949 = vunpack.c.l.s4 1966171168
  %v950 = vunpack.c.0.s8 %v949
  %v951 = vlaneseq
  %v952 = vshrl.u32 %v951, 7
  %v953 = vsub.s32 %v950, %v952
  %v954 = vrot.slane %v940, %v953
  %v955 = vcombine.low %v947, %v954
  %v957 = vunpack.c.l.s4 1966171168
  %v958 = vunpack.c.0.s8 %v957
  %v959 = vlaneseq
  %v960 = vshrl.u32 %v959, 7
  %v961 = vsub.s32 %v958, %v960
  %v962 = vrot.slane %v955, %v961
  %s964 = scalar_lea.vmem %s4, 1
  %965 = vst.msk [vmem:[%s964] ss:$8 sm:$0xf] %vm932, %v962
  %966 = vst.msk [vmem:[%s964] ss:$8 sm:$0x0] %vm932, %v962
  %v967 = vpack.c.bf16 %v334, %v330
  %v968 = vpack.c.bf16 %v336, %v332
  %v969 = vpack.c.bf16 %v447, %v443
  %v970 = vpack.c.bf16 %v449, %v445
  %v971 = vpack.c.bf16 %v344, %v340
  %v972 = vpack.c.bf16 %v346, %v342
  %v973 = vpack.c.bf16 %v457, %v453
  %v974 = vpack.c.bf16 %v459, %v455
  %v975 = vpack.c.bf16 %v354, %v350
  %v976 = vpack.c.bf16 %v356, %v352
  %v977 = vpack.c.bf16 %v467, %v463
  %v978 = vpack.c.bf16 %v469, %v465
  %v979 = vpack.c.bf16 %v364, %v360
  %v980 = vpack.c.bf16 %v366, %v362
  %v981 = vpack.c.bf16 %v477, %v473
  %v982 = vpack.c.bf16 %v479, %v475
  %v983 = vpack.c.bf16 %v374, %v370
  %v984 = vpack.c.bf16 %v376, %v372
  %v985 = vpack.c.bf16 %v487, %v483
  %v986 = vpack.c.bf16 %v489, %v485
  %v987 = vpack.c.bf16 %v384, %v380
  %v988 = vpack.c.bf16 %v386, %v382
  %v989 = vpack.c.bf16 %v497, %v493
  %v990 = vpack.c.bf16 %v499, %v495
  %v991 = vpack.c.bf16 %v394, %v390
  %v992 = vpack.c.bf16 %v396, %v392
  %v993 = vpack.c.bf16 %v507, %v503
  %v994 = vpack.c.bf16 %v509, %v505
  %v995 = vpack.c.bf16 %v404, %v400
  %v996 = vpack.c.bf16 %v406, %v402
  %v997 = vpack.c.bf16 %v517, %v513
  %v998 = vpack.c.bf16 %v519, %v515
  %v1031 = vunpack.c.l.b16 %v967
  %v1032 = vunpack.c.l.b16 %v968
  %v1033 = vunpack.c.l.b16 %v969
  %v1034 = vunpack.c.l.b16 %v970
  %v1035 = vunpack.c.h.b16 %v967
  %v1036 = vunpack.c.h.b16 %v968
  %v1037 = vunpack.c.h.b16 %v969
  %v1038 = vunpack.c.h.b16 %v970
  %v1039 = vunpack.c.l.b16 %v971
  %v1040 = vunpack.c.l.b16 %v972
  %v1041 = vunpack.c.l.b16 %v973
  %v1042 = vunpack.c.l.b16 %v974
  %v1043 = vunpack.c.h.b16 %v971
  %v1044 = vunpack.c.h.b16 %v972
  %v1045 = vunpack.c.h.b16 %v973
  %v1046 = vunpack.c.h.b16 %v974
  %v1047 = vunpack.c.l.b16 %v975
  %v1048 = vunpack.c.l.b16 %v976
  %v1049 = vunpack.c.l.b16 %v977
  %v1050 = vunpack.c.l.b16 %v978
  %v1051 = vunpack.c.h.b16 %v975
  %v1052 = vunpack.c.h.b16 %v976
  %v1053 = vunpack.c.h.b16 %v977
  %v1054 = vunpack.c.h.b16 %v978
  %v1055 = vunpack.c.l.b16 %v979
  %v1056 = vunpack.c.l.b16 %v980
  %v1057 = vunpack.c.l.b16 %v981
  %v1058 = vunpack.c.l.b16 %v982
  %v1059 = vunpack.c.h.b16 %v979
  %v1060 = vunpack.c.h.b16 %v980
  %v1061 = vunpack.c.h.b16 %v981
  %v1062 = vunpack.c.h.b16 %v982
  %v1063 = vunpack.c.l.b16 %v983
  %v1064 = vunpack.c.l.b16 %v984
  %v1065 = vunpack.c.l.b16 %v985
  %v1066 = vunpack.c.l.b16 %v986
  %v1067 = vunpack.c.h.b16 %v983
  %v1068 = vunpack.c.h.b16 %v984
  %v1069 = vunpack.c.h.b16 %v985
  %v1070 = vunpack.c.h.b16 %v986
  %v1071 = vunpack.c.l.b16 %v987
  %v1072 = vunpack.c.l.b16 %v988
  %v1073 = vunpack.c.l.b16 %v989
  %v1074 = vunpack.c.l.b16 %v990
  %v1075 = vunpack.c.h.b16 %v987
  %v1076 = vunpack.c.h.b16 %v988
  %v1077 = vunpack.c.h.b16 %v989
  %v1078 = vunpack.c.h.b16 %v990
  %v1079 = vunpack.c.l.b16 %v991
  %v1080 = vunpack.c.l.b16 %v992
  %v1081 = vunpack.c.l.b16 %v993
  %v1082 = vunpack.c.l.b16 %v994
  %v1083 = vunpack.c.h.b16 %v991
  %v1084 = vunpack.c.h.b16 %v992
  %v1085 = vunpack.c.h.b16 %v993
  %v1086 = vunpack.c.h.b16 %v994
  %v1087 = vunpack.c.l.b16 %v995
  %v1088 = vunpack.c.l.b16 %v996
  %v1089 = vunpack.c.l.b16 %v997
  %v1090 = vunpack.c.l.b16 %v998
  %v1091 = vunpack.c.h.b16 %v995
  %v1092 = vunpack.c.h.b16 %v996
  %v1093 = vunpack.c.h.b16 %v997
  %v1094 = vunpack.c.h.b16 %v998
  %v1095 = vpack.c.b16 %v1032, %v1031
  %v1096 = vpack.c.b16 %v1034, %v1033
  %v1097 = vpack.c.b16 %v1036, %v1035
  %v1098 = vpack.c.b16 %v1038, %v1037
  %v1099 = vpack.c.b16 %v1040, %v1039
  %v1100 = vpack.c.b16 %v1042, %v1041
  %v1101 = vpack.c.b16 %v1044, %v1043
  %v1102 = vpack.c.b16 %v1046, %v1045
  %v1103 = vpack.c.b16 %v1048, %v1047
  %v1104 = vpack.c.b16 %v1050, %v1049
  %v1105 = vpack.c.b16 %v1052, %v1051
  %v1106 = vpack.c.b16 %v1054, %v1053
  %v1107 = vpack.c.b16 %v1056, %v1055
  %v1108 = vpack.c.b16 %v1058, %v1057
  %v1109 = vpack.c.b16 %v1060, %v1059
  %v1110 = vpack.c.b16 %v1062, %v1061
  %v1111 = vpack.c.b16 %v1064, %v1063
  %v1112 = vpack.c.b16 %v1066, %v1065
  %v1113 = vpack.c.b16 %v1068, %v1067
  %v1114 = vpack.c.b16 %v1070, %v1069
  %v1115 = vpack.c.b16 %v1072, %v1071
  %v1116 = vpack.c.b16 %v1074, %v1073
  %v1117 = vpack.c.b16 %v1076, %v1075
  %v1118 = vpack.c.b16 %v1078, %v1077
  %v1119 = vpack.c.b16 %v1080, %v1079
  %v1120 = vpack.c.b16 %v1082, %v1081
  %v1121 = vpack.c.b16 %v1084, %v1083
  %v1122 = vpack.c.b16 %v1086, %v1085
  %v1123 = vpack.c.b16 %v1088, %v1087
  %v1124 = vpack.c.b16 %v1090, %v1089
  %v1125 = vpack.c.b16 %v1092, %v1091
  %v1126 = vpack.c.b16 %v1094, %v1093
  %1159 = vst [vmem:[%s3] sm:$0xff] %v1095
  %1160 = vst [vmem:[%s3 + $0x8] sm:$0xff] %v1096
  %1161 = vst [vmem:[%s3 + $0x10] sm:$0xff] %v1097
  %1162 = vst [vmem:[%s3 + $0x18] sm:$0xff] %v1098
  %1163 = vst [vmem:[%s3 + $0x20] sm:$0xff] %v1099
  %1164 = vst [vmem:[%s3 + $0x28] sm:$0xff] %v1100
  %1165 = vst [vmem:[%s3 + $0x30] sm:$0xff] %v1101
  %1166 = vst [vmem:[%s3 + $0x38] sm:$0xff] %v1102
  %1167 = vst [vmem:[%s3 + $0x40] sm:$0xff] %v1103
  %1168 = vst [vmem:[%s3 + $0x48] sm:$0xff] %v1104
  %1169 = vst [vmem:[%s3 + $0x50] sm:$0xff] %v1105
  %1170 = vst [vmem:[%s3 + $0x58] sm:$0xff] %v1106
  %1171 = vst [vmem:[%s3 + $0x60] sm:$0xff] %v1107
  %1172 = vst [vmem:[%s3 + $0x68] sm:$0xff] %v1108
  %1173 = vst [vmem:[%s3 + $0x70] sm:$0xff] %v1109
  %1174 = vst [vmem:[%s3 + $0x78] sm:$0xff] %v1110
  %1175 = vst [vmem:[%s3 + $0x80] sm:$0xff] %v1111
  %1176 = vst [vmem:[%s3 + $0x88] sm:$0xff] %v1112
  %1177 = vst [vmem:[%s3 + $0x90] sm:$0xff] %v1113
  %1178 = vst [vmem:[%s3 + $0x98] sm:$0xff] %v1114
  %1179 = vst [vmem:[%s3 + $0xa0] sm:$0xff] %v1115
  %1180 = vst [vmem:[%s3 + $0xa8] sm:$0xff] %v1116
  %1181 = vst [vmem:[%s3 + $0xb0] sm:$0xff] %v1117
  %1182 = vst [vmem:[%s3 + $0xb8] sm:$0xff] %v1118
  %1183 = vst [vmem:[%s3 + $0xc0] sm:$0xff] %v1119
  %1184 = vst [vmem:[%s3 + $0xc8] sm:$0xff] %v1120
  %1185 = vst [vmem:[%s3 + $0xd0] sm:$0xff] %v1121
  %1186 = vst [vmem:[%s3 + $0xd8] sm:$0xff] %v1122
  %1187 = vst [vmem:[%s3 + $0xe0] sm:$0xff] %v1123
  %1188 = vst [vmem:[%s3 + $0xe8] sm:$0xff] %v1124
  %1189 = vst [vmem:[%s3 + $0xf0] sm:$0xff] %v1125
  %1190 = vst [vmem:[%s3 + $0xf8] sm:$0xff] %v1126
  // Predicated region
  $region14: #{global_generator_forward.43} parent=0 // pred_check
    _
  $region15: #{global_generator_forward.43} parent=0 // pred_check_branch
    %1192 = sbr.rel (0) target = $region17
  $region16: #{global_generator_forward.43} parent=0 // pred_region
    _
  $region17: #{global_generator_forward.43} parent=0 // pred_fallthru
    _
  // Predicated region
  $region18: #{global_generator_forward.43} parent=0 // pred_check
    _
  $region19: #{global_generator_forward.43} parent=0 // pred_check_branch
    %1194 = sbr.rel (0) target = $region21
  $region20: #{global_generator_forward.43} parent=0 // pred_region
    _
  $region21: #{global_generator_forward.43} parent=0 // pred_fallthru
    _
  // Predicated region
  $region22: #{global_generator_forward.43} parent=0 // pred_check
    _
  $region23: #{global_generator_forward.43} parent=0 // pred_check_branch
    %1196 = sbr.rel (0) target = $region25
  $region24: #{global_generator_forward.43} parent=0 // pred_region
    _
  $region25: #{global_generator_forward.43} parent=0 // pred_fallthru
    _
  // Predicated region
  $region26: #{global_generator_forward.43} parent=0 // pred_check
    _
  $region27: #{global_generator_forward.43} parent=0 // pred_check_branch
    %1198 = sbr.rel (0) target = $region29
  $region28: #{global_generator_forward.43} parent=0 // pred_region
    _
  $region29: #{global_generator_forward.43} parent=0 // pred_fallthru
    _

// kernel: global_generator_forward.45
$region0: #{global_generator_forward.45}
  #allocation0 [shape = 'u32[]', space=smem, size = 0x4, offset = 0x4, fixed_abs, tag = 'smem constant byte address 0x4 - core index']
  #allocation1 [shape = 'u32[144,128]{1,0:T(1,128)}', space=vmem, size = 0x12000, scoped, tag = 'internal scratch']
  %s0 = inlined_call_operand.vmem [shape: bf16[512,896], index: 0, kind: input, shape index: {}]
  %s1 = inlined_call_operand.vmem [shape: bf16[896,128], index: 1, kind: input, shape index: {}]
  %s2 = inlined_call_operand.vmem [shape: f32[1,128], index: 2, kind: input, shape index: {}]
  %s3 = inlined_call_operand.vmem [shape: f32[512,128], index: 3, kind: output, shape index: {0}]
  %s4 = inlined_call_operand.hbm [shape: f32[2,8,128], index: 4, kind: output, shape index: {1}]
  %5 = xla_tuple %s3, %s4
  %s6 = sld [smem:[#allocation0]]
  $region53: #{global_generator_forward.45} parent=0
    _
  %s8 = ssub.s32 1, %s6
  %s9 = scalar_select 0, %s8, %s6
  $region1: #{global_generator_forward.45} parent=0
    #allocation2 [shape = 'u8[8192]{0}', space=vmem, size = 0x2000, scoped, tag = 'output window, operand 1']
    #allocation3 [shape = 's32[2]{0}', space=sflag, size = 0x8, scoped, tag = 'scoped memory for global_generator_forward.45']
    %10 = vsyncpa [#allocation3], 0
    %s11 = scalar_lea.sflag [#allocation3], 1
    %12 = vsyncpa %s11, 0
    loop: start=0, step=1, limit=4
    $region2: #{global_generator_forward.45} parent=1 // loop_pre_header
      _
    $region3: #{global_generator_forward.45} parent=1 // loop_header
      %s14 = sphi 0, %s18
      %p15 = scmp.ge.s32.totalorder %s14, 4
      %s21 = sphi 0, %s33
      %s22 = sphi 0, %s29
      %s23 = sphi 0, %s21
      %s24 = sphi 0, %s22
      %s25 = sphi 0, %s23
      %s26 = sphi 0, %s24
      %s36 = sphi 0, %s38
      %s39 = sphi 0, %s36
      %s40 = sphi 0, %s39
      %s56 = sphi 0, %s40
      %s62 = sphi 0, %s64
      %s65 = sphi 0, %s62
      %s66 = sphi 0, %s65
      %s82 = sphi 0, %s66
      %s88 = sphi 0, %s90
      %s91 = sphi 0, %s88
      %s92 = sphi 0, %s91
      %s108 = sphi 0, %s92
      %s116 = sphi 0, %s118
      %s119 = sphi 0, %s116
      %s120 = sphi 0, %s119
      %s136 = sphi 0, %s120
      %s144 = sphi 0, %s146
      %s147 = sphi 0, %s144
      %s148 = sphi 0, %s147
      %s164 = sphi 0, %s148
    $region4: #{global_generator_forward.45} parent=1 // loop_header_branch
      %17 = sbr.rel (%p15) target = $region8
    $region5: #{global_generator_forward.45} parent=1 // loop_body
      %s19 = ssub.s32 %s14, 1
      %s20 = ssub.s32 %s14, 2
      %s27 = sadd.s32 1, %s22
      %p28 = scmp.ge.s32.totalorder %s27, 1
      %s29 = scalar_select %p28, 0, %s27
      %s30 = sadd.s32 1, %s21
      %s31 = scalar_select %p28, %s30, %s21
      %p32 = scmp.ge.s32.totalorder %s31, 2
      %s33 = scalar_select %p32, 0, %s31
      %s34 = ssub.s32 %s21, %s33
      %p35 = scmp.eq.s32.totalorder %s34, 0
      %s37 = sadd.s32 %s36, 1
      %s38 = scalar_select %p35, %s36, %s37
      %p41 = pneg %p35
      %p42 = scmp.eq.s32.totalorder %s14, 1
      %p43 = por %p41, %p42
      %p44 = scmp.ne.s32.totalorder %s36, %s39
      %p45 = scmp.eq.s32.totalorder %s14, 0
      %p46 = por %p44, %p45
      %p47 = scmp.ne.s32.totalorder %s36, %s39
      %p48 = scmp.eq.s32.totalorder %s19, 1
      %p49 = por %p47, %p48
      %p50 = scmp.ne.s32.totalorder %s39, %s40
      %p51 = scmp.eq.s32.totalorder %s19, 0
      %p52 = por %p50, %p51
      %p53 = scmp.ne.s32.totalorder %s39, %s40
      %p54 = scmp.eq.s32.totalorder %s20, 1
      %p55 = por %p53, %p54
      %p57 = scmp.ne.s32.totalorder %s40, %s56
      %p58 = scmp.eq.s32.totalorder %s20, 0
      %p59 = por %p57, %p58
      %s60 = ssub.s32 %s22, %s29
      %p61 = scmp.eq.s32.totalorder %s60, 0
      %s63 = sadd.s32 %s62, 1
      %s64 = scalar_select %p61, %s62, %s63
      %p67 = pneg %p61
      %p68 = scmp.eq.s32.totalorder %s14, 1
      %p69 = por %p67, %p68
      %p70 = scmp.ne.s32.totalorder %s62, %s65
      %p71 = scmp.eq.s32.totalorder %s14, 0
      %p72 = por %p70, %p71
      %p73 = scmp.ne.s32.totalorder %s62, %s65
      %p74 = scmp.eq.s32.totalorder %s19, 1
      %p75 = por %p73, %p74
      %p76 = scmp.ne.s32.totalorder %s65, %s66
      %p77 = scmp.eq.s32.totalorder %s19, 0
      %p78 = por %p76, %p77
      %p79 = scmp.ne.s32.totalorder %s65, %s66
      %p80 = scmp.eq.s32.totalorder %s20, 1
      %p81 = por %p79, %p80
      %p83 = scmp.ne.s32.totalorder %s66, %s82
      %p84 = scmp.eq.s32.totalorder %s20, 0
      %p85 = por %p83, %p84
      %s86 = ssub.s32 %s22, %s29
      %p87 = scmp.eq.s32.totalorder %s86, 0
      %s89 = sadd.s32 %s88, 1
      %s90 = scalar_select %p87, %s88, %s89
      %p93 = pneg %p87
      %p94 = scmp.eq.s32.totalorder %s14, 1
      %p95 = por %p93, %p94
      %p96 = scmp.ne.s32.totalorder %s88, %s91
      %p97 = scmp.eq.s32.totalorder %s14, 0
      %p98 = por %p96, %p97
      %p99 = scmp.ne.s32.totalorder %s88, %s91
      %p100 = scmp.eq.s32.totalorder %s19, 1
      %p101 = por %p99, %p100
      %p102 = scmp.ne.s32.totalorder %s91, %s92
      %p103 = scmp.eq.s32.totalorder %s19, 0
      %p104 = por %p102, %p103
      %p105 = scmp.ne.s32.totalorder %s91, %s92
      %p106 = scmp.eq.s32.totalorder %s20, 1
      %p107 = por %p105, %p106
      %p109 = scmp.ne.s32.totalorder %s92, %s108
      %p110 = scmp.eq.s32.totalorder %s20, 0
      %p111 = por %p109, %p110
      %s112 = ssub.s32 %s21, %s33
      %s113 = ssub.s32 %s22, %s29
      %s114 = sor.u32 %s112, %s113
      %p115 = scmp.eq.s32.totalorder %s114, 0
      %s117 = sadd.s32 %s116, 1
      %s118 = scalar_select %p115, %s116, %s117
      %p121 = pneg %p115
      %p122 = scmp.eq.s32.totalorder %s14, 1
      %p123 = por %p121, %p122
      %p124 = scmp.ne.s32.totalorder %s116, %s119
      %p125 = scmp.eq.s32.totalorder %s14, 0
      %p126 = por %p124, %p125
      %p127 = scmp.ne.s32.totalorder %s116, %s119
      %p128 = scmp.eq.s32.totalorder %s19, 1
      %p129 = por %p127, %p128
      %p130 = scmp.ne.s32.totalorder %s119, %s120
      %p131 = scmp.eq.s32.totalorder %s19, 0
      %p132 = por %p130, %p131
      %p133 = scmp.ne.s32.totalorder %s119, %s120
      %p134 = scmp.eq.s32.totalorder %s20, 1
      %p135 = por %p133, %p134
      %p137 = scmp.ne.s32.totalorder %s120, %s136
      %p138 = scmp.eq.s32.totalorder %s20, 0
      %p139 = por %p137, %p138
      %s140 = ssub.s32 %s21, %s33
      %s141 = ssub.s32 %s22, %s29
      %s142 = sor.u32 %s140, %s141
      %p143 = scmp.eq.s32.totalorder %s142, 0
      %s145 = sadd.s32 %s144, 1
      %s146 = scalar_select %p143, %s144, %s145
      %p149 = pneg %p143
      %p150 = scmp.eq.s32.totalorder %s14, 1
      %p151 = por %p149, %p150
      %p152 = scmp.ne.s32.totalorder %s144, %s147
      %p153 = scmp.eq.s32.totalorder %s14, 0
      %p154 = por %p152, %p153
      %p155 = scmp.ne.s32.totalorder %s144, %s147
      %p156 = scmp.eq.s32.totalorder %s19, 1
      %p157 = por %p155, %p156
      %p158 = scmp.ne.s32.totalorder %s147, %s148
      %p159 = scmp.eq.s32.totalorder %s19, 0
      %p160 = por %p158, %p159
      %p161 = scmp.ne.s32.totalorder %s147, %s148
      %p162 = scmp.eq.s32.totalorder %s20, 1
      %p163 = por %p161, %p162
      %p165 = scmp.ne.s32.totalorder %s148, %s164
      %p166 = scmp.eq.s32.totalorder %s20, 0
      %p167 = por %p165, %p166
      %p168 = scmp.le.s32.totalorder 1, %s14
      %p169 = scmp.lt.s32.totalorder %s14, 3
      %p170 = pnand %p168, %p169
      %p171 = pneg %p170
      // Predicated region
      $region9: #{global_generator_forward.45} parent=5 // pred_check
        _
      $region10: #{global_generator_forward.45} parent=5 // pred_check_branch
        %173 = sbr.rel (%p170) target = $region12
      $region11: #{global_generator_forward.45} parent=5 // pred_region
        %s174 = ssub.s32 %s14, 1
        // Predicated region
        $region13: #{global_generator_forward.45} parent=11 // pred_check
          %p175 = pneg %p78
        $region14: #{global_generator_forward.45} parent=11 // pred_check_branch
          %177 = sbr.rel (%p175) target = $region16
        $region15: #{global_generator_forward.45} parent=11 // pred_region
          %p178 = scmp.lt.s32.totalorder %s24, 0
          %s179 = scalar_select %p178, %s24, 0
          %s180 = smul.addr %s179, 4
          %s181 = scalar_lea.vmem %s1, %s180
        $region16: #{global_generator_forward.45} parent=11 // pred_fallthru
          _
        // Predicated region
        $region17: #{global_generator_forward.45} parent=11 // pred_check
          %p182 = pneg %p104
        $region18: #{global_generator_forward.45} parent=11 // pred_check_branch
          %184 = sbr.rel (%p182) target = $region20
        $region19: #{global_generator_forward.45} parent=11 // pred_region
          %p185 = scmp.lt.s32.totalorder %s24, 0
          %s186 = scalar_select %p185, %s24, 0
          %s187 = scalar_lea.vmem %s2, %s186
        $region20: #{global_generator_forward.45} parent=11 // pred_fallthru
          _
      $region12: #{global_generator_forward.45} parent=5 // pred_fallthru
        _
      %p188 = scmp.lt.s32.totalorder %s14, 2
      // Predicated region
      $region21: #{global_generator_forward.45} parent=5 // pred_check
        %p189 = pneg %p188
      $region22: #{global_generator_forward.45} parent=5 // pred_check_branch
        %191 = sbr.rel (%p189) target = $region24
      $region23: #{global_generator_forward.45} parent=5 // pred_region
        // Predicated region
        $region25: #{global_generator_forward.45} parent=23 // pred_check
          %p192 = pneg %p46
        $region26: #{global_generator_forward.45} parent=23 // pred_check_branch
          %194 = sbr.rel (%p192) target = $region28
        $region27: #{global_generator_forward.45} parent=23 // pred_region
          %s195 = smul.u32 32, %s21
          %p196 = scmp.lt.s32.totalorder %s195, 63
          %s197 = scalar_select %p196, %s195, 63
          %s198 = smul.addr %s197, 7
          %s199 = smul.addr %s198, 4
          %s200 = scalar_lea.vmem %s0, %s199
          %s201 = smul.u32 32, %s21
        $region28: #{global_generator_forward.45} parent=23 // pred_fallthru
          _
      $region24: #{global_generator_forward.45} parent=5 // pred_fallthru
        _
      %p202 = scmp.le.s32.totalorder 1, %s14
      %p203 = scmp.lt.s32.totalorder %s14, 3
      %p204 = pnand %p202, %p203
      %p205 = pneg %p204
      // Predicated region
      $region29: #{global_generator_forward.45} parent=5 // pred_check
        _
      $region30: #{global_generator_forward.45} parent=5 // pred_check_branch
        %207 = sbr.rel (%p204) target = $region32
      $region31: #{global_generator_forward.45} parent=5 // pred_region
        %s208 = ssub.s32 %s14, 1
        %s209 = smul.u32 32, %s23
        %p210 = scmp.lt.s32.totalorder %s209, 63
        %s211 = scalar_select %p210, %s209, 63
        %s212 = smul.addr %s211, 7
        %s213 = smul.addr %s212, 4
        %s214 = scalar_lea.vmem %s0, %s213
        %p215 = pneg %p52
        %p216 = pneg %p49
        %p217 = scmp.lt.s32.totalorder %s24, 0
        %s218 = scalar_select %p217, %s24, 0
        %s219 = smul.addr %s218, 4
        %s220 = scalar_lea.vmem %s1, %s219
        %p221 = pneg %p78
        %p222 = pneg %p75
        %p223 = scmp.lt.s32.totalorder %s24, 0
        %s224 = scalar_select %p223, %s24, 0
        %s225 = scalar_lea.vmem %s2, %s224
        %p226 = pneg %p104
        %p227 = pneg %p101
        %p228 = pneg %p132
        %p229 = pneg %p129
        %s230 = smul.u32 32, %s23
        %p231 = scmp.lt.s32.totalorder %s230, 63
        %s232 = scalar_select %p231, %s230, 63
        %p233 = scmp.lt.s32.totalorder %s24, 0
        %s234 = scalar_select %p233, %s24, 0
        %s235 = sadd.s32 %s234, %s232
        %s236 = smul.addr %s235, 8
        %s237 = scalar_lea.vmem %s3, %s236
        %p238 = pneg %p160
        %p239 = pneg %p157
        %s240 = sand.u32 %s147, 1
        %s241 = scalar_lea.sflag [#allocation3], %s240
        %s242 = sand.u32 %s147, 1
        %s243 = smul.addr %s242, 8
        %s244 = scalar_lea.vmem [#allocation2], %s243
        %s245 = smul.u32 32, %s23
        %p246 = scmp.lt.s32.totalorder %s245, 63
        %s247 = scalar_select %p246, %s245, 63
        %s248 = smul.addr %s247, 7
        %s249 = smul.addr %s248, 4
        %s250 = scalar_lea.vmem %s0, %s249
        %s251 = smul.u32 32, %s23
        %p252 = scmp.lt.s32.totalorder %s24, 0
        %s253 = scalar_select %p252, %s24, 0
        %s254 = smul.addr %s253, 4
        %s255 = scalar_lea.vmem %s1, %s254
        %p256 = scmp.lt.s32.totalorder %s24, 0
        %s257 = scalar_select %p256, %s24, 0
        %s258 = scalar_lea.vmem %s2, %s257
        %s259 = smul.u32 32, %s23
        %p260 = scmp.lt.s32.totalorder %s259, 63
        %s261 = scalar_select %p260, %s259, 63
        %p262 = scmp.lt.s32.totalorder %s24, 0
        %s263 = scalar_select %p262, %s24, 0
        %s264 = sadd.s32 %s263, %s261
        %s265 = smul.addr %s264, 8
        %s266 = scalar_lea.vmem %s3, %s265
        %s267 = smul.u32 32, %s23
        %v269 = vld [vmem:[%s250] sm:$0xff]
        %v270 = vld [vmem:[%s250 + $0x8] sm:$0xff]
        %v271 = vld [vmem:[%s250 + $0x10] sm:$0xff]
        %v272 = vld [vmem:[%s250 + $0x18] sm:$0xf]
        %v273 = vld [vmem:[%s250 + $0x1c] sm:$0xff]
        %v274 = vld [vmem:[%s250 + $0x24] sm:$0xff]
        %v275 = vld [vmem:[%s250 + $0x2c] sm:$0xff]
        %v276 = vld [vmem:[%s250 + $0x34] sm:$0xf]
        %v277 = vld [vmem:[%s250 + $0x38] sm:$0xff]
        %v278 = vld [vmem:[%s250 + $0x40] sm:$0xff]
        %v279 = vld [vmem:[%s250 + $0x48] sm:$0xff]
        %v280 = vld [vmem:[%s250 + $0x50] sm:$0xf]
        %v281 = vld [vmem:[%s250 + $0x54] sm:$0xff]
        %v282 = vld [vmem:[%s250 + $0x5c] sm:$0xff]
        %v283 = vld [vmem:[%s250 + $0x64] sm:$0xff]
        %v284 = vld [vmem:[%s250 + $0x6c] sm:$0xf]
        %v285 = vld [vmem:[%s250 + $0x70] sm:$0xff]
        %v286 = vld [vmem:[%s250 + $0x78] sm:$0xff]
        %v287 = vld [vmem:[%s250 + $0x80] sm:$0xff]
        %v288 = vld [vmem:[%s250 + $0x88] sm:$0xf]
        %v289 = vld [vmem:[%s250 + $0x8c] sm:$0xff]
        %v290 = vld [vmem:[%s250 + $0x94] sm:$0xff]
        %v291 = vld [vmem:[%s250 + $0x9c] sm:$0xff]
        %v292 = vld [vmem:[%s250 + $0xa4] sm:$0xf]
        %v293 = vld [vmem:[%s250 + $0xa8] sm:$0xff]
        %v294 = vld [vmem:[%s250 + $0xb0] sm:$0xff]
        %v295 = vld [vmem:[%s250 + $0xb8] sm:$0xff]
        %v296 = vld [vmem:[%s250 + $0xc0] sm:$0xf]
        %v297 = vld [vmem:[%s250 + $0xc4] sm:$0xff]
        %v298 = vld [vmem:[%s250 + $0xcc] sm:$0xff]
        %v299 = vld [vmem:[%s250 + $0xd4] sm:$0xff]
        %v300 = vld [vmem:[%s250 + $0xdc] sm:$0xf]
        %v301 = vld [vmem:[%s250 + $0xe0] sm:$0xff]
        %v302 = vld [vmem:[%s250 + $0xe8] sm:$0xff]
        %v303 = vld [vmem:[%s250 + $0xf0] sm:$0xff]
        %v304 = vld [vmem:[%s250 + $0xf8] sm:$0xf]
        %v305 = vld [vmem:[%s250 + $0xfc] sm:$0xff]
        %v306 = vld [vmem:[%s250 + $0x104] sm:$0xff]
        %v307 = vld [vmem:[%s250 + $0x10c] sm:$0xff]
        %v308 = vld [vmem:[%s250 + $0x114] sm:$0xf]
        %v309 = vld [vmem:[%s250 + $0x118] sm:$0xff]
        %v310 = vld [vmem:[%s250 + $0x120] sm:$0xff]
        %v311 = vld [vmem:[%s250 + $0x128] sm:$0xff]
        %v312 = vld [vmem:[%s250 + $0x130] sm:$0xf]
        %v313 = vld [vmem:[%s250 + $0x134] sm:$0xff]
        %v314 = vld [vmem:[%s250 + $0x13c] sm:$0xff]
        %v315 = vld [vmem:[%s250 + $0x144] sm:$0xff]
        %v316 = vld [vmem:[%s250 + $0x14c] sm:$0xf]
        %v317 = vld [vmem:[%s250 + $0x150] sm:$0xff]
        %v318 = vld [vmem:[%s250 + $0x158] sm:$0xff]
        %v319 = vld [vmem:[%s250 + $0x160] sm:$0xff]
        %v320 = vld [vmem:[%s250 + $0x168] sm:$0xf]
        %v321 = vld [vmem:[%s250 + $0x16c] sm:$0xff]
        %v322 = vld [vmem:[%s250 + $0x174] sm:$0xff]
        %v323 = vld [vmem:[%s250 + $0x17c] sm:$0xff]
        %v324 = vld [vmem:[%s250 + $0x184] sm:$0xf]
        %v325 = vld [vmem:[%s250 + $0x188] sm:$0xff]
        %v326 = vld [vmem:[%s250 + $0x190] sm:$0xff]
        %v327 = vld [vmem:[%s250 + $0x198] sm:$0xff]
        %v328 = vld [vmem:[%s250 + $0x1a0] sm:$0xf]
        %v329 = vld [vmem:[%s250 + $0x1a4] sm:$0xff]
        %v330 = vld [vmem:[%s250 + $0x1ac] sm:$0xff]
        %v331 = vld [vmem:[%s250 + $0x1b4] sm:$0xff]
        %v332 = vld [vmem:[%s250 + $0x1bc] sm:$0xf]
        %v333 = vld [vmem:[%s250 + $0x1c0] sm:$0xff]
        %v334 = vld [vmem:[%s250 + $0x1c8] sm:$0xff]
        %v335 = vld [vmem:[%s250 + $0x1d0] sm:$0xff]
        %v336 = vld [vmem:[%s250 + $0x1d8] sm:$0xf]
        %v337 = vld [vmem:[%s250 + $0x1dc] sm:$0xff]
        %v338 = vld [vmem:[%s250 + $0x1e4] sm:$0xff]
        %v339 = vld [vmem:[%s250 + $0x1ec] sm:$0xff]
        %v340 = vld [vmem:[%s250 + $0x1f4] sm:$0xf]
        %v341 = vld [vmem:[%s250 + $0x1f8] sm:$0xff]
        %v342 = vld [vmem:[%s250 + $0x200] sm:$0xff]
        %v343 = vld [vmem:[%s250 + $0x208] sm:$0xff]
        %v344 = vld [vmem:[%s250 + $0x210] sm:$0xf]
        %v345 = vld [vmem:[%s250 + $0x214] sm:$0xff]
        %v346 = vld [vmem:[%s250 + $0x21c] sm:$0xff]
        %v347 = vld [vmem:[%s250 + $0x224] sm:$0xff]
        %v348 = vld [vmem:[%s250 + $0x22c] sm:$0xf]
        %v349 = vld [vmem:[%s250 + $0x230] sm:$0xff]
        %v350 = vld [vmem:[%s250 + $0x238] sm:$0xff]
        %v351 = vld [vmem:[%s250 + $0x240] sm:$0xff]
        %v352 = vld [vmem:[%s250 + $0x248] sm:$0xf]
        %v353 = vld [vmem:[%s250 + $0x24c] sm:$0xff]
        %v354 = vld [vmem:[%s250 + $0x254] sm:$0xff]
        %v355 = vld [vmem:[%s250 + $0x25c] sm:$0xff]
        %v356 = vld [vmem:[%s250 + $0x264] sm:$0xf]
        %v357 = vld [vmem:[%s250 + $0x268] sm:$0xff]
        %v358 = vld [vmem:[%s250 + $0x270] sm:$0xff]
        %v359 = vld [vmem:[%s250 + $0x278] sm:$0xff]
        %v360 = vld [vmem:[%s250 + $0x280] sm:$0xf]
        %v361 = vld [vmem:[%s250 + $0x284] sm:$0xff]
        %v362 = vld [vmem:[%s250 + $0x28c] sm:$0xff]
        %v363 = vld [vmem:[%s250 + $0x294] sm:$0xff]
        %v364 = vld [vmem:[%s250 + $0x29c] sm:$0xf]
        %v365 = vld [vmem:[%s250 + $0x2a0] sm:$0xff]
        %v366 = vld [vmem:[%s250 + $0x2a8] sm:$0xff]
        %v367 = vld [vmem:[%s250 + $0x2b0] sm:$0xff]
        %v368 = vld [vmem:[%s250 + $0x2b8] sm:$0xf]
        %v369 = vld [vmem:[%s250 + $0x2bc] sm:$0xff]
        %v370 = vld [vmem:[%s250 + $0x2c4] sm:$0xff]
        %v371 = vld [vmem:[%s250 + $0x2cc] sm:$0xff]
        %v372 = vld [vmem:[%s250 + $0x2d4] sm:$0xf]
        %v373 = vld [vmem:[%s250 + $0x2d8] sm:$0xff]
        %v374 = vld [vmem:[%s250 + $0x2e0] sm:$0xff]
        %v375 = vld [vmem:[%s250 + $0x2e8] sm:$0xff]
        %v376 = vld [vmem:[%s250 + $0x2f0] sm:$0xf]
        %v377 = vld [vmem:[%s250 + $0x2f4] sm:$0xff]
        %v378 = vld [vmem:[%s250 + $0x2fc] sm:$0xff]
        %v379 = vld [vmem:[%s250 + $0x304] sm:$0xff]
        %v380 = vld [vmem:[%s250 + $0x30c] sm:$0xf]
        %v381 = vld [vmem:[%s250 + $0x310] sm:$0xff]
        %v382 = vld [vmem:[%s250 + $0x318] sm:$0xff]
        %v383 = vld [vmem:[%s250 + $0x320] sm:$0xff]
        %v384 = vld [vmem:[%s250 + $0x328] sm:$0xf]
        %v385 = vld [vmem:[%s250 + $0x32c] sm:$0xff]
        %v386 = vld [vmem:[%s250 + $0x334] sm:$0xff]
        %v387 = vld [vmem:[%s250 + $0x33c] sm:$0xff]
        %v388 = vld [vmem:[%s250 + $0x344] sm:$0xf]
        %v389 = vld [vmem:[%s250 + $0x348] sm:$0xff]
        %v390 = vld [vmem:[%s250 + $0x350] sm:$0xff]
        %v391 = vld [vmem:[%s250 + $0x358] sm:$0xff]
        %v392 = vld [vmem:[%s250 + $0x360] sm:$0xf]
        %v393 = vld [vmem:[%s250 + $0x364] sm:$0xff]
        %v394 = vld [vmem:[%s250 + $0x36c] sm:$0xff]
        %v395 = vld [vmem:[%s250 + $0x374] sm:$0xff]
        %v396 = vld [vmem:[%s250 + $0x37c] sm:$0xf]
        %v397 = vld [vmem:[%s255] sm:$0xf]
        %v398 = vld [vmem:[%s255 + $0x4] sm:$0xf]
        %v399 = vld [vmem:[%s255 + $0x8] sm:$0xf]
        %v400 = vld [vmem:[%s255 + $0xc] sm:$0xf]
        %v401 = vld [vmem:[%s255 + $0x10] sm:$0xf]
        %v402 = vld [vmem:[%s255 + $0x14] sm:$0xf]
        %v403 = vld [vmem:[%s255 + $0x18] sm:$0xf]
        %v404 = vld [vmem:[%s255 + $0x1c] sm:$0xf]
        %v405 = vld [vmem:[%s255 + $0x20] sm:$0xf]
        %v406 = vld [vmem:[%s255 + $0x24] sm:$0xf]
        %v407 = vld [vmem:[%s255 + $0x28] sm:$0xf]
        %v408 = vld [vmem:[%s255 + $0x2c] sm:$0xf]
        %v409 = vld [vmem:[%s255 + $0x30] sm:$0xf]
        %v410 = vld [vmem:[%s255 + $0x34] sm:$0xf]
        %v411 = vld [vmem:[%s255 + $0x38] sm:$0xf]
        %v412 = vld [vmem:[%s255 + $0x3c] sm:$0xf]
        %v413 = vld [vmem:[%s255 + $0x40] sm:$0xf]
        %v414 = vld [vmem:[%s255 + $0x44] sm:$0xf]
        %v415 = vld [vmem:[%s255 + $0x48] sm:$0xf]
        %v416 = vld [vmem:[%s255 + $0x4c] sm:$0xf]
        %v417 = vld [vmem:[%s255 + $0x50] sm:$0xf]
        %v418 = vld [vmem:[%s255 + $0x54] sm:$0xf]
        %v419 = vld [vmem:[%s255 + $0x58] sm:$0xf]
        %v420 = vld [vmem:[%s255 + $0x5c] sm:$0xf]
        %v421 = vld [vmem:[%s255 + $0x60] sm:$0xf]
        %v422 = vld [vmem:[%s255 + $0x64] sm:$0xf]
        %v423 = vld [vmem:[%s255 + $0x68] sm:$0xf]
        %v424 = vld [vmem:[%s255 + $0x6c] sm:$0xf]
        %v425 = vld [vmem:[%s255 + $0x70] sm:$0xf]
        %v426 = vld [vmem:[%s255 + $0x74] sm:$0xf]
        %v427 = vld [vmem:[%s255 + $0x78] sm:$0xf]
        %v428 = vld [vmem:[%s255 + $0x7c] sm:$0xf]
        %v429 = vld [vmem:[%s255 + $0x80] sm:$0xf]
        %v430 = vld [vmem:[%s255 + $0x84] sm:$0xf]
        %v431 = vld [vmem:[%s255 + $0x88] sm:$0xf]
        %v432 = vld [vmem:[%s255 + $0x8c] sm:$0xf]
        %v433 = vld [vmem:[%s255 + $0x90] sm:$0xf]
        %v434 = vld [vmem:[%s255 + $0x94] sm:$0xf]
        %v435 = vld [vmem:[%s255 + $0x98] sm:$0xf]
        %v436 = vld [vmem:[%s255 + $0x9c] sm:$0xf]
        %v437 = vld [vmem:[%s255 + $0xa0] sm:$0xf]
        %v438 = vld [vmem:[%s255 + $0xa4] sm:$0xf]
        %v439 = vld [vmem:[%s255 + $0xa8] sm:$0xf]
        %v440 = vld [vmem:[%s255 + $0xac] sm:$0xf]
        %v441 = vld [vmem:[%s255 + $0xb0] sm:$0xf]
        %v442 = vld [vmem:[%s255 + $0xb4] sm:$0xf]
        %v443 = vld [vmem:[%s255 + $0xb8] sm:$0xf]
        %v444 = vld [vmem:[%s255 + $0xbc] sm:$0xf]
        %v445 = vld [vmem:[%s255 + $0xc0] sm:$0xf]
        %v446 = vld [vmem:[%s255 + $0xc4] sm:$0xf]
        %v447 = vld [vmem:[%s255 + $0xc8] sm:$0xf]
        %v448 = vld [vmem:[%s255 + $0xcc] sm:$0xf]
        %v449 = vld [vmem:[%s255 + $0xd0] sm:$0xf]
        %v450 = vld [vmem:[%s255 + $0xd4] sm:$0xf]
        %v451 = vld [vmem:[%s255 + $0xd8] sm:$0xf]
        %v452 = vld [vmem:[%s255 + $0xdc] sm:$0xf]
        %v453 = vld [vmem:[%s255 + $0xe0] sm:$0xf]
        %v454 = vld [vmem:[%s255 + $0xe4] sm:$0xf]
        %v455 = vld [vmem:[%s255 + $0xe8] sm:$0xf]
        %v456 = vld [vmem:[%s255 + $0xec] sm:$0xf]
        %v457 = vld [vmem:[%s255 + $0xf0] sm:$0xf]
        %v458 = vld [vmem:[%s255 + $0xf4] sm:$0xf]
        %v459 = vld [vmem:[%s255 + $0xf8] sm:$0xf]
        %v460 = vld [vmem:[%s255 + $0xfc] sm:$0xf]
        %v461 = vld [vmem:[%s255 + $0x100] sm:$0xf]
        %v462 = vld [vmem:[%s255 + $0x104] sm:$0xf]
        %v463 = vld [vmem:[%s255 + $0x108] sm:$0xf]
        %v464 = vld [vmem:[%s255 + $0x10c] sm:$0xf]
        %v465 = vld [vmem:[%s255 + $0x110] sm:$0xf]
        %v466 = vld [vmem:[%s255 + $0x114] sm:$0xf]
        %v467 = vld [vmem:[%s255 + $0x118] sm:$0xf]
        %v468 = vld [vmem:[%s255 + $0x11c] sm:$0xf]
        %v469 = vld [vmem:[%s255 + $0x120] sm:$0xf]
        %v470 = vld [vmem:[%s255 + $0x124] sm:$0xf]
        %v471 = vld [vmem:[%s255 + $0x128] sm:$0xf]
        %v472 = vld [vmem:[%s255 + $0x12c] sm:$0xf]
        %v473 = vld [vmem:[%s255 + $0x130] sm:$0xf]
        %v474 = vld [vmem:[%s255 + $0x134] sm:$0xf]
        %v475 = vld [vmem:[%s255 + $0x138] sm:$0xf]
        %v476 = vld [vmem:[%s255 + $0x13c] sm:$0xf]
        %v477 = vld [vmem:[%s255 + $0x140] sm:$0xf]
        %v478 = vld [vmem:[%s255 + $0x144] sm:$0xf]
        %v479 = vld [vmem:[%s255 + $0x148] sm:$0xf]
        %v480 = vld [vmem:[%s255 + $0x14c] sm:$0xf]
        %v481 = vld [vmem:[%s255 + $0x150] sm:$0xf]
        %v482 = vld [vmem:[%s255 + $0x154] sm:$0xf]
        %v483 = vld [vmem:[%s255 + $0x158] sm:$0xf]
        %v484 = vld [vmem:[%s255 + $0x15c] sm:$0xf]
        %v485 = vld [vmem:[%s255 + $0x160] sm:$0xf]
        %v486 = vld [vmem:[%s255 + $0x164] sm:$0xf]
        %v487 = vld [vmem:[%s255 + $0x168] sm:$0xf]
        %v488 = vld [vmem:[%s255 + $0x16c] sm:$0xf]
        %v489 = vld [vmem:[%s255 + $0x170] sm:$0xf]
        %v490 = vld [vmem:[%s255 + $0x174] sm:$0xf]
        %v491 = vld [vmem:[%s255 + $0x178] sm:$0xf]
        %v492 = vld [vmem:[%s255 + $0x17c] sm:$0xf]
        %v493 = vld [vmem:[%s255 + $0x180] sm:$0xf]
        %v494 = vld [vmem:[%s255 + $0x184] sm:$0xf]
        %v495 = vld [vmem:[%s255 + $0x188] sm:$0xf]
        %v496 = vld [vmem:[%s255 + $0x18c] sm:$0xf]
        %v497 = vld [vmem:[%s255 + $0x190] sm:$0xf]
        %v498 = vld [vmem:[%s255 + $0x194] sm:$0xf]
        %v499 = vld [vmem:[%s255 + $0x198] sm:$0xf]
        %v500 = vld [vmem:[%s255 + $0x19c] sm:$0xf]
        %v501 = vld [vmem:[%s255 + $0x1a0] sm:$0xf]
        %v502 = vld [vmem:[%s255 + $0x1a4] sm:$0xf]
        %v503 = vld [vmem:[%s255 + $0x1a8] sm:$0xf]
        %v504 = vld [vmem:[%s255 + $0x1ac] sm:$0xf]
        %v505 = vld [vmem:[%s255 + $0x1b0] sm:$0xf]
        %v506 = vld [vmem:[%s255 + $0x1b4] sm:$0xf]
        %v507 = vld [vmem:[%s255 + $0x1b8] sm:$0xf]
        %v508 = vld [vmem:[%s255 + $0x1bc] sm:$0xf]
        %v509 = vld [vmem:[%s258] sm:$0x1]
        %v511 = vlaneseq
        %v512 = vshrl.u32 %v511, 7
        %v513 = vsub.s32 0, %v512
        %v514 = vrot.slane %v509, %v513
        %v644 = vunpack.c.l.b16 %v269
        %v645 = vunpack.c.h.b16 %v269
        %v646 = vunpack.c.l.b16 %v270
        %v647 = vunpack.c.h.b16 %v270
        %v648 = vunpack.c.l.b16 %v271
        %v649 = vunpack.c.h.b16 %v271
        %v650 = vunpack.c.l.b16 %v272
        %v651 = vunpack.c.l.b16 %v273
        %v652 = vunpack.c.h.b16 %v273
        %v653 = vunpack.c.l.b16 %v274
        %v654 = vunpack.c.h.b16 %v274
        %v655 = vunpack.c.l.b16 %v275
        %v656 = vunpack.c.h.b16 %v275
        %v657 = vunpack.c.l.b16 %v276
        %v658 = vunpack.c.l.b16 %v277
        %v659 = vunpack.c.h.b16 %v277
        %v660 = vunpack.c.l.b16 %v278
        %v661 = vunpack.c.h.b16 %v278
        %v662 = vunpack.c.l.b16 %v279
        %v663 = vunpack.c.h.b16 %v279
        %v664 = vunpack.c.l.b16 %v280
        %v665 = vunpack.c.l.b16 %v281
        %v666 = vunpack.c.h.b16 %v281
        %v667 = vunpack.c.l.b16 %v282
        %v668 = vunpack.c.h.b16 %v282
        %v669 = vunpack.c.l.b16 %v283
        %v670 = vunpack.c.h.b16 %v283
        %v671 = vunpack.c.l.b16 %v284
        %v672 = vunpack.c.l.b16 %v285
        %v673 = vunpack.c.h.b16 %v285
        %v674 = vunpack.c.l.b16 %v286
        %v675 = vunpack.c.h.b16 %v286
        %v676 = vunpack.c.l.b16 %v287
        %v677 = vunpack.c.h.b16 %v287
        %v678 = vunpack.c.l.b16 %v288
        %v679 = vunpack.c.l.b16 %v289
        %v680 = vunpack.c.h.b16 %v289
        %v681 = vunpack.c.l.b16 %v290
        %v682 = vunpack.c.h.b16 %v290
        %v683 = vunpack.c.l.b16 %v291
        %v684 = vunpack.c.h.b16 %v291
        %v685 = vunpack.c.l.b16 %v292
        %v686 = vunpack.c.l.b16 %v293
        %v687 = vunpack.c.h.b16 %v293
        %v688 = vunpack.c.l.b16 %v294
        %v689 = vunpack.c.h.b16 %v294
        %v690 = vunpack.c.l.b16 %v295
        %v691 = vunpack.c.h.b16 %v295
        %v692 = vunpack.c.l.b16 %v296
        %v693 = vunpack.c.l.b16 %v297
        %v694 = vunpack.c.h.b16 %v297
        %v695 = vunpack.c.l.b16 %v298
        %v696 = vunpack.c.h.b16 %v298
        %v697 = vunpack.c.l.b16 %v299
        %v698 = vunpack.c.h.b16 %v299
        %v699 = vunpack.c.l.b16 %v300
        %v700 = vunpack.c.l.b16 %v301
        %v701 = vunpack.c.h.b16 %v301
        %v702 = vunpack.c.l.b16 %v302
        %v703 = vunpack.c.h.b16 %v302
        %v704 = vunpack.c.l.b16 %v303
        %v705 = vunpack.c.h.b16 %v303
        %v706 = vunpack.c.l.b16 %v304
        %v707 = vunpack.c.l.b16 %v305
        %v708 = vunpack.c.h.b16 %v305
        %v709 = vunpack.c.l.b16 %v306
        %v710 = vunpack.c.h.b16 %v306
        %v711 = vunpack.c.l.b16 %v307
        %v712 = vunpack.c.h.b16 %v307
        %v713 = vunpack.c.l.b16 %v308
        %v714 = vunpack.c.l.b16 %v309
        %v715 = vunpack.c.h.b16 %v309
        %v716 = vunpack.c.l.b16 %v310
        %v717 = vunpack.c.h.b16 %v310
        %v718 = vunpack.c.l.b16 %v311
        %v719 = vunpack.c.h.b16 %v311
        %v720 = vunpack.c.l.b16 %v312
        %v721 = vunpack.c.l.b16 %v313
        %v722 = vunpack.c.h.b16 %v313
        %v723 = vunpack.c.l.b16 %v314
        %v724 = vunpack.c.h.b16 %v314
        %v725 = vunpack.c.l.b16 %v315
        %v726 = vunpack.c.h.b16 %v315
        %v727 = vunpack.c.l.b16 %v316
        %v728 = vunpack.c.l.b16 %v317
        %v729 = vunpack.c.h.b16 %v317
        %v730 = vunpack.c.l.b16 %v318
        %v731 = vunpack.c.h.b16 %v318
        %v732 = vunpack.c.l.b16 %v319
        %v733 = vunpack.c.h.b16 %v319
        %v734 = vunpack.c.l.b16 %v320
        %v735 = vunpack.c.l.b16 %v321
        %v736 = vunpack.c.h.b16 %v321
        %v737 = vunpack.c.l.b16 %v322
        %v738 = vunpack.c.h.b16 %v322
        %v739 = vunpack.c.l.b16 %v323
        %v740 = vunpack.c.h.b16 %v323
        %v741 = vunpack.c.l.b16 %v324
        %v742 = vunpack.c.l.b16 %v325
        %v743 = vunpack.c.h.b16 %v325
        %v744 = vunpack.c.l.b16 %v326
        %v745 = vunpack.c.h.b16 %v326
        %v746 = vunpack.c.l.b16 %v327
        %v747 = vunpack.c.h.b16 %v327
        %v748 = vunpack.c.l.b16 %v328
        %v749 = vunpack.c.l.b16 %v329
        %v750 = vunpack.c.h.b16 %v329
        %v751 = vunpack.c.l.b16 %v330
        %v752 = vunpack.c.h.b16 %v330
        %v753 = vunpack.c.l.b16 %v331
        %v754 = vunpack.c.h.b16 %v331
        %v755 = vunpack.c.l.b16 %v332
        %v756 = vunpack.c.l.b16 %v333
        %v757 = vunpack.c.h.b16 %v333
        %v758 = vunpack.c.l.b16 %v334
        %v759 = vunpack.c.h.b16 %v334
        %v760 = vunpack.c.l.b16 %v335
        %v761 = vunpack.c.h.b16 %v335
        %v762 = vunpack.c.l.b16 %v336
        %v763 = vunpack.c.l.b16 %v337
        %v764 = vunpack.c.h.b16 %v337
        %v765 = vunpack.c.l.b16 %v338
        %v766 = vunpack.c.h.b16 %v338
        %v767 = vunpack.c.l.b16 %v339
        %v768 = vunpack.c.h.b16 %v339
        %v769 = vunpack.c.l.b16 %v340
        %v770 = vunpack.c.l.b16 %v341
        %v771 = vunpack.c.h.b16 %v341
        %v772 = vunpack.c.l.b16 %v342
        %v773 = vunpack.c.h.b16 %v342
        %v774 = vunpack.c.l.b16 %v343
        %v775 = vunpack.c.h.b16 %v343
        %v776 = vunpack.c.l.b16 %v344
        %v777 = vunpack.c.l.b16 %v345
        %v778 = vunpack.c.h.b16 %v345
        %v779 = vunpack.c.l.b16 %v346
        %v780 = vunpack.c.h.b16 %v346
        %v781 = vunpack.c.l.b16 %v347
        %v782 = vunpack.c.h.b16 %v347
        %v783 = vunpack.c.l.b16 %v348
        %v784 = vunpack.c.l.b16 %v349
        %v785 = vunpack.c.h.b16 %v349
        %v786 = vunpack.c.l.b16 %v350
        %v787 = vunpack.c.h.b16 %v350
        %v788 = vunpack.c.l.b16 %v351
        %v789 = vunpack.c.h.b16 %v351
        %v790 = vunpack.c.l.b16 %v352
        %v791 = vunpack.c.l.b16 %v353
        %v792 = vunpack.c.h.b16 %v353
        %v793 = vunpack.c.l.b16 %v354
        %v794 = vunpack.c.h.b16 %v354
        %v795 = vunpack.c.l.b16 %v355
        %v796 = vunpack.c.h.b16 %v355
        %v797 = vunpack.c.l.b16 %v356
        %v798 = vunpack.c.l.b16 %v357
        %v799 = vunpack.c.h.b16 %v357
        %v800 = vunpack.c.l.b16 %v358
        %v801 = vunpack.c.h.b16 %v358
        %v802 = vunpack.c.l.b16 %v359
        %v803 = vunpack.c.h.b16 %v359
        %v804 = vunpack.c.l.b16 %v360
        %v805 = vunpack.c.l.b16 %v361
        %v806 = vunpack.c.h.b16 %v361
        %v807 = vunpack.c.l.b16 %v362
        %v808 = vunpack.c.h.b16 %v362
        %v809 = vunpack.c.l.b16 %v363
        %v810 = vunpack.c.h.b16 %v363
        %v811 = vunpack.c.l.b16 %v364
        %v812 = vunpack.c.l.b16 %v365
        %v813 = vunpack.c.h.b16 %v365
        %v814 = vunpack.c.l.b16 %v366
        %v815 = vunpack.c.h.b16 %v366
        %v816 = vunpack.c.l.b16 %v367
        %v817 = vunpack.c.h.b16 %v367
        %v818 = vunpack.c.l.b16 %v368
        %v819 = vunpack.c.l.b16 %v369
        %v820 = vunpack.c.h.b16 %v369
        %v821 = vunpack.c.l.b16 %v370
        %v822 = vunpack.c.h.b16 %v370
        %v823 = vunpack.c.l.b16 %v371
        %v824 = vunpack.c.h.b16 %v371
        %v825 = vunpack.c.l.b16 %v372
        %v826 = vunpack.c.l.b16 %v373
        %v827 = vunpack.c.h.b16 %v373
        %v828 = vunpack.c.l.b16 %v374
        %v829 = vunpack.c.h.b16 %v374
        %v830 = vunpack.c.l.b16 %v375
        %v831 = vunpack.c.h.b16 %v375
        %v832 = vunpack.c.l.b16 %v376
        %v833 = vunpack.c.l.b16 %v377
        %v834 = vunpack.c.h.b16 %v377
        %v835 = vunpack.c.l.b16 %v378
        %v836 = vunpack.c.h.b16 %v378
        %v837 = vunpack.c.l.b16 %v379
        %v838 = vunpack.c.h.b16 %v379
        %v839 = vunpack.c.l.b16 %v380
        %v840 = vunpack.c.l.b16 %v381
        %v841 = vunpack.c.h.b16 %v381
        %v842 = vunpack.c.l.b16 %v382
        %v843 = vunpack.c.h.b16 %v382
        %v844 = vunpack.c.l.b16 %v383
        %v845 = vunpack.c.h.b16 %v383
        %v846 = vunpack.c.l.b16 %v384
        %v847 = vunpack.c.l.b16 %v385
        %v848 = vunpack.c.h.b16 %v385
        %v849 = vunpack.c.l.b16 %v386
        %v850 = vunpack.c.h.b16 %v386
        %v851 = vunpack.c.l.b16 %v387
        %v852 = vunpack.c.h.b16 %v387
        %v853 = vunpack.c.l.b16 %v388
        %v854 = vunpack.c.l.b16 %v389
        %v855 = vunpack.c.h.b16 %v389
        %v856 = vunpack.c.l.b16 %v390
        %v857 = vunpack.c.h.b16 %v390
        %v858 = vunpack.c.l.b16 %v391
        %v859 = vunpack.c.h.b16 %v391
        %v860 = vunpack.c.l.b16 %v392
        %v861 = vunpack.c.l.b16 %v393
        %v862 = vunpack.c.h.b16 %v393
        %v863 = vunpack.c.l.b16 %v394
        %v864 = vunpack.c.h.b16 %v394
        %v865 = vunpack.c.l.b16 %v395
        %v866 = vunpack.c.h.b16 %v395
        %v867 = vunpack.c.l.b16 %v396
        %v868 = vpack.c.b16 %v651, %v644
        %v869 = vpack.c.b16 %v652, %v645
        %v870 = vpack.c.b16 %v653, %v646
        %v871 = vpack.c.b16 %v654, %v647
        %v872 = vpack.c.b16 %v655, %v648
        %v873 = vpack.c.b16 %v656, %v649
        %v874 = vpack.c.b16 %v657, %v650
        %v875 = vpack.c.b16 %v665, %v658
        %v876 = vpack.c.b16 %v666, %v659
        %v877 = vpack.c.b16 %v667, %v660
        %v878 = vpack.c.b16 %v668, %v661
        %v879 = vpack.c.b16 %v669, %v662
        %v880 = vpack.c.b16 %v670, %v663
        %v881 = vpack.c.b16 %v671, %v664
        %v882 = vpack.c.b16 %v679, %v672
        %v883 = vpack.c.b16 %v680, %v673
        %v884 = vpack.c.b16 %v681, %v674
        %v885 = vpack.c.b16 %v682, %v675
        %v886 = vpack.c.b16 %v683, %v676
        %v887 = vpack.c.b16 %v684, %v677
        %v888 = vpack.c.b16 %v685, %v678
        %v889 = vpack.c.b16 %v693, %v686
        %v890 = vpack.c.b16 %v694, %v687
        %v891 = vpack.c.b16 %v695, %v688
        %v892 = vpack.c.b16 %v696, %v689
        %v893 = vpack.c.b16 %v697, %v690
        %v894 = vpack.c.b16 %v698, %v691
        %v895 = vpack.c.b16 %v699, %v692
        %v896 = vpack.c.b16 %v707, %v700
        %v897 = vpack.c.b16 %v708, %v701
        %v898 = vpack.c.b16 %v709, %v702
        %v899 = vpack.c.b16 %v710, %v703
        %v900 = vpack.c.b16 %v711, %v704
        %v901 = vpack.c.b16 %v712, %v705
        %v902 = vpack.c.b16 %v713, %v706
        %v903 = vpack.c.b16 %v721, %v714
        %v904 = vpack.c.b16 %v722, %v715
        %v905 = vpack.c.b16 %v723, %v716
        %v906 = vpack.c.b16 %v724, %v717
        %v907 = vpack.c.b16 %v725, %v718
        %v908 = vpack.c.b16 %v726, %v719
        %v909 = vpack.c.b16 %v727, %v720
        %v910 = vpack.c.b16 %v735, %v728
        %v911 = vpack.c.b16 %v736, %v729
        %v912 = vpack.c.b16 %v737, %v730
        %v913 = vpack.c.b16 %v738, %v731
        %v914 = vpack.c.b16 %v739, %v732
        %v915 = vpack.c.b16 %v740, %v733
        %v916 = vpack.c.b16 %v741, %v734
        %v917 = vpack.c.b16 %v749, %v742
        %v918 = vpack.c.b16 %v750, %v743
        %v919 = vpack.c.b16 %v751, %v744
        %v920 = vpack.c.b16 %v752, %v745
        %v921 = vpack.c.b16 %v753, %v746
        %v922 = vpack.c.b16 %v754, %v747
        %v923 = vpack.c.b16 %v755, %v748
        %v924 = vpack.c.b16 %v763, %v756
        %v925 = vpack.c.b16 %v764, %v757
        %v926 = vpack.c.b16 %v765, %v758
        %v927 = vpack.c.b16 %v766, %v759
        %v928 = vpack.c.b16 %v767, %v760
        %v929 = vpack.c.b16 %v768, %v761
        %v930 = vpack.c.b16 %v769, %v762
        %v931 = vpack.c.b16 %v777, %v770
        %v932 = vpack.c.b16 %v778, %v771
        %v933 = vpack.c.b16 %v779, %v772
        %v934 = vpack.c.b16 %v780, %v773
        %v935 = vpack.c.b16 %v781, %v774
        %v936 = vpack.c.b16 %v782, %v775
        %v937 = vpack.c.b16 %v783, %v776
        %v938 = vpack.c.b16 %v791, %v784
        %v939 = vpack.c.b16 %v792, %v785
        %v940 = vpack.c.b16 %v793, %v786
        %v941 = vpack.c.b16 %v794, %v787
        %v942 = vpack.c.b16 %v795, %v788
        %v943 = vpack.c.b16 %v796, %v789
        %v944 = vpack.c.b16 %v797, %v790
        %v945 = vpack.c.b16 %v805, %v798
        %v946 = vpack.c.b16 %v806, %v799
        %v947 = vpack.c.b16 %v807, %v800
        %v948 = vpack.c.b16 %v808, %v801
        %v949 = vpack.c.b16 %v809, %v802
        %v950 = vpack.c.b16 %v810, %v803
        %v951 = vpack.c.b16 %v811, %v804
        %v952 = vpack.c.b16 %v819, %v812
        %v953 = vpack.c.b16 %v820, %v813
        %v954 = vpack.c.b16 %v821, %v814
        %v955 = vpack.c.b16 %v822, %v815
        %v956 = vpack.c.b16 %v823, %v816
        %v957 = vpack.c.b16 %v824, %v817
        %v958 = vpack.c.b16 %v825, %v818
        %v959 = vpack.c.b16 %v833, %v826
        %v960 = vpack.c.b16 %v834, %v827
        %v961 = vpack.c.b16 %v835, %v828
        %v962 = vpack.c.b16 %v836, %v829
        %v963 = vpack.c.b16 %v837, %v830
        %v964 = vpack.c.b16 %v838, %v831
        %v965 = vpack.c.b16 %v839, %v832
        %v966 = vpack.c.b16 %v847, %v840
        %v967 = vpack.c.b16 %v848, %v841
        %v968 = vpack.c.b16 %v849, %v842
        %v969 = vpack.c.b16 %v850, %v843
        %v970 = vpack.c.b16 %v851, %v844
        %v971 = vpack.c.b16 %v852, %v845
        %v972 = vpack.c.b16 %v853, %v846
        %v973 = vpack.c.b16 %v861, %v854
        %v974 = vpack.c.b16 %v862, %v855
        %v975 = vpack.c.b16 %v863, %v856
        %v976 = vpack.c.b16 %v864, %v857
        %v977 = vpack.c.b16 %v865, %v858
        %v978 = vpack.c.b16 %v866, %v859
        %v979 = vpack.c.b16 %v867, %v860
        %v1204 = vunpack.c.l.b16 %v397
        %v1205 = vunpack.c.l.b16 %v398
        %v1206 = vunpack.c.l.b16 %v399
        %v1207 = vunpack.c.l.b16 %v400
        %v1208 = vunpack.c.l.b16 %v401
        %v1209 = vunpack.c.l.b16 %v402
        %v1210 = vunpack.c.l.b16 %v403
        %v1211 = vunpack.c.l.b16 %v404
        %v1212 = vunpack.c.l.b16 %v405
        %v1213 = vunpack.c.l.b16 %v406
        %v1214 = vunpack.c.l.b16 %v407
        %v1215 = vunpack.c.l.b16 %v408
        %v1216 = vunpack.c.l.b16 %v409
        %v1217 = vunpack.c.l.b16 %v410
        %v1218 = vunpack.c.l.b16 %v411
        %v1219 = vunpack.c.l.b16 %v412
        %v1220 = vunpack.c.l.b16 %v413
        %v1221 = vunpack.c.l.b16 %v414
        %v1222 = vunpack.c.l.b16 %v415
        %v1223 = vunpack.c.l.b16 %v416
        %v1224 = vunpack.c.l.b16 %v417
        %v1225 = vunpack.c.l.b16 %v418
        %v1226 = vunpack.c.l.b16 %v419
        %v1227 = vunpack.c.l.b16 %v420
        %v1228 = vunpack.c.l.b16 %v421
        %v1229 = vunpack.c.l.b16 %v422
        %v1230 = vunpack.c.l.b16 %v423
        %v1231 = vunpack.c.l.b16 %v424
        %v1232 = vunpack.c.l.b16 %v425
        %v1233 = vunpack.c.l.b16 %v426
        %v1234 = vunpack.c.l.b16 %v427
        %v1235 = vunpack.c.l.b16 %v428
        %v1236 = vunpack.c.l.b16 %v429
        %v1237 = vunpack.c.l.b16 %v430
        %v1238 = vunpack.c.l.b16 %v431
        %v1239 = vunpack.c.l.b16 %v432
        %v1240 = vunpack.c.l.b16 %v433
        %v1241 = vunpack.c.l.b16 %v434
        %v1242 = vunpack.c.l.b16 %v435
        %v1243 = vunpack.c.l.b16 %v436
        %v1244 = vunpack.c.l.b16 %v437
        %v1245 = vunpack.c.l.b16 %v438
        %v1246 = vunpack.c.l.b16 %v439
        %v1247 = vunpack.c.l.b16 %v440
        %v1248 = vunpack.c.l.b16 %v441
        %v1249 = vunpack.c.l.b16 %v442
        %v1250 = vunpack.c.l.b16 %v443
        %v1251 = vunpack.c.l.b16 %v444
        %v1252 = vunpack.c.l.b16 %v445
        %v1253 = vunpack.c.l.b16 %v446
        %v1254 = vunpack.c.l.b16 %v447
        %v1255 = vunpack.c.l.b16 %v448
        %v1256 = vunpack.c.l.b16 %v449
        %v1257 = vunpack.c.l.b16 %v450
        %v1258 = vunpack.c.l.b16 %v451
        %v1259 = vunpack.c.l.b16 %v452
        %v1260 = vunpack.c.l.b16 %v453
        %v1261 = vunpack.c.l.b16 %v454
        %v1262 = vunpack.c.l.b16 %v455
        %v1263 = vunpack.c.l.b16 %v456
        %v1264 = vunpack.c.l.b16 %v457
        %v1265 = vunpack.c.l.b16 %v458
        %v1266 = vunpack.c.l.b16 %v459
        %v1267 = vunpack.c.l.b16 %v460
        %v1268 = vunpack.c.l.b16 %v461
        %v1269 = vunpack.c.l.b16 %v462
        %v1270 = vunpack.c.l.b16 %v463
        %v1271 = vunpack.c.l.b16 %v464
        %v1272 = vunpack.c.l.b16 %v465
        %v1273 = vunpack.c.l.b16 %v466
        %v1274 = vunpack.c.l.b16 %v467
        %v1275 = vunpack.c.l.b16 %v468
        %v1276 = vunpack.c.l.b16 %v469
        %v1277 = vunpack.c.l.b16 %v470
        %v1278 = vunpack.c.l.b16 %v471
        %v1279 = vunpack.c.l.b16 %v472
        %v1280 = vunpack.c.l.b16 %v473
        %v1281 = vunpack.c.l.b16 %v474
        %v1282 = vunpack.c.l.b16 %v475
        %v1283 = vunpack.c.l.b16 %v476
        %v1284 = vunpack.c.l.b16 %v477
        %v1285 = vunpack.c.l.b16 %v478
        %v1286 = vunpack.c.l.b16 %v479
        %v1287 = vunpack.c.l.b16 %v480
        %v1288 = vunpack.c.l.b16 %v481
        %v1289 = vunpack.c.l.b16 %v482
        %v1290 = vunpack.c.l.b16 %v483
        %v1291 = vunpack.c.l.b16 %v484
        %v1292 = vunpack.c.l.b16 %v485
        %v1293 = vunpack.c.l.b16 %v486
        %v1294 = vunpack.c.l.b16 %v487
        %v1295 = vunpack.c.l.b16 %v488
        %v1296 = vunpack.c.l.b16 %v489
        %v1297 = vunpack.c.l.b16 %v490
        %v1298 = vunpack.c.l.b16 %v491
        %v1299 = vunpack.c.l.b16 %v492
        %v1300 = vunpack.c.l.b16 %v493
        %v1301 = vunpack.c.l.b16 %v494
        %v1302 = vunpack.c.l.b16 %v495
        %v1303 = vunpack.c.l.b16 %v496
        %v1304 = vunpack.c.l.b16 %v497
        %v1305 = vunpack.c.l.b16 %v498
        %v1306 = vunpack.c.l.b16 %v499
        %v1307 = vunpack.c.l.b16 %v500
        %v1308 = vunpack.c.l.b16 %v501
        %v1309 = vunpack.c.l.b16 %v502
        %v1310 = vunpack.c.l.b16 %v503
        %v1311 = vunpack.c.l.b16 %v504
        %v1312 = vunpack.c.l.b16 %v505
        %v1313 = vunpack.c.l.b16 %v506
        %v1314 = vunpack.c.l.b16 %v507
        %v1315 = vunpack.c.l.b16 %v508
        %v1316 = vpack.c.b16 %v1205, %v1204
        %v1317 = vpack.c.b16 %v1207, %v1206
        %v1318 = vpack.c.b16 %v1209, %v1208
        %v1319 = vpack.c.b16 %v1211, %v1210
        %v1320 = vpack.c.b16 %v1213, %v1212
        %v1321 = vpack.c.b16 %v1215, %v1214
        %v1322 = vpack.c.b16 %v1217, %v1216
        %v1323 = vpack.c.b16 %v1219, %v1218
        %v1324 = vpack.c.b16 %v1221, %v1220
        %v1325 = vpack.c.b16 %v1223, %v1222
        %v1326 = vpack.c.b16 %v1225, %v1224
        %v1327 = vpack.c.b16 %v1227, %v1226
        %v1328 = vpack.c.b16 %v1229, %v1228
        %v1329 = vpack.c.b16 %v1231, %v1230
        %v1330 = vpack.c.b16 %v1233, %v1232
        %v1331 = vpack.c.b16 %v1235, %v1234
        %v1332 = vpack.c.b16 %v1237, %v1236
        %v1333 = vpack.c.b16 %v1239, %v1238
        %v1334 = vpack.c.b16 %v1241, %v1240
        %v1335 = vpack.c.b16 %v1243, %v1242
        %v1336 = vpack.c.b16 %v1245, %v1244
        %v1337 = vpack.c.b16 %v1247, %v1246
        %v1338 = vpack.c.b16 %v1249, %v1248
        %v1339 = vpack.c.b16 %v1251, %v1250
        %v1340 = vpack.c.b16 %v1253, %v1252
        %v1341 = vpack.c.b16 %v1255, %v1254
        %v1342 = vpack.c.b16 %v1257, %v1256
        %v1343 = vpack.c.b16 %v1259, %v1258
        %v1344 = vpack.c.b16 %v1261, %v1260
        %v1345 = vpack.c.b16 %v1263, %v1262
        %v1346 = vpack.c.b16 %v1265, %v1264
        %v1347 = vpack.c.b16 %v1267, %v1266
        %v1348 = vpack.c.b16 %v1269, %v1268
        %v1349 = vpack.c.b16 %v1271, %v1270
        %v1350 = vpack.c.b16 %v1273, %v1272
        %v1351 = vpack.c.b16 %v1275, %v1274
        %v1352 = vpack.c.b16 %v1277, %v1276
        %v1353 = vpack.c.b16 %v1279, %v1278
        %v1354 = vpack.c.b16 %v1281, %v1280
        %v1355 = vpack.c.b16 %v1283, %v1282
        %v1356 = vpack.c.b16 %v1285, %v1284
        %v1357 = vpack.c.b16 %v1287, %v1286
        %v1358 = vpack.c.b16 %v1289, %v1288
        %v1359 = vpack.c.b16 %v1291, %v1290
        %v1360 = vpack.c.b16 %v1293, %v1292
        %v1361 = vpack.c.b16 %v1295, %v1294
        %v1362 = vpack.c.b16 %v1297, %v1296
        %v1363 = vpack.c.b16 %v1299, %v1298
        %v1364 = vpack.c.b16 %v1301, %v1300
        %v1365 = vpack.c.b16 %v1303, %v1302
        %v1366 = vpack.c.b16 %v1305, %v1304
        %v1367 = vpack.c.b16 %v1307, %v1306
        %v1368 = vpack.c.b16 %v1309, %v1308
        %v1369 = vpack.c.b16 %v1311, %v1310
        %v1370 = vpack.c.b16 %v1313, %v1312
        %v1371 = vpack.c.b16 %v1315, %v1314
        %1428 = vmatprep.subr.bf16.mxu0 0
        %1429 = vmatpush1.bf16.msra.mxu0 %v1323
        %1430 = vmatprep.subr.bf16.mxu0 0
        %1431 = vmatpush1.bf16.msra.mxu0 %v1322
        %1432 = vmatprep.subr.bf16.mxu0 0
        %1433 = vmatpush1.bf16.msra.mxu0 %v1321
        %1434 = vmatprep.subr.bf16.mxu0 0
        %1435 = vmatpush1.bf16.msra.mxu0 %v1320
        %1436 = vmatprep.subr.bf16.mxu0 0
        %1437 = vmatpush1.bf16.msra.mxu0 %v1319
        %1438 = vmatprep.subr.bf16.mxu0 0
        %1439 = vmatpush1.bf16.msra.mxu0 %v1318
        %1440 = vmatprep.subr.bf16.mxu0 0
        %1441 = vmatpush1.bf16.msra.mxu0 %v1317
        %1442 = vmatprep.subr.bf16.mxu0 0
        %1443 = vmatpush1.bf16.msra.mxu0 %v1316
        %1444 = vmatprep.subr.bf16.mxu0 0
        %1445 = vmatpush2.bf16.msra.mxu0 %v1331
        %1446 = vmatprep.subr.bf16.mxu0 0
        %1447 = vmatpush2.bf16.msra.mxu0 %v1330
        %1448 = vmatprep.subr.bf16.mxu0 0
        %1449 = vmatpush2.bf16.msra.mxu0 %v1329
        %1450 = vmatprep.subr.bf16.mxu0 0
        %1451 = vmatpush2.bf16.msra.mxu0 %v1328
        %1452 = vmatprep.subr.bf16.mxu0 0
        %1453 = vmatpush2.bf16.msra.mxu0 %v1327
        %1454 = vmatprep.subr.bf16.mxu0 0
        %1455 = vmatpush2.bf16.msra.mxu0 %v1326
        %1456 = vmatprep.subr.bf16.mxu0 0
        %1457 = vmatpush2.bf16.msra.mxu0 %v1325
        %1458 = vmatprep.subr.bf16.mxu0 0
        %1459 = vmatpush2.bf16.msra.mxu0 %v1324
        %1460 = vmatprep.mubr.bf16.mxu0 %v869
        %1461 = vmatmul.mubr.bf16.gmra.mxu0 %v868
        %v1462 = vpop.f32.mrf.mxu0
        %v1463 = vadd.f32 %v514, %v1462
        %v1464 = vpop.f32.mrf.mxu0
        %v1465 = vpop.f32.mrf.mxu0
        %v1466 = vadd.f32 %v514, %v1465
        %v1467 = vpop.f32.mrf.mxu0
        %1468 = vmatprep.mubr.bf16.mxu0 %v876
        %1469 = vmatmul.mubr.bf16.gmra.mxu0 %v875
        %v1470 = vpop.f32.mrf.mxu0
        %v1471 = vadd.f32 %v514, %v1470
        %v1472 = vpop.f32.mrf.mxu0
        %v1473 = vpop.f32.mrf.mxu0
        %v1474 = vadd.f32 %v514, %v1473
        %v1475 = vpop.f32.mrf.mxu0
        %1476 = vmatprep.mubr.bf16.mxu0 %v883
        %1477 = vmatmul.mubr.bf16.gmra.mxu0 %v882
        %v1478 = vpop.f32.mrf.mxu0
        %v1479 = vadd.f32 %v514, %v1478
        %v1480 = vpop.f32.mrf.mxu0
        %v1481 = vpop.f32.mrf.mxu0
        %v1482 = vadd.f32 %v514, %v1481
        %v1483 = vpop.f32.mrf.mxu0
        %1484 = vmatprep.mubr.bf16.mxu0 %v890
        %1485 = vmatmul.mubr.bf16.gmra.mxu0 %v889
        %v1486 = vpop.f32.mrf.mxu0
        %v1487 = vadd.f32 %v514, %v1486
        %v1488 = vpop.f32.mrf.mxu0
        %v1489 = vpop.f32.mrf.mxu0
        %v1490 = vadd.f32 %v514, %v1489
        %v1491 = vpop.f32.mrf.mxu0
        %1492 = vmatprep.mubr.bf16.mxu0 %v897
        %1493 = vmatmul.mubr.bf16.gmra.mxu0 %v896
        %v1494 = vpop.f32.mrf.mxu0
        %v1495 = vadd.f32 %v514, %v1494
        %v1496 = vpop.f32.mrf.mxu0
        %v1497 = vpop.f32.mrf.mxu0
        %v1498 = vadd.f32 %v514, %v1497
        %v1499 = vpop.f32.mrf.mxu0
        %1500 = vmatprep.mubr.bf16.mxu0 %v904
        %1501 = vmatmul.mubr.bf16.gmra.mxu0 %v903
        %v1502 = vpop.f32.mrf.mxu0
        %v1503 = vadd.f32 %v514, %v1502
        %v1504 = vpop.f32.mrf.mxu0
        %v1505 = vpop.f32.mrf.mxu0
        %v1506 = vadd.f32 %v514, %v1505
        %v1507 = vpop.f32.mrf.mxu0
        %1508 = vmatprep.mubr.bf16.mxu0 %v911
        %1509 = vmatmul.mubr.bf16.gmra.mxu0 %v910
        %v1510 = vpop.f32.mrf.mxu0
        %v1511 = vadd.f32 %v514, %v1510
        %v1512 = vpop.f32.mrf.mxu0
        %v1513 = vpop.f32.mrf.mxu0
        %v1514 = vadd.f32 %v514, %v1513
        %v1515 = vpop.f32.mrf.mxu0
        %1516 = vmatprep.mubr.bf16.mxu0 %v918
        %1517 = vmatmul.mubr.bf16.gmra.mxu0 %v917
        %v1518 = vpop.f32.mrf.mxu0
        %v1519 = vadd.f32 %v514, %v1518
        %v1520 = vpop.f32.mrf.mxu0
        %v1521 = vpop.f32.mrf.mxu0
        %v1522 = vadd.f32 %v514, %v1521
        %v1523 = vpop.f32.mrf.mxu0
        %1524 = vmatprep.mubr.bf16.mxu0 %v925
        %1525 = vmatmul.mubr.bf16.gmra.mxu0 %v924
        %v1526 = vpop.f32.mrf.mxu0
        %v1527 = vadd.f32 %v514, %v1526
        %v1528 = vpop.f32.mrf.mxu0
        %v1529 = vpop.f32.mrf.mxu0
        %v1530 = vadd.f32 %v514, %v1529
        %v1531 = vpop.f32.mrf.mxu0
        %1532 = vmatprep.mubr.bf16.mxu0 %v932
        %1533 = vmatmul.mubr.bf16.gmra.mxu0 %v931
        %v1534 = vpop.f32.mrf.mxu0
        %v1535 = vadd.f32 %v514, %v1534
        %v1536 = vpop.f32.mrf.mxu0
        %v1537 = vpop.f32.mrf.mxu0
        %v1538 = vadd.f32 %v514, %v1537
        %v1539 = vpop.f32.mrf.mxu0
        %1540 = vmatprep.mubr.bf16.mxu0 %v939
        %1541 = vmatmul.mubr.bf16.gmra.mxu0 %v938
        %v1542 = vpop.f32.mrf.mxu0
        %v1543 = vadd.f32 %v514, %v1542
        %v1544 = vpop.f32.mrf.mxu0
        %v1545 = vpop.f32.mrf.mxu0
        %v1546 = vadd.f32 %v514, %v1545
        %v1547 = vpop.f32.mrf.mxu0
        %1548 = vmatprep.mubr.bf16.mxu0 %v946
        %1549 = vmatmul.mubr.bf16.gmra.mxu0 %v945
        %v1550 = vpop.f32.mrf.mxu0
        %v1551 = vadd.f32 %v514, %v1550
        %v1552 = vpop.f32.mrf.mxu0
        %v1553 = vpop.f32.mrf.mxu0
        %v1554 = vadd.f32 %v514, %v1553
        %v1555 = vpop.f32.mrf.mxu0
        %1556 = vmatprep.mubr.bf16.mxu0 %v953
        %1557 = vmatmul.mubr.bf16.gmra.mxu0 %v952
        %v1558 = vpop.f32.mrf.mxu0
        %v1559 = vadd.f32 %v514, %v1558
        %v1560 = vpop.f32.mrf.mxu0
        %v1561 = vpop.f32.mrf.mxu0
        %v1562 = vadd.f32 %v514, %v1561
        %v1563 = vpop.f32.mrf.mxu0
        %1564 = vmatprep.mubr.bf16.mxu0 %v960
        %1565 = vmatmul.mubr.bf16.gmra.mxu0 %v959
        %v1566 = vpop.f32.mrf.mxu0
        %v1567 = vadd.f32 %v514, %v1566
        %v1568 = vpop.f32.mrf.mxu0
        %v1569 = vpop.f32.mrf.mxu0
        %v1570 = vadd.f32 %v514, %v1569
        %v1571 = vpop.f32.mrf.mxu0
        %1572 = vmatprep.mubr.bf16.mxu0 %v967
        %1573 = vmatmul.mubr.bf16.gmra.mxu0 %v966
        %v1574 = vpop.f32.mrf.mxu0
        %v1575 = vadd.f32 %v514, %v1574
        %v1576 = vpop.f32.mrf.mxu0
        %v1577 = vpop.f32.mrf.mxu0
        %v1578 = vadd.f32 %v514, %v1577
        %v1579 = vpop.f32.mrf.mxu0
        %1580 = vmatprep.mubr.bf16.mxu0 %v974
        %1581 = vmatmul.mubr.bf16.gmra.mxu0 %v973
        %v1582 = vpop.f32.mrf.mxu0
        %v1583 = vadd.f32 %v514, %v1582
        %v1584 = vpop.f32.mrf.mxu0
        %v1585 = vpop.f32.mrf.mxu0
        %v1586 = vadd.f32 %v514, %v1585
        %v1587 = vpop.f32.mrf.mxu0
        %1588 = vdwg.mxu0
        %1589 = vmatprep.subr.bf16.mxu0 0
        %1590 = vmatpush1.bf16.msra.mxu0 %v1339
        %1591 = vmatprep.subr.bf16.mxu0 0
        %1592 = vmatpush1.bf16.msra.mxu0 %v1338
        %1593 = vmatprep.subr.bf16.mxu0 0
        %1594 = vmatpush1.bf16.msra.mxu0 %v1337
        %1595 = vmatprep.subr.bf16.mxu0 0
        %1596 = vmatpush1.bf16.msra.mxu0 %v1336
        %1597 = vmatprep.subr.bf16.mxu0 0
        %1598 = vmatpush1.bf16.msra.mxu0 %v1335
        %1599 = vmatprep.subr.bf16.mxu0 0
        %1600 = vmatpush1.bf16.msra.mxu0 %v1334
        %1601 = vmatprep.subr.bf16.mxu0 0
        %1602 = vmatpush1.bf16.msra.mxu0 %v1333
        %1603 = vmatprep.subr.bf16.mxu0 0
        %1604 = vmatpush1.bf16.msra.mxu0 %v1332
        %1605 = vmatprep.subr.bf16.mxu0 0
        %1606 = vmatpush2.bf16.msra.mxu0 %v1347
        %1607 = vmatprep.subr.bf16.mxu0 0
        %1608 = vmatpush2.bf16.msra.mxu0 %v1346
        %1609 = vmatprep.subr.bf16.mxu0 0
        %1610 = vmatpush2.bf16.msra.mxu0 %v1345
        %1611 = vmatprep.subr.bf16.mxu0 0
        %1612 = vmatpush2.bf16.msra.mxu0 %v1344
        %1613 = vmatprep.subr.bf16.mxu0 0
        %1614 = vmatpush2.bf16.msra.mxu0 %v1343
        %1615 = vmatprep.subr.bf16.mxu0 0
        %1616 = vmatpush2.bf16.msra.mxu0 %v1342
        %1617 = vmatprep.subr.bf16.mxu0 0
        %1618 = vmatpush2.bf16.msra.mxu0 %v1341
        %1619 = vmatprep.subr.bf16.mxu0 0
        %1620 = vmatpush2.bf16.msra.mxu0 %v1340
        %1621 = vmatprep.mubr.bf16.mxu0 %v871
        %1622 = vmatmul.mubr.bf16.gmra.mxu0 %v870
        %v1623 = vpop.f32.mrf.mxu0
        %v1624 = vadd.f32 %v1463, %v1623
        %v1625 = vpop.f32.mrf.mxu0
        %v1626 = vpop.f32.mrf.mxu0
        %v1627 = vadd.f32 %v1466, %v1626
        %v1628 = vpop.f32.mrf.mxu0
        %1629 = vmatprep.mubr.bf16.mxu0 %v878
        %1630 = vmatmul.mubr.bf16.gmra.mxu0 %v877
        %v1631 = vpop.f32.mrf.mxu0
        %v1632 = vadd.f32 %v1471, %v1631
        %v1633 = vpop.f32.mrf.mxu0
        %v1634 = vpop.f32.mrf.mxu0
        %v1635 = vadd.f32 %v1474, %v1634
        %v1636 = vpop.f32.mrf.mxu0
        %1637 = vmatprep.mubr.bf16.mxu0 %v885
        %1638 = vmatmul.mubr.bf16.gmra.mxu0 %v884
        %v1639 = vpop.f32.mrf.mxu0
        %v1640 = vadd.f32 %v1479, %v1639
        %v1641 = vpop.f32.mrf.mxu0
        %v1642 = vpop.f32.mrf.mxu0
        %v1643 = vadd.f32 %v1482, %v1642
        %v1644 = vpop.f32.mrf.mxu0
        %1645 = vmatprep.mubr.bf16.mxu0 %v892
        %1646 = vmatmul.mubr.bf16.gmra.mxu0 %v891
        %v1647 = vpop.f32.mrf.mxu0
        %v1648 = vadd.f32 %v1487, %v1647
        %v1649 = vpop.f32.mrf.mxu0
        %v1650 = vpop.f32.mrf.mxu0
        %v1651 = vadd.f32 %v1490, %v1650
        %v1652 = vpop.f32.mrf.mxu0
        %1653 = vmatprep.mubr.bf16.mxu0 %v899
        %1654 = vmatmul.mubr.bf16.gmra.mxu0 %v898
        %v1655 = vpop.f32.mrf.mxu0
        %v1656 = vadd.f32 %v1495, %v1655
        %v1657 = vpop.f32.mrf.mxu0
        %v1658 = vpop.f32.mrf.mxu0
        %v1659 = vadd.f32 %v1498, %v1658
        %v1660 = vpop.f32.mrf.mxu0
        %1661 = vmatprep.mubr.bf16.mxu0 %v906
        %1662 = vmatmul.mubr.bf16.gmra.mxu0 %v905
        %v1663 = vpop.f32.mrf.mxu0
        %v1664 = vadd.f32 %v1503, %v1663
        %v1665 = vpop.f32.mrf.mxu0
        %v1666 = vpop.f32.mrf.mxu0
        %v1667 = vadd.f32 %v1506, %v1666
        %v1668 = vpop.f32.mrf.mxu0
        %1669 = vmatprep.mubr.bf16.mxu0 %v913
        %1670 = vmatmul.mubr.bf16.gmra.mxu0 %v912
        %v1671 = vpop.f32.mrf.mxu0
        %v1672 = vadd.f32 %v1511, %v1671
        %v1673 = vpop.f32.mrf.mxu0
        %v1674 = vpop.f32.mrf.mxu0
        %v1675 = vadd.f32 %v1514, %v1674
        %v1676 = vpop.f32.mrf.mxu0
        %1677 = vmatprep.mubr.bf16.mxu0 %v920
        %1678 = vmatmul.mubr.bf16.gmra.mxu0 %v919
        %v1679 = vpop.f32.mrf.mxu0
        %v1680 = vadd.f32 %v1519, %v1679
        %v1681 = vpop.f32.mrf.mxu0
        %v1682 = vpop.f32.mrf.mxu0
        %v1683 = vadd.f32 %v1522, %v1682
        %v1684 = vpop.f32.mrf.mxu0
        %1685 = vmatprep.mubr.bf16.mxu0 %v927
        %1686 = vmatmul.mubr.bf16.gmra.mxu0 %v926
        %v1687 = vpop.f32.mrf.mxu0
        %v1688 = vadd.f32 %v1527, %v1687
        %v1689 = vpop.f32.mrf.mxu0
        %v1690 = vpop.f32.mrf.mxu0
        %v1691 = vadd.f32 %v1530, %v1690
        %v1692 = vpop.f32.mrf.mxu0
        %1693 = vmatprep.mubr.bf16.mxu0 %v934
        %1694 = vmatmul.mubr.bf16.gmra.mxu0 %v933
        %v1695 = vpop.f32.mrf.mxu0
        %v1696 = vadd.f32 %v1535, %v1695
        %v1697 = vpop.f32.mrf.mxu0
        %v1698 = vpop.f32.mrf.mxu0
        %v1699 = vadd.f32 %v1538, %v1698
        %v1700 = vpop.f32.mrf.mxu0
        %1701 = vmatprep.mubr.bf16.mxu0 %v941
        %1702 = vmatmul.mubr.bf16.gmra.mxu0 %v940
        %v1703 = vpop.f32.mrf.mxu0
        %v1704 = vadd.f32 %v1543, %v1703
        %v1705 = vpop.f32.mrf.mxu0
        %v1706 = vpop.f32.mrf.mxu0
        %v1707 = vadd.f32 %v1546, %v1706
        %v1708 = vpop.f32.mrf.mxu0
        %1709 = vmatprep.mubr.bf16.mxu0 %v948
        %1710 = vmatmul.mubr.bf16.gmra.mxu0 %v947
        %v1711 = vpop.f32.mrf.mxu0
        %v1712 = vadd.f32 %v1551, %v1711
        %v1713 = vpop.f32.mrf.mxu0
        %v1714 = vpop.f32.mrf.mxu0
        %v1715 = vadd.f32 %v1554, %v1714
        %v1716 = vpop.f32.mrf.mxu0
        %1717 = vmatprep.mubr.bf16.mxu0 %v955
        %1718 = vmatmul.mubr.bf16.gmra.mxu0 %v954
        %v1719 = vpop.f32.mrf.mxu0
        %v1720 = vadd.f32 %v1559, %v1719
        %v1721 = vpop.f32.mrf.mxu0
        %v1722 = vpop.f32.mrf.mxu0
        %v1723 = vadd.f32 %v1562, %v1722
        %v1724 = vpop.f32.mrf.mxu0
        %1725 = vmatprep.mubr.bf16.mxu0 %v962
        %1726 = vmatmul.mubr.bf16.gmra.mxu0 %v961
        %v1727 = vpop.f32.mrf.mxu0
        %v1728 = vadd.f32 %v1567, %v1727
        %v1729 = vpop.f32.mrf.mxu0
        %v1730 = vpop.f32.mrf.mxu0
        %v1731 = vadd.f32 %v1570, %v1730
        %v1732 = vpop.f32.mrf.mxu0
        %1733 = vmatprep.mubr.bf16.mxu0 %v969
        %1734 = vmatmul.mubr.bf16.gmra.mxu0 %v968
        %v1735 = vpop.f32.mrf.mxu0
        %v1736 = vadd.f32 %v1575, %v1735
        %v1737 = vpop.f32.mrf.mxu0
        %v1738 = vpop.f32.mrf.mxu0
        %v1739 = vadd.f32 %v1578, %v1738
        %v1740 = vpop.f32.mrf.mxu0
        %1741 = vmatprep.mubr.bf16.mxu0 %v976
        %1742 = vmatmul.mubr.bf16.gmra.mxu0 %v975
        %v1743 = vpop.f32.mrf.mxu0
        %v1744 = vadd.f32 %v1583, %v1743
        %v1745 = vpop.f32.mrf.mxu0
        %v1746 = vpop.f32.mrf.mxu0
        %v1747 = vadd.f32 %v1586, %v1746
        %v1748 = vpop.f32.mrf.mxu0
        %1749 = vdwg.mxu0
        %1750 = vmatprep.subr.bf16.mxu0 0
        %1751 = vmatpush1.bf16.msra.mxu0 %v1355
        %1752 = vmatprep.subr.bf16.mxu0 0
        %1753 = vmatpush1.bf16.msra.mxu0 %v1354
        %1754 = vmatprep.subr.bf16.mxu0 0
        %1755 = vmatpush1.bf16.msra.mxu0 %v1353
        %1756 = vmatprep.subr.bf16.mxu0 0
        %1757 = vmatpush1.bf16.msra.mxu0 %v1352
        %1758 = vmatprep.subr.bf16.mxu0 0
        %1759 = vmatpush1.bf16.msra.mxu0 %v1351
        %1760 = vmatprep.subr.bf16.mxu0 0
        %1761 = vmatpush1.bf16.msra.mxu0 %v1350
        %1762 = vmatprep.subr.bf16.mxu0 0
        %1763 = vmatpush1.bf16.msra.mxu0 %v1349
        %1764 = vmatprep.subr.bf16.mxu0 0
        %1765 = vmatpush1.bf16.msra.mxu0 %v1348
        %1766 = vmatprep.subr.bf16.mxu0 0
        %1767 = vmatpush2.bf16.msra.mxu0 %v1363
        %1768 = vmatprep.subr.bf16.mxu0 0
        %1769 = vmatpush2.bf16.msra.mxu0 %v1362
        %1770 = vmatprep.subr.bf16.mxu0 0
        %1771 = vmatpush2.bf16.msra.mxu0 %v1361
        %1772 = vmatprep.subr.bf16.mxu0 0
        %1773 = vmatpush2.bf16.msra.mxu0 %v1360
        %1774 = vmatprep.subr.bf16.mxu0 0
        %1775 = vmatpush2.bf16.msra.mxu0 %v1359
        %1776 = vmatprep.subr.bf16.mxu0 0
        %1777 = vmatpush2.bf16.msra.mxu0 %v1358
        %1778 = vmatprep.subr.bf16.mxu0 0
        %1779 = vmatpush2.bf16.msra.mxu0 %v1357
        %1780 = vmatprep.subr.bf16.mxu0 0
        %1781 = vmatpush2.bf16.msra.mxu0 %v1356
        %1782 = vmatprep.mubr.bf16.mxu0 %v873
        %1783 = vmatmul.mubr.bf16.gmra.mxu0 %v872
        %v1784 = vpop.f32.mrf.mxu0
        %v1785 = vadd.f32 %v1624, %v1784
        %v1786 = vpop.f32.mrf.mxu0
        %v1787 = vpop.f32.mrf.mxu0
        %v1788 = vadd.f32 %v1627, %v1787
        %v1789 = vpop.f32.mrf.mxu0
        %1790 = vmatprep.mubr.bf16.mxu0 %v880
        %1791 = vmatmul.mubr.bf16.gmra.mxu0 %v879
        %v1792 = vpop.f32.mrf.mxu0
        %v1793 = vadd.f32 %v1632, %v1792
        %v1794 = vpop.f32.mrf.mxu0
        %v1795 = vpop.f32.mrf.mxu0
        %v1796 = vadd.f32 %v1635, %v1795
        %v1797 = vpop.f32.mrf.mxu0
        %1798 = vmatprep.mubr.bf16.mxu0 %v887
        %1799 = vmatmul.mubr.bf16.gmra.mxu0 %v886
        %v1800 = vpop.f32.mrf.mxu0
        %v1801 = vadd.f32 %v1640, %v1800
        %v1802 = vpop.f32.mrf.mxu0
        %v1803 = vpop.f32.mrf.mxu0
        %v1804 = vadd.f32 %v1643, %v1803
        %v1805 = vpop.f32.mrf.mxu0
        %1806 = vmatprep.mubr.bf16.mxu0 %v894
        %1807 = vmatmul.mubr.bf16.gmra.mxu0 %v893
        %v1808 = vpop.f32.mrf.mxu0
        %v1809 = vadd.f32 %v1648, %v1808
        %v1810 = vpop.f32.mrf.mxu0
        %v1811 = vpop.f32.mrf.mxu0
        %v1812 = vadd.f32 %v1651, %v1811
        %v1813 = vpop.f32.mrf.mxu0
        %1814 = vmatprep.mubr.bf16.mxu0 %v901
        %1815 = vmatmul.mubr.bf16.gmra.mxu0 %v900
        %v1816 = vpop.f32.mrf.mxu0
        %v1817 = vadd.f32 %v1656, %v1816
        %v1818 = vpop.f32.mrf.mxu0
        %v1819 = vpop.f32.mrf.mxu0
        %v1820 = vadd.f32 %v1659, %v1819
        %v1821 = vpop.f32.mrf.mxu0
        %1822 = vmatprep.mubr.bf16.mxu0 %v908
        %1823 = vmatmul.mubr.bf16.gmra.mxu0 %v907
        %v1824 = vpop.f32.mrf.mxu0
        %v1825 = vadd.f32 %v1664, %v1824
        %v1826 = vpop.f32.mrf.mxu0
        %v1827 = vpop.f32.mrf.mxu0
        %v1828 = vadd.f32 %v1667, %v1827
        %v1829 = vpop.f32.mrf.mxu0
        %1830 = vmatprep.mubr.bf16.mxu0 %v915
        %1831 = vmatmul.mubr.bf16.gmra.mxu0 %v914
        %v1832 = vpop.f32.mrf.mxu0
        %v1833 = vadd.f32 %v1672, %v1832
        %v1834 = vpop.f32.mrf.mxu0
        %v1835 = vpop.f32.mrf.mxu0
        %v1836 = vadd.f32 %v1675, %v1835
        %v1837 = vpop.f32.mrf.mxu0
        %1838 = vmatprep.mubr.bf16.mxu0 %v922
        %1839 = vmatmul.mubr.bf16.gmra.mxu0 %v921
        %v1840 = vpop.f32.mrf.mxu0
        %v1841 = vadd.f32 %v1680, %v1840
        %v1842 = vpop.f32.mrf.mxu0
        %v1843 = vpop.f32.mrf.mxu0
        %v1844 = vadd.f32 %v1683, %v1843
        %v1845 = vpop.f32.mrf.mxu0
        %1846 = vmatprep.mubr.bf16.mxu0 %v929
        %1847 = vmatmul.mubr.bf16.gmra.mxu0 %v928
        %v1848 = vpop.f32.mrf.mxu0
        %v1849 = vadd.f32 %v1688, %v1848
        %v1850 = vpop.f32.mrf.mxu0
        %v1851 = vpop.f32.mrf.mxu0
        %v1852 = vadd.f32 %v1691, %v1851
        %v1853 = vpop.f32.mrf.mxu0
        %1854 = vmatprep.mubr.bf16.mxu0 %v936
        %1855 = vmatmul.mubr.bf16.gmra.mxu0 %v935
        %v1856 = vpop.f32.mrf.mxu0
        %v1857 = vadd.f32 %v1696, %v1856
        %v1858 = vpop.f32.mrf.mxu0
        %v1859 = vpop.f32.mrf.mxu0
        %v1860 = vadd.f32 %v1699, %v1859
        %v1861 = vpop.f32.mrf.mxu0
        %1862 = vmatprep.mubr.bf16.mxu0 %v943
        %1863 = vmatmul.mubr.bf16.gmra.mxu0 %v942
        %v1864 = vpop.f32.mrf.mxu0
        %v1865 = vadd.f32 %v1704, %v1864
        %v1866 = vpop.f32.mrf.mxu0
        %v1867 = vpop.f32.mrf.mxu0
        %v1868 = vadd.f32 %v1707, %v1867
        %v1869 = vpop.f32.mrf.mxu0
        %1870 = vmatprep.mubr.bf16.mxu0 %v950
        %1871 = vmatmul.mubr.bf16.gmra.mxu0 %v949
        %v1872 = vpop.f32.mrf.mxu0
        %v1873 = vadd.f32 %v1712, %v1872
        %v1874 = vpop.f32.mrf.mxu0
        %v1875 = vpop.f32.mrf.mxu0
        %v1876 = vadd.f32 %v1715, %v1875
        %v1877 = vpop.f32.mrf.mxu0
        %1878 = vmatprep.mubr.bf16.mxu0 %v957
        %1879 = vmatmul.mubr.bf16.gmra.mxu0 %v956
        %v1880 = vpop.f32.mrf.mxu0
        %v1881 = vadd.f32 %v1720, %v1880
        %v1882 = vpop.f32.mrf.mxu0
        %v1883 = vpop.f32.mrf.mxu0
        %v1884 = vadd.f32 %v1723, %v1883
        %v1885 = vpop.f32.mrf.mxu0
        %1886 = vmatprep.mubr.bf16.mxu0 %v964
        %1887 = vmatmul.mubr.bf16.gmra.mxu0 %v963
        %v1888 = vpop.f32.mrf.mxu0
        %v1889 = vadd.f32 %v1728, %v1888
        %v1890 = vpop.f32.mrf.mxu0
        %v1891 = vpop.f32.mrf.mxu0
        %v1892 = vadd.f32 %v1731, %v1891
        %v1893 = vpop.f32.mrf.mxu0
        %1894 = vmatprep.mubr.bf16.mxu0 %v971
        %1895 = vmatmul.mubr.bf16.gmra.mxu0 %v970
        %v1896 = vpop.f32.mrf.mxu0
        %v1897 = vadd.f32 %v1736, %v1896
        %v1898 = vpop.f32.mrf.mxu0
        %v1899 = vpop.f32.mrf.mxu0
        %v1900 = vadd.f32 %v1739, %v1899
        %v1901 = vpop.f32.mrf.mxu0
        %1902 = vmatprep.mubr.bf16.mxu0 %v978
        %1903 = vmatmul.mubr.bf16.gmra.mxu0 %v977
        %v1904 = vpop.f32.mrf.mxu0
        %v1905 = vadd.f32 %v1744, %v1904
        %v1906 = vpop.f32.mrf.mxu0
        %v1907 = vpop.f32.mrf.mxu0
        %v1908 = vadd.f32 %v1747, %v1907
        %v1909 = vpop.f32.mrf.mxu0
        %1910 = vdwg.mxu0
        %1911 = vmatprep.subr.bf16.mxu0 0
        %1912 = vmatpush1.bf16.msra.mxu0 %v1371
        %1913 = vmatprep.subr.bf16.mxu0 0
        %1914 = vmatpush1.bf16.msra.mxu0 %v1370
        %1915 = vmatprep.subr.bf16.mxu0 0
        %1916 = vmatpush1.bf16.msra.mxu0 %v1369
        %1917 = vmatprep.subr.bf16.mxu0 0
        %1918 = vmatpush1.bf16.msra.mxu0 %v1368
        %1919 = vmatprep.subr.bf16.mxu0 0
        %1920 = vmatpush1.bf16.msra.mxu0 %v1367
        %1921 = vmatprep.subr.bf16.mxu0 0
        %1922 = vmatpush1.bf16.msra.mxu0 %v1366
        %1923 = vmatprep.subr.bf16.mxu0 0
        %1924 = vmatpush1.bf16.msra.mxu0 %v1365
        %1925 = vmatprep.subr.bf16.mxu0 0
        %1926 = vmatpush1.bf16.msra.mxu0 %v1364
        %1927 = vmatprep.subr.bf16.mxu0 0
        %1928 = vmatpush2.bf16.msra.mxu0 0
        %1929 = vmatprep.subr.bf16.mxu0 0
        %1930 = vmatpush2.bf16.msra.mxu0 0
        %1931 = vmatprep.subr.bf16.mxu0 0
        %1932 = vmatpush2.bf16.msra.mxu0 0
        %1933 = vmatprep.subr.bf16.mxu0 0
        %1934 = vmatpush2.bf16.msra.mxu0 0
        %1935 = vmatprep.subr.bf16.mxu0 0
        %1936 = vmatpush2.bf16.msra.mxu0 0
        %1937 = vmatprep.subr.bf16.mxu0 0
        %1938 = vmatpush2.bf16.msra.mxu0 0
        %1939 = vmatprep.subr.bf16.mxu0 0
        %1940 = vmatpush2.bf16.msra.mxu0 0
        %1941 = vmatprep.subr.bf16.mxu0 0
        %1942 = vmatpush2.bf16.msra.mxu0 0
        %1943 = vmatprep.mubr.bf16.mxu0 0
        %1944 = vmatmul.mubr.bf16.gmra.mxu0 %v874
        %v1945 = vpop.f32.mrf.mxu0
        %v1946 = vadd.f32 %v1785, %v1945
        %v1947 = vpop.f32.mrf.mxu0
        %v1948 = vpop.f32.mrf.mxu0
        %v1949 = vadd.f32 %v1788, %v1948
        %v1950 = vpop.f32.mrf.mxu0
        %1951 = vmatprep.mubr.bf16.mxu0 0
        %1952 = vmatmul.mubr.bf16.gmra.mxu0 %v881
        %v1953 = vpop.f32.mrf.mxu0
        %v1954 = vadd.f32 %v1793, %v1953
        %v1955 = vpop.f32.mrf.mxu0
        %v1956 = vpop.f32.mrf.mxu0
        %v1957 = vadd.f32 %v1796, %v1956
        %v1958 = vpop.f32.mrf.mxu0
        %1959 = vmatprep.mubr.bf16.mxu0 0
        %1960 = vmatmul.mubr.bf16.gmra.mxu0 %v888
        %v1961 = vpop.f32.mrf.mxu0
        %v1962 = vadd.f32 %v1801, %v1961
        %v1963 = vpop.f32.mrf.mxu0
        %v1964 = vpop.f32.mrf.mxu0
        %v1965 = vadd.f32 %v1804, %v1964
        %v1966 = vpop.f32.mrf.mxu0
        %1967 = vmatprep.mubr.bf16.mxu0 0
        %1968 = vmatmul.mubr.bf16.gmra.mxu0 %v895
        %v1969 = vpop.f32.mrf.mxu0
        %v1970 = vadd.f32 %v1809, %v1969
        %v1971 = vpop.f32.mrf.mxu0
        %v1972 = vpop.f32.mrf.mxu0
        %v1973 = vadd.f32 %v1812, %v1972
        %v1974 = vpop.f32.mrf.mxu0
        %1975 = vmatprep.mubr.bf16.mxu0 0
        %1976 = vmatmul.mubr.bf16.gmra.mxu0 %v902
        %v1977 = vpop.f32.mrf.mxu0
        %v1978 = vadd.f32 %v1817, %v1977
        %v1979 = vpop.f32.mrf.mxu0
        %v1980 = vpop.f32.mrf.mxu0
        %v1981 = vadd.f32 %v1820, %v1980
        %v1982 = vpop.f32.mrf.mxu0
        %1983 = vmatprep.mubr.bf16.mxu0 0
        %1984 = vmatmul.mubr.bf16.gmra.mxu0 %v909
        %v1985 = vpop.f32.mrf.mxu0
        %v1986 = vadd.f32 %v1825, %v1985
        %v1987 = vpop.f32.mrf.mxu0
        %v1988 = vpop.f32.mrf.mxu0
        %v1989 = vadd.f32 %v1828, %v1988
        %v1990 = vpop.f32.mrf.mxu0
        %1991 = vmatprep.mubr.bf16.mxu0 0
        %1992 = vmatmul.mubr.bf16.gmra.mxu0 %v916
        %v1993 = vpop.f32.mrf.mxu0
        %v1994 = vadd.f32 %v1833, %v1993
        %v1995 = vpop.f32.mrf.mxu0
        %v1996 = vpop.f32.mrf.mxu0
        %v1997 = vadd.f32 %v1836, %v1996
        %v1998 = vpop.f32.mrf.mxu0
        %1999 = vmatprep.mubr.bf16.mxu0 0
        %2000 = vmatmul.mubr.bf16.gmra.mxu0 %v923
        %v2001 = vpop.f32.mrf.mxu0
        %v2002 = vadd.f32 %v1841, %v2001
        %v2003 = vpop.f32.mrf.mxu0
        %v2004 = vpop.f32.mrf.mxu0
        %v2005 = vadd.f32 %v1844, %v2004
        %v2006 = vpop.f32.mrf.mxu0
        %2007 = vmatprep.mubr.bf16.mxu0 0
        %2008 = vmatmul.mubr.bf16.gmra.mxu0 %v930
        %v2009 = vpop.f32.mrf.mxu0
        %v2010 = vadd.f32 %v1849, %v2009
        %v2011 = vpop.f32.mrf.mxu0
        %v2012 = vpop.f32.mrf.mxu0
        %v2013 = vadd.f32 %v1852, %v2012
        %v2014 = vpop.f32.mrf.mxu0
        %2015 = vmatprep.mubr.bf16.mxu0 0
        %2016 = vmatmul.mubr.bf16.gmra.mxu0 %v937
        %v2017 = vpop.f32.mrf.mxu0
        %v2018 = vadd.f32 %v1857, %v2017
        %v2019 = vpop.f32.mrf.mxu0
        %v2020 = vpop.f32.mrf.mxu0
        %v2021 = vadd.f32 %v1860, %v2020
        %v2022 = vpop.f32.mrf.mxu0
        %2023 = vmatprep.mubr.bf16.mxu0 0
        %2024 = vmatmul.mubr.bf16.gmra.mxu0 %v944
        %v2025 = vpop.f32.mrf.mxu0
        %v2026 = vadd.f32 %v1865, %v2025
        %v2027 = vpop.f32.mrf.mxu0
        %v2028 = vpop.f32.mrf.mxu0
        %v2029 = vadd.f32 %v1868, %v2028
        %v2030 = vpop.f32.mrf.mxu0
        %2031 = vmatprep.mubr.bf16.mxu0 0
        %2032 = vmatmul.mubr.bf16.gmra.mxu0 %v951
        %v2033 = vpop.f32.mrf.mxu0
        %v2034 = vadd.f32 %v1873, %v2033
        %v2035 = vpop.f32.mrf.mxu0
        %v2036 = vpop.f32.mrf.mxu0
        %v2037 = vadd.f32 %v1876, %v2036
        %v2038 = vpop.f32.mrf.mxu0
        %2039 = vmatprep.mubr.bf16.mxu0 0
        %2040 = vmatmul.mubr.bf16.gmra.mxu0 %v958
        %v2041 = vpop.f32.mrf.mxu0
        %v2042 = vadd.f32 %v1881, %v2041
        %v2043 = vpop.f32.mrf.mxu0
        %v2044 = vpop.f32.mrf.mxu0
        %v2045 = vadd.f32 %v1884, %v2044
        %v2046 = vpop.f32.mrf.mxu0
        %2047 = vmatprep.mubr.bf16.mxu0 0
        %2048 = vmatmul.mubr.bf16.gmra.mxu0 %v965
        %v2049 = vpop.f32.mrf.mxu0
        %v2050 = vadd.f32 %v1889, %v2049
        %v2051 = vpop.f32.mrf.mxu0
        %v2052 = vpop.f32.mrf.mxu0
        %v2053 = vadd.f32 %v1892, %v2052
        %v2054 = vpop.f32.mrf.mxu0
        %2055 = vmatprep.mubr.bf16.mxu0 0
        %2056 = vmatmul.mubr.bf16.gmra.mxu0 %v972
        %v2057 = vpop.f32.mrf.mxu0
        %v2058 = vadd.f32 %v1897, %v2057
        %v2059 = vpop.f32.mrf.mxu0
        %v2060 = vpop.f32.mrf.mxu0
        %v2061 = vadd.f32 %v1900, %v2060
        %v2062 = vpop.f32.mrf.mxu0
        %2063 = vmatprep.mubr.bf16.mxu0 0
        %2064 = vmatmul.mubr.bf16.gmra.mxu0 %v979
        %v2065 = vpop.f32.mrf.mxu0
        %v2066 = vadd.f32 %v1905, %v2065
        %v2067 = vpop.f32.mrf.mxu0
        %v2068 = vpop.f32.mrf.mxu0
        %v2069 = vadd.f32 %v1908, %v2068
        %v2070 = vpop.f32.mrf.mxu0
        %2071 = vdwg.mxu0
        %v2072 = vtanh.pop %v1946
        %v2073 = vtanh.pop %v1949
        %v2074 = vtanh.pop %v1954
        %v2075 = vtanh.pop %v1957
        %v2076 = vtanh.pop %v1962
        %v2077 = vtanh.pop %v1965
        %v2078 = vtanh.pop %v1970
        %v2079 = vtanh.pop %v1973
        %v2080 = vtanh.pop %v1978
        %v2081 = vtanh.pop %v1981
        %v2082 = vtanh.pop %v1986
        %v2083 = vtanh.pop %v1989
        %v2084 = vtanh.pop %v1994
        %v2085 = vtanh.pop %v1997
        %v2086 = vtanh.pop %v2002
        %v2087 = vtanh.pop %v2005
        %v2088 = vtanh.pop %v2010
        %v2089 = vtanh.pop %v2013
        %v2090 = vtanh.pop %v2018
        %v2091 = vtanh.pop %v2021
        %v2092 = vtanh.pop %v2026
        %v2093 = vtanh.pop %v2029
        %v2094 = vtanh.pop %v2034
        %v2095 = vtanh.pop %v2037
        %v2096 = vtanh.pop %v2042
        %v2097 = vtanh.pop %v2045
        %v2098 = vtanh.pop %v2050
        %v2099 = vtanh.pop %v2053
        %v2100 = vtanh.pop %v2058
        %v2101 = vtanh.pop %v2061
        %v2102 = vtanh.pop %v2066
        %v2103 = vtanh.pop %v2069
        %s2104 = smul.u32 %s23, 256
        %v2105 = vlaneseq
        %v2106 = vshrl.u32 %v2105, 7
        %v2107 = vadd.s32 %v2106, 8
        %v2108 = vadd.s32 %v2106, 16
        %v2109 = vadd.s32 %v2106, 24
        %v2110 = vadd.s32 %v2106, 32
        %v2111 = vadd.s32 %v2106, 40
        %v2112 = vadd.s32 %v2106, 48
        %v2113 = vadd.s32 %v2106, 56
        %v2114 = vadd.s32 %v2106, 64
        %v2115 = vadd.s32 %v2106, 72
        %v2116 = vadd.s32 %v2106, 80
        %v2117 = vadd.s32 %v2106, 88
        %v2118 = vadd.s32 %v2106, 96
        %v2119 = vadd.s32 %v2106, 104
        %v2120 = vadd.s32 %v2106, 112
        %v2121 = vadd.s32 %v2106, 120
        %v2122 = vadd.s32 %v2106, 128
        %v2123 = vadd.s32 %v2106, 136
        %v2124 = vadd.s32 %v2106, 144
        %v2125 = vadd.s32 %v2106, 152
        %v2126 = vadd.s32 %v2106, 160
        %v2127 = vadd.s32 %v2106, 168
        %v2128 = vadd.s32 %v2106, 176
        %v2129 = vadd.s32 %v2106, 184
        %v2130 = vadd.s32 %v2106, 192
        %v2131 = vadd.s32 %v2106, 200
        %v2132 = vadd.s32 %v2106, 208
        %v2133 = vadd.s32 %v2106, 216
        %v2134 = vadd.s32 %v2106, 224
        %v2135 = vadd.s32 %v2106, 232
        %v2136 = vadd.s32 %v2106, 240
        %v2137 = vadd.s32 %v2106, 248
        %v2138 = vstv %s2104
        %v2139 = vadd.s32 %v2138, %v2106
        %v2140 = vadd.s32 %v2138, %v2107
        %v2141 = vadd.s32 %v2138, %v2108
        %v2142 = vadd.s32 %v2138, %v2109
        %v2143 = vadd.s32 %v2138, %v2110
        %v2144 = vadd.s32 %v2138, %v2111
        %v2145 = vadd.s32 %v2138, %v2112
        %v2146 = vadd.s32 %v2138, %v2113
        %v2147 = vadd.s32 %v2138, %v2114
        %v2148 = vadd.s32 %v2138, %v2115
        %v2149 = vadd.s32 %v2138, %v2116
        %v2150 = vadd.s32 %v2138, %v2117
        %v2151 = vadd.s32 %v2138, %v2118
        %v2152 = vadd.s32 %v2138, %v2119
        %v2153 = vadd.s32 %v2138, %v2120
        %v2154 = vadd.s32 %v2138, %v2121
        %v2155 = vadd.s32 %v2138, %v2122
        %v2156 = vadd.s32 %v2138, %v2123
        %v2157 = vadd.s32 %v2138, %v2124
        %v2158 = vadd.s32 %v2138, %v2125
        %v2159 = vadd.s32 %v2138, %v2126
        %v2160 = vadd.s32 %v2138, %v2127
        %v2161 = vadd.s32 %v2138, %v2128
        %v2162 = vadd.s32 %v2138, %v2129
        %v2163 = vadd.s32 %v2138, %v2130
        %v2164 = vadd.s32 %v2138, %v2131
        %v2165 = vadd.s32 %v2138, %v2132
        %v2166 = vadd.s32 %v2138, %v2133
        %v2167 = vadd.s32 %v2138, %v2134
        %v2168 = vadd.s32 %v2138, %v2135
        %v2169 = vadd.s32 %v2138, %v2136
        %v2170 = vadd.s32 %v2138, %v2137
        %vm2171 = vcmp.lt.s32.totalorder %v2139, 512
        %vm2172 = vcmp.lt.s32.totalorder %v2140, 512
        %vm2173 = vcmp.lt.s32.totalorder %v2141, 512
        %vm2174 = vcmp.lt.s32.totalorder %v2142, 512
        %vm2175 = vcmp.lt.s32.totalorder %v2143, 512
        %vm2176 = vcmp.lt.s32.totalorder %v2144, 512
        %vm2177 = vcmp.lt.s32.totalorder %v2145, 512
        %vm2178 = vcmp.lt.s32.totalorder %v2146, 512
        %vm2179 = vcmp.lt.s32.totalorder %v2147, 512
        %vm2180 = vcmp.lt.s32.totalorder %v2148, 512
        %vm2181 = vcmp.lt.s32.totalorder %v2149, 512
        %vm2182 = vcmp.lt.s32.totalorder %v2150, 512
        %vm2183 = vcmp.lt.s32.totalorder %v2151, 512
        %vm2184 = vcmp.lt.s32.totalorder %v2152, 512
        %vm2185 = vcmp.lt.s32.totalorder %v2153, 512
        %vm2186 = vcmp.lt.s32.totalorder %v2154, 512
        %vm2187 = vcmp.lt.s32.totalorder %v2155, 512
        %vm2188 = vcmp.lt.s32.totalorder %v2156, 512
        %vm2189 = vcmp.lt.s32.totalorder %v2157, 512
        %vm2190 = vcmp.lt.s32.totalorder %v2158, 512
        %vm2191 = vcmp.lt.s32.totalorder %v2159, 512
        %vm2192 = vcmp.lt.s32.totalorder %v2160, 512
        %vm2193 = vcmp.lt.s32.totalorder %v2161, 512
        %vm2194 = vcmp.lt.s32.totalorder %v2162, 512
        %vm2195 = vcmp.lt.s32.totalorder %v2163, 512
        %vm2196 = vcmp.lt.s32.totalorder %v2164, 512
        %vm2197 = vcmp.lt.s32.totalorder %v2165, 512
        %vm2198 = vcmp.lt.s32.totalorder %v2166, 512
        %vm2199 = vcmp.lt.s32.totalorder %v2167, 512
        %vm2200 = vcmp.lt.s32.totalorder %v2168, 512
        %vm2201 = vcmp.lt.s32.totalorder %v2169, 512
        %vm2202 = vcmp.lt.s32.totalorder %v2170, 512
        %v2203 = vsel %vm2171, 1, 0
        %v2204 = vsel %vm2172, 1, 0
        %v2205 = vsel %vm2173, 1, 0
        %v2206 = vsel %vm2174, 1, 0
        %v2207 = vsel %vm2175, 1, 0
        %v2208 = vsel %vm2176, 1, 0
        %v2209 = vsel %vm2177, 1, 0
        %v2210 = vsel %vm2178, 1, 0
        %v2211 = vsel %vm2179, 1, 0
        %v2212 = vsel %vm2180, 1, 0
        %v2213 = vsel %vm2181, 1, 0
        %v2214 = vsel %vm2182, 1, 0
        %v2215 = vsel %vm2183, 1, 0
        %v2216 = vsel %vm2184, 1, 0
        %v2217 = vsel %vm2185, 1, 0
        %v2218 = vsel %vm2186, 1, 0
        %v2219 = vsel %vm2187, 1, 0
        %v2220 = vsel %vm2188, 1, 0
        %v2221 = vsel %vm2189, 1, 0
        %v2222 = vsel %vm2190, 1, 0
        %v2223 = vsel %vm2191, 1, 0
        %v2224 = vsel %vm2192, 1, 0
        %v2225 = vsel %vm2193, 1, 0
        %v2226 = vsel %vm2194, 1, 0
        %v2227 = vsel %vm2195, 1, 0
        %v2228 = vsel %vm2196, 1, 0
        %v2229 = vsel %vm2197, 1, 0
        %v2230 = vsel %vm2198, 1, 0
        %v2231 = vsel %vm2199, 1, 0
        %v2232 = vsel %vm2200, 1, 0
        %v2233 = vsel %vm2201, 1, 0
        %v2234 = vsel %vm2202, 1, 0
        %v2235 = vcvt.s32.f32 %v2203
        %v2236 = vcvt.s32.f32 %v2204
        %v2237 = vcvt.s32.f32 %v2205
        %v2238 = vcvt.s32.f32 %v2206
        %v2239 = vcvt.s32.f32 %v2207
        %v2240 = vcvt.s32.f32 %v2208
        %v2241 = vcvt.s32.f32 %v2209
        %v2242 = vcvt.s32.f32 %v2210
        %v2243 = vcvt.s32.f32 %v2211
        %v2244 = vcvt.s32.f32 %v2212
        %v2245 = vcvt.s32.f32 %v2213
        %v2246 = vcvt.s32.f32 %v2214
        %v2247 = vcvt.s32.f32 %v2215
        %v2248 = vcvt.s32.f32 %v2216
        %v2249 = vcvt.s32.f32 %v2217
        %v2250 = vcvt.s32.f32 %v2218
        %v2251 = vcvt.s32.f32 %v2219
        %v2252 = vcvt.s32.f32 %v2220
        %v2253 = vcvt.s32.f32 %v2221
        %v2254 = vcvt.s32.f32 %v2222
        %v2255 = vcvt.s32.f32 %v2223
        %v2256 = vcvt.s32.f32 %v2224
        %v2257 = vcvt.s32.f32 %v2225
        %v2258 = vcvt.s32.f32 %v2226
        %v2259 = vcvt.s32.f32 %v2227
        %v2260 = vcvt.s32.f32 %v2228
        %v2261 = vcvt.s32.f32 %v2229
        %v2262 = vcvt.s32.f32 %v2230
        %v2263 = vcvt.s32.f32 %v2231
        %v2264 = vcvt.s32.f32 %v2232
        %v2265 = vcvt.s32.f32 %v2233
        %v2266 = vcvt.s32.f32 %v2234
        %v2267 = vmul.f32 %v2072, %v2235
        %v2268 = vmul.f32 %v2073, %v2236
        %v2269 = vmul.f32 %v2074, %v2237
        %v2270 = vmul.f32 %v2075, %v2238
        %v2271 = vmul.f32 %v2076, %v2239
        %v2272 = vmul.f32 %v2077, %v2240
        %v2273 = vmul.f32 %v2078, %v2241
        %v2274 = vmul.f32 %v2079, %v2242
        %v2275 = vmul.f32 %v2080, %v2243
        %v2276 = vmul.f32 %v2081, %v2244
        %v2277 = vmul.f32 %v2082, %v2245
        %v2278 = vmul.f32 %v2083, %v2246
        %v2279 = vmul.f32 %v2084, %v2247
        %v2280 = vmul.f32 %v2085, %v2248
        %v2281 = vmul.f32 %v2086, %v2249
        %v2282 = vmul.f32 %v2087, %v2250
        %v2283 = vmul.f32 %v2088, %v2251
        %v2284 = vmul.f32 %v2089, %v2252
        %v2285 = vmul.f32 %v2090, %v2253
        %v2286 = vmul.f32 %v2091, %v2254
        %v2287 = vmul.f32 %v2092, %v2255
        %v2288 = vmul.f32 %v2093, %v2256
        %v2289 = vmul.f32 %v2094, %v2257
        %v2290 = vmul.f32 %v2095, %v2258
        %v2291 = vmul.f32 %v2096, %v2259
        %v2292 = vmul.f32 %v2097, %v2260
        %v2293 = vmul.f32 %v2098, %v2261
        %v2294 = vmul.f32 %v2099, %v2262
        %v2295 = vmul.f32 %v2100, %v2263
        %v2296 = vmul.f32 %v2101, %v2264
        %v2297 = vmul.f32 %v2102, %v2265
        %v2298 = vmul.f32 %v2103, %v2266
        %v2299 = vadd.f32 %v2267, %v2268
        %v2300 = vadd.f32 %v2299, %v2269
        %v2301 = vadd.f32 %v2300, %v2270
        %v2302 = vadd.f32 %v2301, %v2271
        %v2303 = vadd.f32 %v2302, %v2272
        %v2304 = vadd.f32 %v2303, %v2273
        %v2305 = vadd.f32 %v2304, %v2274
        %v2306 = vadd.f32 %v2305, %v2275
        %v2307 = vadd.f32 %v2306, %v2276
        %v2308 = vadd.f32 %v2307, %v2277
        %v2309 = vadd.f32 %v2308, %v2278
        %v2310 = vadd.f32 %v2309, %v2279
        %v2311 = vadd.f32 %v2310, %v2280
        %v2312 = vadd.f32 %v2311, %v2281
        %v2313 = vadd.f32 %v2312, %v2282
        %v2314 = vadd.f32 %v2313, %v2283
        %v2315 = vadd.f32 %v2314, %v2284
        %v2316 = vadd.f32 %v2315, %v2285
        %v2317 = vadd.f32 %v2316, %v2286
        %v2318 = vadd.f32 %v2317, %v2287
        %v2319 = vadd.f32 %v2318, %v2288
        %v2320 = vadd.f32 %v2319, %v2289
        %v2321 = vadd.f32 %v2320, %v2290
        %v2322 = vadd.f32 %v2321, %v2291
        %v2323 = vadd.f32 %v2322, %v2292
        %v2324 = vadd.f32 %v2323, %v2293
        %v2325 = vadd.f32 %v2324, %v2294
        %v2326 = vadd.f32 %v2325, %v2295
        %v2327 = vadd.f32 %v2326, %v2296
        %v2328 = vadd.f32 %v2327, %v2297
        %v2329 = vadd.f32 %v2328, %v2298
        %v2330 = vrot.slane %v2329, 4
        %v2331 = vadd.f32 %v2329, %v2330
        %v2332 = vrot.slane %v2331, 2
        %v2333 = vadd.f32 %v2331, %v2332
        %v2334 = vrot.slane %v2333, 1
        %v2335 = vadd.f32 %v2333, %v2334
        %v2336 = vmul.f32 %v2267, %v2267
        %v2337 = vmul.f32 %v2268, %v2268
        %v2338 = vmul.f32 %v2269, %v2269
        %v2339 = vmul.f32 %v2270, %v2270
        %v2340 = vmul.f32 %v2271, %v2271
        %v2341 = vmul.f32 %v2272, %v2272
        %v2342 = vmul.f32 %v2273, %v2273
        %v2343 = vmul.f32 %v2274, %v2274
        %v2344 = vmul.f32 %v2275, %v2275
        %v2345 = vmul.f32 %v2276, %v2276
        %v2346 = vmul.f32 %v2277, %v2277
        %v2347 = vmul.f32 %v2278, %v2278
        %v2348 = vmul.f32 %v2279, %v2279
        %v2349 = vmul.f32 %v2280, %v2280
        %v2350 = vmul.f32 %v2281, %v2281
        %v2351 = vmul.f32 %v2282, %v2282
        %v2352 = vmul.f32 %v2283, %v2283
        %v2353 = vmul.f32 %v2284, %v2284
        %v2354 = vmul.f32 %v2285, %v2285
        %v2355 = vmul.f32 %v2286, %v2286
        %v2356 = vmul.f32 %v2287, %v2287
        %v2357 = vmul.f32 %v2288, %v2288
        %v2358 = vmul.f32 %v2289, %v2289
        %v2359 = vmul.f32 %v2290, %v2290
        %v2360 = vmul.f32 %v2291, %v2291
        %v2361 = vmul.f32 %v2292, %v2292
        %v2362 = vmul.f32 %v2293, %v2293
        %v2363 = vmul.f32 %v2294, %v2294
        %v2364 = vmul.f32 %v2295, %v2295
        %v2365 = vmul.f32 %v2296, %v2296
        %v2366 = vmul.f32 %v2297, %v2297
        %v2367 = vmul.f32 %v2298, %v2298
        %v2368 = vadd.f32 %v2336, %v2337
        %v2369 = vadd.f32 %v2368, %v2338
        %v2370 = vadd.f32 %v2369, %v2339
        %v2371 = vadd.f32 %v2370, %v2340
        %v2372 = vadd.f32 %v2371, %v2341
        %v2373 = vadd.f32 %v2372, %v2342
        %v2374 = vadd.f32 %v2373, %v2343
        %v2375 = vadd.f32 %v2374, %v2344
        %v2376 = vadd.f32 %v2375, %v2345
        %v2377 = vadd.f32 %v2376, %v2346
        %v2378 = vadd.f32 %v2377, %v2347
        %v2379 = vadd.f32 %v2378, %v2348
        %v2380 = vadd.f32 %v2379, %v2349
        %v2381 = vadd.f32 %v2380, %v2350
        %v2382 = vadd.f32 %v2381, %v2351
        %v2383 = vadd.f32 %v2382, %v2352
        %v2384 = vadd.f32 %v2383, %v2353
        %v2385 = vadd.f32 %v2384, %v2354
        %v2386 = vadd.f32 %v2385, %v2355
        %v2387 = vadd.f32 %v2386, %v2356
        %v2388 = vadd.f32 %v2387, %v2357
        %v2389 = vadd.f32 %v2388, %v2358
        %v2390 = vadd.f32 %v2389, %v2359
        %v2391 = vadd.f32 %v2390, %v2360
        %v2392 = vadd.f32 %v2391, %v2361
        %v2393 = vadd.f32 %v2392, %v2362
        %v2394 = vadd.f32 %v2393, %v2363
        %v2395 = vadd.f32 %v2394, %v2364
        %v2396 = vadd.f32 %v2395, %v2365
        %v2397 = vadd.f32 %v2396, %v2366
        %v2398 = vadd.f32 %v2397, %v2367
        %v2399 = vrot.slane %v2398, 4
        %v2400 = vadd.f32 %v2398, %v2399
        %v2401 = vrot.slane %v2400, 2
        %v2402 = vadd.f32 %v2400, %v2401
        %v2403 = vrot.slane %v2402, 1
        %v2404 = vadd.f32 %v2402, %v2403
        %2405 = vst [vmem:[%s244] sm:$0x1] %v2335
        %2406 = vst [vmem:[%s244 + $0x1] sm:$0x1] %v2404
        %2407 = vst [vmem:[%s266] sm:$0xff] %v2072
        %2408 = vst [vmem:[%s266 + $0x8] sm:$0xff] %v2073
        %2409 = vst [vmem:[%s266 + $0x10] sm:$0xff] %v2074
        %2410 = vst [vmem:[%s266 + $0x18] sm:$0xff] %v2075
        %2411 = vst [vmem:[%s266 + $0x20] sm:$0xff] %v2076
        %2412 = vst [vmem:[%s266 + $0x28] sm:$0xff] %v2077
        %2413 = vst [vmem:[%s266 + $0x30] sm:$0xff] %v2078
        %2414 = vst [vmem:[%s266 + $0x38] sm:$0xff] %v2079
        %2415 = vst [vmem:[%s266 + $0x40] sm:$0xff] %v2080
        %2416 = vst [vmem:[%s266 + $0x48] sm:$0xff] %v2081
        %2417 = vst [vmem:[%s266 + $0x50] sm:$0xff] %v2082
        %2418 = vst [vmem:[%s266 + $0x58] sm:$0xff] %v2083
        %2419 = vst [vmem:[%s266 + $0x60] sm:$0xff] %v2084
        %2420 = vst [vmem:[%s266 + $0x68] sm:$0xff] %v2085
        %2421 = vst [vmem:[%s266 + $0x70] sm:$0xff] %v2086
        %2422 = vst [vmem:[%s266 + $0x78] sm:$0xff] %v2087
        %2423 = vst [vmem:[%s266 + $0x80] sm:$0xff] %v2088
        %2424 = vst [vmem:[%s266 + $0x88] sm:$0xff] %v2089
        %2425 = vst [vmem:[%s266 + $0x90] sm:$0xff] %v2090
        %2426 = vst [vmem:[%s266 + $0x98] sm:$0xff] %v2091
        %2427 = vst [vmem:[%s266 + $0xa0] sm:$0xff] %v2092
        %2428 = vst [vmem:[%s266 + $0xa8] sm:$0xff] %v2093
        %2429 = vst [vmem:[%s266 + $0xb0] sm:$0xff] %v2094
        %2430 = vst [vmem:[%s266 + $0xb8] sm:$0xff] %v2095
        %2431 = vst [vmem:[%s266 + $0xc0] sm:$0xff] %v2096
        %2432 = vst [vmem:[%s266 + $0xc8] sm:$0xff] %v2097
        %2433 = vst [vmem:[%s266 + $0xd0] sm:$0xff] %v2098
        %2434 = vst [vmem:[%s266 + $0xd8] sm:$0xff] %v2099
        %2435 = vst [vmem:[%s266 + $0xe0] sm:$0xff] %v2100
        %2436 = vst [vmem:[%s266 + $0xe8] sm:$0xff] %v2101
        %2437 = vst [vmem:[%s266 + $0xf0] sm:$0xff] %v2102
        %2438 = vst [vmem:[%s266 + $0xf8] sm:$0xff] %v2103
        %s2439 = smul.u32 32, %s23
        %p2440 = scmp.lt.s32.totalorder %s2439, 63
        %s2441 = scalar_select %p2440, %s2439, 63
        %p2442 = scmp.lt.s32.totalorder %s24, 0
        %s2443 = scalar_select %p2442, %s24, 0
        %s2444 = sadd.s32 %s2443, %s2441
        %s2445 = smul.addr %s2444, 8
        %s2446 = scalar_lea.vmem %s3, %s2445
        %s2447 = sand.u32 %s147, 1
        %s2448 = scalar_lea.sflag [#allocation3], %s2447
        %s2449 = sand.u32 %s147, 1
        %s2450 = smul.addr %s2449, 8
        %s2451 = scalar_lea.vmem [#allocation2], %s2450
        // Predicated region
        $region33: #{global_generator_forward.45} parent=31 // pred_check
          %p2452 = pneg %p129
        $region34: #{global_generator_forward.45} parent=31 // pred_check_branch
          %2454 = sbr.rel (%p2452) target = $region36
        $region35: #{global_generator_forward.45} parent=31 // pred_region
          %s2455 = smul.u32 32, %s23
        $region36: #{global_generator_forward.45} parent=31 // pred_fallthru
          _
        // Predicated region
        $region37: #{global_generator_forward.45} parent=31 // pred_check
          %p2456 = pneg %p157
        $region38: #{global_generator_forward.45} parent=31 // pred_check_branch
          %2458 = sbr.rel (%p2456) target = $region40
        $region39: #{global_generator_forward.45} parent=31 // pred_region
          %s2460 = ssub.s32 128, 128
          %2461 = vsyncadd %s2448, %s2460
          %s2462 = sadd.s32 %s24, %s23
          %s2463 = smul.addr %s2462, 128
          %s2464 = scalar_lea.hbm %s4, %s2463
          %s2466 = sshll.u32 %s2451, 4
          %s2467 = int_to_ptr.vmem [resolvable:$true] %s2466
          %2469 = dma.vmem_to_hbm [thread:$0]  %s2467, 128, %s2464, %s2448
        $region40: #{global_generator_forward.45} parent=31 // pred_fallthru
          _
      $region32: #{global_generator_forward.45} parent=5 // pred_fallthru
        _
      %p2470 = scmp.le.s32.totalorder 2, %s14
      // Predicated region
      $region41: #{global_generator_forward.45} parent=5 // pred_check
        %p2471 = pneg %p2470
      $region42: #{global_generator_forward.45} parent=5 // pred_check_branch
        %2473 = sbr.rel (%p2471) target = $region44
      $region43: #{global_generator_forward.45} parent=5 // pred_region
        %s2474 = ssub.s32 %s14, 2
        // Predicated region
        $region45: #{global_generator_forward.45} parent=43 // pred_check
          %p2475 = pneg %p135
        $region46: #{global_generator_forward.45} parent=43 // pred_check_branch
          %2477 = sbr.rel (%p2475) target = $region48
        $region47: #{global_generator_forward.45} parent=43 // pred_region
          %s2478 = smul.u32 32, %s25
          %p2479 = scmp.lt.s32.totalorder %s2478, 63
          %s2480 = scalar_select %p2479, %s2478, 63
          %p2481 = scmp.lt.s32.totalorder %s26, 0
          %s2482 = scalar_select %p2481, %s26, 0
          %s2483 = sadd.s32 %s2482, %s2480
          %s2484 = smul.addr %s2483, 8
          %s2485 = scalar_lea.vmem %s3, %s2484
        $region48: #{global_generator_forward.45} parent=43 // pred_fallthru
          _
        // Predicated region
        $region49: #{global_generator_forward.45} parent=43 // pred_check
          %p2486 = pneg %p163
        $region50: #{global_generator_forward.45} parent=43 // pred_check_branch
          %2488 = sbr.rel (%p2486) target = $region52
        $region51: #{global_generator_forward.45} parent=43 // pred_region
          %s2489 = sand.u32 %s148, 1
          %s2490 = scalar_lea.sflag [#allocation3], %s2489
          %s2491 = sand.u32 %s148, 1
          %s2492 = smul.addr %s2491, 8
          %s2493 = scalar_lea.vmem [#allocation2], %s2492
          %2494 = dma.done %s2490, 128
        $region52: #{global_generator_forward.45} parent=43 // pred_fallthru
          _
      $region44: #{global_generator_forward.45} parent=5 // pred_fallthru
        _
    $region6: #{global_generator_forward.45} parent=1 // loop_footer
      %s18 = sadd.s32 1, %s14
    $region7: #{global_generator_forward.45} parent=1 // loop_footer_branch
      %13 = sbr.rel target = $region3
    $region8: #{global_generator_forward.45} parent=1 // loop_exit
      _
    %2495 = vsyncpa [#allocation3], 1
    %s2496 = scalar_lea.sflag [#allocation3], 1
    %2497 = vsyncpa %s2496, 1

</llo_original>
